<compile_context>
chip_gen: v7x
topology: tpu7x:2x2x1
jax: 0.10.0
libtpu: 0.0.40
codegen_flags: <defaults>
</compile_context>

<pallas_src>
import jax
import jax.numpy as jnp
from jax.experimental import pallas as pl
from jax.experimental.pallas import tpu as pltpu

_BN_EPS = 1e-5


def _row_tile(m: int) -> int:
    """Largest multiple-of-8 divisor of m that is <= 512, preferring >= 2 grid
    steps (so a 'parallel' grid axis can feed both v7x TensorCores)."""
    assert m % 8 == 0, m
    multi = [t for t in range(8, 513, 8) if m % t == 0 and m // t >= 2]
    if multi:
        return max(multi)
    return m  # tiny, already-aligned single block


# ---------------------------------------------------------------------------
# Pallas kernels
# ---------------------------------------------------------------------------
def _logit_kernel(x_ref, o_ref):
    # SigmoidInverse: x -> log(x) - log(1 - x) with a small eps squash.
    # TODO(synk): eps constant (1e-3) assumed from vaetc's SigmoidInverse.
    x = x_ref[...] * (1.0 - 2e-3) + 1e-3
    o_ref[...] = (jnp.log(x) - jnp.log1p(-x)).astype(o_ref.dtype)


def _conv_silu_stats_kernel(x_ref, w_ref, b_ref, o_ref, stats_ref):
    # x: (tm, K) bf16, w: (K, Cp) bf16, b: (1, Cp) f32
    acc = jnp.dot(x_ref[...], w_ref[...], preferred_element_type=jnp.float32)
    acc = acc + b_ref[...]
    s = acc * jax.nn.sigmoid(acc)                         # SiLU
    o_ref[...] = s.astype(o_ref.dtype)
    # per-tile BatchNorm partial statistics (rows 0/1 of an 8-row tile;
    # remaining rows are never read back).
    stats_ref[0:1, :] = jnp.sum(s, axis=0, keepdims=True)
    stats_ref[1:2, :] = jnp.sum(s * s, axis=0, keepdims=True)


def _fc_head_kernel(x_ref, w1_ref, b1_ref, w2_ref, b2_ref, o_ref):
    # fused Linear(4096,256) -> SiLU -> Linear(256,z_pad)
    h = jnp.dot(x_ref[...], w1_ref[...], preferred_element_type=jnp.float32)
    h = h + b1_ref[...]
    h = h * jax.nn.sigmoid(h)
    z = jnp.dot(h.astype(w2_ref.dtype), w2_ref[...],
                preferred_element_type=jnp.float32)
    o_ref[...] = z + b2_ref[...]


# ---------------------------------------------------------------------------
# Pallas wrappers
# ---------------------------------------------------------------------------
def sigmoid_inverse(x_flat):
    M, C = x_flat.shape                                   # C == 128, lane-dense
    tm = _row_tile(M)
    return pl.pallas_call(
        _logit_kernel,
        out_shape=jax.ShapeDtypeStruct((M, C), jnp.bfloat16),
        grid_spec=pltpu.PrefetchScalarGridSpec(
            num_scalar_prefetch=0,
            grid=(M // tm,),
            in_specs=[pl.BlockSpec((tm, C), lambda i: (i, 0))],
            out_specs=pl.BlockSpec((tm, C), lambda i: (i, 0)),
        ),
        compiler_params=pltpu.CompilerParams(dimension_semantics=("parallel",)),
    )(x_flat)


def conv_silu_stats(cols, w2, b):
    """y = SiLU(cols @ w2 + b) and per-tile column (sum, sumsq) stats.

    cols: (M, K) bf16, w2: (K, Cp) bf16, b: (Cp,) f32.
    Returns y (M, Cp) bf16 and stats (grid_m, 8, Cp) f32 where
    stats[:, 0] = per-tile column sums, stats[:, 1] = per-tile sums of squares.
    """
    M, K = cols.shape
    K2, Cp = w2.shape
    assert K == K2 and Cp % 128 == 0 and K % 128 == 0
    tm = _row_tile(M)
    gm = M // tm
    y, stats = pl.pallas_call(
        _conv_silu_stats_kernel,
        out_shape=(
            jax.ShapeDtypeStruct((M, Cp), jnp.bfloat16),
            jax.ShapeDtypeStruct((gm * 8, Cp), jnp.float32),
        ),
        grid_spec=pltpu.PrefetchScalarGridSpec(
            num_scalar_prefetch=0,
            grid=(gm,),
            in_specs=[
                pl.BlockSpec((tm, K), lambda i: (i, 0)),
                pl.BlockSpec((K, Cp), lambda i: (0, 0)),
                pl.BlockSpec((1, Cp), lambda i: (0, 0)),
            ],
            out_specs=(
                pl.BlockSpec((tm, Cp), lambda i: (i, 0)),
                pl.BlockSpec((8, Cp), lambda i: (i, 0)),
            ),
        ),
        # No oversized vmem_limit_bytes: the biggest block set here is only a
        # few MiB double-buffered, well inside the default scoped VMEM budget
        # on v5e/v6e/v7x.
        compiler_params=pltpu.CompilerParams(dimension_semantics=("parallel",)),
    )(cols, w2, b.reshape(1, Cp))
    return y, stats.reshape(gm, 8, Cp)


def fc_head(x, w1, b1, w2, b2):
    """Fused Linear -> SiLU -> Linear.  All blocks = full arrays, grid=(1,)."""
    Mp, K = x.shape
    _, H = w1.shape
    _, Z = w2.shape
    return pl.pallas_call(
        _fc_head_kernel,
        out_shape=jax.ShapeDtypeStruct((Mp, Z), jnp.float32),
        grid_spec=pltpu.PrefetchScalarGridSpec(
            num_scalar_prefetch=0,
            grid=(1,),
            in_specs=[
                pl.BlockSpec((Mp, K), lambda i: (0, 0)),
                pl.BlockSpec((K, H), lambda i: (0, 0)),
                pl.BlockSpec((1, H), lambda i: (0, 0)),
                pl.BlockSpec((H, Z), lambda i: (0, 0)),
                pl.BlockSpec((1, Z), lambda i: (0, 0)),
            ],
            out_specs=pl.BlockSpec((Mp, Z), lambda i: (0, 0)),
        ),
        compiler_params=pltpu.CompilerParams(dimension_semantics=("arbitrary",)),
    )(x, w1, b1.reshape(1, H), w2, b2.reshape(1, Z))


# ---------------------------------------------------------------------------
# Plain-JAX glue: im2col, BN folding, weight layout
# ---------------------------------------------------------------------------
def _im2col_4x4_s2(x_nhwc, c_take, k=4, s=2, pad=1):
    """'replicate'-padded 4x4 / stride-2 patches of the first c_take channels,
    flattened to a bf16 (N*OH*OW, 16*c_take) matrix (tap-major, channel-minor,
    matching the weight layout in _conv_weights)."""
    x = x_nhwc[..., :c_take].astype(jnp.bfloat16)
    xp = jnp.pad(x, ((0, 0), (pad, pad), (pad, pad), (0, 0)), mode="edge")
    N, Hp, Wp, C = xp.shape
    OH = (Hp - k) // s + 1
    OW = (Wp - k) // s + 1
    cols = [xp[:, kh:kh + s * OH:s, kw:kw + s * OW:s, :]
            for kh in range(k) for kw in range(k)]
    patches = jnp.stack(cols, axis=3)                     # (N, OH, OW, 16, C)
    return patches.reshape(N * OH * OW, k * k * C), (N, OH, OW)


def _conv_weights(w, b, cin_pad, cout_pad, scale=None, shift=None):
    """Fold the previous layer's BatchNorm affine into (w, b), pad Cin/Cout and
    reshape to matmul layout (16*cin_pad, cout_pad) bf16 + (cout_pad,) f32.

    The fold is exact because replicate padding of (x*scale + shift) equals
    (replicate-padded x)*scale + shift for per-channel scale/shift.
    """
    cout, cin = w.shape[0], w.shape[1]
    if scale is not None:
        b = b + jnp.einsum("oihw,i->o", w, shift)         # use original w here
        w = w * scale[None, :, None, None]
    if cin_pad > cin:
        w = jnp.pad(w, ((0, 0), (0, cin_pad - cin), (0, 0), (0, 0)))
    w2 = jnp.transpose(w, (2, 3, 1, 0)).reshape(16 * cin_pad, cout)
    w2 = jnp.pad(w2, ((0, 0), (0, cout_pad - cout))).astype(jnp.bfloat16)
    bp = jnp.pad(b, (0, cout_pad - cout)).astype(jnp.float32)
    return w2, bp


# (c_take = channels consumed from the stored activation, cout = real output
#  channels, cout_pad = lane-padded stored output channels)
_LAYERS = (
    dict(c_take=8,   cout=32,  cout_pad=128),
    dict(c_take=32,  cout=64,  cout_pad=128),
    dict(c_take=64,  cout=128, cout_pad=128),
    dict(c_take=128, cout=256, cout_pad=256),
)


# ---------------------------------------------------------------------------
# Full ConvEncoder forward
# ---------------------------------------------------------------------------
def conv_encoder_forward(x_nchw, params):
    N, C, H, W = x_nchw.shape
    assert C == 3 and H == 64 and W == 64, (N, C, H, W)

    # SigmoidInverse: element order is irrelevant -> run lane-dense on a
    # (-1, 128) view of the NCHW buffer (N*3*64*64 is divisible by 128).
    flat = x_nchw.astype(jnp.float32).reshape(-1, 128)
    h = sigmoid_inverse(flat).reshape(N, C, H, W)
    h = jnp.transpose(h, (0, 2, 3, 1))                    # NHWC, bf16
    h = jnp.pad(h, ((0, 0), (0, 0), (0, 0), (0, 8 - C)))  # Cin 3 -> 8 (K = 128)

    scale = shift = None
    for i, cfg in enumerate(_LAYERS):
        w2, bp = _conv_weights(params[f"conv{i}_w"], params[f"conv{i}_b"],
                               cfg["c_take"], cfg["cout_pad"], scale, shift)
        cols, (n, oh, ow) = _im2col_4x4_s2(h, cfg["c_take"])
        y, stats = conv_silu_stats(cols, w2, bp)

        # Training-mode BatchNorm statistics (biased variance) of the SiLU
        # output; the affine itself is folded into the *next* layer's weights.
        m = n * oh * ow
        cout = cfg["cout"]
        s_sum = jnp.sum(stats[:, 0, :cout], axis=0)
        s_ssq = jnp.sum(stats[:, 1, :cout], axis=0)
        mean = s_sum / m
        var = jnp.maximum(s_ssq / m - mean * mean, 0.0)
        scale = params[f"bn{i}_gamma"] / jnp.sqrt(var + _BN_EPS)
        shift = params[f"bn{i}_beta"] - mean * scale

        h = y.reshape(n, oh, ow, cfg["cout_pad"])

    # ---- fused FC head: Linear(4096,256) -> SiLU -> Linear(256, z) --------
    # h is (N, 4, 4, 256): flatten in NHWC order and permute fc1's columns from
    # PyTorch's NCHW-flatten order instead of transposing the activations.
    # Also fold the last BatchNorm (scale/shift) into fc1, and pad z to 128
    # lanes (sliced off at the end).
    z_dim = params["fc_b"].shape[0]
    w1 = params["fc1_w"].reshape(256, 256, 4, 4)          # (out, c, h, w)
    b1 = params["fc1_b"] + jnp.einsum("ochw,c->o", w1, shift)
    w1 = w1 * scale[None, :, None, None]
    w1 = jnp.transpose(w1, (0, 2, 3, 1)).reshape(256, 4096)   # (out, h*w*c)
    w1 = w1.T.astype(jnp.bfloat16)                             # (4096, 256)

    z_pad = ((z_dim + 127) // 128) * 128
    w2 = jnp.pad(params["fc_w"].T,
                 ((0, 0), (0, z_pad - z_dim))).astype(jnp.bfloat16)
    b2 = jnp.pad(params["fc_b"], (0, z_pad - z_dim)).astype(jnp.float32)

    xf = h.reshape(N, 4 * 4 * 256).astype(jnp.bfloat16)
    n_pad = ((N + 7) // 8) * 8                            # sublane-aligned rows
    xf = jnp.pad(xf, ((0, n_pad - N), (0, 0)))
    z = fc_head(xf, w1, b1.astype(jnp.float32), w2, b2)
    return z[:N, :z_dim]


# ---------------------------------------------------------------------------
# Deterministic parameter init (Kaiming-uniform-like, PyTorch shapes)
# ---------------------------------------------------------------------------
def init_params(key, z_dim):
    params = {}
    keys = jax.random.split(key, 12)
    chans = [3, 32, 64, 128, 256]
    ki = 0
    for i in range(4):
        cin, cout = chans[i], chans[i + 1]
        bound = 1.0 / jnp.sqrt(cin * 16.0)
        params[f"conv{i}_w"] = jax.random.uniform(
            keys[ki], (cout, cin, 4, 4), jnp.float32, -bound, bound); ki += 1
        params[f"conv{i}_b"] = jax.random.uniform(
            keys[ki], (cout,), jnp.float32, -bound, bound); ki += 1
        params[f"bn{i}_gamma"] = jnp.ones((cout,), jnp.float32)
        params[f"bn{i}_beta"] = jnp.zeros((cout,), jnp.float32)
    bound = 1.0 / jnp.sqrt(256.0 * 4 * 4)
    params["fc1_w"] = jax.random.uniform(keys[ki], (256, 4096), jnp.float32, -bound, bound); ki += 1
    params["fc1_b"] = jax.random.uniform(keys[ki], (256,), jnp.float32, -bound, bound); ki += 1
    bound = 1.0 / jnp.sqrt(256.0)
    params["fc_w"] = jax.random.uniform(keys[ki], (z_dim, 256), jnp.float32, -bound, bound); ki += 1
    params["fc_b"] = jax.random.uniform(keys[ki], (z_dim,), jnp.float32, -bound, bound); ki += 1
    return params


if __name__ == "__main__":
    z_dim = 16
    batch = 2
    key = jax.random.PRNGKey(0)
    k_x, k_p = jax.random.split(key)
    # Input spatial size must be 64x64 (the Flatten assumes 256*4*4 features);
    # values in (0, 1) as expected by SigmoidInverse.
    x = jax.random.uniform(k_x, (batch, 3, 64, 64), jnp.float32,
                           minval=1e-3, maxval=1.0 - 1e-3)
    params = init_params(k_p, z_dim)

    forward = jax.jit(conv_encoder_forward)
    z = forward(x, params)
    jax.block_until_ready(z)
    assert z.shape == (batch, z_dim), z.shape
    assert bool(jnp.all(jnp.isfinite(z)))
    print("KERNEL_OK")
</pallas_src>

<mosaic_0001>
module attributes {stable_mosaic.version = 11 : i64} {
  func.func @_logit_kernel(%arg0: i32, %arg1: memref<96x128xf32, #tpu.memory_space<vmem>>, %arg2: memref<96x128xbf16, #tpu.memory_space<vmem>>) attributes {dimension_semantics = [#tpu.dimension_semantics<parallel>], iteration_bounds = array<i64: 2>, scalar_prefetch = 0 : i64, scratch_operands = 0 : i64, tpu.core_type = #tpu.core_type<tc>, window_params = [{transform_indices = @transform_0, window_bounds = array<i64: 96, 128>}, {transform_indices = @transform_1, window_bounds = array<i64: 96, 128>}]} {
    %c0 = arith.constant 0 : index
    %c0_0 = arith.constant 0 : index
    %0 = vector.load %arg1[%c0, %c0_0] : memref<96x128xf32, #tpu.memory_space<vmem>>, vector<96x128xf32>
    %cst = arith.constant 9.980000e-01 : f32
    %1 = vector.broadcast %cst : f32 to vector<96x128xf32>
    %2 = arith.mulf %0, %1 : vector<96x128xf32>
    %cst_1 = arith.constant 1.000000e-03 : f32
    %3 = vector.broadcast %cst_1 : f32 to vector<96x128xf32>
    %4 = arith.addf %2, %3 : vector<96x128xf32>
    %5 = math.log %4 : vector<96x128xf32>
    %cst_2 = arith.constant 0.000000e+00 : f32
    %6 = vector.broadcast %cst_2 : f32 to vector<96x128xf32>
    %7 = arith.subf %6, %4 : vector<96x128xf32>
    %8 = math.log1p %7 : vector<96x128xf32>
    %9 = arith.subf %5, %8 : vector<96x128xf32>
    %10 = arith.truncf %9 : vector<96x128xf32> to vector<96x128xbf16>
    %c0_3 = arith.constant 0 : index
    %c0_4 = arith.constant 0 : index
    %11 = vector.load %arg2[%c0_3, %c0_4] : memref<96x128xbf16, #tpu.memory_space<vmem>>, vector<96x128xbf16>
    tpu.vector_store %arg2[%c0_3, %c0_4], %10 {strides = array<i32>} : memref<96x128xbf16, #tpu.memory_space<vmem>>, vector<96x128xbf16>,
    return
  }
  func.func @transform_0(%arg0: i32) -> (i32, i32) {
    %c0_i32 = arith.constant 0 : i32
    %c0_i32_0 = arith.constant 0 : i32
    return %arg0, %c0_i32 : i32, i32
  }
  func.func @transform_1(%arg0: i32) -> (i32, i32) {
    %c0_i32 = arith.constant 0 : i32
    %c0_i32_0 = arith.constant 0 : i32
    return %arg0, %c0_i32 : i32, i32
  }
}

module attributes {stable_mosaic.version = 11 : i64} {
  func.func @_conv_silu_stats_kernel(%arg0: i32, %arg1: memref<512x128xbf16, #tpu.memory_space<vmem>>, %arg2: memref<128x128xbf16, #tpu.memory_space<vmem>>, %arg3: memref<1x128xf32, #tpu.memory_space<vmem>>, %arg4: memref<512x128xbf16, #tpu.memory_space<vmem>>, %arg5: memref<8x128xf32, #tpu.memory_space<vmem>>) attributes {dimension_semantics = [#tpu.dimension_semantics<parallel>], iteration_bounds = array<i64: 4>, scalar_prefetch = 0 : i64, scratch_operands = 0 : i64, tpu.core_type = #tpu.core_type<tc>, window_params = [{transform_indices = @transform_0, window_bounds = array<i64: 512, 128>}, {pipeline_mode = #tpu.pipeline_mode<synchronous>, transform_indices = @transform_1, window_bounds = array<i64: 128, 128>}, {pipeline_mode = #tpu.pipeline_mode<synchronous>, transform_indices = @transform_2, window_bounds = array<i64: 1, 128>}, {transform_indices = @transform_3, window_bounds = array<i64: 512, 128>}, {transform_indices = @transform_4, window_bounds = array<i64: 8, 128>}]} {
    %c0 = arith.constant 0 : index
    %c0_0 = arith.constant 0 : index
    %0 = vector.load %arg1[%c0, %c0_0] : memref<512x128xbf16, #tpu.memory_space<vmem>>, vector<512x128xbf16>
    %c0_1 = arith.constant 0 : index
    %c0_2 = arith.constant 0 : index
    %1 = vector.load %arg2[%c0_1, %c0_2] : memref<128x128xbf16, #tpu.memory_space<vmem>>, vector<128x128xbf16>
    %cst = arith.constant dense<0.000000e+00> : vector<512x128xf32>
    %2 = tpu.matmul %0, %1, %cst {dimension_numbers = #tpu.dot_dimension_numbers<[1], [0], [0], [1], [0, 0, 1, 1], [], []>} : vector<512x128xbf16>, vector<128x128xbf16>, vector<512x128xf32> -> vector<512x128xf32>
    %c0_3 = arith.constant 0 : index
    %c0_4 = arith.constant 0 : index
    %3 = vector.load %arg3[%c0_3, %c0_4] : memref<1x128xf32, #tpu.memory_space<vmem>>, vector<1x128xf32>
    %4 = vector.broadcast %3 : vector<1x128xf32> to vector<512x128xf32>
    %5 = arith.addf %2, %4 : vector<512x128xf32>
    %6 = arith.negf %5 : vector<512x128xf32>
    %7 = math.exp %6 : vector<512x128xf32>
    %cst_5 = arith.constant 1.000000e+00 : f32
    %8 = vector.broadcast %cst_5 : f32 to vector<512x128xf32>
    %9 = arith.addf %8, %7 : vector<512x128xf32>
    %10 = arith.divf %8, %9 : vector<512x128xf32>
    %11 = arith.mulf %5, %10 : vector<512x128xf32>
    %12 = arith.truncf %11 : vector<512x128xf32> to vector<512x128xbf16>
    %c0_6 = arith.constant 0 : index
    %c0_7 = arith.constant 0 : index
    %13 = vector.load %arg4[%c0_6, %c0_7] : memref<512x128xbf16, #tpu.memory_space<vmem>>, vector<512x128xbf16>
    tpu.vector_store %arg4[%c0_6, %c0_7], %12 {strides = array<i32>} : memref<512x128xbf16, #tpu.memory_space<vmem>>, vector<512x128xbf16>,
    %cst_8 = arith.constant dense<0.000000e+00> : vector<128xf32>
    %14 = vector.multi_reduction <add>, %11, %cst_8 [0] : vector<512x128xf32> to vector<128xf32>
    %15 = vector.shape_cast %14 : vector<128xf32> to vector<1x128xf32>
    %c0_9 = arith.constant 0 : index
    %c0_10 = arith.constant 0 : index
    %16 = vector.load %arg5[%c0_9, %c0_10] : memref<8x128xf32, #tpu.memory_space<vmem>>, vector<1x128xf32>
    tpu.vector_store %arg5[%c0_9, %c0_10], %15 {strides = array<i32>} : memref<8x128xf32, #tpu.memory_space<vmem>>, vector<1x128xf32>,
    %17 = arith.mulf %11, %11 : vector<512x128xf32>
    %cst_11 = arith.constant dense<0.000000e+00> : vector<128xf32>
    %18 = vector.multi_reduction <add>, %17, %cst_11 [0] : vector<512x128xf32> to vector<128xf32>
    %19 = vector.shape_cast %18 : vector<128xf32> to vector<1x128xf32>
    %c1 = arith.constant 1 : index
    %c0_12 = arith.constant 0 : index
    %20 = vector.load %arg5[%c1, %c0_12] : memref<8x128xf32, #tpu.memory_space<vmem>>, vector<1x128xf32>
    tpu.vector_store %arg5[%c1, %c0_12], %19 {strides = array<i32>} : memref<8x128xf32, #tpu.memory_space<vmem>>, vector<1x128xf32>,
    return
  }
  func.func @transform_0(%arg0: i32) -> (i32, i32) {
    %c0_i32 = arith.constant 0 : i32
    %c0_i32_0 = arith.constant 0 : i32
    return %arg0, %c0_i32 : i32, i32
  }
  func.func @transform_1(%arg0: i32) -> (i32, i32) {
    %c0_i32 = arith.constant 0 : i32
    %c0_i32_0 = arith.constant 0 : i32
    %c0_i32_1 = arith.constant 0 : i32
    return %c0_i32, %c0_i32_0 : i32, i32
  }
  func.func @transform_2(%arg0: i32) -> (i32, i32) {
    %c0_i32 = arith.constant 0 : i32
    %c0_i32_0 = arith.constant 0 : i32
    %c0_i32_1 = arith.constant 0 : i32
    return %c0_i32, %c0_i32_0 : i32, i32
  }
  func.func @transform_3(%arg0: i32) -> (i32, i32) {
    %c0_i32 = arith.constant 0 : i32
    %c0_i32_0 = arith.constant 0 : i32
    return %arg0, %c0_i32 : i32, i32
  }
  func.func @transform_4(%arg0: i32) -> (i32, i32) {
    %c0_i32 = arith.constant 0 : i32
    %c0_i32_0 = arith.constant 0 : i32
    return %arg0, %c0_i32 : i32, i32
  }
}

module attributes {stable_mosaic.version = 11 : i64} {
  func.func @_conv_silu_stats_kernel(%arg0: i32, %arg1: memref<256x512xbf16, #tpu.memory_space<vmem>>, %arg2: memref<512x128xbf16, #tpu.memory_space<vmem>>, %arg3: memref<1x128xf32, #tpu.memory_space<vmem>>, %arg4: memref<256x128xbf16, #tpu.memory_space<vmem>>, %arg5: memref<8x128xf32, #tpu.memory_space<vmem>>) attributes {dimension_semantics = [#tpu.dimension_semantics<parallel>], iteration_bounds = array<i64: 2>, scalar_prefetch = 0 : i64, scratch_operands = 0 : i64, tpu.core_type = #tpu.core_type<tc>, window_params = [{transform_indices = @transform_0, window_bounds = array<i64: 256, 512>}, {pipeline_mode = #tpu.pipeline_mode<synchronous>, transform_indices = @transform_1, window_bounds = array<i64: 512, 128>}, {pipeline_mode = #tpu.pipeline_mode<synchronous>, transform_indices = @transform_2, window_bounds = array<i64: 1, 128>}, {transform_indices = @transform_3, window_bounds = array<i64: 256, 128>}, {transform_indices = @transform_4, window_bounds = array<i64: 8, 128>}]} {
    %c0 = arith.constant 0 : index
    %c0_0 = arith.constant 0 : index
    %0 = vector.load %arg1[%c0, %c0_0] : memref<256x512xbf16, #tpu.memory_space<vmem>>, vector<256x512xbf16>
    %c0_1 = arith.constant 0 : index
    %c0_2 = arith.constant 0 : index
    %1 = vector.load %arg2[%c0_1, %c0_2] : memref<512x128xbf16, #tpu.memory_space<vmem>>, vector<512x128xbf16>
    %cst = arith.constant dense<0.000000e+00> : vector<256x128xf32>
    %2 = tpu.matmul %0, %1, %cst {dimension_numbers = #tpu.dot_dimension_numbers<[1], [0], [0], [1], [0, 0, 1, 1], [], []>} : vector<256x512xbf16>, vector<512x128xbf16>, vector<256x128xf32> -> vector<256x128xf32>
    %c0_3 = arith.constant 0 : index
    %c0_4 = arith.constant 0 : index
    %3 = vector.load %arg3[%c0_3, %c0_4] : memref<1x128xf32, #tpu.memory_space<vmem>>, vector<1x128xf32>
    %4 = vector.broadcast %3 : vector<1x128xf32> to vector<256x128xf32>
    %5 = arith.addf %2, %4 : vector<256x128xf32>
    %6 = arith.negf %5 : vector<256x128xf32>
    %7 = math.exp %6 : vector<256x128xf32>
    %cst_5 = arith.constant 1.000000e+00 : f32
    %8 = vector.broadcast %cst_5 : f32 to vector<256x128xf32>
    %9 = arith.addf %8, %7 : vector<256x128xf32>
    %10 = arith.divf %8, %9 : vector<256x128xf32>
    %11 = arith.mulf %5, %10 : vector<256x128xf32>
    %12 = arith.truncf %11 : vector<256x128xf32> to vector<256x128xbf16>
    %c0_6 = arith.constant 0 : index
    %c0_7 = arith.constant 0 : index
    %13 = vector.load %arg4[%c0_6, %c0_7] : memref<256x128xbf16, #tpu.memory_space<vmem>>, vector<256x128xbf16>
    tpu.vector_store %arg4[%c0_6, %c0_7], %12 {strides = array<i32>} : memref<256x128xbf16, #tpu.memory_space<vmem>>, vector<256x128xbf16>,
    %cst_8 = arith.constant dense<0.000000e+00> : vector<128xf32>
    %14 = vector.multi_reduction <add>, %11, %cst_8 [0] : vector<256x128xf32> to vector<128xf32>
    %15 = vector.shape_cast %14 : vector<128xf32> to vector<1x128xf32>
    %c0_9 = arith.constant 0 : index
    %c0_10 = arith.constant 0 : index
    %16 = vector.load %arg5[%c0_9, %c0_10] : memref<8x128xf32, #tpu.memory_space<vmem>>, vector<1x128xf32>
    tpu.vector_store %arg5[%c0_9, %c0_10], %15 {strides = array<i32>} : memref<8x128xf32, #tpu.memory_space<vmem>>, vector<1x128xf32>,
    %17 = arith.mulf %11, %11 : vector<256x128xf32>
    %cst_11 = arith.constant dense<0.000000e+00> : vector<128xf32>
    %18 = vector.multi_reduction <add>, %17, %cst_11 [0] : vector<256x128xf32> to vector<128xf32>
    %19 = vector.shape_cast %18 : vector<128xf32> to vector<1x128xf32>
    %c1 = arith.constant 1 : index
    %c0_12 = arith.constant 0 : index
    %20 = vector.load %arg5[%c1, %c0_12] : memref<8x128xf32, #tpu.memory_space<vmem>>, vector<1x128xf32>
    tpu.vector_store %arg5[%c1, %c0_12], %19 {strides = array<i32>} : memref<8x128xf32, #tpu.memory_space<vmem>>, vector<1x128xf32>,
    return
  }
  func.func @transform_0(%arg0: i32) -> (i32, i32) {
    %c0_i32 = arith.constant 0 : i32
    %c0_i32_0 = arith.constant 0 : i32
    return %arg0, %c0_i32 : i32, i32
  }
  func.func @transform_1(%arg0: i32) -> (i32, i32) {
    %c0_i32 = arith.constant 0 : i32
    %c0_i32_0 = arith.constant 0 : i32
    %c0_i32_1 = arith.constant 0 : i32
    return %c0_i32, %c0_i32_0 : i32, i32
  }
  func.func @transform_2(%arg0: i32) -> (i32, i32) {
    %c0_i32 = arith.constant 0 : i32
    %c0_i32_0 = arith.constant 0 : i32
    %c0_i32_1 = arith.constant 0 : i32
    return %c0_i32, %c0_i32_0 : i32, i32
  }
  func.func @transform_3(%arg0: i32) -> (i32, i32) {
    %c0_i32 = arith.constant 0 : i32
    %c0_i32_0 = arith.constant 0 : i32
    return %arg0, %c0_i32 : i32, i32
  }
  func.func @transform_4(%arg0: i32) -> (i32, i32) {
    %c0_i32 = arith.constant 0 : i32
    %c0_i32_0 = arith.constant 0 : i32
    return %arg0, %c0_i32 : i32, i32
  }
}

module attributes {stable_mosaic.version = 11 : i64} {
  func.func @_conv_silu_stats_kernel(%arg0: i32, %arg1: memref<64x1024xbf16, #tpu.memory_space<vmem>>, %arg2: memref<1024x128xbf16, #tpu.memory_space<vmem>>, %arg3: memref<1x128xf32, #tpu.memory_space<vmem>>, %arg4: memref<64x128xbf16, #tpu.memory_space<vmem>>, %arg5: memref<8x128xf32, #tpu.memory_space<vmem>>) attributes {dimension_semantics = [#tpu.dimension_semantics<parallel>], iteration_bounds = array<i64: 2>, scalar_prefetch = 0 : i64, scratch_operands = 0 : i64, tpu.core_type = #tpu.core_type<tc>, window_params = [{transform_indices = @transform_0, window_bounds = array<i64: 64, 1024>}, {pipeline_mode = #tpu.pipeline_mode<synchronous>, transform_indices = @transform_1, window_bounds = array<i64: 1024, 128>}, {pipeline_mode = #tpu.pipeline_mode<synchronous>, transform_indices = @transform_2, window_bounds = array<i64: 1, 128>}, {transform_indices = @transform_3, window_bounds = array<i64: 64, 128>}, {transform_indices = @transform_4, window_bounds = array<i64: 8, 128>}]} {
    %c0 = arith.constant 0 : index
    %c0_0 = arith.constant 0 : index
    %0 = vector.load %arg1[%c0, %c0_0] : memref<64x1024xbf16, #tpu.memory_space<vmem>>, vector<64x1024xbf16>
    %c0_1 = arith.constant 0 : index
    %c0_2 = arith.constant 0 : index
    %1 = vector.load %arg2[%c0_1, %c0_2] : memref<1024x128xbf16, #tpu.memory_space<vmem>>, vector<1024x128xbf16>
    %cst = arith.constant dense<0.000000e+00> : vector<64x128xf32>
    %2 = tpu.matmul %0, %1, %cst {dimension_numbers = #tpu.dot_dimension_numbers<[1], [0], [0], [1], [0, 0, 1, 1], [], []>} : vector<64x1024xbf16>, vector<1024x128xbf16>, vector<64x128xf32> -> vector<64x128xf32>
    %c0_3 = arith.constant 0 : index
    %c0_4 = arith.constant 0 : index
    %3 = vector.load %arg3[%c0_3, %c0_4] : memref<1x128xf32, #tpu.memory_space<vmem>>, vector<1x128xf32>
    %4 = vector.broadcast %3 : vector<1x128xf32> to vector<64x128xf32>
    %5 = arith.addf %2, %4 : vector<64x128xf32>
    %6 = arith.negf %5 : vector<64x128xf32>
    %7 = math.exp %6 : vector<64x128xf32>
    %cst_5 = arith.constant 1.000000e+00 : f32
    %8 = vector.broadcast %cst_5 : f32 to vector<64x128xf32>
    %9 = arith.addf %8, %7 : vector<64x128xf32>
    %10 = arith.divf %8, %9 : vector<64x128xf32>
    %11 = arith.mulf %5, %10 : vector<64x128xf32>
    %12 = arith.truncf %11 : vector<64x128xf32> to vector<64x128xbf16>
    %c0_6 = arith.constant 0 : index
    %c0_7 = arith.constant 0 : index
    %13 = vector.load %arg4[%c0_6, %c0_7] : memref<64x128xbf16, #tpu.memory_space<vmem>>, vector<64x128xbf16>
    tpu.vector_store %arg4[%c0_6, %c0_7], %12 {strides = array<i32>} : memref<64x128xbf16, #tpu.memory_space<vmem>>, vector<64x128xbf16>,
    %cst_8 = arith.constant dense<0.000000e+00> : vector<128xf32>
    %14 = vector.multi_reduction <add>, %11, %cst_8 [0] : vector<64x128xf32> to vector<128xf32>
    %15 = vector.shape_cast %14 : vector<128xf32> to vector<1x128xf32>
    %c0_9 = arith.constant 0 : index
    %c0_10 = arith.constant 0 : index
    %16 = vector.load %arg5[%c0_9, %c0_10] : memref<8x128xf32, #tpu.memory_space<vmem>>, vector<1x128xf32>
    tpu.vector_store %arg5[%c0_9, %c0_10], %15 {strides = array<i32>} : memref<8x128xf32, #tpu.memory_space<vmem>>, vector<1x128xf32>,
    %17 = arith.mulf %11, %11 : vector<64x128xf32>
    %cst_11 = arith.constant dense<0.000000e+00> : vector<128xf32>
    %18 = vector.multi_reduction <add>, %17, %cst_11 [0] : vector<64x128xf32> to vector<128xf32>
    %19 = vector.shape_cast %18 : vector<128xf32> to vector<1x128xf32>
    %c1 = arith.constant 1 : index
    %c0_12 = arith.constant 0 : index
    %20 = vector.load %arg5[%c1, %c0_12] : memref<8x128xf32, #tpu.memory_space<vmem>>, vector<1x128xf32>
    tpu.vector_store %arg5[%c1, %c0_12], %19 {strides = array<i32>} : memref<8x128xf32, #tpu.memory_space<vmem>>, vector<1x128xf32>,
    return
  }
  func.func @transform_0(%arg0: i32) -> (i32, i32) {
    %c0_i32 = arith.constant 0 : i32
    %c0_i32_0 = arith.constant 0 : i32
    return %arg0, %c0_i32 : i32, i32
  }
  func.func @transform_1(%arg0: i32) -> (i32, i32) {
    %c0_i32 = arith.constant 0 : i32
    %c0_i32_0 = arith.constant 0 : i32
    %c0_i32_1 = arith.constant 0 : i32
    return %c0_i32, %c0_i32_0 : i32, i32
  }
  func.func @transform_2(%arg0: i32) -> (i32, i32) {
    %c0_i32 = arith.constant 0 : i32
    %c0_i32_0 = arith.constant 0 : i32
    %c0_i32_1 = arith.constant 0 : i32
    return %c0_i32, %c0_i32_0 : i32, i32
  }
  func.func @transform_3(%arg0: i32) -> (i32, i32) {
    %c0_i32 = arith.constant 0 : i32
    %c0_i32_0 = arith.constant 0 : i32
    return %arg0, %c0_i32 : i32, i32
  }
  func.func @transform_4(%arg0: i32) -> (i32, i32) {
    %c0_i32 = arith.constant 0 : i32
    %c0_i32_0 = arith.constant 0 : i32
    return %arg0, %c0_i32 : i32, i32
  }
}

module attributes {stable_mosaic.version = 11 : i64} {
  func.func @_conv_silu_stats_kernel(%arg0: i32, %arg1: memref<16x2048xbf16, #tpu.memory_space<vmem>>, %arg2: memref<2048x256xbf16, #tpu.memory_space<vmem>>, %arg3: memref<1x256xf32, #tpu.memory_space<vmem>>, %arg4: memref<16x256xbf16, #tpu.memory_space<vmem>>, %arg5: memref<8x256xf32, #tpu.memory_space<vmem>>) attributes {dimension_semantics = [#tpu.dimension_semantics<parallel>], iteration_bounds = array<i64: 2>, scalar_prefetch = 0 : i64, scratch_operands = 0 : i64, tpu.core_type = #tpu.core_type<tc>, window_params = [{transform_indices = @transform_0, window_bounds = array<i64: 16, 2048>}, {pipeline_mode = #tpu.pipeline_mode<synchronous>, transform_indices = @transform_1, window_bounds = array<i64: 2048, 256>}, {pipeline_mode = #tpu.pipeline_mode<synchronous>, transform_indices = @transform_2, window_bounds = array<i64: 1, 256>}, {transform_indices = @transform_3, window_bounds = array<i64: 16, 256>}, {transform_indices = @transform_4, window_bounds = array<i64: 8, 256>}]} {
    %c0 = arith.constant 0 : index
    %c0_0 = arith.constant 0 : index
    %0 = vector.load %arg1[%c0, %c0_0] : memref<16x2048xbf16, #tpu.memory_space<vmem>>, vector<16x2048xbf16>
    %c0_1 = arith.constant 0 : index
    %c0_2 = arith.constant 0 : index
    %1 = vector.load %arg2[%c0_1, %c0_2] : memref<2048x256xbf16, #tpu.memory_space<vmem>>, vector<2048x256xbf16>
    %cst = arith.constant dense<0.000000e+00> : vector<16x256xf32>
    %2 = tpu.matmul %0, %1, %cst {dimension_numbers = #tpu.dot_dimension_numbers<[1], [0], [0], [1], [0, 0, 1, 1], [], []>} : vector<16x2048xbf16>, vector<2048x256xbf16>, vector<16x256xf32> -> vector<16x256xf32>
    %c0_3 = arith.constant 0 : index
    %c0_4 = arith.constant 0 : index
    %3 = vector.load %arg3[%c0_3, %c0_4] : memref<1x256xf32, #tpu.memory_space<vmem>>, vector<1x256xf32>
    %4 = vector.broadcast %3 : vector<1x256xf32> to vector<16x256xf32>
    %5 = arith.addf %2, %4 : vector<16x256xf32>
    %6 = arith.negf %5 : vector<16x256xf32>
    %7 = math.exp %6 : vector<16x256xf32>
    %cst_5 = arith.constant 1.000000e+00 : f32
    %8 = vector.broadcast %cst_5 : f32 to vector<16x256xf32>
    %9 = arith.addf %8, %7 : vector<16x256xf32>
    %10 = arith.divf %8, %9 : vector<16x256xf32>
    %11 = arith.mulf %5, %10 : vector<16x256xf32>
    %12 = arith.truncf %11 : vector<16x256xf32> to vector<16x256xbf16>
    %c0_6 = arith.constant 0 : index
    %c0_7 = arith.constant 0 : index
    %13 = vector.load %arg4[%c0_6, %c0_7] : memref<16x256xbf16, #tpu.memory_space<vmem>>, vector<16x256xbf16>
    tpu.vector_store %arg4[%c0_6, %c0_7], %12 {strides = array<i32>} : memref<16x256xbf16, #tpu.memory_space<vmem>>, vector<16x256xbf16>,
    %cst_8 = arith.constant dense<0.000000e+00> : vector<256xf32>
    %14 = vector.multi_reduction <add>, %11, %cst_8 [0] : vector<16x256xf32> to vector<256xf32>
    %15 = vector.shape_cast %14 : vector<256xf32> to vector<1x256xf32>
    %c0_9 = arith.constant 0 : index
    %c0_10 = arith.constant 0 : index
    %16 = vector.load %arg5[%c0_9, %c0_10] : memref<8x256xf32, #tpu.memory_space<vmem>>, vector<1x256xf32>
    tpu.vector_store %arg5[%c0_9, %c0_10], %15 {strides = array<i32>} : memref<8x256xf32, #tpu.memory_space<vmem>>, vector<1x256xf32>,
    %17 = arith.mulf %11, %11 : vector<16x256xf32>
    %cst_11 = arith.constant dense<0.000000e+00> : vector<256xf32>
    %18 = vector.multi_reduction <add>, %17, %cst_11 [0] : vector<16x256xf32> to vector<256xf32>
    %19 = vector.shape_cast %18 : vector<256xf32> to vector<1x256xf32>
    %c1 = arith.constant 1 : index
    %c0_12 = arith.constant 0 : index
    %20 = vector.load %arg5[%c1, %c0_12] : memref<8x256xf32, #tpu.memory_space<vmem>>, vector<1x256xf32>
    tpu.vector_store %arg5[%c1, %c0_12], %19 {strides = array<i32>} : memref<8x256xf32, #tpu.memory_space<vmem>>, vector<1x256xf32>,
    return
  }
  func.func @transform_0(%arg0: i32) -> (i32, i32) {
    %c0_i32 = arith.constant 0 : i32
    %c0_i32_0 = arith.constant 0 : i32
    return %arg0, %c0_i32 : i32, i32
  }
  func.func @transform_1(%arg0: i32) -> (i32, i32) {
    %c0_i32 = arith.constant 0 : i32
    %c0_i32_0 = arith.constant 0 : i32
    %c0_i32_1 = arith.constant 0 : i32
    return %c0_i32, %c0_i32_0 : i32, i32
  }
  func.func @transform_2(%arg0: i32) -> (i32, i32) {
    %c0_i32 = arith.constant 0 : i32
    %c0_i32_0 = arith.constant 0 : i32
    %c0_i32_1 = arith.constant 0 : i32
    return %c0_i32, %c0_i32_0 : i32, i32
  }
  func.func @transform_3(%arg0: i32) -> (i32, i32) {
    %c0_i32 = arith.constant 0 : i32
    %c0_i32_0 = arith.constant 0 : i32
    return %arg0, %c0_i32 : i32, i32
  }
  func.func @transform_4(%arg0: i32) -> (i32, i32) {
    %c0_i32 = arith.constant 0 : i32
    %c0_i32_0 = arith.constant 0 : i32
    return %arg0, %c0_i32 : i32, i32
  }
}

module attributes {stable_mosaic.version = 11 : i64} {
  func.func @_fc_head_kernel(%arg0: i32, %arg1: memref<8x4096xbf16, #tpu.memory_space<vmem>>, %arg2: memref<4096x256xbf16, #tpu.memory_space<vmem>>, %arg3: memref<1x256xf32, #tpu.memory_space<vmem>>, %arg4: memref<256x128xbf16, #tpu.memory_space<vmem>>, %arg5: memref<1x128xf32, #tpu.memory_space<vmem>>, %arg6: memref<8x128xf32, #tpu.memory_space<vmem>>) attributes {dimension_semantics = [#tpu.dimension_semantics<arbitrary>], iteration_bounds = array<i64: 1>, scalar_prefetch = 0 : i64, scratch_operands = 0 : i64, tpu.core_type = #tpu.core_type<tc>, window_params = [{pipeline_mode = #tpu.pipeline_mode<synchronous>, transform_indices = @transform_0, window_bounds = array<i64: 8, 4096>}, {pipeline_mode = #tpu.pipeline_mode<synchronous>, transform_indices = @transform_1, window_bounds = array<i64: 4096, 256>}, {pipeline_mode = #tpu.pipeline_mode<synchronous>, transform_indices = @transform_2, window_bounds = array<i64: 1, 256>}, {pipeline_mode = #tpu.pipeline_mode<synchronous>, transform_indices = @transform_3, window_bounds = array<i64: 256, 128>}, {pipeline_mode = #tpu.pipeline_mode<synchronous>, transform_indices = @transform_4, window_bounds = array<i64: 1, 128>}, {pipeline_mode = #tpu.pipeline_mode<synchronous>, transform_indices = @transform_5, window_bounds = array<i64: 8, 128>}]} {
    %c0 = arith.constant 0 : index
    %c0_0 = arith.constant 0 : index
    %0 = vector.load %arg1[%c0, %c0_0] : memref<8x4096xbf16, #tpu.memory_space<vmem>>, vector<8x4096xbf16>
    %c0_1 = arith.constant 0 : index
    %c0_2 = arith.constant 0 : index
    %1 = vector.load %arg2[%c0_1, %c0_2] : memref<4096x256xbf16, #tpu.memory_space<vmem>>, vector<4096x256xbf16>
    %cst = arith.constant dense<0.000000e+00> : vector<8x256xf32>
    %2 = tpu.matmul %0, %1, %cst {dimension_numbers = #tpu.dot_dimension_numbers<[1], [0], [0], [1], [0, 0, 1, 1], [], []>} : vector<8x4096xbf16>, vector<4096x256xbf16>, vector<8x256xf32> -> vector<8x256xf32>
    %c0_3 = arith.constant 0 : index
    %c0_4 = arith.constant 0 : index
    %3 = vector.load %arg3[%c0_3, %c0_4] : memref<1x256xf32, #tpu.memory_space<vmem>>, vector<1x256xf32>
    %4 = vector.broadcast %3 : vector<1x256xf32> to vector<8x256xf32>
    %5 = arith.addf %2, %4 : vector<8x256xf32>
    %6 = arith.negf %5 : vector<8x256xf32>
    %7 = math.exp %6 : vector<8x256xf32>
    %cst_5 = arith.constant 1.000000e+00 : f32
    %8 = vector.broadcast %cst_5 : f32 to vector<8x256xf32>
    %9 = arith.addf %8, %7 : vector<8x256xf32>
    %10 = arith.divf %8, %9 : vector<8x256xf32>
    %11 = arith.mulf %5, %10 : vector<8x256xf32>
    %12 = arith.truncf %11 : vector<8x256xf32> to vector<8x256xbf16>
    %c0_6 = arith.constant 0 : index
    %c0_7 = arith.constant 0 : index
    %13 = vector.load %arg4[%c0_6, %c0_7] : memref<256x128xbf16, #tpu.memory_space<vmem>>, vector<256x128xbf16>
    %cst_8 = arith.constant dense<0.000000e+00> : vector<8x128xf32>
    %14 = tpu.matmul %12, %13, %cst_8 {dimension_numbers = #tpu.dot_dimension_numbers<[1], [0], [0], [1], [0, 0, 1, 1], [], []>} : vector<8x256xbf16>, vector<256x128xbf16>, vector<8x128xf32> -> vector<8x128xf32>
    %c0_9 = arith.constant 0 : index
    %c0_10 = arith.constant 0 : index
    %15 = vector.load %arg5[%c0_9, %c0_10] : memref<1x128xf32, #tpu.memory_space<vmem>>, vector<1x128xf32>
    %16 = vector.broadcast %15 : vector<1x128xf32> to vector<8x128xf32>
    %17 = arith.addf %14, %16 : vector<8x128xf32>
    %c0_11 = arith.constant 0 : index
    %c0_12 = arith.constant 0 : index
    %18 = vector.load %arg6[%c0_11, %c0_12] : memref<8x128xf32, #tpu.memory_space<vmem>>, vector<8x128xf32>
    tpu.vector_store %arg6[%c0_11, %c0_12], %17 {strides = array<i32>} : memref<8x128xf32, #tpu.memory_space<vmem>>, vector<8x128xf32>,
    return
  }
  func.func @transform_0(%arg0: i32) -> (i32, i32) {
    %c0_i32 = arith.constant 0 : i32
    %c0_i32_0 = arith.constant 0 : i32
    %c0_i32_1 = arith.constant 0 : i32
    return %c0_i32, %c0_i32_0 : i32, i32
  }
  func.func @transform_1(%arg0: i32) -> (i32, i32) {
    %c0_i32 = arith.constant 0 : i32
    %c0_i32_0 = arith.constant 0 : i32
    %c0_i32_1 = arith.constant 0 : i32
    return %c0_i32, %c0_i32_0 : i32, i32
  }
  func.func @transform_2(%arg0: i32) -> (i32, i32) {
    %c0_i32 = arith.constant 0 : i32
    %c0_i32_0 = arith.constant 0 : i32
    %c0_i32_1 = arith.constant 0 : i32
    return %c0_i32, %c0_i32_0 : i32, i32
  }
  func.func @transform_3(%arg0: i32) -> (i32, i32) {
    %c0_i32 = arith.constant 0 : i32
    %c0_i32_0 = arith.constant 0 : i32
    %c0_i32_1 = arith.constant 0 : i32
    return %c0_i32, %c0_i32_0 : i32, i32
  }
  func.func @transform_4(%arg0: i32) -> (i32, i32) {
    %c0_i32 = arith.constant 0 : i32
    %c0_i32_0 = arith.constant 0 : i32
    %c0_i32_1 = arith.constant 0 : i32
    return %c0_i32, %c0_i32_0 : i32, i32
  }
  func.func @transform_5(%arg0: i32) -> (i32, i32) {
    %c0_i32 = arith.constant 0 : i32
    %c0_i32_0 = arith.constant 0 : i32
    %c0_i32_1 = arith.constant 0 : i32
    return %c0_i32, %c0_i32_0 : i32, i32
  }
}

</mosaic_0001>

<llo_original>
// kernel: conv_encoder_forward.6
$region0: #{conv_encoder_forward.6}
  #allocation0 [shape = 'u32[]', space=smem, size = 0x4, offset = 0x4, fixed_abs, tag = 'smem constant byte address 0x4 - core index']
  #allocation1 [shape = 'u32[144,128]{1,0:T(1,128)}', space=vmem, size = 0x12000, scoped, tag = 'internal scratch']
  %s0 = inlined_call_operand.vmem [shape: f32[192,128], index: 0, kind: input, shape index: {}]
  %s1 = inlined_call_operand.vmem [shape: bf16[192,128], index: 1, kind: output, shape index: {}]
  %s2 = sld [smem:[#allocation0]]
  $region37: #{conv_encoder_forward.6} parent=0
    _
  %s4 = ssub.s32 1, %s2
  %s5 = scalar_select 0, %s4, %s2
  loop: start=0, step=1, limit=4
  $region2: #{conv_encoder_forward.6} parent=0 // loop_pre_header
    _
  $region3: #{conv_encoder_forward.6} parent=0 // loop_header
    %s7 = sphi 0, %s11
    %p8 = scmp.ge.s32.totalorder %s7, 4
    %s17 = sphi 0, %s19
    %s20 = sphi 0, %s17
    %s21 = sphi 0, %s20
    %s37 = sphi 0, %s21
    %s43 = sphi 0, %s45
    %s46 = sphi 0, %s43
    %s47 = sphi 0, %s46
    %s63 = sphi 0, %s47
  $region4: #{conv_encoder_forward.6} parent=0 // loop_header_branch
    %10 = sbr.rel (%p8) target = $region8
  $region5: #{conv_encoder_forward.6} parent=0 // loop_body
    %s12 = ssub.s32 %s7, 1
    %s13 = ssub.s32 %s7, 2
    %s14 = sadd.s32 %s7, 1
    %s15 = ssub.s32 %s7, %s14
    %p16 = scmp.eq.s32.totalorder %s15, 0
    %s18 = sadd.s32 %s17, 1
    %s19 = scalar_select %p16, %s17, %s18
    %p22 = pneg %p16
    %p23 = scmp.eq.s32.totalorder %s7, 1
    %p24 = por %p22, %p23
    %p25 = scmp.ne.s32.totalorder %s17, %s20
    %p26 = scmp.eq.s32.totalorder %s7, 0
    %p27 = por %p25, %p26
    %p28 = scmp.ne.s32.totalorder %s17, %s20
    %p29 = scmp.eq.s32.totalorder %s12, 1
    %p30 = por %p28, %p29
    %p31 = scmp.ne.s32.totalorder %s20, %s21
    %p32 = scmp.eq.s32.totalorder %s12, 0
    %p33 = por %p31, %p32
    %p34 = scmp.ne.s32.totalorder %s20, %s21
    %p35 = scmp.eq.s32.totalorder %s13, 1
    %p36 = por %p34, %p35
    %p38 = scmp.ne.s32.totalorder %s21, %s37
    %p39 = scmp.eq.s32.totalorder %s13, 0
    %p40 = por %p38, %p39
    %s41 = ssub.s32 %s7, %s14
    %p42 = scmp.eq.s32.totalorder %s41, 0
    %s44 = sadd.s32 %s43, 1
    %s45 = scalar_select %p42, %s43, %s44
    %p48 = pneg %p42
    %p49 = scmp.eq.s32.totalorder %s7, 1
    %p50 = por %p48, %p49
    %p51 = scmp.ne.s32.totalorder %s43, %s46
    %p52 = scmp.eq.s32.totalorder %s7, 0
    %p53 = por %p51, %p52
    %p54 = scmp.ne.s32.totalorder %s43, %s46
    %p55 = scmp.eq.s32.totalorder %s12, 1
    %p56 = por %p54, %p55
    %p57 = scmp.ne.s32.totalorder %s46, %s47
    %p58 = scmp.eq.s32.totalorder %s12, 0
    %p59 = por %p57, %p58
    %p60 = scmp.ne.s32.totalorder %s46, %s47
    %p61 = scmp.eq.s32.totalorder %s13, 1
    %p62 = por %p60, %p61
    %p64 = scmp.ne.s32.totalorder %s47, %s63
    %p65 = scmp.eq.s32.totalorder %s13, 0
    %p66 = por %p64, %p65
    %p67 = scmp.le.s32.totalorder 1, %s7
    %p68 = scmp.lt.s32.totalorder %s7, 3
    %p69 = pnand %p67, %p68
    %p70 = pneg %p69
    // Predicated region
    $region9: #{conv_encoder_forward.6} parent=5 // pred_check
      _
    $region10: #{conv_encoder_forward.6} parent=5 // pred_check_branch
      %72 = sbr.rel (%p69) target = $region12
    $region11: #{conv_encoder_forward.6} parent=5 // pred_region
      %s73 = ssub.s32 %s7, 1
    $region12: #{conv_encoder_forward.6} parent=5 // pred_fallthru
      _
    %p74 = scmp.lt.s32.totalorder %s7, 2
    // Predicated region
    $region13: #{conv_encoder_forward.6} parent=5 // pred_check
      %p75 = pneg %p74
    $region14: #{conv_encoder_forward.6} parent=5 // pred_check_branch
      %77 = sbr.rel (%p75) target = $region16
    $region15: #{conv_encoder_forward.6} parent=5 // pred_region
      // Predicated region
      $region17: #{conv_encoder_forward.6} parent=15 // pred_check
        %p78 = pneg %p27
      $region18: #{conv_encoder_forward.6} parent=15 // pred_check_branch
        %80 = sbr.rel (%p78) target = $region20
      $region19: #{conv_encoder_forward.6} parent=15 // pred_region
        %s81 = smul.u32 12, %s7
        %p82 = scmp.lt.s32.totalorder %s81, 23
        %s83 = scalar_select %p82, %s81, 23
        %s84 = smul.addr %s83, 8
        %s85 = scalar_lea.vmem %s0, %s84
        %s86 = smul.u32 12, %s7
      $region20: #{conv_encoder_forward.6} parent=15 // pred_fallthru
        _
    $region16: #{conv_encoder_forward.6} parent=5 // pred_fallthru
      _
    %p87 = scmp.le.s32.totalorder 1, %s7
    %p88 = scmp.lt.s32.totalorder %s7, 3
    %p89 = pnand %p87, %p88
    %p90 = pneg %p89
    // Predicated region
    $region21: #{conv_encoder_forward.6} parent=5 // pred_check
      _
    $region22: #{conv_encoder_forward.6} parent=5 // pred_check_branch
      %92 = sbr.rel (%p89) target = $region24
    $region23: #{conv_encoder_forward.6} parent=5 // pred_region
      %s93 = ssub.s32 %s7, 1
      %s94 = smul.u32 12, %s12
      %p95 = scmp.lt.s32.totalorder %s94, 23
      %s96 = scalar_select %p95, %s94, 23
      %s97 = smul.addr %s96, 8
      %s98 = scalar_lea.vmem %s0, %s97
      %p99 = pneg %p33
      %p100 = pneg %p30
      %p101 = pneg %p59
      %p102 = pneg %p56
      %s103 = smul.u32 12, %s12
      %p104 = scmp.lt.s32.totalorder %s103, 23
      %s105 = scalar_select %p104, %s103, 23
      %s106 = smul.addr %s105, 4
      %s107 = scalar_lea.vmem %s1, %s106
      %s108 = smul.u32 12, %s12
      %p109 = scmp.lt.s32.totalorder %s108, 23
      %s110 = scalar_select %p109, %s108, 23
      %s111 = smul.addr %s110, 8
      %s112 = scalar_lea.vmem %s0, %s111
      %s113 = smul.u32 12, %s12
      %s114 = smul.u32 12, %s12
      %p115 = scmp.lt.s32.totalorder %s114, 23
      %s116 = scalar_select %p115, %s114, 23
      %s117 = smul.addr %s116, 4
      %s118 = scalar_lea.vmem %s1, %s117
      %s119 = smul.u32 12, %s12
      %v120 = vld [vmem:[%s112] sm:$0xff]
      %v121 = vld [vmem:[%s112 + $0x8] sm:$0xff]
      %v122 = vld [vmem:[%s112 + $0x10] sm:$0xff]
      %v123 = vld [vmem:[%s112 + $0x18] sm:$0xff]
      %v124 = vld [vmem:[%s112 + $0x20] sm:$0xff]
      %v125 = vld [vmem:[%s112 + $0x28] sm:$0xff]
      %v126 = vld [vmem:[%s112 + $0x30] sm:$0xff]
      %v127 = vld [vmem:[%s112 + $0x38] sm:$0xff]
      %v128 = vld [vmem:[%s112 + $0x40] sm:$0xff]
      %v129 = vld [vmem:[%s112 + $0x48] sm:$0xff]
      %v130 = vld [vmem:[%s112 + $0x50] sm:$0xff]
      %v131 = vld [vmem:[%s112 + $0x58] sm:$0xff]
      %v132 = vmul.f32 %v120, 0.998
      %v133 = vmul.f32 %v121, 0.998
      %v134 = vmul.f32 %v122, 0.998
      %v135 = vmul.f32 %v123, 0.998
      %v136 = vmul.f32 %v124, 0.998
      %v137 = vmul.f32 %v125, 0.998
      %v138 = vmul.f32 %v126, 0.998
      %v139 = vmul.f32 %v127, 0.998
      %v140 = vmul.f32 %v128, 0.998
      %v141 = vmul.f32 %v129, 0.998
      %v142 = vmul.f32 %v130, 0.998
      %v143 = vmul.f32 %v131, 0.998
      %v144 = vadd.f32 %v132, 0.001
      %v145 = vadd.f32 %v133, 0.001
      %v146 = vadd.f32 %v134, 0.001
      %v147 = vadd.f32 %v135, 0.001
      %v148 = vadd.f32 %v136, 0.001
      %v149 = vadd.f32 %v137, 0.001
      %v150 = vadd.f32 %v138, 0.001
      %v151 = vadd.f32 %v139, 0.001
      %v152 = vadd.f32 %v140, 0.001
      %v153 = vadd.f32 %v141, 0.001
      %v154 = vadd.f32 %v142, 0.001
      %v155 = vadd.f32 %v143, 0.001
      %v156 = vlog2.pop %v144
      %v157 = vmul.f32 %v156, 0.6931472
      %v158 = vlog2.pop %v145
      %v159 = vmul.f32 %v158, 0.6931472
      %v160 = vlog2.pop %v146
      %v161 = vmul.f32 %v160, 0.6931472
      %v162 = vlog2.pop %v147
      %v163 = vmul.f32 %v162, 0.6931472
      %v164 = vlog2.pop %v148
      %v165 = vmul.f32 %v164, 0.6931472
      %v166 = vlog2.pop %v149
      %v167 = vmul.f32 %v166, 0.6931472
      %v168 = vlog2.pop %v150
      %v169 = vmul.f32 %v168, 0.6931472
      %v170 = vlog2.pop %v151
      %v171 = vmul.f32 %v170, 0.6931472
      %v172 = vlog2.pop %v152
      %v173 = vmul.f32 %v172, 0.6931472
      %v174 = vlog2.pop %v153
      %v175 = vmul.f32 %v174, 0.6931472
      %v176 = vlog2.pop %v154
      %v177 = vmul.f32 %v176, 0.6931472
      %v178 = vlog2.pop %v155
      %v179 = vmul.f32 %v178, 0.6931472
      %v180 = vsub.f32 0.0, %v144
      %v181 = vsub.f32 0.0, %v145
      %v182 = vsub.f32 0.0, %v146
      %v183 = vsub.f32 0.0, %v147
      %v184 = vsub.f32 0.0, %v148
      %v185 = vsub.f32 0.0, %v149
      %v186 = vsub.f32 0.0, %v150
      %v187 = vsub.f32 0.0, %v151
      %v188 = vsub.f32 0.0, %v152
      %v189 = vsub.f32 0.0, %v153
      %v190 = vsub.f32 0.0, %v154
      %v191 = vsub.f32 0.0, %v155
      %v192 = vadd.f32 %v180, 1.0
      %v193 = vlog2.pop %v192
      %v194 = vmul.f32 %v193, 0.6931472
      %v195 = vmul.f32 -0.5, %v180
      %v196 = vadd.f32 %v195, 1.0
      %v197 = vmul.f32 %v196, %v180
      %v198 = vand.u32 2147483647, %v180
      %vm199 = vcmp.lt.f32.partialorder %v198, 0.0004427343
      %v200 = vsel %vm199, %v197, %v194
      %v201 = vadd.f32 %v181, 1.0
      %v202 = vlog2.pop %v201
      %v203 = vmul.f32 %v202, 0.6931472
      %v204 = vmul.f32 -0.5, %v181
      %v205 = vadd.f32 %v204, 1.0
      %v206 = vmul.f32 %v205, %v181
      %v207 = vand.u32 2147483647, %v181
      %vm208 = vcmp.lt.f32.partialorder %v207, 0.0004427343
      %v209 = vsel %vm208, %v206, %v203
      %v210 = vadd.f32 %v182, 1.0
      %v211 = vlog2.pop %v210
      %v212 = vmul.f32 %v211, 0.6931472
      %v213 = vmul.f32 -0.5, %v182
      %v214 = vadd.f32 %v213, 1.0
      %v215 = vmul.f32 %v214, %v182
      %v216 = vand.u32 2147483647, %v182
      %vm217 = vcmp.lt.f32.partialorder %v216, 0.0004427343
      %v218 = vsel %vm217, %v215, %v212
      %v219 = vadd.f32 %v183, 1.0
      %v220 = vlog2.pop %v219
      %v221 = vmul.f32 %v220, 0.6931472
      %v222 = vmul.f32 -0.5, %v183
      %v223 = vadd.f32 %v222, 1.0
      %v224 = vmul.f32 %v223, %v183
      %v225 = vand.u32 2147483647, %v183
      %vm226 = vcmp.lt.f32.partialorder %v225, 0.0004427343
      %v227 = vsel %vm226, %v224, %v221
      %v228 = vadd.f32 %v184, 1.0
      %v229 = vlog2.pop %v228
      %v230 = vmul.f32 %v229, 0.6931472
      %v231 = vmul.f32 -0.5, %v184
      %v232 = vadd.f32 %v231, 1.0
      %v233 = vmul.f32 %v232, %v184
      %v234 = vand.u32 2147483647, %v184
      %vm235 = vcmp.lt.f32.partialorder %v234, 0.0004427343
      %v236 = vsel %vm235, %v233, %v230
      %v237 = vadd.f32 %v185, 1.0
      %v238 = vlog2.pop %v237
      %v239 = vmul.f32 %v238, 0.6931472
      %v240 = vmul.f32 -0.5, %v185
      %v241 = vadd.f32 %v240, 1.0
      %v242 = vmul.f32 %v241, %v185
      %v243 = vand.u32 2147483647, %v185
      %vm244 = vcmp.lt.f32.partialorder %v243, 0.0004427343
      %v245 = vsel %vm244, %v242, %v239
      %v246 = vadd.f32 %v186, 1.0
      %v247 = vlog2.pop %v246
      %v248 = vmul.f32 %v247, 0.6931472
      %v249 = vmul.f32 -0.5, %v186
      %v250 = vadd.f32 %v249, 1.0
      %v251 = vmul.f32 %v250, %v186
      %v252 = vand.u32 2147483647, %v186
      %vm253 = vcmp.lt.f32.partialorder %v252, 0.0004427343
      %v254 = vsel %vm253, %v251, %v248
      %v255 = vadd.f32 %v187, 1.0
      %v256 = vlog2.pop %v255
      %v257 = vmul.f32 %v256, 0.6931472
      %v258 = vmul.f32 -0.5, %v187
      %v259 = vadd.f32 %v258, 1.0
      %v260 = vmul.f32 %v259, %v187
      %v261 = vand.u32 2147483647, %v187
      %vm262 = vcmp.lt.f32.partialorder %v261, 0.0004427343
      %v263 = vsel %vm262, %v260, %v257
      %v264 = vadd.f32 %v188, 1.0
      %v265 = vlog2.pop %v264
      %v266 = vmul.f32 %v265, 0.6931472
      %v267 = vmul.f32 -0.5, %v188
      %v268 = vadd.f32 %v267, 1.0
      %v269 = vmul.f32 %v268, %v188
      %v270 = vand.u32 2147483647, %v188
      %vm271 = vcmp.lt.f32.partialorder %v270, 0.0004427343
      %v272 = vsel %vm271, %v269, %v266
      %v273 = vadd.f32 %v189, 1.0
      %v274 = vlog2.pop %v273
      %v275 = vmul.f32 %v274, 0.6931472
      %v276 = vmul.f32 -0.5, %v189
      %v277 = vadd.f32 %v276, 1.0
      %v278 = vmul.f32 %v277, %v189
      %v279 = vand.u32 2147483647, %v189
      %vm280 = vcmp.lt.f32.partialorder %v279, 0.0004427343
      %v281 = vsel %vm280, %v278, %v275
      %v282 = vadd.f32 %v190, 1.0
      %v283 = vlog2.pop %v282
      %v284 = vmul.f32 %v283, 0.6931472
      %v285 = vmul.f32 -0.5, %v190
      %v286 = vadd.f32 %v285, 1.0
      %v287 = vmul.f32 %v286, %v190
      %v288 = vand.u32 2147483647, %v190
      %vm289 = vcmp.lt.f32.partialorder %v288, 0.0004427343
      %v290 = vsel %vm289, %v287, %v284
      %v291 = vadd.f32 %v191, 1.0
      %v292 = vlog2.pop %v291
      %v293 = vmul.f32 %v292, 0.6931472
      %v294 = vmul.f32 -0.5, %v191
      %v295 = vadd.f32 %v294, 1.0
      %v296 = vmul.f32 %v295, %v191
      %v297 = vand.u32 2147483647, %v191
      %vm298 = vcmp.lt.f32.partialorder %v297, 0.0004427343
      %v299 = vsel %vm298, %v296, %v293
      %v300 = vsub.f32 %v157, %v200
      %v301 = vsub.f32 %v159, %v209
      %v302 = vsub.f32 %v161, %v218
      %v303 = vsub.f32 %v163, %v227
      %v304 = vsub.f32 %v165, %v236
      %v305 = vsub.f32 %v167, %v245
      %v306 = vsub.f32 %v169, %v254
      %v307 = vsub.f32 %v171, %v263
      %v308 = vsub.f32 %v173, %v272
      %v309 = vsub.f32 %v175, %v281
      %v310 = vsub.f32 %v177, %v290
      %v311 = vsub.f32 %v179, %v299
      %v312 = vpack.c.bf16 %v301, %v300
      %v313 = vpack.c.bf16 %v303, %v302
      %v314 = vpack.c.bf16 %v305, %v304
      %v315 = vpack.c.bf16 %v307, %v306
      %v316 = vpack.c.bf16 %v309, %v308
      %v317 = vpack.c.bf16 %v311, %v310
      %v324 = vunpack.c.l.b16 %v312
      %v325 = vunpack.c.h.b16 %v312
      %v326 = vunpack.c.l.b16 %v313
      %v327 = vunpack.c.h.b16 %v313
      %v328 = vunpack.c.l.b16 %v314
      %v329 = vunpack.c.h.b16 %v314
      %v330 = vunpack.c.l.b16 %v315
      %v331 = vunpack.c.h.b16 %v315
      %v332 = vunpack.c.l.b16 %v316
      %v333 = vunpack.c.h.b16 %v316
      %v334 = vunpack.c.l.b16 %v317
      %v335 = vunpack.c.h.b16 %v317
      %v336 = vpack.c.b16 %v324, %v324
      %v337 = vpack.c.b16 %v325, %v325
      %v338 = vpack.c.b16 %v326, %v326
      %v339 = vpack.c.b16 %v327, %v327
      %v340 = vpack.c.b16 %v328, %v328
      %v341 = vpack.c.b16 %v329, %v329
      %v342 = vpack.c.b16 %v330, %v330
      %v343 = vpack.c.b16 %v331, %v331
      %v344 = vpack.c.b16 %v332, %v332
      %v345 = vpack.c.b16 %v333, %v333
      %v346 = vpack.c.b16 %v334, %v334
      %v347 = vpack.c.b16 %v335, %v335
      %360 = vst [vmem:[%s118] sm:$0xf] %v336
      %361 = vst [vmem:[%s118 + $0x4] sm:$0xf] %v337
      %362 = vst [vmem:[%s118 + $0x8] sm:$0xf] %v338
      %363 = vst [vmem:[%s118 + $0xc] sm:$0xf] %v339
      %364 = vst [vmem:[%s118 + $0x10] sm:$0xf] %v340
      %365 = vst [vmem:[%s118 + $0x14] sm:$0xf] %v341
      %366 = vst [vmem:[%s118 + $0x18] sm:$0xf] %v342
      %367 = vst [vmem:[%s118 + $0x1c] sm:$0xf] %v343
      %368 = vst [vmem:[%s118 + $0x20] sm:$0xf] %v344
      %369 = vst [vmem:[%s118 + $0x24] sm:$0xf] %v345
      %370 = vst [vmem:[%s118 + $0x28] sm:$0xf] %v346
      %371 = vst [vmem:[%s118 + $0x2c] sm:$0xf] %v347
      %s372 = smul.u32 12, %s12
      %p373 = scmp.lt.s32.totalorder %s372, 23
      %s374 = scalar_select %p373, %s372, 23
      %s375 = smul.addr %s374, 4
      %s376 = scalar_lea.vmem %s1, %s375
      // Predicated region
      $region25: #{conv_encoder_forward.6} parent=23 // pred_check
        %p377 = pneg %p56
      $region26: #{conv_encoder_forward.6} parent=23 // pred_check_branch
        %379 = sbr.rel (%p377) target = $region28
      $region27: #{conv_encoder_forward.6} parent=23 // pred_region
        %s380 = smul.u32 12, %s12
      $region28: #{conv_encoder_forward.6} parent=23 // pred_fallthru
        _
    $region24: #{conv_encoder_forward.6} parent=5 // pred_fallthru
      _
    %p381 = scmp.le.s32.totalorder 2, %s7
    // Predicated region
    $region29: #{conv_encoder_forward.6} parent=5 // pred_check
      %p382 = pneg %p381
    $region30: #{conv_encoder_forward.6} parent=5 // pred_check_branch
      %384 = sbr.rel (%p382) target = $region32
    $region31: #{conv_encoder_forward.6} parent=5 // pred_region
      %s385 = ssub.s32 %s7, 2
      // Predicated region
      $region33: #{conv_encoder_forward.6} parent=31 // pred_check
        %p386 = pneg %p62
      $region34: #{conv_encoder_forward.6} parent=31 // pred_check_branch
        %388 = sbr.rel (%p386) target = $region36
      $region35: #{conv_encoder_forward.6} parent=31 // pred_region
        %s389 = smul.u32 12, %s13
        %p390 = scmp.lt.s32.totalorder %s389, 23
        %s391 = scalar_select %p390, %s389, 23
        %s392 = smul.addr %s391, 4
        %s393 = scalar_lea.vmem %s1, %s392
      $region36: #{conv_encoder_forward.6} parent=31 // pred_fallthru
        _
    $region32: #{conv_encoder_forward.6} parent=5 // pred_fallthru
      _
  $region6: #{conv_encoder_forward.6} parent=0 // loop_footer
    %s11 = sadd.s32 1, %s7
  $region7: #{conv_encoder_forward.6} parent=0 // loop_footer_branch
    %6 = sbr.rel target = $region3
  $region8: #{conv_encoder_forward.6} parent=0 // loop_exit
    _

// kernel: conv_encoder_forward.7
$region0: #{conv_encoder_forward.7}
  #allocation0 [shape = 'u32[]', space=smem, size = 0x4, offset = 0x4, fixed_abs, tag = 'smem constant byte address 0x4 - core index']
  #allocation1 [shape = 'u32[144,128]{1,0:T(1,128)}', space=vmem, size = 0x12000, scoped, tag = 'internal scratch']
  %s0 = inlined_call_operand.vmem [shape: bf16[2048,128], index: 0, kind: input, shape index: {}]
  %s1 = inlined_call_operand.vmem [shape: bf16[128,128], index: 1, kind: input, shape index: {}]
  %s2 = inlined_call_operand.vmem [shape: f32[1,128], index: 2, kind: input, shape index: {}]
  %s3 = inlined_call_operand.vmem [shape: bf16[2048,128], index: 3, kind: output, shape index: {0}]
  %s4 = inlined_call_operand.vmem [shape: f32[32,128], index: 4, kind: output, shape index: {1}]
  %5 = xla_tuple %s3, %s4
  %s6 = sld [smem:[#allocation0]]
  $region53: #{conv_encoder_forward.7} parent=0
    _
  %s8 = ssub.s32 1, %s6
  %s9 = scalar_select 0, %s8, %s6
  loop: start=0, step=1, limit=6
  $region2: #{conv_encoder_forward.7} parent=0 // loop_pre_header
    _
  $region3: #{conv_encoder_forward.7} parent=0 // loop_header
    %s11 = sphi 0, %s15
    %p12 = scmp.ge.s32.totalorder %s11, 6
    %s21 = sphi 0, %s23
    %s24 = sphi 0, %s21
    %s25 = sphi 0, %s24
    %s41 = sphi 0, %s25
    %s45 = sphi 0, %s45
    %s47 = sphi 0, %s45
    %s48 = sphi 0, %s47
    %s62 = sphi 0, %s48
    %s66 = sphi 0, %s66
    %s68 = sphi 0, %s66
    %s69 = sphi 0, %s68
    %s83 = sphi 0, %s69
    %s89 = sphi 0, %s91
    %s92 = sphi 0, %s89
    %s93 = sphi 0, %s92
    %s109 = sphi 0, %s93
    %s115 = sphi 0, %s117
    %s118 = sphi 0, %s115
    %s119 = sphi 0, %s118
    %s135 = sphi 0, %s119
  $region4: #{conv_encoder_forward.7} parent=0 // loop_header_branch
    %14 = sbr.rel (%p12) target = $region8
  $region5: #{conv_encoder_forward.7} parent=0 // loop_body
    %s16 = ssub.s32 %s11, 1
    %s17 = ssub.s32 %s11, 2
    %s18 = sadd.s32 %s11, 1
    %s19 = ssub.s32 %s11, %s18
    %p20 = scmp.eq.s32.totalorder %s19, 0
    %s22 = sadd.s32 %s21, 1
    %s23 = scalar_select %p20, %s21, %s22
    %p26 = pneg %p20
    %p27 = scmp.eq.s32.totalorder %s11, 3
    %p28 = por %p26, %p27
    %p29 = scmp.ne.s32.totalorder %s21, %s24
    %p30 = scmp.eq.s32.totalorder %s11, 0
    %p31 = por %p29, %p30
    %p32 = scmp.ne.s32.totalorder %s21, %s24
    %p33 = scmp.eq.s32.totalorder %s16, 3
    %p34 = por %p32, %p33
    %p35 = scmp.ne.s32.totalorder %s24, %s25
    %p36 = scmp.eq.s32.totalorder %s16, 0
    %p37 = por %p35, %p36
    %p38 = scmp.ne.s32.totalorder %s24, %s25
    %p39 = scmp.eq.s32.totalorder %s17, 3
    %p40 = por %p38, %p39
    %p42 = scmp.ne.s32.totalorder %s25, %s41
    %p43 = scmp.eq.s32.totalorder %s17, 0
    %p44 = por %p42, %p43
    %s46 = sadd.s32 %s45, 1
    %p49 = scmp.eq.s32.totalorder %s11, 3
    %p50 = scmp.ne.s32.totalorder %s45, %s47
    %p51 = scmp.eq.s32.totalorder %s11, 0
    %p52 = por %p50, %p51
    %p53 = scmp.ne.s32.totalorder %s45, %s47
    %p54 = scmp.eq.s32.totalorder %s16, 3
    %p55 = por %p53, %p54
    %p56 = scmp.ne.s32.totalorder %s47, %s48
    %p57 = scmp.eq.s32.totalorder %s16, 0
    %p58 = por %p56, %p57
    %p59 = scmp.ne.s32.totalorder %s47, %s48
    %p60 = scmp.eq.s32.totalorder %s17, 3
    %p61 = por %p59, %p60
    %p63 = scmp.ne.s32.totalorder %s48, %s62
    %p64 = scmp.eq.s32.totalorder %s17, 0
    %p65 = por %p63, %p64
    %s67 = sadd.s32 %s66, 1
    %p70 = scmp.eq.s32.totalorder %s11, 3
    %p71 = scmp.ne.s32.totalorder %s66, %s68
    %p72 = scmp.eq.s32.totalorder %s11, 0
    %p73 = por %p71, %p72
    %p74 = scmp.ne.s32.totalorder %s66, %s68
    %p75 = scmp.eq.s32.totalorder %s16, 3
    %p76 = por %p74, %p75
    %p77 = scmp.ne.s32.totalorder %s68, %s69
    %p78 = scmp.eq.s32.totalorder %s16, 0
    %p79 = por %p77, %p78
    %p80 = scmp.ne.s32.totalorder %s68, %s69
    %p81 = scmp.eq.s32.totalorder %s17, 3
    %p82 = por %p80, %p81
    %p84 = scmp.ne.s32.totalorder %s69, %s83
    %p85 = scmp.eq.s32.totalorder %s17, 0
    %p86 = por %p84, %p85
    %s87 = ssub.s32 %s11, %s18
    %p88 = scmp.eq.s32.totalorder %s87, 0
    %s90 = sadd.s32 %s89, 1
    %s91 = scalar_select %p88, %s89, %s90
    %p94 = pneg %p88
    %p95 = scmp.eq.s32.totalorder %s11, 3
    %p96 = por %p94, %p95
    %p97 = scmp.ne.s32.totalorder %s89, %s92
    %p98 = scmp.eq.s32.totalorder %s11, 0
    %p99 = por %p97, %p98
    %p100 = scmp.ne.s32.totalorder %s89, %s92
    %p101 = scmp.eq.s32.totalorder %s16, 3
    %p102 = por %p100, %p101
    %p103 = scmp.ne.s32.totalorder %s92, %s93
    %p104 = scmp.eq.s32.totalorder %s16, 0
    %p105 = por %p103, %p104
    %p106 = scmp.ne.s32.totalorder %s92, %s93
    %p107 = scmp.eq.s32.totalorder %s17, 3
    %p108 = por %p106, %p107
    %p110 = scmp.ne.s32.totalorder %s93, %s109
    %p111 = scmp.eq.s32.totalorder %s17, 0
    %p112 = por %p110, %p111
    %s113 = ssub.s32 %s11, %s18
    %p114 = scmp.eq.s32.totalorder %s113, 0
    %s116 = sadd.s32 %s115, 1
    %s117 = scalar_select %p114, %s115, %s116
    %p120 = pneg %p114
    %p121 = scmp.eq.s32.totalorder %s11, 3
    %p122 = por %p120, %p121
    %p123 = scmp.ne.s32.totalorder %s115, %s118
    %p124 = scmp.eq.s32.totalorder %s11, 0
    %p125 = por %p123, %p124
    %p126 = scmp.ne.s32.totalorder %s115, %s118
    %p127 = scmp.eq.s32.totalorder %s16, 3
    %p128 = por %p126, %p127
    %p129 = scmp.ne.s32.totalorder %s118, %s119
    %p130 = scmp.eq.s32.totalorder %s16, 0
    %p131 = por %p129, %p130
    %p132 = scmp.ne.s32.totalorder %s118, %s119
    %p133 = scmp.eq.s32.totalorder %s17, 3
    %p134 = por %p132, %p133
    %p136 = scmp.ne.s32.totalorder %s119, %s135
    %p137 = scmp.eq.s32.totalorder %s17, 0
    %p138 = por %p136, %p137
    %p139 = scmp.le.s32.totalorder 1, %s11
    %p140 = scmp.lt.s32.totalorder %s11, 5
    %p141 = pnand %p139, %p140
    %p142 = pneg %p141
    // Predicated region
    $region9: #{conv_encoder_forward.7} parent=5 // pred_check
      _
    $region10: #{conv_encoder_forward.7} parent=5 // pred_check_branch
      %144 = sbr.rel (%p141) target = $region12
    $region11: #{conv_encoder_forward.7} parent=5 // pred_region
      %s145 = ssub.s32 %s11, 1
      // Predicated region
      $region13: #{conv_encoder_forward.7} parent=11 // pred_check
        %p146 = pneg %p58
      $region14: #{conv_encoder_forward.7} parent=11 // pred_check_branch
        %148 = sbr.rel (%p146) target = $region16
      $region15: #{conv_encoder_forward.7} parent=11 // pred_region
        _
      $region16: #{conv_encoder_forward.7} parent=11 // pred_fallthru
        _
      // Predicated region
      $region17: #{conv_encoder_forward.7} parent=11 // pred_check
        %p149 = pneg %p79
      $region18: #{conv_encoder_forward.7} parent=11 // pred_check_branch
        %151 = sbr.rel (%p149) target = $region20
      $region19: #{conv_encoder_forward.7} parent=11 // pred_region
        _
      $region20: #{conv_encoder_forward.7} parent=11 // pred_fallthru
        _
    $region12: #{conv_encoder_forward.7} parent=5 // pred_fallthru
      _
    %p152 = scmp.lt.s32.totalorder %s11, 4
    // Predicated region
    $region21: #{conv_encoder_forward.7} parent=5 // pred_check
      %p153 = pneg %p152
    $region22: #{conv_encoder_forward.7} parent=5 // pred_check_branch
      %155 = sbr.rel (%p153) target = $region24
    $region23: #{conv_encoder_forward.7} parent=5 // pred_region
      // Predicated region
      $region25: #{conv_encoder_forward.7} parent=23 // pred_check
        %p156 = pneg %p31
      $region26: #{conv_encoder_forward.7} parent=23 // pred_check_branch
        %158 = sbr.rel (%p156) target = $region28
      $region27: #{conv_encoder_forward.7} parent=23 // pred_region
        %s159 = smul.u32 64, %s11
        %p160 = scmp.lt.s32.totalorder %s159, 255
        %s161 = scalar_select %p160, %s159, 255
        %s162 = smul.addr %s161, 4
        %s163 = scalar_lea.vmem %s0, %s162
        %s164 = smul.u32 64, %s11
      $region28: #{conv_encoder_forward.7} parent=23 // pred_fallthru
        _
    $region24: #{conv_encoder_forward.7} parent=5 // pred_fallthru
      _
    %p165 = scmp.le.s32.totalorder 1, %s11
    %p166 = scmp.lt.s32.totalorder %s11, 5
    %p167 = pnand %p165, %p166
    %p168 = pneg %p167
    // Predicated region
    $region29: #{conv_encoder_forward.7} parent=5 // pred_check
      _
    $region30: #{conv_encoder_forward.7} parent=5 // pred_check_branch
      %170 = sbr.rel (%p167) target = $region32
    $region31: #{conv_encoder_forward.7} parent=5 // pred_region
      %s171 = ssub.s32 %s11, 1
      %s172 = smul.u32 64, %s16
      %p173 = scmp.lt.s32.totalorder %s172, 255
      %s174 = scalar_select %p173, %s172, 255
      %s175 = smul.addr %s174, 4
      %s176 = scalar_lea.vmem %s0, %s175
      %p177 = pneg %p37
      %p178 = pneg %p34
      %p179 = pneg %p58
      %p180 = pneg %p55
      %p181 = pneg %p79
      %p182 = pneg %p76
      %p183 = pneg %p105
      %p184 = pneg %p102
      %s185 = smul.u32 64, %s16
      %p186 = scmp.lt.s32.totalorder %s185, 255
      %s187 = scalar_select %p186, %s185, 255
      %s188 = smul.addr %s187, 4
      %s189 = scalar_lea.vmem %s3, %s188
      %p190 = pneg %p131
      %p191 = pneg %p128
      %p192 = scmp.lt.s32.totalorder %s16, 3
      %s193 = scalar_select %p192, %s16, 3
      %s194 = smul.addr %s193, 8
      %s195 = scalar_lea.vmem %s4, %s194
      %s196 = smul.u32 64, %s16
      %p197 = scmp.lt.s32.totalorder %s196, 255
      %s198 = scalar_select %p197, %s196, 255
      %s199 = smul.addr %s198, 4
      %s200 = scalar_lea.vmem %s0, %s199
      %s201 = smul.u32 64, %s16
      %s202 = smul.u32 64, %s16
      %p203 = scmp.lt.s32.totalorder %s202, 255
      %s204 = scalar_select %p203, %s202, 255
      %s205 = smul.addr %s204, 4
      %s206 = scalar_lea.vmem %s3, %s205
      %s207 = smul.u32 64, %s16
      %p208 = scmp.lt.s32.totalorder %s16, 3
      %s209 = scalar_select %p208, %s16, 3
      %s210 = smul.addr %s209, 8
      %s211 = scalar_lea.vmem %s4, %s210
      %v213 = vld [vmem:[%s200] sm:$0xf]
      %v214 = vld [vmem:[%s200 + $0x4] sm:$0xf]
      %v215 = vld [vmem:[%s200 + $0x8] sm:$0xf]
      %v216 = vld [vmem:[%s200 + $0xc] sm:$0xf]
      %v217 = vld [vmem:[%s200 + $0x10] sm:$0xf]
      %v218 = vld [vmem:[%s200 + $0x14] sm:$0xf]
      %v219 = vld [vmem:[%s200 + $0x18] sm:$0xf]
      %v220 = vld [vmem:[%s200 + $0x1c] sm:$0xf]
      %v221 = vld [vmem:[%s200 + $0x20] sm:$0xf]
      %v222 = vld [vmem:[%s200 + $0x24] sm:$0xf]
      %v223 = vld [vmem:[%s200 + $0x28] sm:$0xf]
      %v224 = vld [vmem:[%s200 + $0x2c] sm:$0xf]
      %v225 = vld [vmem:[%s200 + $0x30] sm:$0xf]
      %v226 = vld [vmem:[%s200 + $0x34] sm:$0xf]
      %v227 = vld [vmem:[%s200 + $0x38] sm:$0xf]
      %v228 = vld [vmem:[%s200 + $0x3c] sm:$0xf]
      %v229 = vld [vmem:[%s200 + $0x40] sm:$0xf]
      %v230 = vld [vmem:[%s200 + $0x44] sm:$0xf]
      %v231 = vld [vmem:[%s200 + $0x48] sm:$0xf]
      %v232 = vld [vmem:[%s200 + $0x4c] sm:$0xf]
      %v233 = vld [vmem:[%s200 + $0x50] sm:$0xf]
      %v234 = vld [vmem:[%s200 + $0x54] sm:$0xf]
      %v235 = vld [vmem:[%s200 + $0x58] sm:$0xf]
      %v236 = vld [vmem:[%s200 + $0x5c] sm:$0xf]
      %v237 = vld [vmem:[%s200 + $0x60] sm:$0xf]
      %v238 = vld [vmem:[%s200 + $0x64] sm:$0xf]
      %v239 = vld [vmem:[%s200 + $0x68] sm:$0xf]
      %v240 = vld [vmem:[%s200 + $0x6c] sm:$0xf]
      %v241 = vld [vmem:[%s200 + $0x70] sm:$0xf]
      %v242 = vld [vmem:[%s200 + $0x74] sm:$0xf]
      %v243 = vld [vmem:[%s200 + $0x78] sm:$0xf]
      %v244 = vld [vmem:[%s200 + $0x7c] sm:$0xf]
      %v245 = vld [vmem:[%s200 + $0x80] sm:$0xf]
      %v246 = vld [vmem:[%s200 + $0x84] sm:$0xf]
      %v247 = vld [vmem:[%s200 + $0x88] sm:$0xf]
      %v248 = vld [vmem:[%s200 + $0x8c] sm:$0xf]
      %v249 = vld [vmem:[%s200 + $0x90] sm:$0xf]
      %v250 = vld [vmem:[%s200 + $0x94] sm:$0xf]
      %v251 = vld [vmem:[%s200 + $0x98] sm:$0xf]
      %v252 = vld [vmem:[%s200 + $0x9c] sm:$0xf]
      %v253 = vld [vmem:[%s200 + $0xa0] sm:$0xf]
      %v254 = vld [vmem:[%s200 + $0xa4] sm:$0xf]
      %v255 = vld [vmem:[%s200 + $0xa8] sm:$0xf]
      %v256 = vld [vmem:[%s200 + $0xac] sm:$0xf]
      %v257 = vld [vmem:[%s200 + $0xb0] sm:$0xf]
      %v258 = vld [vmem:[%s200 + $0xb4] sm:$0xf]
      %v259 = vld [vmem:[%s200 + $0xb8] sm:$0xf]
      %v260 = vld [vmem:[%s200 + $0xbc] sm:$0xf]
      %v261 = vld [vmem:[%s200 + $0xc0] sm:$0xf]
      %v262 = vld [vmem:[%s200 + $0xc4] sm:$0xf]
      %v263 = vld [vmem:[%s200 + $0xc8] sm:$0xf]
      %v264 = vld [vmem:[%s200 + $0xcc] sm:$0xf]
      %v265 = vld [vmem:[%s200 + $0xd0] sm:$0xf]
      %v266 = vld [vmem:[%s200 + $0xd4] sm:$0xf]
      %v267 = vld [vmem:[%s200 + $0xd8] sm:$0xf]
      %v268 = vld [vmem:[%s200 + $0xdc] sm:$0xf]
      %v269 = vld [vmem:[%s200 + $0xe0] sm:$0xf]
      %v270 = vld [vmem:[%s200 + $0xe4] sm:$0xf]
      %v271 = vld [vmem:[%s200 + $0xe8] sm:$0xf]
      %v272 = vld [vmem:[%s200 + $0xec] sm:$0xf]
      %v273 = vld [vmem:[%s200 + $0xf0] sm:$0xf]
      %v274 = vld [vmem:[%s200 + $0xf4] sm:$0xf]
      %v275 = vld [vmem:[%s200 + $0xf8] sm:$0xf]
      %v276 = vld [vmem:[%s200 + $0xfc] sm:$0xf]
      %v277 = vld [vmem:[%s1] sm:$0xf]
      %v278 = vld [vmem:[%s1 + $0x4] sm:$0xf]
      %v279 = vld [vmem:[%s1 + $0x8] sm:$0xf]
      %v280 = vld [vmem:[%s1 + $0xc] sm:$0xf]
      %v281 = vld [vmem:[%s1 + $0x10] sm:$0xf]
      %v282 = vld [vmem:[%s1 + $0x14] sm:$0xf]
      %v283 = vld [vmem:[%s1 + $0x18] sm:$0xf]
      %v284 = vld [vmem:[%s1 + $0x1c] sm:$0xf]
      %v285 = vld [vmem:[%s1 + $0x20] sm:$0xf]
      %v286 = vld [vmem:[%s1 + $0x24] sm:$0xf]
      %v287 = vld [vmem:[%s1 + $0x28] sm:$0xf]
      %v288 = vld [vmem:[%s1 + $0x2c] sm:$0xf]
      %v289 = vld [vmem:[%s1 + $0x30] sm:$0xf]
      %v290 = vld [vmem:[%s1 + $0x34] sm:$0xf]
      %v291 = vld [vmem:[%s1 + $0x38] sm:$0xf]
      %v292 = vld [vmem:[%s1 + $0x3c] sm:$0xf]
      %v293 = vld [vmem:[%s2] sm:$0x1]
      %v295 = vlaneseq
      %v296 = vshrl.u32 %v295, 7
      %v297 = vsub.s32 0, %v296
      %v298 = vrot.slane %v293, %v297
      %v364 = vunpack.c.l.b16 %v213
      %v365 = vunpack.c.l.b16 %v214
      %v366 = vunpack.c.l.b16 %v215
      %v367 = vunpack.c.l.b16 %v216
      %v368 = vunpack.c.l.b16 %v217
      %v369 = vunpack.c.l.b16 %v218
      %v370 = vunpack.c.l.b16 %v219
      %v371 = vunpack.c.l.b16 %v220
      %v372 = vunpack.c.l.b16 %v221
      %v373 = vunpack.c.l.b16 %v222
      %v374 = vunpack.c.l.b16 %v223
      %v375 = vunpack.c.l.b16 %v224
      %v376 = vunpack.c.l.b16 %v225
      %v377 = vunpack.c.l.b16 %v226
      %v378 = vunpack.c.l.b16 %v227
      %v379 = vunpack.c.l.b16 %v228
      %v380 = vunpack.c.l.b16 %v229
      %v381 = vunpack.c.l.b16 %v230
      %v382 = vunpack.c.l.b16 %v231
      %v383 = vunpack.c.l.b16 %v232
      %v384 = vunpack.c.l.b16 %v233
      %v385 = vunpack.c.l.b16 %v234
      %v386 = vunpack.c.l.b16 %v235
      %v387 = vunpack.c.l.b16 %v236
      %v388 = vunpack.c.l.b16 %v237
      %v389 = vunpack.c.l.b16 %v238
      %v390 = vunpack.c.l.b16 %v239
      %v391 = vunpack.c.l.b16 %v240
      %v392 = vunpack.c.l.b16 %v241
      %v393 = vunpack.c.l.b16 %v242
      %v394 = vunpack.c.l.b16 %v243
      %v395 = vunpack.c.l.b16 %v244
      %v396 = vunpack.c.l.b16 %v245
      %v397 = vunpack.c.l.b16 %v246
      %v398 = vunpack.c.l.b16 %v247
      %v399 = vunpack.c.l.b16 %v248
      %v400 = vunpack.c.l.b16 %v249
      %v401 = vunpack.c.l.b16 %v250
      %v402 = vunpack.c.l.b16 %v251
      %v403 = vunpack.c.l.b16 %v252
      %v404 = vunpack.c.l.b16 %v253
      %v405 = vunpack.c.l.b16 %v254
      %v406 = vunpack.c.l.b16 %v255
      %v407 = vunpack.c.l.b16 %v256
      %v408 = vunpack.c.l.b16 %v257
      %v409 = vunpack.c.l.b16 %v258
      %v410 = vunpack.c.l.b16 %v259
      %v411 = vunpack.c.l.b16 %v260
      %v412 = vunpack.c.l.b16 %v261
      %v413 = vunpack.c.l.b16 %v262
      %v414 = vunpack.c.l.b16 %v263
      %v415 = vunpack.c.l.b16 %v264
      %v416 = vunpack.c.l.b16 %v265
      %v417 = vunpack.c.l.b16 %v266
      %v418 = vunpack.c.l.b16 %v267
      %v419 = vunpack.c.l.b16 %v268
      %v420 = vunpack.c.l.b16 %v269
      %v421 = vunpack.c.l.b16 %v270
      %v422 = vunpack.c.l.b16 %v271
      %v423 = vunpack.c.l.b16 %v272
      %v424 = vunpack.c.l.b16 %v273
      %v425 = vunpack.c.l.b16 %v274
      %v426 = vunpack.c.l.b16 %v275
      %v427 = vunpack.c.l.b16 %v276
      %v428 = vpack.c.b16 %v365, %v364
      %v429 = vpack.c.b16 %v367, %v366
      %v430 = vpack.c.b16 %v369, %v368
      %v431 = vpack.c.b16 %v371, %v370
      %v432 = vpack.c.b16 %v373, %v372
      %v433 = vpack.c.b16 %v375, %v374
      %v434 = vpack.c.b16 %v377, %v376
      %v435 = vpack.c.b16 %v379, %v378
      %v436 = vpack.c.b16 %v381, %v380
      %v437 = vpack.c.b16 %v383, %v382
      %v438 = vpack.c.b16 %v385, %v384
      %v439 = vpack.c.b16 %v387, %v386
      %v440 = vpack.c.b16 %v389, %v388
      %v441 = vpack.c.b16 %v391, %v390
      %v442 = vpack.c.b16 %v393, %v392
      %v443 = vpack.c.b16 %v395, %v394
      %v444 = vpack.c.b16 %v397, %v396
      %v445 = vpack.c.b16 %v399, %v398
      %v446 = vpack.c.b16 %v401, %v400
      %v447 = vpack.c.b16 %v403, %v402
      %v448 = vpack.c.b16 %v405, %v404
      %v449 = vpack.c.b16 %v407, %v406
      %v450 = vpack.c.b16 %v409, %v408
      %v451 = vpack.c.b16 %v411, %v410
      %v452 = vpack.c.b16 %v413, %v412
      %v453 = vpack.c.b16 %v415, %v414
      %v454 = vpack.c.b16 %v417, %v416
      %v455 = vpack.c.b16 %v419, %v418
      %v456 = vpack.c.b16 %v421, %v420
      %v457 = vpack.c.b16 %v423, %v422
      %v458 = vpack.c.b16 %v425, %v424
      %v459 = vpack.c.b16 %v427, %v426
      %v508 = vunpack.c.l.b16 %v277
      %v509 = vunpack.c.l.b16 %v278
      %v510 = vunpack.c.l.b16 %v279
      %v511 = vunpack.c.l.b16 %v280
      %v512 = vunpack.c.l.b16 %v281
      %v513 = vunpack.c.l.b16 %v282
      %v514 = vunpack.c.l.b16 %v283
      %v515 = vunpack.c.l.b16 %v284
      %v516 = vunpack.c.l.b16 %v285
      %v517 = vunpack.c.l.b16 %v286
      %v518 = vunpack.c.l.b16 %v287
      %v519 = vunpack.c.l.b16 %v288
      %v520 = vunpack.c.l.b16 %v289
      %v521 = vunpack.c.l.b16 %v290
      %v522 = vunpack.c.l.b16 %v291
      %v523 = vunpack.c.l.b16 %v292
      %v524 = vpack.c.b16 %v509, %v508
      %v525 = vpack.c.b16 %v511, %v510
      %v526 = vpack.c.b16 %v513, %v512
      %v527 = vpack.c.b16 %v515, %v514
      %v528 = vpack.c.b16 %v517, %v516
      %v529 = vpack.c.b16 %v519, %v518
      %v530 = vpack.c.b16 %v521, %v520
      %v531 = vpack.c.b16 %v523, %v522
      %540 = vmatprep.subr.bf16.mxu0 0
      %541 = vmatpush1.bf16.msra.mxu0 %v524
      %542 = vmatprep.subr.bf16.mxu0 0
      %543 = vmatpush1.bf16.msra.mxu0 %v525
      %544 = vmatprep.subr.bf16.mxu0 0
      %545 = vmatpush1.bf16.msra.mxu0 %v526
      %546 = vmatprep.subr.bf16.mxu0 0
      %547 = vmatpush1.bf16.msra.mxu0 %v527
      %548 = vmatprep.subr.bf16.mxu0 0
      %549 = vmatpush1.bf16.msra.mxu0 %v528
      %550 = vmatprep.subr.bf16.mxu0 0
      %551 = vmatpush1.bf16.msra.mxu0 %v529
      %552 = vmatprep.subr.bf16.mxu0 0
      %553 = vmatpush1.bf16.msra.mxu0 %v530
      %554 = vmatprep.subr.bf16.mxu0 0
      %555 = vmatpush1.bf16.msra.mxu0 %v531
      %556 = vmatprep.subr.bf16.mxu0 0
      %557 = vmatpush1.bf16.msra.mxu0 0
      %558 = vmatprep.subr.bf16.mxu0 0
      %559 = vmatpush1.bf16.msra.mxu0 0
      %560 = vmatprep.subr.bf16.mxu0 0
      %561 = vmatpush1.bf16.msra.mxu0 0
      %562 = vmatprep.subr.bf16.mxu0 0
      %563 = vmatpush1.bf16.msra.mxu0 0
      %564 = vmatprep.subr.bf16.mxu0 0
      %565 = vmatpush1.bf16.msra.mxu0 0
      %566 = vmatprep.subr.bf16.mxu0 0
      %567 = vmatpush1.bf16.msra.mxu0 0
      %568 = vmatprep.subr.bf16.mxu0 0
      %569 = vmatpush1.bf16.msra.mxu0 0
      %570 = vmatprep.subr.bf16.mxu0 0
      %571 = vmatpush1.bf16.msra.mxu0 0
      %572 = vmatprep.mubr.bf16.mxu0 0
      %573 = vmatmul.mubr.bf16.gmra.mrb[0].mxu0 %v428
      %v574 = vpop.f32.mrb[0].mxu0
      %v575 = vadd.f32 %v298, %v574
      %v576 = vpop.f32.mrb[0].mxu0
      %v577 = vpop.f32.mrb[0].mxu0
      %v578 = vadd.f32 %v298, %v577
      %v579 = vpop.f32.mrb[0].mxu0
      %580 = vmatprep.mubr.bf16.mxu0 0
      %581 = vmatmul.mubr.bf16.gmra.mrb[0].mxu0 %v429
      %v582 = vpop.f32.mrb[0].mxu0
      %v583 = vadd.f32 %v298, %v582
      %v584 = vpop.f32.mrb[0].mxu0
      %v585 = vpop.f32.mrb[0].mxu0
      %v586 = vadd.f32 %v298, %v585
      %v587 = vpop.f32.mrb[0].mxu0
      %588 = vmatprep.mubr.bf16.mxu0 0
      %589 = vmatmul.mubr.bf16.gmra.mrb[0].mxu0 %v430
      %v590 = vpop.f32.mrb[0].mxu0
      %v591 = vadd.f32 %v298, %v590
      %v592 = vpop.f32.mrb[0].mxu0
      %v593 = vpop.f32.mrb[0].mxu0
      %v594 = vadd.f32 %v298, %v593
      %v595 = vpop.f32.mrb[0].mxu0
      %596 = vmatprep.mubr.bf16.mxu0 0
      %597 = vmatmul.mubr.bf16.gmra.mrb[0].mxu0 %v431
      %v598 = vpop.f32.mrb[0].mxu0
      %v599 = vadd.f32 %v298, %v598
      %v600 = vpop.f32.mrb[0].mxu0
      %v601 = vpop.f32.mrb[0].mxu0
      %v602 = vadd.f32 %v298, %v601
      %v603 = vpop.f32.mrb[0].mxu0
      %604 = vmatprep.mubr.bf16.mxu0 0
      %605 = vmatmul.mubr.bf16.gmra.mrb[0].mxu0 %v432
      %v606 = vpop.f32.mrb[0].mxu0
      %v607 = vadd.f32 %v298, %v606
      %v608 = vpop.f32.mrb[0].mxu0
      %v609 = vpop.f32.mrb[0].mxu0
      %v610 = vadd.f32 %v298, %v609
      %v611 = vpop.f32.mrb[0].mxu0
      %612 = vmatprep.mubr.bf16.mxu0 0
      %613 = vmatmul.mubr.bf16.gmra.mrb[0].mxu0 %v433
      %v614 = vpop.f32.mrb[0].mxu0
      %v615 = vadd.f32 %v298, %v614
      %v616 = vpop.f32.mrb[0].mxu0
      %v617 = vpop.f32.mrb[0].mxu0
      %v618 = vadd.f32 %v298, %v617
      %v619 = vpop.f32.mrb[0].mxu0
      %620 = vmatprep.mubr.bf16.mxu0 0
      %621 = vmatmul.mubr.bf16.gmra.mrb[0].mxu0 %v434
      %v622 = vpop.f32.mrb[0].mxu0
      %v623 = vadd.f32 %v298, %v622
      %v624 = vpop.f32.mrb[0].mxu0
      %v625 = vpop.f32.mrb[0].mxu0
      %v626 = vadd.f32 %v298, %v625
      %v627 = vpop.f32.mrb[0].mxu0
      %628 = vmatprep.mubr.bf16.mxu0 0
      %629 = vmatmul.mubr.bf16.gmra.mrb[0].mxu0 %v435
      %v630 = vpop.f32.mrb[0].mxu0
      %v631 = vadd.f32 %v298, %v630
      %v632 = vpop.f32.mrb[0].mxu0
      %v633 = vpop.f32.mrb[0].mxu0
      %v634 = vadd.f32 %v298, %v633
      %v635 = vpop.f32.mrb[0].mxu0
      %636 = vmatprep.mubr.bf16.mxu0 0
      %637 = vmatmul.mubr.bf16.gmra.mrb[0].mxu0 %v436
      %v638 = vpop.f32.mrb[0].mxu0
      %v639 = vadd.f32 %v298, %v638
      %v640 = vpop.f32.mrb[0].mxu0
      %v641 = vpop.f32.mrb[0].mxu0
      %v642 = vadd.f32 %v298, %v641
      %v643 = vpop.f32.mrb[0].mxu0
      %644 = vmatprep.mubr.bf16.mxu0 0
      %645 = vmatmul.mubr.bf16.gmra.mrb[0].mxu0 %v437
      %v646 = vpop.f32.mrb[0].mxu0
      %v647 = vadd.f32 %v298, %v646
      %v648 = vpop.f32.mrb[0].mxu0
      %v649 = vpop.f32.mrb[0].mxu0
      %v650 = vadd.f32 %v298, %v649
      %v651 = vpop.f32.mrb[0].mxu0
      %652 = vmatprep.mubr.bf16.mxu0 0
      %653 = vmatmul.mubr.bf16.gmra.mrb[0].mxu0 %v438
      %v654 = vpop.f32.mrb[0].mxu0
      %v655 = vadd.f32 %v298, %v654
      %v656 = vpop.f32.mrb[0].mxu0
      %v657 = vpop.f32.mrb[0].mxu0
      %v658 = vadd.f32 %v298, %v657
      %v659 = vpop.f32.mrb[0].mxu0
      %660 = vmatprep.mubr.bf16.mxu0 0
      %661 = vmatmul.mubr.bf16.gmra.mrb[0].mxu0 %v439
      %v662 = vpop.f32.mrb[0].mxu0
      %v663 = vadd.f32 %v298, %v662
      %v664 = vpop.f32.mrb[0].mxu0
      %v665 = vpop.f32.mrb[0].mxu0
      %v666 = vadd.f32 %v298, %v665
      %v667 = vpop.f32.mrb[0].mxu0
      %668 = vmatprep.mubr.bf16.mxu0 0
      %669 = vmatmul.mubr.bf16.gmra.mrb[0].mxu0 %v440
      %v670 = vpop.f32.mrb[0].mxu0
      %v671 = vadd.f32 %v298, %v670
      %v672 = vpop.f32.mrb[0].mxu0
      %v673 = vpop.f32.mrb[0].mxu0
      %v674 = vadd.f32 %v298, %v673
      %v675 = vpop.f32.mrb[0].mxu0
      %676 = vmatprep.mubr.bf16.mxu0 0
      %677 = vmatmul.mubr.bf16.gmra.mrb[0].mxu0 %v441
      %v678 = vpop.f32.mrb[0].mxu0
      %v679 = vadd.f32 %v298, %v678
      %v680 = vpop.f32.mrb[0].mxu0
      %v681 = vpop.f32.mrb[0].mxu0
      %v682 = vadd.f32 %v298, %v681
      %v683 = vpop.f32.mrb[0].mxu0
      %684 = vmatprep.mubr.bf16.mxu0 0
      %685 = vmatmul.mubr.bf16.gmra.mrb[0].mxu0 %v442
      %v686 = vpop.f32.mrb[0].mxu0
      %v687 = vadd.f32 %v298, %v686
      %v688 = vpop.f32.mrb[0].mxu0
      %v689 = vpop.f32.mrb[0].mxu0
      %v690 = vadd.f32 %v298, %v689
      %v691 = vpop.f32.mrb[0].mxu0
      %692 = vmatprep.mubr.bf16.mxu0 0
      %693 = vmatmul.mubr.bf16.gmra.mrb[0].mxu0 %v443
      %v694 = vpop.f32.mrb[0].mxu0
      %v695 = vadd.f32 %v298, %v694
      %v696 = vpop.f32.mrb[0].mxu0
      %v697 = vpop.f32.mrb[0].mxu0
      %v698 = vadd.f32 %v298, %v697
      %v699 = vpop.f32.mrb[0].mxu0
      %700 = vmatprep.mubr.bf16.mxu0 0
      %701 = vmatmul.mubr.bf16.gmra.mrb[0].mxu0 %v444
      %v702 = vpop.f32.mrb[0].mxu0
      %v703 = vadd.f32 %v298, %v702
      %v704 = vpop.f32.mrb[0].mxu0
      %v705 = vpop.f32.mrb[0].mxu0
      %v706 = vadd.f32 %v298, %v705
      %v707 = vpop.f32.mrb[0].mxu0
      %708 = vmatprep.mubr.bf16.mxu0 0
      %709 = vmatmul.mubr.bf16.gmra.mrb[0].mxu0 %v445
      %v710 = vpop.f32.mrb[0].mxu0
      %v711 = vadd.f32 %v298, %v710
      %v712 = vpop.f32.mrb[0].mxu0
      %v713 = vpop.f32.mrb[0].mxu0
      %v714 = vadd.f32 %v298, %v713
      %v715 = vpop.f32.mrb[0].mxu0
      %716 = vmatprep.mubr.bf16.mxu0 0
      %717 = vmatmul.mubr.bf16.gmra.mrb[0].mxu0 %v446
      %v718 = vpop.f32.mrb[0].mxu0
      %v719 = vadd.f32 %v298, %v718
      %v720 = vpop.f32.mrb[0].mxu0
      %v721 = vpop.f32.mrb[0].mxu0
      %v722 = vadd.f32 %v298, %v721
      %v723 = vpop.f32.mrb[0].mxu0
      %724 = vmatprep.mubr.bf16.mxu0 0
      %725 = vmatmul.mubr.bf16.gmra.mrb[0].mxu0 %v447
      %v726 = vpop.f32.mrb[0].mxu0
      %v727 = vadd.f32 %v298, %v726
      %v728 = vpop.f32.mrb[0].mxu0
      %v729 = vpop.f32.mrb[0].mxu0
      %v730 = vadd.f32 %v298, %v729
      %v731 = vpop.f32.mrb[0].mxu0
      %732 = vmatprep.mubr.bf16.mxu0 0
      %733 = vmatmul.mubr.bf16.gmra.mrb[0].mxu0 %v448
      %v734 = vpop.f32.mrb[0].mxu0
      %v735 = vadd.f32 %v298, %v734
      %v736 = vpop.f32.mrb[0].mxu0
      %v737 = vpop.f32.mrb[0].mxu0
      %v738 = vadd.f32 %v298, %v737
      %v739 = vpop.f32.mrb[0].mxu0
      %740 = vmatprep.mubr.bf16.mxu0 0
      %741 = vmatmul.mubr.bf16.gmra.mrb[0].mxu0 %v449
      %v742 = vpop.f32.mrb[0].mxu0
      %v743 = vadd.f32 %v298, %v742
      %v744 = vpop.f32.mrb[0].mxu0
      %v745 = vpop.f32.mrb[0].mxu0
      %v746 = vadd.f32 %v298, %v745
      %v747 = vpop.f32.mrb[0].mxu0
      %748 = vmatprep.mubr.bf16.mxu0 0
      %749 = vmatmul.mubr.bf16.gmra.mrb[0].mxu0 %v450
      %v750 = vpop.f32.mrb[0].mxu0
      %v751 = vadd.f32 %v298, %v750
      %v752 = vpop.f32.mrb[0].mxu0
      %v753 = vpop.f32.mrb[0].mxu0
      %v754 = vadd.f32 %v298, %v753
      %v755 = vpop.f32.mrb[0].mxu0
      %756 = vmatprep.mubr.bf16.mxu0 0
      %757 = vmatmul.mubr.bf16.gmra.mrb[0].mxu0 %v451
      %v758 = vpop.f32.mrb[0].mxu0
      %v759 = vadd.f32 %v298, %v758
      %v760 = vpop.f32.mrb[0].mxu0
      %v761 = vpop.f32.mrb[0].mxu0
      %v762 = vadd.f32 %v298, %v761
      %v763 = vpop.f32.mrb[0].mxu0
      %764 = vmatprep.mubr.bf16.mxu0 0
      %765 = vmatmul.mubr.bf16.gmra.mrb[0].mxu0 %v452
      %v766 = vpop.f32.mrb[0].mxu0
      %v767 = vadd.f32 %v298, %v766
      %v768 = vpop.f32.mrb[0].mxu0
      %v769 = vpop.f32.mrb[0].mxu0
      %v770 = vadd.f32 %v298, %v769
      %v771 = vpop.f32.mrb[0].mxu0
      %772 = vmatprep.mubr.bf16.mxu0 0
      %773 = vmatmul.mubr.bf16.gmra.mrb[0].mxu0 %v453
      %v774 = vpop.f32.mrb[0].mxu0
      %v775 = vadd.f32 %v298, %v774
      %v776 = vpop.f32.mrb[0].mxu0
      %v777 = vpop.f32.mrb[0].mxu0
      %v778 = vadd.f32 %v298, %v777
      %v779 = vpop.f32.mrb[0].mxu0
      %780 = vmatprep.mubr.bf16.mxu0 0
      %781 = vmatmul.mubr.bf16.gmra.mrb[0].mxu0 %v454
      %v782 = vpop.f32.mrb[0].mxu0
      %v783 = vadd.f32 %v298, %v782
      %v784 = vpop.f32.mrb[0].mxu0
      %v785 = vpop.f32.mrb[0].mxu0
      %v786 = vadd.f32 %v298, %v785
      %v787 = vpop.f32.mrb[0].mxu0
      %788 = vmatprep.mubr.bf16.mxu0 0
      %789 = vmatmul.mubr.bf16.gmra.mrb[0].mxu0 %v455
      %v790 = vpop.f32.mrb[0].mxu0
      %v791 = vadd.f32 %v298, %v790
      %v792 = vpop.f32.mrb[0].mxu0
      %v793 = vpop.f32.mrb[0].mxu0
      %v794 = vadd.f32 %v298, %v793
      %v795 = vpop.f32.mrb[0].mxu0
      %796 = vmatprep.mubr.bf16.mxu0 0
      %797 = vmatmul.mubr.bf16.gmra.mrb[0].mxu0 %v456
      %v798 = vpop.f32.mrb[0].mxu0
      %v799 = vadd.f32 %v298, %v798
      %v800 = vpop.f32.mrb[0].mxu0
      %v801 = vpop.f32.mrb[0].mxu0
      %v802 = vadd.f32 %v298, %v801
      %v803 = vpop.f32.mrb[0].mxu0
      %804 = vmatprep.mubr.bf16.mxu0 0
      %805 = vmatmul.mubr.bf16.gmra.mrb[0].mxu0 %v457
      %v806 = vpop.f32.mrb[0].mxu0
      %v807 = vadd.f32 %v298, %v806
      %v808 = vpop.f32.mrb[0].mxu0
      %v809 = vpop.f32.mrb[0].mxu0
      %v810 = vadd.f32 %v298, %v809
      %v811 = vpop.f32.mrb[0].mxu0
      %812 = vmatprep.mubr.bf16.mxu0 0
      %813 = vmatmul.mubr.bf16.gmra.mrb[0].mxu0 %v458
      %v814 = vpop.f32.mrb[0].mxu0
      %v815 = vadd.f32 %v298, %v814
      %v816 = vpop.f32.mrb[0].mxu0
      %v817 = vpop.f32.mrb[0].mxu0
      %v818 = vadd.f32 %v298, %v817
      %v819 = vpop.f32.mrb[0].mxu0
      %820 = vmatprep.mubr.bf16.mxu0 0
      %821 = vmatmul.mubr.bf16.gmra.mrb[0].mxu0 %v459
      %v822 = vpop.f32.mrb[0].mxu0
      %v823 = vadd.f32 %v298, %v822
      %v824 = vpop.f32.mrb[0].mxu0
      %v825 = vpop.f32.mrb[0].mxu0
      %v826 = vadd.f32 %v298, %v825
      %v827 = vpop.f32.mrb[0].mxu0
      %828 = vdwg.mxu0
      %v829 = vxor.u32 %v575, 2147483648
      %v830 = vxor.u32 %v578, 2147483648
      %v831 = vxor.u32 %v583, 2147483648
      %v832 = vxor.u32 %v586, 2147483648
      %v833 = vxor.u32 %v591, 2147483648
      %v834 = vxor.u32 %v594, 2147483648
      %v835 = vxor.u32 %v599, 2147483648
      %v836 = vxor.u32 %v602, 2147483648
      %v837 = vxor.u32 %v607, 2147483648
      %v838 = vxor.u32 %v610, 2147483648
      %v839 = vxor.u32 %v615, 2147483648
      %v840 = vxor.u32 %v618, 2147483648
      %v841 = vxor.u32 %v623, 2147483648
      %v842 = vxor.u32 %v626, 2147483648
      %v843 = vxor.u32 %v631, 2147483648
      %v844 = vxor.u32 %v634, 2147483648
      %v845 = vxor.u32 %v639, 2147483648
      %v846 = vxor.u32 %v642, 2147483648
      %v847 = vxor.u32 %v647, 2147483648
      %v848 = vxor.u32 %v650, 2147483648
      %v849 = vxor.u32 %v655, 2147483648
      %v850 = vxor.u32 %v658, 2147483648
      %v851 = vxor.u32 %v663, 2147483648
      %v852 = vxor.u32 %v666, 2147483648
      %v853 = vxor.u32 %v671, 2147483648
      %v854 = vxor.u32 %v674, 2147483648
      %v855 = vxor.u32 %v679, 2147483648
      %v856 = vxor.u32 %v682, 2147483648
      %v857 = vxor.u32 %v687, 2147483648
      %v858 = vxor.u32 %v690, 2147483648
      %v859 = vxor.u32 %v695, 2147483648
      %v860 = vxor.u32 %v698, 2147483648
      %v861 = vxor.u32 %v703, 2147483648
      %v862 = vxor.u32 %v706, 2147483648
      %v863 = vxor.u32 %v711, 2147483648
      %v864 = vxor.u32 %v714, 2147483648
      %v865 = vxor.u32 %v719, 2147483648
      %v866 = vxor.u32 %v722, 2147483648
      %v867 = vxor.u32 %v727, 2147483648
      %v868 = vxor.u32 %v730, 2147483648
      %v869 = vxor.u32 %v735, 2147483648
      %v870 = vxor.u32 %v738, 2147483648
      %v871 = vxor.u32 %v743, 2147483648
      %v872 = vxor.u32 %v746, 2147483648
      %v873 = vxor.u32 %v751, 2147483648
      %v874 = vxor.u32 %v754, 2147483648
      %v875 = vxor.u32 %v759, 2147483648
      %v876 = vxor.u32 %v762, 2147483648
      %v877 = vxor.u32 %v767, 2147483648
      %v878 = vxor.u32 %v770, 2147483648
      %v879 = vxor.u32 %v775, 2147483648
      %v880 = vxor.u32 %v778, 2147483648
      %v881 = vxor.u32 %v783, 2147483648
      %v882 = vxor.u32 %v786, 2147483648
      %v883 = vxor.u32 %v791, 2147483648
      %v884 = vxor.u32 %v794, 2147483648
      %v885 = vxor.u32 %v799, 2147483648
      %v886 = vxor.u32 %v802, 2147483648
      %v887 = vxor.u32 %v807, 2147483648
      %v888 = vxor.u32 %v810, 2147483648
      %v889 = vxor.u32 %v815, 2147483648
      %v890 = vxor.u32 %v818, 2147483648
      %v891 = vxor.u32 %v823, 2147483648
      %v892 = vxor.u32 %v826, 2147483648
      %v893 = vmul.f32 %v829, 1.442695
      %v894 = vpow.pop %v893
      %v895 = vmul.f32 %v830, 1.442695
      %v896 = vpow.pop %v895
      %v897 = vmul.f32 %v831, 1.442695
      %v898 = vpow.pop %v897
      %v899 = vmul.f32 %v832, 1.442695
      %v900 = vpow.pop %v899
      %v901 = vmul.f32 %v833, 1.442695
      %v902 = vpow.pop %v901
      %v903 = vmul.f32 %v834, 1.442695
      %v904 = vpow.pop %v903
      %v905 = vmul.f32 %v835, 1.442695
      %v906 = vpow.pop %v905
      %v907 = vmul.f32 %v836, 1.442695
      %v908 = vpow.pop %v907
      %v909 = vmul.f32 %v837, 1.442695
      %v910 = vpow.pop %v909
      %v911 = vmul.f32 %v838, 1.442695
      %v912 = vpow.pop %v911
      %v913 = vmul.f32 %v839, 1.442695
      %v914 = vpow.pop %v913
      %v915 = vmul.f32 %v840, 1.442695
      %v916 = vpow.pop %v915
      %v917 = vmul.f32 %v841, 1.442695
      %v918 = vpow.pop %v917
      %v919 = vmul.f32 %v842, 1.442695
      %v920 = vpow.pop %v919
      %v921 = vmul.f32 %v843, 1.442695
      %v922 = vpow.pop %v921
      %v923 = vmul.f32 %v844, 1.442695
      %v924 = vpow.pop %v923
      %v925 = vmul.f32 %v845, 1.442695
      %v926 = vpow.pop %v925
      %v927 = vmul.f32 %v846, 1.442695
      %v928 = vpow.pop %v927
      %v929 = vmul.f32 %v847, 1.442695
      %v930 = vpow.pop %v929
      %v931 = vmul.f32 %v848, 1.442695
      %v932 = vpow.pop %v931
      %v933 = vmul.f32 %v849, 1.442695
      %v934 = vpow.pop %v933
      %v935 = vmul.f32 %v850, 1.442695
      %v936 = vpow.pop %v935
      %v937 = vmul.f32 %v851, 1.442695
      %v938 = vpow.pop %v937
      %v939 = vmul.f32 %v852, 1.442695
      %v940 = vpow.pop %v939
      %v941 = vmul.f32 %v853, 1.442695
      %v942 = vpow.pop %v941
      %v943 = vmul.f32 %v854, 1.442695
      %v944 = vpow.pop %v943
      %v945 = vmul.f32 %v855, 1.442695
      %v946 = vpow.pop %v945
      %v947 = vmul.f32 %v856, 1.442695
      %v948 = vpow.pop %v947
      %v949 = vmul.f32 %v857, 1.442695
      %v950 = vpow.pop %v949
      %v951 = vmul.f32 %v858, 1.442695
      %v952 = vpow.pop %v951
      %v953 = vmul.f32 %v859, 1.442695
      %v954 = vpow.pop %v953
      %v955 = vmul.f32 %v860, 1.442695
      %v956 = vpow.pop %v955
      %v957 = vmul.f32 %v861, 1.442695
      %v958 = vpow.pop %v957
      %v959 = vmul.f32 %v862, 1.442695
      %v960 = vpow.pop %v959
      %v961 = vmul.f32 %v863, 1.442695
      %v962 = vpow.pop %v961
      %v963 = vmul.f32 %v864, 1.442695
      %v964 = vpow.pop %v963
      %v965 = vmul.f32 %v865, 1.442695
      %v966 = vpow.pop %v965
      %v967 = vmul.f32 %v866, 1.442695
      %v968 = vpow.pop %v967
      %v969 = vmul.f32 %v867, 1.442695
      %v970 = vpow.pop %v969
      %v971 = vmul.f32 %v868, 1.442695
      %v972 = vpow.pop %v971
      %v973 = vmul.f32 %v869, 1.442695
      %v974 = vpow.pop %v973
      %v975 = vmul.f32 %v870, 1.442695
      %v976 = vpow.pop %v975
      %v977 = vmul.f32 %v871, 1.442695
      %v978 = vpow.pop %v977
      %v979 = vmul.f32 %v872, 1.442695
      %v980 = vpow.pop %v979
      %v981 = vmul.f32 %v873, 1.442695
      %v982 = vpow.pop %v981
      %v983 = vmul.f32 %v874, 1.442695
      %v984 = vpow.pop %v983
      %v985 = vmul.f32 %v875, 1.442695
      %v986 = vpow.pop %v985
      %v987 = vmul.f32 %v876, 1.442695
      %v988 = vpow.pop %v987
      %v989 = vmul.f32 %v877, 1.442695
      %v990 = vpow.pop %v989
      %v991 = vmul.f32 %v878, 1.442695
      %v992 = vpow.pop %v991
      %v993 = vmul.f32 %v879, 1.442695
      %v994 = vpow.pop %v993
      %v995 = vmul.f32 %v880, 1.442695
      %v996 = vpow.pop %v995
      %v997 = vmul.f32 %v881, 1.442695
      %v998 = vpow.pop %v997
      %v999 = vmul.f32 %v882, 1.442695
      %v1000 = vpow.pop %v999
      %v1001 = vmul.f32 %v883, 1.442695
      %v1002 = vpow.pop %v1001
      %v1003 = vmul.f32 %v884, 1.442695
      %v1004 = vpow.pop %v1003
      %v1005 = vmul.f32 %v885, 1.442695
      %v1006 = vpow.pop %v1005
      %v1007 = vmul.f32 %v886, 1.442695
      %v1008 = vpow.pop %v1007
      %v1009 = vmul.f32 %v887, 1.442695
      %v1010 = vpow.pop %v1009
      %v1011 = vmul.f32 %v888, 1.442695
      %v1012 = vpow.pop %v1011
      %v1013 = vmul.f32 %v889, 1.442695
      %v1014 = vpow.pop %v1013
      %v1015 = vmul.f32 %v890, 1.442695
      %v1016 = vpow.pop %v1015
      %v1017 = vmul.f32 %v891, 1.442695
      %v1018 = vpow.pop %v1017
      %v1019 = vmul.f32 %v892, 1.442695
      %v1020 = vpow.pop %v1019
      %v1021 = vadd.f32 %v894, 1.0
      %v1022 = vadd.f32 %v896, 1.0
      %v1023 = vadd.f32 %v898, 1.0
      %v1024 = vadd.f32 %v900, 1.0
      %v1025 = vadd.f32 %v902, 1.0
      %v1026 = vadd.f32 %v904, 1.0
      %v1027 = vadd.f32 %v906, 1.0
      %v1028 = vadd.f32 %v908, 1.0
      %v1029 = vadd.f32 %v910, 1.0
      %v1030 = vadd.f32 %v912, 1.0
      %v1031 = vadd.f32 %v914, 1.0
      %v1032 = vadd.f32 %v916, 1.0
      %v1033 = vadd.f32 %v918, 1.0
      %v1034 = vadd.f32 %v920, 1.0
      %v1035 = vadd.f32 %v922, 1.0
      %v1036 = vadd.f32 %v924, 1.0
      %v1037 = vadd.f32 %v926, 1.0
      %v1038 = vadd.f32 %v928, 1.0
      %v1039 = vadd.f32 %v930, 1.0
      %v1040 = vadd.f32 %v932, 1.0
      %v1041 = vadd.f32 %v934, 1.0
      %v1042 = vadd.f32 %v936, 1.0
      %v1043 = vadd.f32 %v938, 1.0
      %v1044 = vadd.f32 %v940, 1.0
      %v1045 = vadd.f32 %v942, 1.0
      %v1046 = vadd.f32 %v944, 1.0
      %v1047 = vadd.f32 %v946, 1.0
      %v1048 = vadd.f32 %v948, 1.0
      %v1049 = vadd.f32 %v950, 1.0
      %v1050 = vadd.f32 %v952, 1.0
      %v1051 = vadd.f32 %v954, 1.0
      %v1052 = vadd.f32 %v956, 1.0
      %v1053 = vadd.f32 %v958, 1.0
      %v1054 = vadd.f32 %v960, 1.0
      %v1055 = vadd.f32 %v962, 1.0
      %v1056 = vadd.f32 %v964, 1.0
      %v1057 = vadd.f32 %v966, 1.0
      %v1058 = vadd.f32 %v968, 1.0
      %v1059 = vadd.f32 %v970, 1.0
      %v1060 = vadd.f32 %v972, 1.0
      %v1061 = vadd.f32 %v974, 1.0
      %v1062 = vadd.f32 %v976, 1.0
      %v1063 = vadd.f32 %v978, 1.0
      %v1064 = vadd.f32 %v980, 1.0
      %v1065 = vadd.f32 %v982, 1.0
      %v1066 = vadd.f32 %v984, 1.0
      %v1067 = vadd.f32 %v986, 1.0
      %v1068 = vadd.f32 %v988, 1.0
      %v1069 = vadd.f32 %v990, 1.0
      %v1070 = vadd.f32 %v992, 1.0
      %v1071 = vadd.f32 %v994, 1.0
      %v1072 = vadd.f32 %v996, 1.0
      %v1073 = vadd.f32 %v998, 1.0
      %v1074 = vadd.f32 %v1000, 1.0
      %v1075 = vadd.f32 %v1002, 1.0
      %v1076 = vadd.f32 %v1004, 1.0
      %v1077 = vadd.f32 %v1006, 1.0
      %v1078 = vadd.f32 %v1008, 1.0
      %v1079 = vadd.f32 %v1010, 1.0
      %v1080 = vadd.f32 %v1012, 1.0
      %v1081 = vadd.f32 %v1014, 1.0
      %v1082 = vadd.f32 %v1016, 1.0
      %v1083 = vadd.f32 %v1018, 1.0
      %v1084 = vadd.f32 %v1020, 1.0
      %v1085 = vrcp.pop %v1021
      %v1086 = vmul.f32 1.0, %v1085
      %v1087 = vrcp.pop %v1022
      %v1088 = vmul.f32 1.0, %v1087
      %v1089 = vrcp.pop %v1023
      %v1090 = vmul.f32 1.0, %v1089
      %v1091 = vrcp.pop %v1024
      %v1092 = vmul.f32 1.0, %v1091
      %v1093 = vrcp.pop %v1025
      %v1094 = vmul.f32 1.0, %v1093
      %v1095 = vrcp.pop %v1026
      %v1096 = vmul.f32 1.0, %v1095
      %v1097 = vrcp.pop %v1027
      %v1098 = vmul.f32 1.0, %v1097
      %v1099 = vrcp.pop %v1028
      %v1100 = vmul.f32 1.0, %v1099
      %v1101 = vrcp.pop %v1029
      %v1102 = vmul.f32 1.0, %v1101
      %v1103 = vrcp.pop %v1030
      %v1104 = vmul.f32 1.0, %v1103
      %v1105 = vrcp.pop %v1031
      %v1106 = vmul.f32 1.0, %v1105
      %v1107 = vrcp.pop %v1032
      %v1108 = vmul.f32 1.0, %v1107
      %v1109 = vrcp.pop %v1033
      %v1110 = vmul.f32 1.0, %v1109
      %v1111 = vrcp.pop %v1034
      %v1112 = vmul.f32 1.0, %v1111
      %v1113 = vrcp.pop %v1035
      %v1114 = vmul.f32 1.0, %v1113
      %v1115 = vrcp.pop %v1036
      %v1116 = vmul.f32 1.0, %v1115
      %v1117 = vrcp.pop %v1037
      %v1118 = vmul.f32 1.0, %v1117
      %v1119 = vrcp.pop %v1038
      %v1120 = vmul.f32 1.0, %v1119
      %v1121 = vrcp.pop %v1039
      %v1122 = vmul.f32 1.0, %v1121
      %v1123 = vrcp.pop %v1040
      %v1124 = vmul.f32 1.0, %v1123
      %v1125 = vrcp.pop %v1041
      %v1126 = vmul.f32 1.0, %v1125
      %v1127 = vrcp.pop %v1042
      %v1128 = vmul.f32 1.0, %v1127
      %v1129 = vrcp.pop %v1043
      %v1130 = vmul.f32 1.0, %v1129
      %v1131 = vrcp.pop %v1044
      %v1132 = vmul.f32 1.0, %v1131
      %v1133 = vrcp.pop %v1045
      %v1134 = vmul.f32 1.0, %v1133
      %v1135 = vrcp.pop %v1046
      %v1136 = vmul.f32 1.0, %v1135
      %v1137 = vrcp.pop %v1047
      %v1138 = vmul.f32 1.0, %v1137
      %v1139 = vrcp.pop %v1048
      %v1140 = vmul.f32 1.0, %v1139
      %v1141 = vrcp.pop %v1049
      %v1142 = vmul.f32 1.0, %v1141
      %v1143 = vrcp.pop %v1050
      %v1144 = vmul.f32 1.0, %v1143
      %v1145 = vrcp.pop %v1051
      %v1146 = vmul.f32 1.0, %v1145
      %v1147 = vrcp.pop %v1052
      %v1148 = vmul.f32 1.0, %v1147
      %v1149 = vrcp.pop %v1053
      %v1150 = vmul.f32 1.0, %v1149
      %v1151 = vrcp.pop %v1054
      %v1152 = vmul.f32 1.0, %v1151
      %v1153 = vrcp.pop %v1055
      %v1154 = vmul.f32 1.0, %v1153
      %v1155 = vrcp.pop %v1056
      %v1156 = vmul.f32 1.0, %v1155
      %v1157 = vrcp.pop %v1057
      %v1158 = vmul.f32 1.0, %v1157
      %v1159 = vrcp.pop %v1058
      %v1160 = vmul.f32 1.0, %v1159
      %v1161 = vrcp.pop %v1059
      %v1162 = vmul.f32 1.0, %v1161
      %v1163 = vrcp.pop %v1060
      %v1164 = vmul.f32 1.0, %v1163
      %v1165 = vrcp.pop %v1061
      %v1166 = vmul.f32 1.0, %v1165
      %v1167 = vrcp.pop %v1062
      %v1168 = vmul.f32 1.0, %v1167
      %v1169 = vrcp.pop %v1063
      %v1170 = vmul.f32 1.0, %v1169
      %v1171 = vrcp.pop %v1064
      %v1172 = vmul.f32 1.0, %v1171
      %v1173 = vrcp.pop %v1065
      %v1174 = vmul.f32 1.0, %v1173
      %v1175 = vrcp.pop %v1066
      %v1176 = vmul.f32 1.0, %v1175
      %v1177 = vrcp.pop %v1067
      %v1178 = vmul.f32 1.0, %v1177
      %v1179 = vrcp.pop %v1068
      %v1180 = vmul.f32 1.0, %v1179
      %v1181 = vrcp.pop %v1069
      %v1182 = vmul.f32 1.0, %v1181
      %v1183 = vrcp.pop %v1070
      %v1184 = vmul.f32 1.0, %v1183
      %v1185 = vrcp.pop %v1071
      %v1186 = vmul.f32 1.0, %v1185
      %v1187 = vrcp.pop %v1072
      %v1188 = vmul.f32 1.0, %v1187
      %v1189 = vrcp.pop %v1073
      %v1190 = vmul.f32 1.0, %v1189
      %v1191 = vrcp.pop %v1074
      %v1192 = vmul.f32 1.0, %v1191
      %v1193 = vrcp.pop %v1075
      %v1194 = vmul.f32 1.0, %v1193
      %v1195 = vrcp.pop %v1076
      %v1196 = vmul.f32 1.0, %v1195
      %v1197 = vrcp.pop %v1077
      %v1198 = vmul.f32 1.0, %v1197
      %v1199 = vrcp.pop %v1078
      %v1200 = vmul.f32 1.0, %v1199
      %v1201 = vrcp.pop %v1079
      %v1202 = vmul.f32 1.0, %v1201
      %v1203 = vrcp.pop %v1080
      %v1204 = vmul.f32 1.0, %v1203
      %v1205 = vrcp.pop %v1081
      %v1206 = vmul.f32 1.0, %v1205
      %v1207 = vrcp.pop %v1082
      %v1208 = vmul.f32 1.0, %v1207
      %v1209 = vrcp.pop %v1083
      %v1210 = vmul.f32 1.0, %v1209
      %v1211 = vrcp.pop %v1084
      %v1212 = vmul.f32 1.0, %v1211
      %v1213 = vmul.f32 %v575, %v1086
      %v1214 = vmul.f32 %v578, %v1088
      %v1215 = vmul.f32 %v583, %v1090
      %v1216 = vmul.f32 %v586, %v1092
      %v1217 = vmul.f32 %v591, %v1094
      %v1218 = vmul.f32 %v594, %v1096
      %v1219 = vmul.f32 %v599, %v1098
      %v1220 = vmul.f32 %v602, %v1100
      %v1221 = vmul.f32 %v607, %v1102
      %v1222 = vmul.f32 %v610, %v1104
      %v1223 = vmul.f32 %v615, %v1106
      %v1224 = vmul.f32 %v618, %v1108
      %v1225 = vmul.f32 %v623, %v1110
      %v1226 = vmul.f32 %v626, %v1112
      %v1227 = vmul.f32 %v631, %v1114
      %v1228 = vmul.f32 %v634, %v1116
      %v1229 = vmul.f32 %v639, %v1118
      %v1230 = vmul.f32 %v642, %v1120
      %v1231 = vmul.f32 %v647, %v1122
      %v1232 = vmul.f32 %v650, %v1124
      %v1233 = vmul.f32 %v655, %v1126
      %v1234 = vmul.f32 %v658, %v1128
      %v1235 = vmul.f32 %v663, %v1130
      %v1236 = vmul.f32 %v666, %v1132
      %v1237 = vmul.f32 %v671, %v1134
      %v1238 = vmul.f32 %v674, %v1136
      %v1239 = vmul.f32 %v679, %v1138
      %v1240 = vmul.f32 %v682, %v1140
      %v1241 = vmul.f32 %v687, %v1142
      %v1242 = vmul.f32 %v690, %v1144
      %v1243 = vmul.f32 %v695, %v1146
      %v1244 = vmul.f32 %v698, %v1148
      %v1245 = vmul.f32 %v703, %v1150
      %v1246 = vmul.f32 %v706, %v1152
      %v1247 = vmul.f32 %v711, %v1154
      %v1248 = vmul.f32 %v714, %v1156
      %v1249 = vmul.f32 %v719, %v1158
      %v1250 = vmul.f32 %v722, %v1160
      %v1251 = vmul.f32 %v727, %v1162
      %v1252 = vmul.f32 %v730, %v1164
      %v1253 = vmul.f32 %v735, %v1166
      %v1254 = vmul.f32 %v738, %v1168
      %v1255 = vmul.f32 %v743, %v1170
      %v1256 = vmul.f32 %v746, %v1172
      %v1257 = vmul.f32 %v751, %v1174
      %v1258 = vmul.f32 %v754, %v1176
      %v1259 = vmul.f32 %v759, %v1178
      %v1260 = vmul.f32 %v762, %v1180
      %v1261 = vmul.f32 %v767, %v1182
      %v1262 = vmul.f32 %v770, %v1184
      %v1263 = vmul.f32 %v775, %v1186
      %v1264 = vmul.f32 %v778, %v1188
      %v1265 = vmul.f32 %v783, %v1190
      %v1266 = vmul.f32 %v786, %v1192
      %v1267 = vmul.f32 %v791, %v1194
      %v1268 = vmul.f32 %v794, %v1196
      %v1269 = vmul.f32 %v799, %v1198
      %v1270 = vmul.f32 %v802, %v1200
      %v1271 = vmul.f32 %v807, %v1202
      %v1272 = vmul.f32 %v810, %v1204
      %v1273 = vmul.f32 %v815, %v1206
      %v1274 = vmul.f32 %v818, %v1208
      %v1275 = vmul.f32 %v823, %v1210
      %v1276 = vmul.f32 %v826, %v1212
      %v1277 = vpack.c.bf16 %v1214, %v1213
      %v1278 = vpack.c.bf16 %v1216, %v1215
      %v1279 = vpack.c.bf16 %v1218, %v1217
      %v1280 = vpack.c.bf16 %v1220, %v1219
      %v1281 = vpack.c.bf16 %v1222, %v1221
      %v1282 = vpack.c.bf16 %v1224, %v1223
      %v1283 = vpack.c.bf16 %v1226, %v1225
      %v1284 = vpack.c.bf16 %v1228, %v1227
      %v1285 = vpack.c.bf16 %v1230, %v1229
      %v1286 = vpack.c.bf16 %v1232, %v1231
      %v1287 = vpack.c.bf16 %v1234, %v1233
      %v1288 = vpack.c.bf16 %v1236, %v1235
      %v1289 = vpack.c.bf16 %v1238, %v1237
      %v1290 = vpack.c.bf16 %v1240, %v1239
      %v1291 = vpack.c.bf16 %v1242, %v1241
      %v1292 = vpack.c.bf16 %v1244, %v1243
      %v1293 = vpack.c.bf16 %v1246, %v1245
      %v1294 = vpack.c.bf16 %v1248, %v1247
      %v1295 = vpack.c.bf16 %v1250, %v1249
      %v1296 = vpack.c.bf16 %v1252, %v1251
      %v1297 = vpack.c.bf16 %v1254, %v1253
      %v1298 = vpack.c.bf16 %v1256, %v1255
      %v1299 = vpack.c.bf16 %v1258, %v1257
      %v1300 = vpack.c.bf16 %v1260, %v1259
      %v1301 = vpack.c.bf16 %v1262, %v1261
      %v1302 = vpack.c.bf16 %v1264, %v1263
      %v1303 = vpack.c.bf16 %v1266, %v1265
      %v1304 = vpack.c.bf16 %v1268, %v1267
      %v1305 = vpack.c.bf16 %v1270, %v1269
      %v1306 = vpack.c.bf16 %v1272, %v1271
      %v1307 = vpack.c.bf16 %v1274, %v1273
      %v1308 = vpack.c.bf16 %v1276, %v1275
      %v1341 = vunpack.c.l.b16 %v1277
      %v1342 = vunpack.c.h.b16 %v1277
      %v1343 = vunpack.c.l.b16 %v1278
      %v1344 = vunpack.c.h.b16 %v1278
      %v1345 = vunpack.c.l.b16 %v1279
      %v1346 = vunpack.c.h.b16 %v1279
      %v1347 = vunpack.c.l.b16 %v1280
      %v1348 = vunpack.c.h.b16 %v1280
      %v1349 = vunpack.c.l.b16 %v1281
      %v1350 = vunpack.c.h.b16 %v1281
      %v1351 = vunpack.c.l.b16 %v1282
      %v1352 = vunpack.c.h.b16 %v1282
      %v1353 = vunpack.c.l.b16 %v1283
      %v1354 = vunpack.c.h.b16 %v1283
      %v1355 = vunpack.c.l.b16 %v1284
      %v1356 = vunpack.c.h.b16 %v1284
      %v1357 = vunpack.c.l.b16 %v1285
      %v1358 = vunpack.c.h.b16 %v1285
      %v1359 = vunpack.c.l.b16 %v1286
      %v1360 = vunpack.c.h.b16 %v1286
      %v1361 = vunpack.c.l.b16 %v1287
      %v1362 = vunpack.c.h.b16 %v1287
      %v1363 = vunpack.c.l.b16 %v1288
      %v1364 = vunpack.c.h.b16 %v1288
      %v1365 = vunpack.c.l.b16 %v1289
      %v1366 = vunpack.c.h.b16 %v1289
      %v1367 = vunpack.c.l.b16 %v1290
      %v1368 = vunpack.c.h.b16 %v1290
      %v1369 = vunpack.c.l.b16 %v1291
      %v1370 = vunpack.c.h.b16 %v1291
      %v1371 = vunpack.c.l.b16 %v1292
      %v1372 = vunpack.c.h.b16 %v1292
      %v1373 = vunpack.c.l.b16 %v1293
      %v1374 = vunpack.c.h.b16 %v1293
      %v1375 = vunpack.c.l.b16 %v1294
      %v1376 = vunpack.c.h.b16 %v1294
      %v1377 = vunpack.c.l.b16 %v1295
      %v1378 = vunpack.c.h.b16 %v1295
      %v1379 = vunpack.c.l.b16 %v1296
      %v1380 = vunpack.c.h.b16 %v1296
      %v1381 = vunpack.c.l.b16 %v1297
      %v1382 = vunpack.c.h.b16 %v1297
      %v1383 = vunpack.c.l.b16 %v1298
      %v1384 = vunpack.c.h.b16 %v1298
      %v1385 = vunpack.c.l.b16 %v1299
      %v1386 = vunpack.c.h.b16 %v1299
      %v1387 = vunpack.c.l.b16 %v1300
      %v1388 = vunpack.c.h.b16 %v1300
      %v1389 = vunpack.c.l.b16 %v1301
      %v1390 = vunpack.c.h.b16 %v1301
      %v1391 = vunpack.c.l.b16 %v1302
      %v1392 = vunpack.c.h.b16 %v1302
      %v1393 = vunpack.c.l.b16 %v1303
      %v1394 = vunpack.c.h.b16 %v1303
      %v1395 = vunpack.c.l.b16 %v1304
      %v1396 = vunpack.c.h.b16 %v1304
      %v1397 = vunpack.c.l.b16 %v1305
      %v1398 = vunpack.c.h.b16 %v1305
      %v1399 = vunpack.c.l.b16 %v1306
      %v1400 = vunpack.c.h.b16 %v1306
      %v1401 = vunpack.c.l.b16 %v1307
      %v1402 = vunpack.c.h.b16 %v1307
      %v1403 = vunpack.c.l.b16 %v1308
      %v1404 = vunpack.c.h.b16 %v1308
      %v1405 = vpack.c.b16 %v1341, %v1341
      %v1406 = vpack.c.b16 %v1342, %v1342
      %v1407 = vpack.c.b16 %v1343, %v1343
      %v1408 = vpack.c.b16 %v1344, %v1344
      %v1409 = vpack.c.b16 %v1345, %v1345
      %v1410 = vpack.c.b16 %v1346, %v1346
      %v1411 = vpack.c.b16 %v1347, %v1347
      %v1412 = vpack.c.b16 %v1348, %v1348
      %v1413 = vpack.c.b16 %v1349, %v1349
      %v1414 = vpack.c.b16 %v1350, %v1350
      %v1415 = vpack.c.b16 %v1351, %v1351
      %v1416 = vpack.c.b16 %v1352, %v1352
      %v1417 = vpack.c.b16 %v1353, %v1353
      %v1418 = vpack.c.b16 %v1354, %v1354
      %v1419 = vpack.c.b16 %v1355, %v1355
      %v1420 = vpack.c.b16 %v1356, %v1356
      %v1421 = vpack.c.b16 %v1357, %v1357
      %v1422 = vpack.c.b16 %v1358, %v1358
      %v1423 = vpack.c.b16 %v1359, %v1359
      %v1424 = vpack.c.b16 %v1360, %v1360
      %v1425 = vpack.c.b16 %v1361, %v1361
      %v1426 = vpack.c.b16 %v1362, %v1362
      %v1427 = vpack.c.b16 %v1363, %v1363
      %v1428 = vpack.c.b16 %v1364, %v1364
      %v1429 = vpack.c.b16 %v1365, %v1365
      %v1430 = vpack.c.b16 %v1366, %v1366
      %v1431 = vpack.c.b16 %v1367, %v1367
      %v1432 = vpack.c.b16 %v1368, %v1368
      %v1433 = vpack.c.b16 %v1369, %v1369
      %v1434 = vpack.c.b16 %v1370, %v1370
      %v1435 = vpack.c.b16 %v1371, %v1371
      %v1436 = vpack.c.b16 %v1372, %v1372
      %v1437 = vpack.c.b16 %v1373, %v1373
      %v1438 = vpack.c.b16 %v1374, %v1374
      %v1439 = vpack.c.b16 %v1375, %v1375
      %v1440 = vpack.c.b16 %v1376, %v1376
      %v1441 = vpack.c.b16 %v1377, %v1377
      %v1442 = vpack.c.b16 %v1378, %v1378
      %v1443 = vpack.c.b16 %v1379, %v1379
      %v1444 = vpack.c.b16 %v1380, %v1380
      %v1445 = vpack.c.b16 %v1381, %v1381
      %v1446 = vpack.c.b16 %v1382, %v1382
      %v1447 = vpack.c.b16 %v1383, %v1383
      %v1448 = vpack.c.b16 %v1384, %v1384
      %v1449 = vpack.c.b16 %v1385, %v1385
      %v1450 = vpack.c.b16 %v1386, %v1386
      %v1451 = vpack.c.b16 %v1387, %v1387
      %v1452 = vpack.c.b16 %v1388, %v1388
      %v1453 = vpack.c.b16 %v1389, %v1389
      %v1454 = vpack.c.b16 %v1390, %v1390
      %v1455 = vpack.c.b16 %v1391, %v1391
      %v1456 = vpack.c.b16 %v1392, %v1392
      %v1457 = vpack.c.b16 %v1393, %v1393
      %v1458 = vpack.c.b16 %v1394, %v1394
      %v1459 = vpack.c.b16 %v1395, %v1395
      %v1460 = vpack.c.b16 %v1396, %v1396
      %v1461 = vpack.c.b16 %v1397, %v1397
      %v1462 = vpack.c.b16 %v1398, %v1398
      %v1463 = vpack.c.b16 %v1399, %v1399
      %v1464 = vpack.c.b16 %v1400, %v1400
      %v1465 = vpack.c.b16 %v1401, %v1401
      %v1466 = vpack.c.b16 %v1402, %v1402
      %v1467 = vpack.c.b16 %v1403, %v1403
      %v1468 = vpack.c.b16 %v1404, %v1404
      %1533 = vst [vmem:[%s206] sm:$0xf] %v1405
      %1534 = vst [vmem:[%s206 + $0x4] sm:$0xf] %v1406
      %1535 = vst [vmem:[%s206 + $0x8] sm:$0xf] %v1407
      %1536 = vst [vmem:[%s206 + $0xc] sm:$0xf] %v1408
      %1537 = vst [vmem:[%s206 + $0x10] sm:$0xf] %v1409
      %1538 = vst [vmem:[%s206 + $0x14] sm:$0xf] %v1410
      %1539 = vst [vmem:[%s206 + $0x18] sm:$0xf] %v1411
      %1540 = vst [vmem:[%s206 + $0x1c] sm:$0xf] %v1412
      %1541 = vst [vmem:[%s206 + $0x20] sm:$0xf] %v1413
      %1542 = vst [vmem:[%s206 + $0x24] sm:$0xf] %v1414
      %1543 = vst [vmem:[%s206 + $0x28] sm:$0xf] %v1415
      %1544 = vst [vmem:[%s206 + $0x2c] sm:$0xf] %v1416
      %1545 = vst [vmem:[%s206 + $0x30] sm:$0xf] %v1417
      %1546 = vst [vmem:[%s206 + $0x34] sm:$0xf] %v1418
      %1547 = vst [vmem:[%s206 + $0x38] sm:$0xf] %v1419
      %1548 = vst [vmem:[%s206 + $0x3c] sm:$0xf] %v1420
      %1549 = vst [vmem:[%s206 + $0x40] sm:$0xf] %v1421
      %1550 = vst [vmem:[%s206 + $0x44] sm:$0xf] %v1422
      %1551 = vst [vmem:[%s206 + $0x48] sm:$0xf] %v1423
      %1552 = vst [vmem:[%s206 + $0x4c] sm:$0xf] %v1424
      %1553 = vst [vmem:[%s206 + $0x50] sm:$0xf] %v1425
      %1554 = vst [vmem:[%s206 + $0x54] sm:$0xf] %v1426
      %1555 = vst [vmem:[%s206 + $0x58] sm:$0xf] %v1427
      %1556 = vst [vmem:[%s206 + $0x5c] sm:$0xf] %v1428
      %1557 = vst [vmem:[%s206 + $0x60] sm:$0xf] %v1429
      %1558 = vst [vmem:[%s206 + $0x64] sm:$0xf] %v1430
      %1559 = vst [vmem:[%s206 + $0x68] sm:$0xf] %v1431
      %1560 = vst [vmem:[%s206 + $0x6c] sm:$0xf] %v1432
      %1561 = vst [vmem:[%s206 + $0x70] sm:$0xf] %v1433
      %1562 = vst [vmem:[%s206 + $0x74] sm:$0xf] %v1434
      %1563 = vst [vmem:[%s206 + $0x78] sm:$0xf] %v1435
      %1564 = vst [vmem:[%s206 + $0x7c] sm:$0xf] %v1436
      %1565 = vst [vmem:[%s206 + $0x80] sm:$0xf] %v1437
      %1566 = vst [vmem:[%s206 + $0x84] sm:$0xf] %v1438
      %1567 = vst [vmem:[%s206 + $0x88] sm:$0xf] %v1439
      %1568 = vst [vmem:[%s206 + $0x8c] sm:$0xf] %v1440
      %1569 = vst [vmem:[%s206 + $0x90] sm:$0xf] %v1441
      %1570 = vst [vmem:[%s206 + $0x94] sm:$0xf] %v1442
      %1571 = vst [vmem:[%s206 + $0x98] sm:$0xf] %v1443
      %1572 = vst [vmem:[%s206 + $0x9c] sm:$0xf] %v1444
      %1573 = vst [vmem:[%s206 + $0xa0] sm:$0xf] %v1445
      %1574 = vst [vmem:[%s206 + $0xa4] sm:$0xf] %v1446
      %1575 = vst [vmem:[%s206 + $0xa8] sm:$0xf] %v1447
      %1576 = vst [vmem:[%s206 + $0xac] sm:$0xf] %v1448
      %1577 = vst [vmem:[%s206 + $0xb0] sm:$0xf] %v1449
      %1578 = vst [vmem:[%s206 + $0xb4] sm:$0xf] %v1450
      %1579 = vst [vmem:[%s206 + $0xb8] sm:$0xf] %v1451
      %1580 = vst [vmem:[%s206 + $0xbc] sm:$0xf] %v1452
      %1581 = vst [vmem:[%s206 + $0xc0] sm:$0xf] %v1453
      %1582 = vst [vmem:[%s206 + $0xc4] sm:$0xf] %v1454
      %1583 = vst [vmem:[%s206 + $0xc8] sm:$0xf] %v1455
      %1584 = vst [vmem:[%s206 + $0xcc] sm:$0xf] %v1456
      %1585 = vst [vmem:[%s206 + $0xd0] sm:$0xf] %v1457
      %1586 = vst [vmem:[%s206 + $0xd4] sm:$0xf] %v1458
      %1587 = vst [vmem:[%s206 + $0xd8] sm:$0xf] %v1459
      %1588 = vst [vmem:[%s206 + $0xdc] sm:$0xf] %v1460
      %1589 = vst [vmem:[%s206 + $0xe0] sm:$0xf] %v1461
      %1590 = vst [vmem:[%s206 + $0xe4] sm:$0xf] %v1462
      %1591 = vst [vmem:[%s206 + $0xe8] sm:$0xf] %v1463
      %1592 = vst [vmem:[%s206 + $0xec] sm:$0xf] %v1464
      %1593 = vst [vmem:[%s206 + $0xf0] sm:$0xf] %v1465
      %1594 = vst [vmem:[%s206 + $0xf4] sm:$0xf] %v1466
      %1595 = vst [vmem:[%s206 + $0xf8] sm:$0xf] %v1467
      %1596 = vst [vmem:[%s206 + $0xfc] sm:$0xf] %v1468
      %v1597 = vadd.f32 %v1213, %v1214
      %v1598 = vadd.f32 %v1597, %v1215
      %v1599 = vadd.f32 %v1598, %v1216
      %v1600 = vadd.f32 %v1599, %v1217
      %v1601 = vadd.f32 %v1600, %v1218
      %v1602 = vadd.f32 %v1601, %v1219
      %v1603 = vadd.f32 %v1602, %v1220
      %v1604 = vadd.f32 %v1603, %v1221
      %v1605 = vadd.f32 %v1604, %v1222
      %v1606 = vadd.f32 %v1605, %v1223
      %v1607 = vadd.f32 %v1606, %v1224
      %v1608 = vadd.f32 %v1607, %v1225
      %v1609 = vadd.f32 %v1608, %v1226
      %v1610 = vadd.f32 %v1609, %v1227
      %v1611 = vadd.f32 %v1610, %v1228
      %v1612 = vadd.f32 %v1611, %v1229
      %v1613 = vadd.f32 %v1612, %v1230
      %v1614 = vadd.f32 %v1613, %v1231
      %v1615 = vadd.f32 %v1614, %v1232
      %v1616 = vadd.f32 %v1615, %v1233
      %v1617 = vadd.f32 %v1616, %v1234
      %v1618 = vadd.f32 %v1617, %v1235
      %v1619 = vadd.f32 %v1618, %v1236
      %v1620 = vadd.f32 %v1619, %v1237
      %v1621 = vadd.f32 %v1620, %v1238
      %v1622 = vadd.f32 %v1621, %v1239
      %v1623 = vadd.f32 %v1622, %v1240
      %v1624 = vadd.f32 %v1623, %v1241
      %v1625 = vadd.f32 %v1624, %v1242
      %v1626 = vadd.f32 %v1625, %v1243
      %v1627 = vadd.f32 %v1626, %v1244
      %v1628 = vadd.f32 %v1627, %v1245
      %v1629 = vadd.f32 %v1628, %v1246
      %v1630 = vadd.f32 %v1629, %v1247
      %v1631 = vadd.f32 %v1630, %v1248
      %v1632 = vadd.f32 %v1631, %v1249
      %v1633 = vadd.f32 %v1632, %v1250
      %v1634 = vadd.f32 %v1633, %v1251
      %v1635 = vadd.f32 %v1634, %v1252
      %v1636 = vadd.f32 %v1635, %v1253
      %v1637 = vadd.f32 %v1636, %v1254
      %v1638 = vadd.f32 %v1637, %v1255
      %v1639 = vadd.f32 %v1638, %v1256
      %v1640 = vadd.f32 %v1639, %v1257
      %v1641 = vadd.f32 %v1640, %v1258
      %v1642 = vadd.f32 %v1641, %v1259
      %v1643 = vadd.f32 %v1642, %v1260
      %v1644 = vadd.f32 %v1643, %v1261
      %v1645 = vadd.f32 %v1644, %v1262
      %v1646 = vadd.f32 %v1645, %v1263
      %v1647 = vadd.f32 %v1646, %v1264
      %v1648 = vadd.f32 %v1647, %v1265
      %v1649 = vadd.f32 %v1648, %v1266
      %v1650 = vadd.f32 %v1649, %v1267
      %v1651 = vadd.f32 %v1650, %v1268
      %v1652 = vadd.f32 %v1651, %v1269
      %v1653 = vadd.f32 %v1652, %v1270
      %v1654 = vadd.f32 %v1653, %v1271
      %v1655 = vadd.f32 %v1654, %v1272
      %v1656 = vadd.f32 %v1655, %v1273
      %v1657 = vadd.f32 %v1656, %v1274
      %v1658 = vadd.f32 %v1657, %v1275
      %v1659 = vadd.f32 %v1658, %v1276
      %v1660 = vrot.slane %v1659, 4
      %v1661 = vadd.f32 %v1659, %v1660
      %v1662 = vrot.slane %v1661, 2
      %v1663 = vadd.f32 %v1661, %v1662
      %v1664 = vrot.slane %v1663, 1
      %v1665 = vadd.f32 %v1663, %v1664
      %1666 = vst [vmem:[%s211] sm:$0x1] %v1665
      %v1667 = vmul.f32 %v1213, %v1213
      %v1668 = vmul.f32 %v1214, %v1214
      %v1669 = vmul.f32 %v1215, %v1215
      %v1670 = vmul.f32 %v1216, %v1216
      %v1671 = vmul.f32 %v1217, %v1217
      %v1672 = vmul.f32 %v1218, %v1218
      %v1673 = vmul.f32 %v1219, %v1219
      %v1674 = vmul.f32 %v1220, %v1220
      %v1675 = vmul.f32 %v1221, %v1221
      %v1676 = vmul.f32 %v1222, %v1222
      %v1677 = vmul.f32 %v1223, %v1223
      %v1678 = vmul.f32 %v1224, %v1224
      %v1679 = vmul.f32 %v1225, %v1225
      %v1680 = vmul.f32 %v1226, %v1226
      %v1681 = vmul.f32 %v1227, %v1227
      %v1682 = vmul.f32 %v1228, %v1228
      %v1683 = vmul.f32 %v1229, %v1229
      %v1684 = vmul.f32 %v1230, %v1230
      %v1685 = vmul.f32 %v1231, %v1231
      %v1686 = vmul.f32 %v1232, %v1232
      %v1687 = vmul.f32 %v1233, %v1233
      %v1688 = vmul.f32 %v1234, %v1234
      %v1689 = vmul.f32 %v1235, %v1235
      %v1690 = vmul.f32 %v1236, %v1236
      %v1691 = vmul.f32 %v1237, %v1237
      %v1692 = vmul.f32 %v1238, %v1238
      %v1693 = vmul.f32 %v1239, %v1239
      %v1694 = vmul.f32 %v1240, %v1240
      %v1695 = vmul.f32 %v1241, %v1241
      %v1696 = vmul.f32 %v1242, %v1242
      %v1697 = vmul.f32 %v1243, %v1243
      %v1698 = vmul.f32 %v1244, %v1244
      %v1699 = vmul.f32 %v1245, %v1245
      %v1700 = vmul.f32 %v1246, %v1246
      %v1701 = vmul.f32 %v1247, %v1247
      %v1702 = vmul.f32 %v1248, %v1248
      %v1703 = vmul.f32 %v1249, %v1249
      %v1704 = vmul.f32 %v1250, %v1250
      %v1705 = vmul.f32 %v1251, %v1251
      %v1706 = vmul.f32 %v1252, %v1252
      %v1707 = vmul.f32 %v1253, %v1253
      %v1708 = vmul.f32 %v1254, %v1254
      %v1709 = vmul.f32 %v1255, %v1255
      %v1710 = vmul.f32 %v1256, %v1256
      %v1711 = vmul.f32 %v1257, %v1257
      %v1712 = vmul.f32 %v1258, %v1258
      %v1713 = vmul.f32 %v1259, %v1259
      %v1714 = vmul.f32 %v1260, %v1260
      %v1715 = vmul.f32 %v1261, %v1261
      %v1716 = vmul.f32 %v1262, %v1262
      %v1717 = vmul.f32 %v1263, %v1263
      %v1718 = vmul.f32 %v1264, %v1264
      %v1719 = vmul.f32 %v1265, %v1265
      %v1720 = vmul.f32 %v1266, %v1266
      %v1721 = vmul.f32 %v1267, %v1267
      %v1722 = vmul.f32 %v1268, %v1268
      %v1723 = vmul.f32 %v1269, %v1269
      %v1724 = vmul.f32 %v1270, %v1270
      %v1725 = vmul.f32 %v1271, %v1271
      %v1726 = vmul.f32 %v1272, %v1272
      %v1727 = vmul.f32 %v1273, %v1273
      %v1728 = vmul.f32 %v1274, %v1274
      %v1729 = vmul.f32 %v1275, %v1275
      %v1730 = vmul.f32 %v1276, %v1276
      %v1731 = vadd.f32 %v1667, %v1668
      %v1732 = vadd.f32 %v1731, %v1669
      %v1733 = vadd.f32 %v1732, %v1670
      %v1734 = vadd.f32 %v1733, %v1671
      %v1735 = vadd.f32 %v1734, %v1672
      %v1736 = vadd.f32 %v1735, %v1673
      %v1737 = vadd.f32 %v1736, %v1674
      %v1738 = vadd.f32 %v1737, %v1675
      %v1739 = vadd.f32 %v1738, %v1676
      %v1740 = vadd.f32 %v1739, %v1677
      %v1741 = vadd.f32 %v1740, %v1678
      %v1742 = vadd.f32 %v1741, %v1679
      %v1743 = vadd.f32 %v1742, %v1680
      %v1744 = vadd.f32 %v1743, %v1681
      %v1745 = vadd.f32 %v1744, %v1682
      %v1746 = vadd.f32 %v1745, %v1683
      %v1747 = vadd.f32 %v1746, %v1684
      %v1748 = vadd.f32 %v1747, %v1685
      %v1749 = vadd.f32 %v1748, %v1686
      %v1750 = vadd.f32 %v1749, %v1687
      %v1751 = vadd.f32 %v1750, %v1688
      %v1752 = vadd.f32 %v1751, %v1689
      %v1753 = vadd.f32 %v1752, %v1690
      %v1754 = vadd.f32 %v1753, %v1691
      %v1755 = vadd.f32 %v1754, %v1692
      %v1756 = vadd.f32 %v1755, %v1693
      %v1757 = vadd.f32 %v1756, %v1694
      %v1758 = vadd.f32 %v1757, %v1695
      %v1759 = vadd.f32 %v1758, %v1696
      %v1760 = vadd.f32 %v1759, %v1697
      %v1761 = vadd.f32 %v1760, %v1698
      %v1762 = vadd.f32 %v1761, %v1699
      %v1763 = vadd.f32 %v1762, %v1700
      %v1764 = vadd.f32 %v1763, %v1701
      %v1765 = vadd.f32 %v1764, %v1702
      %v1766 = vadd.f32 %v1765, %v1703
      %v1767 = vadd.f32 %v1766, %v1704
      %v1768 = vadd.f32 %v1767, %v1705
      %v1769 = vadd.f32 %v1768, %v1706
      %v1770 = vadd.f32 %v1769, %v1707
      %v1771 = vadd.f32 %v1770, %v1708
      %v1772 = vadd.f32 %v1771, %v1709
      %v1773 = vadd.f32 %v1772, %v1710
      %v1774 = vadd.f32 %v1773, %v1711
      %v1775 = vadd.f32 %v1774, %v1712
      %v1776 = vadd.f32 %v1775, %v1713
      %v1777 = vadd.f32 %v1776, %v1714
      %v1778 = vadd.f32 %v1777, %v1715
      %v1779 = vadd.f32 %v1778, %v1716
      %v1780 = vadd.f32 %v1779, %v1717
      %v1781 = vadd.f32 %v1780, %v1718
      %v1782 = vadd.f32 %v1781, %v1719
      %v1783 = vadd.f32 %v1782, %v1720
      %v1784 = vadd.f32 %v1783, %v1721
      %v1785 = vadd.f32 %v1784, %v1722
      %v1786 = vadd.f32 %v1785, %v1723
      %v1787 = vadd.f32 %v1786, %v1724
      %v1788 = vadd.f32 %v1787, %v1725
      %v1789 = vadd.f32 %v1788, %v1726
      %v1790 = vadd.f32 %v1789, %v1727
      %v1791 = vadd.f32 %v1790, %v1728
      %v1792 = vadd.f32 %v1791, %v1729
      %v1793 = vadd.f32 %v1792, %v1730
      %v1794 = vrot.slane %v1793, 4
      %v1795 = vadd.f32 %v1793, %v1794
      %v1796 = vrot.slane %v1795, 2
      %v1797 = vadd.f32 %v1795, %v1796
      %v1798 = vrot.slane %v1797, 1
      %v1799 = vadd.f32 %v1797, %v1798
      %1800 = vst [vmem:[%s211 + $0x1] sm:$0x1] %v1799
      %s1801 = smul.u32 64, %s16
      %p1802 = scmp.lt.s32.totalorder %s1801, 255
      %s1803 = scalar_select %p1802, %s1801, 255
      %s1804 = smul.addr %s1803, 4
      %s1805 = scalar_lea.vmem %s3, %s1804
      %p1806 = scmp.lt.s32.totalorder %s16, 3
      %s1807 = scalar_select %p1806, %s16, 3
      %s1808 = smul.addr %s1807, 8
      %s1809 = scalar_lea.vmem %s4, %s1808
      // Predicated region
      $region33: #{conv_encoder_forward.7} parent=31 // pred_check
        %p1810 = pneg %p102
      $region34: #{conv_encoder_forward.7} parent=31 // pred_check_branch
        %1812 = sbr.rel (%p1810) target = $region36
      $region35: #{conv_encoder_forward.7} parent=31 // pred_region
        %s1813 = smul.u32 64, %s16
      $region36: #{conv_encoder_forward.7} parent=31 // pred_fallthru
        _
      // Predicated region
      $region37: #{conv_encoder_forward.7} parent=31 // pred_check
        %p1814 = pneg %p128
      $region38: #{conv_encoder_forward.7} parent=31 // pred_check_branch
        %1816 = sbr.rel (%p1814) target = $region40
      $region39: #{conv_encoder_forward.7} parent=31 // pred_region
        _
      $region40: #{conv_encoder_forward.7} parent=31 // pred_fallthru
        _
    $region32: #{conv_encoder_forward.7} parent=5 // pred_fallthru
      _
    %p1817 = scmp.le.s32.totalorder 2, %s11
    // Predicated region
    $region41: #{conv_encoder_forward.7} parent=5 // pred_check
      %p1818 = pneg %p1817
    $region42: #{conv_encoder_forward.7} parent=5 // pred_check_branch
      %1820 = sbr.rel (%p1818) target = $region44
    $region43: #{conv_encoder_forward.7} parent=5 // pred_region
      %s1821 = ssub.s32 %s11, 2
      // Predicated region
      $region45: #{conv_encoder_forward.7} parent=43 // pred_check
        %p1822 = pneg %p108
      $region46: #{conv_encoder_forward.7} parent=43 // pred_check_branch
        %1824 = sbr.rel (%p1822) target = $region48
      $region47: #{conv_encoder_forward.7} parent=43 // pred_region
        %s1825 = smul.u32 64, %s17
        %p1826 = scmp.lt.s32.totalorder %s1825, 255
        %s1827 = scalar_select %p1826, %s1825, 255
        %s1828 = smul.addr %s1827, 4
        %s1829 = scalar_lea.vmem %s3, %s1828
      $region48: #{conv_encoder_forward.7} parent=43 // pred_fallthru
        _
      // Predicated region
      $region49: #{conv_encoder_forward.7} parent=43 // pred_check
        %p1830 = pneg %p134
      $region50: #{conv_encoder_forward.7} parent=43 // pred_check_branch
        %1832 = sbr.rel (%p1830) target = $region52
      $region51: #{conv_encoder_forward.7} parent=43 // pred_region
        %p1833 = scmp.lt.s32.totalorder %s17, 3
        %s1834 = scalar_select %p1833, %s17, 3
        %s1835 = smul.addr %s1834, 8
        %s1836 = scalar_lea.vmem %s4, %s1835
      $region52: #{conv_encoder_forward.7} parent=43 // pred_fallthru
        _
    $region44: #{conv_encoder_forward.7} parent=5 // pred_fallthru
      _
  $region6: #{conv_encoder_forward.7} parent=0 // loop_footer
    %s15 = sadd.s32 1, %s11
  $region7: #{conv_encoder_forward.7} parent=0 // loop_footer_branch
    %10 = sbr.rel target = $region3
  $region8: #{conv_encoder_forward.7} parent=0 // loop_exit
    _

// kernel: conv_encoder_forward.8
$region0: #{conv_encoder_forward.8}
  #allocation0 [shape = 'u32[]', space=smem, size = 0x4, offset = 0x4, fixed_abs, tag = 'smem constant byte address 0x4 - core index']
  #allocation1 [shape = 'u32[144,128]{1,0:T(1,128)}', space=vmem, size = 0x12000, scoped, tag = 'internal scratch']
  %s0 = inlined_call_operand.vmem [shape: bf16[512,512], index: 0, kind: input, shape index: {}]
  %s1 = inlined_call_operand.vmem [shape: bf16[512,128], index: 1, kind: input, shape index: {}]
  %s2 = inlined_call_operand.vmem [shape: f32[1,128], index: 2, kind: input, shape index: {}]
  %s3 = inlined_call_operand.vmem [shape: bf16[512,128], index: 3, kind: output, shape index: {0}]
  %s4 = inlined_call_operand.vmem [shape: f32[16,128], index: 4, kind: output, shape index: {1}]
  %5 = xla_tuple %s3, %s4
  %s6 = sld [smem:[#allocation0]]
  $region53: #{conv_encoder_forward.8} parent=0
    _
  %s8 = ssub.s32 1, %s6
  %s9 = scalar_select 0, %s8, %s6
  loop: start=0, step=1, limit=4
  $region2: #{conv_encoder_forward.8} parent=0 // loop_pre_header
    _
  $region3: #{conv_encoder_forward.8} parent=0 // loop_header
    %s11 = sphi 0, %s15
    %p12 = scmp.ge.s32.totalorder %s11, 4
    %s21 = sphi 0, %s23
    %s24 = sphi 0, %s21
    %s25 = sphi 0, %s24
    %s41 = sphi 0, %s25
    %s45 = sphi 0, %s45
    %s47 = sphi 0, %s45
    %s48 = sphi 0, %s47
    %s62 = sphi 0, %s48
    %s66 = sphi 0, %s66
    %s68 = sphi 0, %s66
    %s69 = sphi 0, %s68
    %s83 = sphi 0, %s69
    %s89 = sphi 0, %s91
    %s92 = sphi 0, %s89
    %s93 = sphi 0, %s92
    %s109 = sphi 0, %s93
    %s115 = sphi 0, %s117
    %s118 = sphi 0, %s115
    %s119 = sphi 0, %s118
    %s135 = sphi 0, %s119
  $region4: #{conv_encoder_forward.8} parent=0 // loop_header_branch
    %14 = sbr.rel (%p12) target = $region8
  $region5: #{conv_encoder_forward.8} parent=0 // loop_body
    %s16 = ssub.s32 %s11, 1
    %s17 = ssub.s32 %s11, 2
    %s18 = sadd.s32 %s11, 1
    %s19 = ssub.s32 %s11, %s18
    %p20 = scmp.eq.s32.totalorder %s19, 0
    %s22 = sadd.s32 %s21, 1
    %s23 = scalar_select %p20, %s21, %s22
    %p26 = pneg %p20
    %p27 = scmp.eq.s32.totalorder %s11, 1
    %p28 = por %p26, %p27
    %p29 = scmp.ne.s32.totalorder %s21, %s24
    %p30 = scmp.eq.s32.totalorder %s11, 0
    %p31 = por %p29, %p30
    %p32 = scmp.ne.s32.totalorder %s21, %s24
    %p33 = scmp.eq.s32.totalorder %s16, 1
    %p34 = por %p32, %p33
    %p35 = scmp.ne.s32.totalorder %s24, %s25
    %p36 = scmp.eq.s32.totalorder %s16, 0
    %p37 = por %p35, %p36
    %p38 = scmp.ne.s32.totalorder %s24, %s25
    %p39 = scmp.eq.s32.totalorder %s17, 1
    %p40 = por %p38, %p39
    %p42 = scmp.ne.s32.totalorder %s25, %s41
    %p43 = scmp.eq.s32.totalorder %s17, 0
    %p44 = por %p42, %p43
    %s46 = sadd.s32 %s45, 1
    %p49 = scmp.eq.s32.totalorder %s11, 1
    %p50 = scmp.ne.s32.totalorder %s45, %s47
    %p51 = scmp.eq.s32.totalorder %s11, 0
    %p52 = por %p50, %p51
    %p53 = scmp.ne.s32.totalorder %s45, %s47
    %p54 = scmp.eq.s32.totalorder %s16, 1
    %p55 = por %p53, %p54
    %p56 = scmp.ne.s32.totalorder %s47, %s48
    %p57 = scmp.eq.s32.totalorder %s16, 0
    %p58 = por %p56, %p57
    %p59 = scmp.ne.s32.totalorder %s47, %s48
    %p60 = scmp.eq.s32.totalorder %s17, 1
    %p61 = por %p59, %p60
    %p63 = scmp.ne.s32.totalorder %s48, %s62
    %p64 = scmp.eq.s32.totalorder %s17, 0
    %p65 = por %p63, %p64
    %s67 = sadd.s32 %s66, 1
    %p70 = scmp.eq.s32.totalorder %s11, 1
    %p71 = scmp.ne.s32.totalorder %s66, %s68
    %p72 = scmp.eq.s32.totalorder %s11, 0
    %p73 = por %p71, %p72
    %p74 = scmp.ne.s32.totalorder %s66, %s68
    %p75 = scmp.eq.s32.totalorder %s16, 1
    %p76 = por %p74, %p75
    %p77 = scmp.ne.s32.totalorder %s68, %s69
    %p78 = scmp.eq.s32.totalorder %s16, 0
    %p79 = por %p77, %p78
    %p80 = scmp.ne.s32.totalorder %s68, %s69
    %p81 = scmp.eq.s32.totalorder %s17, 1
    %p82 = por %p80, %p81
    %p84 = scmp.ne.s32.totalorder %s69, %s83
    %p85 = scmp.eq.s32.totalorder %s17, 0
    %p86 = por %p84, %p85
    %s87 = ssub.s32 %s11, %s18
    %p88 = scmp.eq.s32.totalorder %s87, 0
    %s90 = sadd.s32 %s89, 1
    %s91 = scalar_select %p88, %s89, %s90
    %p94 = pneg %p88
    %p95 = scmp.eq.s32.totalorder %s11, 1
    %p96 = por %p94, %p95
    %p97 = scmp.ne.s32.totalorder %s89, %s92
    %p98 = scmp.eq.s32.totalorder %s11, 0
    %p99 = por %p97, %p98
    %p100 = scmp.ne.s32.totalorder %s89, %s92
    %p101 = scmp.eq.s32.totalorder %s16, 1
    %p102 = por %p100, %p101
    %p103 = scmp.ne.s32.totalorder %s92, %s93
    %p104 = scmp.eq.s32.totalorder %s16, 0
    %p105 = por %p103, %p104
    %p106 = scmp.ne.s32.totalorder %s92, %s93
    %p107 = scmp.eq.s32.totalorder %s17, 1
    %p108 = por %p106, %p107
    %p110 = scmp.ne.s32.totalorder %s93, %s109
    %p111 = scmp.eq.s32.totalorder %s17, 0
    %p112 = por %p110, %p111
    %s113 = ssub.s32 %s11, %s18
    %p114 = scmp.eq.s32.totalorder %s113, 0
    %s116 = sadd.s32 %s115, 1
    %s117 = scalar_select %p114, %s115, %s116
    %p120 = pneg %p114
    %p121 = scmp.eq.s32.totalorder %s11, 1
    %p122 = por %p120, %p121
    %p123 = scmp.ne.s32.totalorder %s115, %s118
    %p124 = scmp.eq.s32.totalorder %s11, 0
    %p125 = por %p123, %p124
    %p126 = scmp.ne.s32.totalorder %s115, %s118
    %p127 = scmp.eq.s32.totalorder %s16, 1
    %p128 = por %p126, %p127
    %p129 = scmp.ne.s32.totalorder %s118, %s119
    %p130 = scmp.eq.s32.totalorder %s16, 0
    %p131 = por %p129, %p130
    %p132 = scmp.ne.s32.totalorder %s118, %s119
    %p133 = scmp.eq.s32.totalorder %s17, 1
    %p134 = por %p132, %p133
    %p136 = scmp.ne.s32.totalorder %s119, %s135
    %p137 = scmp.eq.s32.totalorder %s17, 0
    %p138 = por %p136, %p137
    %p139 = scmp.le.s32.totalorder 1, %s11
    %p140 = scmp.lt.s32.totalorder %s11, 3
    %p141 = pnand %p139, %p140
    %p142 = pneg %p141
    // Predicated region
    $region9: #{conv_encoder_forward.8} parent=5 // pred_check
      _
    $region10: #{conv_encoder_forward.8} parent=5 // pred_check_branch
      %144 = sbr.rel (%p141) target = $region12
    $region11: #{conv_encoder_forward.8} parent=5 // pred_region
      %s145 = ssub.s32 %s11, 1
      // Predicated region
      $region13: #{conv_encoder_forward.8} parent=11 // pred_check
        %p146 = pneg %p58
      $region14: #{conv_encoder_forward.8} parent=11 // pred_check_branch
        %148 = sbr.rel (%p146) target = $region16
      $region15: #{conv_encoder_forward.8} parent=11 // pred_region
        _
      $region16: #{conv_encoder_forward.8} parent=11 // pred_fallthru
        _
      // Predicated region
      $region17: #{conv_encoder_forward.8} parent=11 // pred_check
        %p149 = pneg %p79
      $region18: #{conv_encoder_forward.8} parent=11 // pred_check_branch
        %151 = sbr.rel (%p149) target = $region20
      $region19: #{conv_encoder_forward.8} parent=11 // pred_region
        _
      $region20: #{conv_encoder_forward.8} parent=11 // pred_fallthru
        _
    $region12: #{conv_encoder_forward.8} parent=5 // pred_fallthru
      _
    %p152 = scmp.lt.s32.totalorder %s11, 2
    // Predicated region
    $region21: #{conv_encoder_forward.8} parent=5 // pred_check
      %p153 = pneg %p152
    $region22: #{conv_encoder_forward.8} parent=5 // pred_check_branch
      %155 = sbr.rel (%p153) target = $region24
    $region23: #{conv_encoder_forward.8} parent=5 // pred_region
      // Predicated region
      $region25: #{conv_encoder_forward.8} parent=23 // pred_check
        %p156 = pneg %p31
      $region26: #{conv_encoder_forward.8} parent=23 // pred_check_branch
        %158 = sbr.rel (%p156) target = $region28
      $region27: #{conv_encoder_forward.8} parent=23 // pred_region
        %s159 = smul.u32 32, %s11
        %p160 = scmp.lt.s32.totalorder %s159, 63
        %s161 = scalar_select %p160, %s159, 63
        %s162 = smul.addr %s161, 4
        %s163 = smul.addr %s162, 4
        %s164 = scalar_lea.vmem %s0, %s163
        %s165 = smul.u32 32, %s11
      $region28: #{conv_encoder_forward.8} parent=23 // pred_fallthru
        _
    $region24: #{conv_encoder_forward.8} parent=5 // pred_fallthru
      _
    %p166 = scmp.le.s32.totalorder 1, %s11
    %p167 = scmp.lt.s32.totalorder %s11, 3
    %p168 = pnand %p166, %p167
    %p169 = pneg %p168
    // Predicated region
    $region29: #{conv_encoder_forward.8} parent=5 // pred_check
      _
    $region30: #{conv_encoder_forward.8} parent=5 // pred_check_branch
      %171 = sbr.rel (%p168) target = $region32
    $region31: #{conv_encoder_forward.8} parent=5 // pred_region
      %s172 = ssub.s32 %s11, 1
      %s173 = smul.u32 32, %s16
      %p174 = scmp.lt.s32.totalorder %s173, 63
      %s175 = scalar_select %p174, %s173, 63
      %s176 = smul.addr %s175, 4
      %s177 = smul.addr %s176, 4
      %s178 = scalar_lea.vmem %s0, %s177
      %p179 = pneg %p37
      %p180 = pneg %p34
      %p181 = pneg %p58
      %p182 = pneg %p55
      %p183 = pneg %p79
      %p184 = pneg %p76
      %p185 = pneg %p105
      %p186 = pneg %p102
      %s187 = smul.u32 32, %s16
      %p188 = scmp.lt.s32.totalorder %s187, 63
      %s189 = scalar_select %p188, %s187, 63
      %s190 = smul.addr %s189, 4
      %s191 = scalar_lea.vmem %s3, %s190
      %p192 = pneg %p131
      %p193 = pneg %p128
      %p194 = scmp.lt.s32.totalorder %s16, 1
      %s195 = scalar_select %p194, %s16, 1
      %s196 = smul.addr %s195, 8
      %s197 = scalar_lea.vmem %s4, %s196
      %s198 = smul.u32 32, %s16
      %p199 = scmp.lt.s32.totalorder %s198, 63
      %s200 = scalar_select %p199, %s198, 63
      %s201 = smul.addr %s200, 4
      %s202 = smul.addr %s201, 4
      %s203 = scalar_lea.vmem %s0, %s202
      %s204 = smul.u32 32, %s16
      %s205 = smul.u32 32, %s16
      %p206 = scmp.lt.s32.totalorder %s205, 63
      %s207 = scalar_select %p206, %s205, 63
      %s208 = smul.addr %s207, 4
      %s209 = scalar_lea.vmem %s3, %s208
      %s210 = smul.u32 32, %s16
      %p211 = scmp.lt.s32.totalorder %s16, 1
      %s212 = scalar_select %p211, %s16, 1
      %s213 = smul.addr %s212, 8
      %s214 = scalar_lea.vmem %s4, %s213
      %v216 = vld [vmem:[%s203] sm:$0xff]
      %v217 = vld [vmem:[%s203 + $0x8] sm:$0xff]
      %v218 = vld [vmem:[%s203 + $0x10] sm:$0xff]
      %v219 = vld [vmem:[%s203 + $0x18] sm:$0xff]
      %v220 = vld [vmem:[%s203 + $0x20] sm:$0xff]
      %v221 = vld [vmem:[%s203 + $0x28] sm:$0xff]
      %v222 = vld [vmem:[%s203 + $0x30] sm:$0xff]
      %v223 = vld [vmem:[%s203 + $0x38] sm:$0xff]
      %v224 = vld [vmem:[%s203 + $0x40] sm:$0xff]
      %v225 = vld [vmem:[%s203 + $0x48] sm:$0xff]
      %v226 = vld [vmem:[%s203 + $0x50] sm:$0xff]
      %v227 = vld [vmem:[%s203 + $0x58] sm:$0xff]
      %v228 = vld [vmem:[%s203 + $0x60] sm:$0xff]
      %v229 = vld [vmem:[%s203 + $0x68] sm:$0xff]
      %v230 = vld [vmem:[%s203 + $0x70] sm:$0xff]
      %v231 = vld [vmem:[%s203 + $0x78] sm:$0xff]
      %v232 = vld [vmem:[%s203 + $0x80] sm:$0xff]
      %v233 = vld [vmem:[%s203 + $0x88] sm:$0xff]
      %v234 = vld [vmem:[%s203 + $0x90] sm:$0xff]
      %v235 = vld [vmem:[%s203 + $0x98] sm:$0xff]
      %v236 = vld [vmem:[%s203 + $0xa0] sm:$0xff]
      %v237 = vld [vmem:[%s203 + $0xa8] sm:$0xff]
      %v238 = vld [vmem:[%s203 + $0xb0] sm:$0xff]
      %v239 = vld [vmem:[%s203 + $0xb8] sm:$0xff]
      %v240 = vld [vmem:[%s203 + $0xc0] sm:$0xff]
      %v241 = vld [vmem:[%s203 + $0xc8] sm:$0xff]
      %v242 = vld [vmem:[%s203 + $0xd0] sm:$0xff]
      %v243 = vld [vmem:[%s203 + $0xd8] sm:$0xff]
      %v244 = vld [vmem:[%s203 + $0xe0] sm:$0xff]
      %v245 = vld [vmem:[%s203 + $0xe8] sm:$0xff]
      %v246 = vld [vmem:[%s203 + $0xf0] sm:$0xff]
      %v247 = vld [vmem:[%s203 + $0xf8] sm:$0xff]
      %v248 = vld [vmem:[%s203 + $0x100] sm:$0xff]
      %v249 = vld [vmem:[%s203 + $0x108] sm:$0xff]
      %v250 = vld [vmem:[%s203 + $0x110] sm:$0xff]
      %v251 = vld [vmem:[%s203 + $0x118] sm:$0xff]
      %v252 = vld [vmem:[%s203 + $0x120] sm:$0xff]
      %v253 = vld [vmem:[%s203 + $0x128] sm:$0xff]
      %v254 = vld [vmem:[%s203 + $0x130] sm:$0xff]
      %v255 = vld [vmem:[%s203 + $0x138] sm:$0xff]
      %v256 = vld [vmem:[%s203 + $0x140] sm:$0xff]
      %v257 = vld [vmem:[%s203 + $0x148] sm:$0xff]
      %v258 = vld [vmem:[%s203 + $0x150] sm:$0xff]
      %v259 = vld [vmem:[%s203 + $0x158] sm:$0xff]
      %v260 = vld [vmem:[%s203 + $0x160] sm:$0xff]
      %v261 = vld [vmem:[%s203 + $0x168] sm:$0xff]
      %v262 = vld [vmem:[%s203 + $0x170] sm:$0xff]
      %v263 = vld [vmem:[%s203 + $0x178] sm:$0xff]
      %v264 = vld [vmem:[%s203 + $0x180] sm:$0xff]
      %v265 = vld [vmem:[%s203 + $0x188] sm:$0xff]
      %v266 = vld [vmem:[%s203 + $0x190] sm:$0xff]
      %v267 = vld [vmem:[%s203 + $0x198] sm:$0xff]
      %v268 = vld [vmem:[%s203 + $0x1a0] sm:$0xff]
      %v269 = vld [vmem:[%s203 + $0x1a8] sm:$0xff]
      %v270 = vld [vmem:[%s203 + $0x1b0] sm:$0xff]
      %v271 = vld [vmem:[%s203 + $0x1b8] sm:$0xff]
      %v272 = vld [vmem:[%s203 + $0x1c0] sm:$0xff]
      %v273 = vld [vmem:[%s203 + $0x1c8] sm:$0xff]
      %v274 = vld [vmem:[%s203 + $0x1d0] sm:$0xff]
      %v275 = vld [vmem:[%s203 + $0x1d8] sm:$0xff]
      %v276 = vld [vmem:[%s203 + $0x1e0] sm:$0xff]
      %v277 = vld [vmem:[%s203 + $0x1e8] sm:$0xff]
      %v278 = vld [vmem:[%s203 + $0x1f0] sm:$0xff]
      %v279 = vld [vmem:[%s203 + $0x1f8] sm:$0xff]
      %v280 = vld [vmem:[%s1] sm:$0xf]
      %v281 = vld [vmem:[%s1 + $0x4] sm:$0xf]
      %v282 = vld [vmem:[%s1 + $0x8] sm:$0xf]
      %v283 = vld [vmem:[%s1 + $0xc] sm:$0xf]
      %v284 = vld [vmem:[%s1 + $0x10] sm:$0xf]
      %v285 = vld [vmem:[%s1 + $0x14] sm:$0xf]
      %v286 = vld [vmem:[%s1 + $0x18] sm:$0xf]
      %v287 = vld [vmem:[%s1 + $0x1c] sm:$0xf]
      %v288 = vld [vmem:[%s1 + $0x20] sm:$0xf]
      %v289 = vld [vmem:[%s1 + $0x24] sm:$0xf]
      %v290 = vld [vmem:[%s1 + $0x28] sm:$0xf]
      %v291 = vld [vmem:[%s1 + $0x2c] sm:$0xf]
      %v292 = vld [vmem:[%s1 + $0x30] sm:$0xf]
      %v293 = vld [vmem:[%s1 + $0x34] sm:$0xf]
      %v294 = vld [vmem:[%s1 + $0x38] sm:$0xf]
      %v295 = vld [vmem:[%s1 + $0x3c] sm:$0xf]
      %v296 = vld [vmem:[%s1 + $0x40] sm:$0xf]
      %v297 = vld [vmem:[%s1 + $0x44] sm:$0xf]
      %v298 = vld [vmem:[%s1 + $0x48] sm:$0xf]
      %v299 = vld [vmem:[%s1 + $0x4c] sm:$0xf]
      %v300 = vld [vmem:[%s1 + $0x50] sm:$0xf]
      %v301 = vld [vmem:[%s1 + $0x54] sm:$0xf]
      %v302 = vld [vmem:[%s1 + $0x58] sm:$0xf]
      %v303 = vld [vmem:[%s1 + $0x5c] sm:$0xf]
      %v304 = vld [vmem:[%s1 + $0x60] sm:$0xf]
      %v305 = vld [vmem:[%s1 + $0x64] sm:$0xf]
      %v306 = vld [vmem:[%s1 + $0x68] sm:$0xf]
      %v307 = vld [vmem:[%s1 + $0x6c] sm:$0xf]
      %v308 = vld [vmem:[%s1 + $0x70] sm:$0xf]
      %v309 = vld [vmem:[%s1 + $0x74] sm:$0xf]
      %v310 = vld [vmem:[%s1 + $0x78] sm:$0xf]
      %v311 = vld [vmem:[%s1 + $0x7c] sm:$0xf]
      %v312 = vld [vmem:[%s1 + $0x80] sm:$0xf]
      %v313 = vld [vmem:[%s1 + $0x84] sm:$0xf]
      %v314 = vld [vmem:[%s1 + $0x88] sm:$0xf]
      %v315 = vld [vmem:[%s1 + $0x8c] sm:$0xf]
      %v316 = vld [vmem:[%s1 + $0x90] sm:$0xf]
      %v317 = vld [vmem:[%s1 + $0x94] sm:$0xf]
      %v318 = vld [vmem:[%s1 + $0x98] sm:$0xf]
      %v319 = vld [vmem:[%s1 + $0x9c] sm:$0xf]
      %v320 = vld [vmem:[%s1 + $0xa0] sm:$0xf]
      %v321 = vld [vmem:[%s1 + $0xa4] sm:$0xf]
      %v322 = vld [vmem:[%s1 + $0xa8] sm:$0xf]
      %v323 = vld [vmem:[%s1 + $0xac] sm:$0xf]
      %v324 = vld [vmem:[%s1 + $0xb0] sm:$0xf]
      %v325 = vld [vmem:[%s1 + $0xb4] sm:$0xf]
      %v326 = vld [vmem:[%s1 + $0xb8] sm:$0xf]
      %v327 = vld [vmem:[%s1 + $0xbc] sm:$0xf]
      %v328 = vld [vmem:[%s1 + $0xc0] sm:$0xf]
      %v329 = vld [vmem:[%s1 + $0xc4] sm:$0xf]
      %v330 = vld [vmem:[%s1 + $0xc8] sm:$0xf]
      %v331 = vld [vmem:[%s1 + $0xcc] sm:$0xf]
      %v332 = vld [vmem:[%s1 + $0xd0] sm:$0xf]
      %v333 = vld [vmem:[%s1 + $0xd4] sm:$0xf]
      %v334 = vld [vmem:[%s1 + $0xd8] sm:$0xf]
      %v335 = vld [vmem:[%s1 + $0xdc] sm:$0xf]
      %v336 = vld [vmem:[%s1 + $0xe0] sm:$0xf]
      %v337 = vld [vmem:[%s1 + $0xe4] sm:$0xf]
      %v338 = vld [vmem:[%s1 + $0xe8] sm:$0xf]
      %v339 = vld [vmem:[%s1 + $0xec] sm:$0xf]
      %v340 = vld [vmem:[%s1 + $0xf0] sm:$0xf]
      %v341 = vld [vmem:[%s1 + $0xf4] sm:$0xf]
      %v342 = vld [vmem:[%s1 + $0xf8] sm:$0xf]
      %v343 = vld [vmem:[%s1 + $0xfc] sm:$0xf]
      %v344 = vld [vmem:[%s2] sm:$0x1]
      %v346 = vlaneseq
      %v347 = vshrl.u32 %v346, 7
      %v348 = vsub.s32 0, %v347
      %v349 = vrot.slane %v344, %v348
      %v415 = vunpack.c.l.b16 %v216
      %v416 = vunpack.c.h.b16 %v216
      %v417 = vunpack.c.l.b16 %v217
      %v418 = vunpack.c.h.b16 %v217
      %v419 = vunpack.c.l.b16 %v218
      %v420 = vunpack.c.h.b16 %v218
      %v421 = vunpack.c.l.b16 %v219
      %v422 = vunpack.c.h.b16 %v219
      %v423 = vunpack.c.l.b16 %v220
      %v424 = vunpack.c.h.b16 %v220
      %v425 = vunpack.c.l.b16 %v221
      %v426 = vunpack.c.h.b16 %v221
      %v427 = vunpack.c.l.b16 %v222
      %v428 = vunpack.c.h.b16 %v222
      %v429 = vunpack.c.l.b16 %v223
      %v430 = vunpack.c.h.b16 %v223
      %v431 = vunpack.c.l.b16 %v224
      %v432 = vunpack.c.h.b16 %v224
      %v433 = vunpack.c.l.b16 %v225
      %v434 = vunpack.c.h.b16 %v225
      %v435 = vunpack.c.l.b16 %v226
      %v436 = vunpack.c.h.b16 %v226
      %v437 = vunpack.c.l.b16 %v227
      %v438 = vunpack.c.h.b16 %v227
      %v439 = vunpack.c.l.b16 %v228
      %v440 = vunpack.c.h.b16 %v228
      %v441 = vunpack.c.l.b16 %v229
      %v442 = vunpack.c.h.b16 %v229
      %v443 = vunpack.c.l.b16 %v230
      %v444 = vunpack.c.h.b16 %v230
      %v445 = vunpack.c.l.b16 %v231
      %v446 = vunpack.c.h.b16 %v231
      %v447 = vunpack.c.l.b16 %v232
      %v448 = vunpack.c.h.b16 %v232
      %v449 = vunpack.c.l.b16 %v233
      %v450 = vunpack.c.h.b16 %v233
      %v451 = vunpack.c.l.b16 %v234
      %v452 = vunpack.c.h.b16 %v234
      %v453 = vunpack.c.l.b16 %v235
      %v454 = vunpack.c.h.b16 %v235
      %v455 = vunpack.c.l.b16 %v236
      %v456 = vunpack.c.h.b16 %v236
      %v457 = vunpack.c.l.b16 %v237
      %v458 = vunpack.c.h.b16 %v237
      %v459 = vunpack.c.l.b16 %v238
      %v460 = vunpack.c.h.b16 %v238
      %v461 = vunpack.c.l.b16 %v239
      %v462 = vunpack.c.h.b16 %v239
      %v463 = vunpack.c.l.b16 %v240
      %v464 = vunpack.c.h.b16 %v240
      %v465 = vunpack.c.l.b16 %v241
      %v466 = vunpack.c.h.b16 %v241
      %v467 = vunpack.c.l.b16 %v242
      %v468 = vunpack.c.h.b16 %v242
      %v469 = vunpack.c.l.b16 %v243
      %v470 = vunpack.c.h.b16 %v243
      %v471 = vunpack.c.l.b16 %v244
      %v472 = vunpack.c.h.b16 %v244
      %v473 = vunpack.c.l.b16 %v245
      %v474 = vunpack.c.h.b16 %v245
      %v475 = vunpack.c.l.b16 %v246
      %v476 = vunpack.c.h.b16 %v246
      %v477 = vunpack.c.l.b16 %v247
      %v478 = vunpack.c.h.b16 %v247
      %v479 = vunpack.c.l.b16 %v248
      %v480 = vunpack.c.h.b16 %v248
      %v481 = vunpack.c.l.b16 %v249
      %v482 = vunpack.c.h.b16 %v249
      %v483 = vunpack.c.l.b16 %v250
      %v484 = vunpack.c.h.b16 %v250
      %v485 = vunpack.c.l.b16 %v251
      %v486 = vunpack.c.h.b16 %v251
      %v487 = vunpack.c.l.b16 %v252
      %v488 = vunpack.c.h.b16 %v252
      %v489 = vunpack.c.l.b16 %v253
      %v490 = vunpack.c.h.b16 %v253
      %v491 = vunpack.c.l.b16 %v254
      %v492 = vunpack.c.h.b16 %v254
      %v493 = vunpack.c.l.b16 %v255
      %v494 = vunpack.c.h.b16 %v255
      %v495 = vunpack.c.l.b16 %v256
      %v496 = vunpack.c.h.b16 %v256
      %v497 = vunpack.c.l.b16 %v257
      %v498 = vunpack.c.h.b16 %v257
      %v499 = vunpack.c.l.b16 %v258
      %v500 = vunpack.c.h.b16 %v258
      %v501 = vunpack.c.l.b16 %v259
      %v502 = vunpack.c.h.b16 %v259
      %v503 = vunpack.c.l.b16 %v260
      %v504 = vunpack.c.h.b16 %v260
      %v505 = vunpack.c.l.b16 %v261
      %v506 = vunpack.c.h.b16 %v261
      %v507 = vunpack.c.l.b16 %v262
      %v508 = vunpack.c.h.b16 %v262
      %v509 = vunpack.c.l.b16 %v263
      %v510 = vunpack.c.h.b16 %v263
      %v511 = vunpack.c.l.b16 %v264
      %v512 = vunpack.c.h.b16 %v264
      %v513 = vunpack.c.l.b16 %v265
      %v514 = vunpack.c.h.b16 %v265
      %v515 = vunpack.c.l.b16 %v266
      %v516 = vunpack.c.h.b16 %v266
      %v517 = vunpack.c.l.b16 %v267
      %v518 = vunpack.c.h.b16 %v267
      %v519 = vunpack.c.l.b16 %v268
      %v520 = vunpack.c.h.b16 %v268
      %v521 = vunpack.c.l.b16 %v269
      %v522 = vunpack.c.h.b16 %v269
      %v523 = vunpack.c.l.b16 %v270
      %v524 = vunpack.c.h.b16 %v270
      %v525 = vunpack.c.l.b16 %v271
      %v526 = vunpack.c.h.b16 %v271
      %v527 = vunpack.c.l.b16 %v272
      %v528 = vunpack.c.h.b16 %v272
      %v529 = vunpack.c.l.b16 %v273
      %v530 = vunpack.c.h.b16 %v273
      %v531 = vunpack.c.l.b16 %v274
      %v532 = vunpack.c.h.b16 %v274
      %v533 = vunpack.c.l.b16 %v275
      %v534 = vunpack.c.h.b16 %v275
      %v535 = vunpack.c.l.b16 %v276
      %v536 = vunpack.c.h.b16 %v276
      %v537 = vunpack.c.l.b16 %v277
      %v538 = vunpack.c.h.b16 %v277
      %v539 = vunpack.c.l.b16 %v278
      %v540 = vunpack.c.h.b16 %v278
      %v541 = vunpack.c.l.b16 %v279
      %v542 = vunpack.c.h.b16 %v279
      %v543 = vpack.c.b16 %v419, %v415
      %v544 = vpack.c.b16 %v420, %v416
      %v545 = vpack.c.b16 %v421, %v417
      %v546 = vpack.c.b16 %v422, %v418
      %v547 = vpack.c.b16 %v427, %v423
      %v548 = vpack.c.b16 %v428, %v424
      %v549 = vpack.c.b16 %v429, %v425
      %v550 = vpack.c.b16 %v430, %v426
      %v551 = vpack.c.b16 %v435, %v431
      %v552 = vpack.c.b16 %v436, %v432
      %v553 = vpack.c.b16 %v437, %v433
      %v554 = vpack.c.b16 %v438, %v434
      %v555 = vpack.c.b16 %v443, %v439
      %v556 = vpack.c.b16 %v444, %v440
      %v557 = vpack.c.b16 %v445, %v441
      %v558 = vpack.c.b16 %v446, %v442
      %v559 = vpack.c.b16 %v451, %v447
      %v560 = vpack.c.b16 %v452, %v448
      %v561 = vpack.c.b16 %v453, %v449
      %v562 = vpack.c.b16 %v454, %v450
      %v563 = vpack.c.b16 %v459, %v455
      %v564 = vpack.c.b16 %v460, %v456
      %v565 = vpack.c.b16 %v461, %v457
      %v566 = vpack.c.b16 %v462, %v458
      %v567 = vpack.c.b16 %v467, %v463
      %v568 = vpack.c.b16 %v468, %v464
      %v569 = vpack.c.b16 %v469, %v465
      %v570 = vpack.c.b16 %v470, %v466
      %v571 = vpack.c.b16 %v475, %v471
      %v572 = vpack.c.b16 %v476, %v472
      %v573 = vpack.c.b16 %v477, %v473
      %v574 = vpack.c.b16 %v478, %v474
      %v575 = vpack.c.b16 %v483, %v479
      %v576 = vpack.c.b16 %v484, %v480
      %v577 = vpack.c.b16 %v485, %v481
      %v578 = vpack.c.b16 %v486, %v482
      %v579 = vpack.c.b16 %v491, %v487
      %v580 = vpack.c.b16 %v492, %v488
      %v581 = vpack.c.b16 %v493, %v489
      %v582 = vpack.c.b16 %v494, %v490
      %v583 = vpack.c.b16 %v499, %v495
      %v584 = vpack.c.b16 %v500, %v496
      %v585 = vpack.c.b16 %v501, %v497
      %v586 = vpack.c.b16 %v502, %v498
      %v587 = vpack.c.b16 %v507, %v503
      %v588 = vpack.c.b16 %v508, %v504
      %v589 = vpack.c.b16 %v509, %v505
      %v590 = vpack.c.b16 %v510, %v506
      %v591 = vpack.c.b16 %v515, %v511
      %v592 = vpack.c.b16 %v516, %v512
      %v593 = vpack.c.b16 %v517, %v513
      %v594 = vpack.c.b16 %v518, %v514
      %v595 = vpack.c.b16 %v523, %v519
      %v596 = vpack.c.b16 %v524, %v520
      %v597 = vpack.c.b16 %v525, %v521
      %v598 = vpack.c.b16 %v526, %v522
      %v599 = vpack.c.b16 %v531, %v527
      %v600 = vpack.c.b16 %v532, %v528
      %v601 = vpack.c.b16 %v533, %v529
      %v602 = vpack.c.b16 %v534, %v530
      %v603 = vpack.c.b16 %v539, %v535
      %v604 = vpack.c.b16 %v540, %v536
      %v605 = vpack.c.b16 %v541, %v537
      %v606 = vpack.c.b16 %v542, %v538
      %v735 = vunpack.c.l.b16 %v280
      %v736 = vunpack.c.l.b16 %v281
      %v737 = vunpack.c.l.b16 %v282
      %v738 = vunpack.c.l.b16 %v283
      %v739 = vunpack.c.l.b16 %v284
      %v740 = vunpack.c.l.b16 %v285
      %v741 = vunpack.c.l.b16 %v286
      %v742 = vunpack.c.l.b16 %v287
      %v743 = vunpack.c.l.b16 %v288
      %v744 = vunpack.c.l.b16 %v289
      %v745 = vunpack.c.l.b16 %v290
      %v746 = vunpack.c.l.b16 %v291
      %v747 = vunpack.c.l.b16 %v292
      %v748 = vunpack.c.l.b16 %v293
      %v749 = vunpack.c.l.b16 %v294
      %v750 = vunpack.c.l.b16 %v295
      %v751 = vunpack.c.l.b16 %v296
      %v752 = vunpack.c.l.b16 %v297
      %v753 = vunpack.c.l.b16 %v298
      %v754 = vunpack.c.l.b16 %v299
      %v755 = vunpack.c.l.b16 %v300
      %v756 = vunpack.c.l.b16 %v301
      %v757 = vunpack.c.l.b16 %v302
      %v758 = vunpack.c.l.b16 %v303
      %v759 = vunpack.c.l.b16 %v304
      %v760 = vunpack.c.l.b16 %v305
      %v761 = vunpack.c.l.b16 %v306
      %v762 = vunpack.c.l.b16 %v307
      %v763 = vunpack.c.l.b16 %v308
      %v764 = vunpack.c.l.b16 %v309
      %v765 = vunpack.c.l.b16 %v310
      %v766 = vunpack.c.l.b16 %v311
      %v767 = vunpack.c.l.b16 %v312
      %v768 = vunpack.c.l.b16 %v313
      %v769 = vunpack.c.l.b16 %v314
      %v770 = vunpack.c.l.b16 %v315
      %v771 = vunpack.c.l.b16 %v316
      %v772 = vunpack.c.l.b16 %v317
      %v773 = vunpack.c.l.b16 %v318
      %v774 = vunpack.c.l.b16 %v319
      %v775 = vunpack.c.l.b16 %v320
      %v776 = vunpack.c.l.b16 %v321
      %v777 = vunpack.c.l.b16 %v322
      %v778 = vunpack.c.l.b16 %v323
      %v779 = vunpack.c.l.b16 %v324
      %v780 = vunpack.c.l.b16 %v325
      %v781 = vunpack.c.l.b16 %v326
      %v782 = vunpack.c.l.b16 %v327
      %v783 = vunpack.c.l.b16 %v328
      %v784 = vunpack.c.l.b16 %v329
      %v785 = vunpack.c.l.b16 %v330
      %v786 = vunpack.c.l.b16 %v331
      %v787 = vunpack.c.l.b16 %v332
      %v788 = vunpack.c.l.b16 %v333
      %v789 = vunpack.c.l.b16 %v334
      %v790 = vunpack.c.l.b16 %v335
      %v791 = vunpack.c.l.b16 %v336
      %v792 = vunpack.c.l.b16 %v337
      %v793 = vunpack.c.l.b16 %v338
      %v794 = vunpack.c.l.b16 %v339
      %v795 = vunpack.c.l.b16 %v340
      %v796 = vunpack.c.l.b16 %v341
      %v797 = vunpack.c.l.b16 %v342
      %v798 = vunpack.c.l.b16 %v343
      %v799 = vpack.c.b16 %v736, %v735
      %v800 = vpack.c.b16 %v738, %v737
      %v801 = vpack.c.b16 %v740, %v739
      %v802 = vpack.c.b16 %v742, %v741
      %v803 = vpack.c.b16 %v744, %v743
      %v804 = vpack.c.b16 %v746, %v745
      %v805 = vpack.c.b16 %v748, %v747
      %v806 = vpack.c.b16 %v750, %v749
      %v807 = vpack.c.b16 %v752, %v751
      %v808 = vpack.c.b16 %v754, %v753
      %v809 = vpack.c.b16 %v756, %v755
      %v810 = vpack.c.b16 %v758, %v757
      %v811 = vpack.c.b16 %v760, %v759
      %v812 = vpack.c.b16 %v762, %v761
      %v813 = vpack.c.b16 %v764, %v763
      %v814 = vpack.c.b16 %v766, %v765
      %v815 = vpack.c.b16 %v768, %v767
      %v816 = vpack.c.b16 %v770, %v769
      %v817 = vpack.c.b16 %v772, %v771
      %v818 = vpack.c.b16 %v774, %v773
      %v819 = vpack.c.b16 %v776, %v775
      %v820 = vpack.c.b16 %v778, %v777
      %v821 = vpack.c.b16 %v780, %v779
      %v822 = vpack.c.b16 %v782, %v781
      %v823 = vpack.c.b16 %v784, %v783
      %v824 = vpack.c.b16 %v786, %v785
      %v825 = vpack.c.b16 %v788, %v787
      %v826 = vpack.c.b16 %v790, %v789
      %v827 = vpack.c.b16 %v792, %v791
      %v828 = vpack.c.b16 %v794, %v793
      %v829 = vpack.c.b16 %v796, %v795
      %v830 = vpack.c.b16 %v798, %v797
      %863 = vmatprep.subr.bf16.mxu0 0
      %864 = vmatpush1.bf16.msra.mxu0 %v799
      %865 = vmatprep.subr.bf16.mxu0 0
      %866 = vmatpush1.bf16.msra.mxu0 %v800
      %867 = vmatprep.subr.bf16.mxu0 0
      %868 = vmatpush1.bf16.msra.mxu0 %v801
      %869 = vmatprep.subr.bf16.mxu0 0
      %870 = vmatpush1.bf16.msra.mxu0 %v802
      %871 = vmatprep.subr.bf16.mxu0 0
      %872 = vmatpush1.bf16.msra.mxu0 %v803
      %873 = vmatprep.subr.bf16.mxu0 0
      %874 = vmatpush1.bf16.msra.mxu0 %v804
      %875 = vmatprep.subr.bf16.mxu0 0
      %876 = vmatpush1.bf16.msra.mxu0 %v805
      %877 = vmatprep.subr.bf16.mxu0 0
      %878 = vmatpush1.bf16.msra.mxu0 %v806
      %879 = vmatprep.subr.bf16.mxu0 0
      %880 = vmatpush1.bf16.msra.mxu0 %v807
      %881 = vmatprep.subr.bf16.mxu0 0
      %882 = vmatpush1.bf16.msra.mxu0 %v808
      %883 = vmatprep.subr.bf16.mxu0 0
      %884 = vmatpush1.bf16.msra.mxu0 %v809
      %885 = vmatprep.subr.bf16.mxu0 0
      %886 = vmatpush1.bf16.msra.mxu0 %v810
      %887 = vmatprep.subr.bf16.mxu0 0
      %888 = vmatpush1.bf16.msra.mxu0 %v811
      %889 = vmatprep.subr.bf16.mxu0 0
      %890 = vmatpush1.bf16.msra.mxu0 %v812
      %891 = vmatprep.subr.bf16.mxu0 0
      %892 = vmatpush1.bf16.msra.mxu0 %v813
      %893 = vmatprep.subr.bf16.mxu0 0
      %894 = vmatpush1.bf16.msra.mxu0 %v814
      %895 = vmatprep.mubr.bf16.mxu0 %v544
      %896 = vmatmul.mubr.bf16.gmra.mrb[0].mxu0 %v543
      %v897 = vpop.f32.mrb[0].mxu0
      %v898 = vadd.f32 %v349, %v897
      %v899 = vpop.f32.mrb[0].mxu0
      %v900 = vpop.f32.mrb[0].mxu0
      %v901 = vadd.f32 %v349, %v900
      %v902 = vpop.f32.mrb[0].mxu0
      %903 = vmatprep.mubr.bf16.mxu0 %v548
      %904 = vmatmul.mubr.bf16.gmra.mrb[0].mxu0 %v547
      %v905 = vpop.f32.mrb[0].mxu0
      %v906 = vadd.f32 %v349, %v905
      %v907 = vpop.f32.mrb[0].mxu0
      %v908 = vpop.f32.mrb[0].mxu0
      %v909 = vadd.f32 %v349, %v908
      %v910 = vpop.f32.mrb[0].mxu0
      %911 = vmatprep.mubr.bf16.mxu0 %v552
      %912 = vmatmul.mubr.bf16.gmra.mrb[0].mxu0 %v551
      %v913 = vpop.f32.mrb[0].mxu0
      %v914 = vadd.f32 %v349, %v913
      %v915 = vpop.f32.mrb[0].mxu0
      %v916 = vpop.f32.mrb[0].mxu0
      %v917 = vadd.f32 %v349, %v916
      %v918 = vpop.f32.mrb[0].mxu0
      %919 = vmatprep.mubr.bf16.mxu0 %v556
      %920 = vmatmul.mubr.bf16.gmra.mrb[0].mxu0 %v555
      %v921 = vpop.f32.mrb[0].mxu0
      %v922 = vadd.f32 %v349, %v921
      %v923 = vpop.f32.mrb[0].mxu0
      %v924 = vpop.f32.mrb[0].mxu0
      %v925 = vadd.f32 %v349, %v924
      %v926 = vpop.f32.mrb[0].mxu0
      %927 = vmatprep.mubr.bf16.mxu0 %v560
      %928 = vmatmul.mubr.bf16.gmra.mrb[0].mxu0 %v559
      %v929 = vpop.f32.mrb[0].mxu0
      %v930 = vadd.f32 %v349, %v929
      %v931 = vpop.f32.mrb[0].mxu0
      %v932 = vpop.f32.mrb[0].mxu0
      %v933 = vadd.f32 %v349, %v932
      %v934 = vpop.f32.mrb[0].mxu0
      %935 = vmatprep.mubr.bf16.mxu0 %v564
      %936 = vmatmul.mubr.bf16.gmra.mrb[0].mxu0 %v563
      %v937 = vpop.f32.mrb[0].mxu0
      %v938 = vadd.f32 %v349, %v937
      %v939 = vpop.f32.mrb[0].mxu0
      %v940 = vpop.f32.mrb[0].mxu0
      %v941 = vadd.f32 %v349, %v940
      %v942 = vpop.f32.mrb[0].mxu0
      %943 = vmatprep.mubr.bf16.mxu0 %v568
      %944 = vmatmul.mubr.bf16.gmra.mrb[0].mxu0 %v567
      %v945 = vpop.f32.mrb[0].mxu0
      %v946 = vadd.f32 %v349, %v945
      %v947 = vpop.f32.mrb[0].mxu0
      %v948 = vpop.f32.mrb[0].mxu0
      %v949 = vadd.f32 %v349, %v948
      %v950 = vpop.f32.mrb[0].mxu0
      %951 = vmatprep.mubr.bf16.mxu0 %v572
      %952 = vmatmul.mubr.bf16.gmra.mrb[0].mxu0 %v571
      %v953 = vpop.f32.mrb[0].mxu0
      %v954 = vadd.f32 %v349, %v953
      %v955 = vpop.f32.mrb[0].mxu0
      %v956 = vpop.f32.mrb[0].mxu0
      %v957 = vadd.f32 %v349, %v956
      %v958 = vpop.f32.mrb[0].mxu0
      %959 = vmatprep.mubr.bf16.mxu0 %v576
      %960 = vmatmul.mubr.bf16.gmra.mrb[0].mxu0 %v575
      %v961 = vpop.f32.mrb[0].mxu0
      %v962 = vadd.f32 %v349, %v961
      %v963 = vpop.f32.mrb[0].mxu0
      %v964 = vpop.f32.mrb[0].mxu0
      %v965 = vadd.f32 %v349, %v964
      %v966 = vpop.f32.mrb[0].mxu0
      %967 = vmatprep.mubr.bf16.mxu0 %v580
      %968 = vmatmul.mubr.bf16.gmra.mrb[0].mxu0 %v579
      %v969 = vpop.f32.mrb[0].mxu0
      %v970 = vadd.f32 %v349, %v969
      %v971 = vpop.f32.mrb[0].mxu0
      %v972 = vpop.f32.mrb[0].mxu0
      %v973 = vadd.f32 %v349, %v972
      %v974 = vpop.f32.mrb[0].mxu0
      %975 = vmatprep.mubr.bf16.mxu0 %v584
      %976 = vmatmul.mubr.bf16.gmra.mrb[0].mxu0 %v583
      %v977 = vpop.f32.mrb[0].mxu0
      %v978 = vadd.f32 %v349, %v977
      %v979 = vpop.f32.mrb[0].mxu0
      %v980 = vpop.f32.mrb[0].mxu0
      %v981 = vadd.f32 %v349, %v980
      %v982 = vpop.f32.mrb[0].mxu0
      %983 = vmatprep.mubr.bf16.mxu0 %v588
      %984 = vmatmul.mubr.bf16.gmra.mrb[0].mxu0 %v587
      %v985 = vpop.f32.mrb[0].mxu0
      %v986 = vadd.f32 %v349, %v985
      %v987 = vpop.f32.mrb[0].mxu0
      %v988 = vpop.f32.mrb[0].mxu0
      %v989 = vadd.f32 %v349, %v988
      %v990 = vpop.f32.mrb[0].mxu0
      %991 = vmatprep.mubr.bf16.mxu0 %v592
      %992 = vmatmul.mubr.bf16.gmra.mrb[0].mxu0 %v591
      %v993 = vpop.f32.mrb[0].mxu0
      %v994 = vadd.f32 %v349, %v993
      %v995 = vpop.f32.mrb[0].mxu0
      %v996 = vpop.f32.mrb[0].mxu0
      %v997 = vadd.f32 %v349, %v996
      %v998 = vpop.f32.mrb[0].mxu0
      %999 = vmatprep.mubr.bf16.mxu0 %v596
      %1000 = vmatmul.mubr.bf16.gmra.mrb[0].mxu0 %v595
      %v1001 = vpop.f32.mrb[0].mxu0
      %v1002 = vadd.f32 %v349, %v1001
      %v1003 = vpop.f32.mrb[0].mxu0
      %v1004 = vpop.f32.mrb[0].mxu0
      %v1005 = vadd.f32 %v349, %v1004
      %v1006 = vpop.f32.mrb[0].mxu0
      %1007 = vmatprep.mubr.bf16.mxu0 %v600
      %1008 = vmatmul.mubr.bf16.gmra.mrb[0].mxu0 %v599
      %v1009 = vpop.f32.mrb[0].mxu0
      %v1010 = vadd.f32 %v349, %v1009
      %v1011 = vpop.f32.mrb[0].mxu0
      %v1012 = vpop.f32.mrb[0].mxu0
      %v1013 = vadd.f32 %v349, %v1012
      %v1014 = vpop.f32.mrb[0].mxu0
      %1015 = vmatprep.mubr.bf16.mxu0 %v604
      %1016 = vmatmul.mubr.bf16.gmra.mrb[0].mxu0 %v603
      %v1017 = vpop.f32.mrb[0].mxu0
      %v1018 = vadd.f32 %v349, %v1017
      %v1019 = vpop.f32.mrb[0].mxu0
      %v1020 = vpop.f32.mrb[0].mxu0
      %v1021 = vadd.f32 %v349, %v1020
      %v1022 = vpop.f32.mrb[0].mxu0
      %1023 = vdwg.mxu0
      %1024 = vmatprep.subr.bf16.mxu0 0
      %1025 = vmatpush1.bf16.msra.mxu0 %v815
      %1026 = vmatprep.subr.bf16.mxu0 0
      %1027 = vmatpush1.bf16.msra.mxu0 %v816
      %1028 = vmatprep.subr.bf16.mxu0 0
      %1029 = vmatpush1.bf16.msra.mxu0 %v817
      %1030 = vmatprep.subr.bf16.mxu0 0
      %1031 = vmatpush1.bf16.msra.mxu0 %v818
      %1032 = vmatprep.subr.bf16.mxu0 0
      %1033 = vmatpush1.bf16.msra.mxu0 %v819
      %1034 = vmatprep.subr.bf16.mxu0 0
      %1035 = vmatpush1.bf16.msra.mxu0 %v820
      %1036 = vmatprep.subr.bf16.mxu0 0
      %1037 = vmatpush1.bf16.msra.mxu0 %v821
      %1038 = vmatprep.subr.bf16.mxu0 0
      %1039 = vmatpush1.bf16.msra.mxu0 %v822
      %1040 = vmatprep.subr.bf16.mxu0 0
      %1041 = vmatpush1.bf16.msra.mxu0 %v823
      %1042 = vmatprep.subr.bf16.mxu0 0
      %1043 = vmatpush1.bf16.msra.mxu0 %v824
      %1044 = vmatprep.subr.bf16.mxu0 0
      %1045 = vmatpush1.bf16.msra.mxu0 %v825
      %1046 = vmatprep.subr.bf16.mxu0 0
      %1047 = vmatpush1.bf16.msra.mxu0 %v826
      %1048 = vmatprep.subr.bf16.mxu0 0
      %1049 = vmatpush1.bf16.msra.mxu0 %v827
      %1050 = vmatprep.subr.bf16.mxu0 0
      %1051 = vmatpush1.bf16.msra.mxu0 %v828
      %1052 = vmatprep.subr.bf16.mxu0 0
      %1053 = vmatpush1.bf16.msra.mxu0 %v829
      %1054 = vmatprep.subr.bf16.mxu0 0
      %1055 = vmatpush1.bf16.msra.mxu0 %v830
      %1056 = vmatprep.mubr.bf16.mxu0 %v546
      %1057 = vmatmul.mubr.bf16.gmra.mrb[0].mxu0 %v545
      %v1058 = vpop.f32.mrb[0].mxu0
      %v1059 = vadd.f32 %v898, %v1058
      %v1060 = vpop.f32.mrb[0].mxu0
      %v1061 = vpop.f32.mrb[0].mxu0
      %v1062 = vadd.f32 %v901, %v1061
      %v1063 = vpop.f32.mrb[0].mxu0
      %1064 = vmatprep.mubr.bf16.mxu0 %v550
      %1065 = vmatmul.mubr.bf16.gmra.mrb[0].mxu0 %v549
      %v1066 = vpop.f32.mrb[0].mxu0
      %v1067 = vadd.f32 %v906, %v1066
      %v1068 = vpop.f32.mrb[0].mxu0
      %v1069 = vpop.f32.mrb[0].mxu0
      %v1070 = vadd.f32 %v909, %v1069
      %v1071 = vpop.f32.mrb[0].mxu0
      %1072 = vmatprep.mubr.bf16.mxu0 %v554
      %1073 = vmatmul.mubr.bf16.gmra.mrb[0].mxu0 %v553
      %v1074 = vpop.f32.mrb[0].mxu0
      %v1075 = vadd.f32 %v914, %v1074
      %v1076 = vpop.f32.mrb[0].mxu0
      %v1077 = vpop.f32.mrb[0].mxu0
      %v1078 = vadd.f32 %v917, %v1077
      %v1079 = vpop.f32.mrb[0].mxu0
      %1080 = vmatprep.mubr.bf16.mxu0 %v558
      %1081 = vmatmul.mubr.bf16.gmra.mrb[0].mxu0 %v557
      %v1082 = vpop.f32.mrb[0].mxu0
      %v1083 = vadd.f32 %v922, %v1082
      %v1084 = vpop.f32.mrb[0].mxu0
      %v1085 = vpop.f32.mrb[0].mxu0
      %v1086 = vadd.f32 %v925, %v1085
      %v1087 = vpop.f32.mrb[0].mxu0
      %1088 = vmatprep.mubr.bf16.mxu0 %v562
      %1089 = vmatmul.mubr.bf16.gmra.mrb[0].mxu0 %v561
      %v1090 = vpop.f32.mrb[0].mxu0
      %v1091 = vadd.f32 %v930, %v1090
      %v1092 = vpop.f32.mrb[0].mxu0
      %v1093 = vpop.f32.mrb[0].mxu0
      %v1094 = vadd.f32 %v933, %v1093
      %v1095 = vpop.f32.mrb[0].mxu0
      %1096 = vmatprep.mubr.bf16.mxu0 %v566
      %1097 = vmatmul.mubr.bf16.gmra.mrb[0].mxu0 %v565
      %v1098 = vpop.f32.mrb[0].mxu0
      %v1099 = vadd.f32 %v938, %v1098
      %v1100 = vpop.f32.mrb[0].mxu0
      %v1101 = vpop.f32.mrb[0].mxu0
      %v1102 = vadd.f32 %v941, %v1101
      %v1103 = vpop.f32.mrb[0].mxu0
      %1104 = vmatprep.mubr.bf16.mxu0 %v570
      %1105 = vmatmul.mubr.bf16.gmra.mrb[0].mxu0 %v569
      %v1106 = vpop.f32.mrb[0].mxu0
      %v1107 = vadd.f32 %v946, %v1106
      %v1108 = vpop.f32.mrb[0].mxu0
      %v1109 = vpop.f32.mrb[0].mxu0
      %v1110 = vadd.f32 %v949, %v1109
      %v1111 = vpop.f32.mrb[0].mxu0
      %1112 = vmatprep.mubr.bf16.mxu0 %v574
      %1113 = vmatmul.mubr.bf16.gmra.mrb[0].mxu0 %v573
      %v1114 = vpop.f32.mrb[0].mxu0
      %v1115 = vadd.f32 %v954, %v1114
      %v1116 = vpop.f32.mrb[0].mxu0
      %v1117 = vpop.f32.mrb[0].mxu0
      %v1118 = vadd.f32 %v957, %v1117
      %v1119 = vpop.f32.mrb[0].mxu0
      %1120 = vmatprep.mubr.bf16.mxu0 %v578
      %1121 = vmatmul.mubr.bf16.gmra.mrb[0].mxu0 %v577
      %v1122 = vpop.f32.mrb[0].mxu0
      %v1123 = vadd.f32 %v962, %v1122
      %v1124 = vpop.f32.mrb[0].mxu0
      %v1125 = vpop.f32.mrb[0].mxu0
      %v1126 = vadd.f32 %v965, %v1125
      %v1127 = vpop.f32.mrb[0].mxu0
      %1128 = vmatprep.mubr.bf16.mxu0 %v582
      %1129 = vmatmul.mubr.bf16.gmra.mrb[0].mxu0 %v581
      %v1130 = vpop.f32.mrb[0].mxu0
      %v1131 = vadd.f32 %v970, %v1130
      %v1132 = vpop.f32.mrb[0].mxu0
      %v1133 = vpop.f32.mrb[0].mxu0
      %v1134 = vadd.f32 %v973, %v1133
      %v1135 = vpop.f32.mrb[0].mxu0
      %1136 = vmatprep.mubr.bf16.mxu0 %v586
      %1137 = vmatmul.mubr.bf16.gmra.mrb[0].mxu0 %v585
      %v1138 = vpop.f32.mrb[0].mxu0
      %v1139 = vadd.f32 %v978, %v1138
      %v1140 = vpop.f32.mrb[0].mxu0
      %v1141 = vpop.f32.mrb[0].mxu0
      %v1142 = vadd.f32 %v981, %v1141
      %v1143 = vpop.f32.mrb[0].mxu0
      %1144 = vmatprep.mubr.bf16.mxu0 %v590
      %1145 = vmatmul.mubr.bf16.gmra.mrb[0].mxu0 %v589
      %v1146 = vpop.f32.mrb[0].mxu0
      %v1147 = vadd.f32 %v986, %v1146
      %v1148 = vpop.f32.mrb[0].mxu0
      %v1149 = vpop.f32.mrb[0].mxu0
      %v1150 = vadd.f32 %v989, %v1149
      %v1151 = vpop.f32.mrb[0].mxu0
      %1152 = vmatprep.mubr.bf16.mxu0 %v594
      %1153 = vmatmul.mubr.bf16.gmra.mrb[0].mxu0 %v593
      %v1154 = vpop.f32.mrb[0].mxu0
      %v1155 = vadd.f32 %v994, %v1154
      %v1156 = vpop.f32.mrb[0].mxu0
      %v1157 = vpop.f32.mrb[0].mxu0
      %v1158 = vadd.f32 %v997, %v1157
      %v1159 = vpop.f32.mrb[0].mxu0
      %1160 = vmatprep.mubr.bf16.mxu0 %v598
      %1161 = vmatmul.mubr.bf16.gmra.mrb[0].mxu0 %v597
      %v1162 = vpop.f32.mrb[0].mxu0
      %v1163 = vadd.f32 %v1002, %v1162
      %v1164 = vpop.f32.mrb[0].mxu0
      %v1165 = vpop.f32.mrb[0].mxu0
      %v1166 = vadd.f32 %v1005, %v1165
      %v1167 = vpop.f32.mrb[0].mxu0
      %1168 = vmatprep.mubr.bf16.mxu0 %v602
      %1169 = vmatmul.mubr.bf16.gmra.mrb[0].mxu0 %v601
      %v1170 = vpop.f32.mrb[0].mxu0
      %v1171 = vadd.f32 %v1010, %v1170
      %v1172 = vpop.f32.mrb[0].mxu0
      %v1173 = vpop.f32.mrb[0].mxu0
      %v1174 = vadd.f32 %v1013, %v1173
      %v1175 = vpop.f32.mrb[0].mxu0
      %1176 = vmatprep.mubr.bf16.mxu0 %v606
      %1177 = vmatmul.mubr.bf16.gmra.mrb[0].mxu0 %v605
      %v1178 = vpop.f32.mrb[0].mxu0
      %v1179 = vadd.f32 %v1018, %v1178
      %v1180 = vpop.f32.mrb[0].mxu0
      %v1181 = vpop.f32.mrb[0].mxu0
      %v1182 = vadd.f32 %v1021, %v1181
      %v1183 = vpop.f32.mrb[0].mxu0
      %1184 = vdwg.mxu0
      %v1185 = vxor.u32 %v1059, 2147483648
      %v1186 = vxor.u32 %v1062, 2147483648
      %v1187 = vxor.u32 %v1067, 2147483648
      %v1188 = vxor.u32 %v1070, 2147483648
      %v1189 = vxor.u32 %v1075, 2147483648
      %v1190 = vxor.u32 %v1078, 2147483648
      %v1191 = vxor.u32 %v1083, 2147483648
      %v1192 = vxor.u32 %v1086, 2147483648
      %v1193 = vxor.u32 %v1091, 2147483648
      %v1194 = vxor.u32 %v1094, 2147483648
      %v1195 = vxor.u32 %v1099, 2147483648
      %v1196 = vxor.u32 %v1102, 2147483648
      %v1197 = vxor.u32 %v1107, 2147483648
      %v1198 = vxor.u32 %v1110, 2147483648
      %v1199 = vxor.u32 %v1115, 2147483648
      %v1200 = vxor.u32 %v1118, 2147483648
      %v1201 = vxor.u32 %v1123, 2147483648
      %v1202 = vxor.u32 %v1126, 2147483648
      %v1203 = vxor.u32 %v1131, 2147483648
      %v1204 = vxor.u32 %v1134, 2147483648
      %v1205 = vxor.u32 %v1139, 2147483648
      %v1206 = vxor.u32 %v1142, 2147483648
      %v1207 = vxor.u32 %v1147, 2147483648
      %v1208 = vxor.u32 %v1150, 2147483648
      %v1209 = vxor.u32 %v1155, 2147483648
      %v1210 = vxor.u32 %v1158, 2147483648
      %v1211 = vxor.u32 %v1163, 2147483648
      %v1212 = vxor.u32 %v1166, 2147483648
      %v1213 = vxor.u32 %v1171, 2147483648
      %v1214 = vxor.u32 %v1174, 2147483648
      %v1215 = vxor.u32 %v1179, 2147483648
      %v1216 = vxor.u32 %v1182, 2147483648
      %v1217 = vmul.f32 %v1185, 1.442695
      %v1218 = vpow.pop %v1217
      %v1219 = vmul.f32 %v1186, 1.442695
      %v1220 = vpow.pop %v1219
      %v1221 = vmul.f32 %v1187, 1.442695
      %v1222 = vpow.pop %v1221
      %v1223 = vmul.f32 %v1188, 1.442695
      %v1224 = vpow.pop %v1223
      %v1225 = vmul.f32 %v1189, 1.442695
      %v1226 = vpow.pop %v1225
      %v1227 = vmul.f32 %v1190, 1.442695
      %v1228 = vpow.pop %v1227
      %v1229 = vmul.f32 %v1191, 1.442695
      %v1230 = vpow.pop %v1229
      %v1231 = vmul.f32 %v1192, 1.442695
      %v1232 = vpow.pop %v1231
      %v1233 = vmul.f32 %v1193, 1.442695
      %v1234 = vpow.pop %v1233
      %v1235 = vmul.f32 %v1194, 1.442695
      %v1236 = vpow.pop %v1235
      %v1237 = vmul.f32 %v1195, 1.442695
      %v1238 = vpow.pop %v1237
      %v1239 = vmul.f32 %v1196, 1.442695
      %v1240 = vpow.pop %v1239
      %v1241 = vmul.f32 %v1197, 1.442695
      %v1242 = vpow.pop %v1241
      %v1243 = vmul.f32 %v1198, 1.442695
      %v1244 = vpow.pop %v1243
      %v1245 = vmul.f32 %v1199, 1.442695
      %v1246 = vpow.pop %v1245
      %v1247 = vmul.f32 %v1200, 1.442695
      %v1248 = vpow.pop %v1247
      %v1249 = vmul.f32 %v1201, 1.442695
      %v1250 = vpow.pop %v1249
      %v1251 = vmul.f32 %v1202, 1.442695
      %v1252 = vpow.pop %v1251
      %v1253 = vmul.f32 %v1203, 1.442695
      %v1254 = vpow.pop %v1253
      %v1255 = vmul.f32 %v1204, 1.442695
      %v1256 = vpow.pop %v1255
      %v1257 = vmul.f32 %v1205, 1.442695
      %v1258 = vpow.pop %v1257
      %v1259 = vmul.f32 %v1206, 1.442695
      %v1260 = vpow.pop %v1259
      %v1261 = vmul.f32 %v1207, 1.442695
      %v1262 = vpow.pop %v1261
      %v1263 = vmul.f32 %v1208, 1.442695
      %v1264 = vpow.pop %v1263
      %v1265 = vmul.f32 %v1209, 1.442695
      %v1266 = vpow.pop %v1265
      %v1267 = vmul.f32 %v1210, 1.442695
      %v1268 = vpow.pop %v1267
      %v1269 = vmul.f32 %v1211, 1.442695
      %v1270 = vpow.pop %v1269
      %v1271 = vmul.f32 %v1212, 1.442695
      %v1272 = vpow.pop %v1271
      %v1273 = vmul.f32 %v1213, 1.442695
      %v1274 = vpow.pop %v1273
      %v1275 = vmul.f32 %v1214, 1.442695
      %v1276 = vpow.pop %v1275
      %v1277 = vmul.f32 %v1215, 1.442695
      %v1278 = vpow.pop %v1277
      %v1279 = vmul.f32 %v1216, 1.442695
      %v1280 = vpow.pop %v1279
      %v1281 = vadd.f32 %v1218, 1.0
      %v1282 = vadd.f32 %v1220, 1.0
      %v1283 = vadd.f32 %v1222, 1.0
      %v1284 = vadd.f32 %v1224, 1.0
      %v1285 = vadd.f32 %v1226, 1.0
      %v1286 = vadd.f32 %v1228, 1.0
      %v1287 = vadd.f32 %v1230, 1.0
      %v1288 = vadd.f32 %v1232, 1.0
      %v1289 = vadd.f32 %v1234, 1.0
      %v1290 = vadd.f32 %v1236, 1.0
      %v1291 = vadd.f32 %v1238, 1.0
      %v1292 = vadd.f32 %v1240, 1.0
      %v1293 = vadd.f32 %v1242, 1.0
      %v1294 = vadd.f32 %v1244, 1.0
      %v1295 = vadd.f32 %v1246, 1.0
      %v1296 = vadd.f32 %v1248, 1.0
      %v1297 = vadd.f32 %v1250, 1.0
      %v1298 = vadd.f32 %v1252, 1.0
      %v1299 = vadd.f32 %v1254, 1.0
      %v1300 = vadd.f32 %v1256, 1.0
      %v1301 = vadd.f32 %v1258, 1.0
      %v1302 = vadd.f32 %v1260, 1.0
      %v1303 = vadd.f32 %v1262, 1.0
      %v1304 = vadd.f32 %v1264, 1.0
      %v1305 = vadd.f32 %v1266, 1.0
      %v1306 = vadd.f32 %v1268, 1.0
      %v1307 = vadd.f32 %v1270, 1.0
      %v1308 = vadd.f32 %v1272, 1.0
      %v1309 = vadd.f32 %v1274, 1.0
      %v1310 = vadd.f32 %v1276, 1.0
      %v1311 = vadd.f32 %v1278, 1.0
      %v1312 = vadd.f32 %v1280, 1.0
      %v1313 = vrcp.pop %v1281
      %v1314 = vmul.f32 1.0, %v1313
      %v1315 = vrcp.pop %v1282
      %v1316 = vmul.f32 1.0, %v1315
      %v1317 = vrcp.pop %v1283
      %v1318 = vmul.f32 1.0, %v1317
      %v1319 = vrcp.pop %v1284
      %v1320 = vmul.f32 1.0, %v1319
      %v1321 = vrcp.pop %v1285
      %v1322 = vmul.f32 1.0, %v1321
      %v1323 = vrcp.pop %v1286
      %v1324 = vmul.f32 1.0, %v1323
      %v1325 = vrcp.pop %v1287
      %v1326 = vmul.f32 1.0, %v1325
      %v1327 = vrcp.pop %v1288
      %v1328 = vmul.f32 1.0, %v1327
      %v1329 = vrcp.pop %v1289
      %v1330 = vmul.f32 1.0, %v1329
      %v1331 = vrcp.pop %v1290
      %v1332 = vmul.f32 1.0, %v1331
      %v1333 = vrcp.pop %v1291
      %v1334 = vmul.f32 1.0, %v1333
      %v1335 = vrcp.pop %v1292
      %v1336 = vmul.f32 1.0, %v1335
      %v1337 = vrcp.pop %v1293
      %v1338 = vmul.f32 1.0, %v1337
      %v1339 = vrcp.pop %v1294
      %v1340 = vmul.f32 1.0, %v1339
      %v1341 = vrcp.pop %v1295
      %v1342 = vmul.f32 1.0, %v1341
      %v1343 = vrcp.pop %v1296
      %v1344 = vmul.f32 1.0, %v1343
      %v1345 = vrcp.pop %v1297
      %v1346 = vmul.f32 1.0, %v1345
      %v1347 = vrcp.pop %v1298
      %v1348 = vmul.f32 1.0, %v1347
      %v1349 = vrcp.pop %v1299
      %v1350 = vmul.f32 1.0, %v1349
      %v1351 = vrcp.pop %v1300
      %v1352 = vmul.f32 1.0, %v1351
      %v1353 = vrcp.pop %v1301
      %v1354 = vmul.f32 1.0, %v1353
      %v1355 = vrcp.pop %v1302
      %v1356 = vmul.f32 1.0, %v1355
      %v1357 = vrcp.pop %v1303
      %v1358 = vmul.f32 1.0, %v1357
      %v1359 = vrcp.pop %v1304
      %v1360 = vmul.f32 1.0, %v1359
      %v1361 = vrcp.pop %v1305
      %v1362 = vmul.f32 1.0, %v1361
      %v1363 = vrcp.pop %v1306
      %v1364 = vmul.f32 1.0, %v1363
      %v1365 = vrcp.pop %v1307
      %v1366 = vmul.f32 1.0, %v1365
      %v1367 = vrcp.pop %v1308
      %v1368 = vmul.f32 1.0, %v1367
      %v1369 = vrcp.pop %v1309
      %v1370 = vmul.f32 1.0, %v1369
      %v1371 = vrcp.pop %v1310
      %v1372 = vmul.f32 1.0, %v1371
      %v1373 = vrcp.pop %v1311
      %v1374 = vmul.f32 1.0, %v1373
      %v1375 = vrcp.pop %v1312
      %v1376 = vmul.f32 1.0, %v1375
      %v1377 = vmul.f32 %v1059, %v1314
      %v1378 = vmul.f32 %v1062, %v1316
      %v1379 = vmul.f32 %v1067, %v1318
      %v1380 = vmul.f32 %v1070, %v1320
      %v1381 = vmul.f32 %v1075, %v1322
      %v1382 = vmul.f32 %v1078, %v1324
      %v1383 = vmul.f32 %v1083, %v1326
      %v1384 = vmul.f32 %v1086, %v1328
      %v1385 = vmul.f32 %v1091, %v1330
      %v1386 = vmul.f32 %v1094, %v1332
      %v1387 = vmul.f32 %v1099, %v1334
      %v1388 = vmul.f32 %v1102, %v1336
      %v1389 = vmul.f32 %v1107, %v1338
      %v1390 = vmul.f32 %v1110, %v1340
      %v1391 = vmul.f32 %v1115, %v1342
      %v1392 = vmul.f32 %v1118, %v1344
      %v1393 = vmul.f32 %v1123, %v1346
      %v1394 = vmul.f32 %v1126, %v1348
      %v1395 = vmul.f32 %v1131, %v1350
      %v1396 = vmul.f32 %v1134, %v1352
      %v1397 = vmul.f32 %v1139, %v1354
      %v1398 = vmul.f32 %v1142, %v1356
      %v1399 = vmul.f32 %v1147, %v1358
      %v1400 = vmul.f32 %v1150, %v1360
      %v1401 = vmul.f32 %v1155, %v1362
      %v1402 = vmul.f32 %v1158, %v1364
      %v1403 = vmul.f32 %v1163, %v1366
      %v1404 = vmul.f32 %v1166, %v1368
      %v1405 = vmul.f32 %v1171, %v1370
      %v1406 = vmul.f32 %v1174, %v1372
      %v1407 = vmul.f32 %v1179, %v1374
      %v1408 = vmul.f32 %v1182, %v1376
      %v1409 = vpack.c.bf16 %v1378, %v1377
      %v1410 = vpack.c.bf16 %v1380, %v1379
      %v1411 = vpack.c.bf16 %v1382, %v1381
      %v1412 = vpack.c.bf16 %v1384, %v1383
      %v1413 = vpack.c.bf16 %v1386, %v1385
      %v1414 = vpack.c.bf16 %v1388, %v1387
      %v1415 = vpack.c.bf16 %v1390, %v1389
      %v1416 = vpack.c.bf16 %v1392, %v1391
      %v1417 = vpack.c.bf16 %v1394, %v1393
      %v1418 = vpack.c.bf16 %v1396, %v1395
      %v1419 = vpack.c.bf16 %v1398, %v1397
      %v1420 = vpack.c.bf16 %v1400, %v1399
      %v1421 = vpack.c.bf16 %v1402, %v1401
      %v1422 = vpack.c.bf16 %v1404, %v1403
      %v1423 = vpack.c.bf16 %v1406, %v1405
      %v1424 = vpack.c.bf16 %v1408, %v1407
      %v1441 = vunpack.c.l.b16 %v1409
      %v1442 = vunpack.c.h.b16 %v1409
      %v1443 = vunpack.c.l.b16 %v1410
      %v1444 = vunpack.c.h.b16 %v1410
      %v1445 = vunpack.c.l.b16 %v1411
      %v1446 = vunpack.c.h.b16 %v1411
      %v1447 = vunpack.c.l.b16 %v1412
      %v1448 = vunpack.c.h.b16 %v1412
      %v1449 = vunpack.c.l.b16 %v1413
      %v1450 = vunpack.c.h.b16 %v1413
      %v1451 = vunpack.c.l.b16 %v1414
      %v1452 = vunpack.c.h.b16 %v1414
      %v1453 = vunpack.c.l.b16 %v1415
      %v1454 = vunpack.c.h.b16 %v1415
      %v1455 = vunpack.c.l.b16 %v1416
      %v1456 = vunpack.c.h.b16 %v1416
      %v1457 = vunpack.c.l.b16 %v1417
      %v1458 = vunpack.c.h.b16 %v1417
      %v1459 = vunpack.c.l.b16 %v1418
      %v1460 = vunpack.c.h.b16 %v1418
      %v1461 = vunpack.c.l.b16 %v1419
      %v1462 = vunpack.c.h.b16 %v1419
      %v1463 = vunpack.c.l.b16 %v1420
      %v1464 = vunpack.c.h.b16 %v1420
      %v1465 = vunpack.c.l.b16 %v1421
      %v1466 = vunpack.c.h.b16 %v1421
      %v1467 = vunpack.c.l.b16 %v1422
      %v1468 = vunpack.c.h.b16 %v1422
      %v1469 = vunpack.c.l.b16 %v1423
      %v1470 = vunpack.c.h.b16 %v1423
      %v1471 = vunpack.c.l.b16 %v1424
      %v1472 = vunpack.c.h.b16 %v1424
      %v1473 = vpack.c.b16 %v1441, %v1441
      %v1474 = vpack.c.b16 %v1442, %v1442
      %v1475 = vpack.c.b16 %v1443, %v1443
      %v1476 = vpack.c.b16 %v1444, %v1444
      %v1477 = vpack.c.b16 %v1445, %v1445
      %v1478 = vpack.c.b16 %v1446, %v1446
      %v1479 = vpack.c.b16 %v1447, %v1447
      %v1480 = vpack.c.b16 %v1448, %v1448
      %v1481 = vpack.c.b16 %v1449, %v1449
      %v1482 = vpack.c.b16 %v1450, %v1450
      %v1483 = vpack.c.b16 %v1451, %v1451
      %v1484 = vpack.c.b16 %v1452, %v1452
      %v1485 = vpack.c.b16 %v1453, %v1453
      %v1486 = vpack.c.b16 %v1454, %v1454
      %v1487 = vpack.c.b16 %v1455, %v1455
      %v1488 = vpack.c.b16 %v1456, %v1456
      %v1489 = vpack.c.b16 %v1457, %v1457
      %v1490 = vpack.c.b16 %v1458, %v1458
      %v1491 = vpack.c.b16 %v1459, %v1459
      %v1492 = vpack.c.b16 %v1460, %v1460
      %v1493 = vpack.c.b16 %v1461, %v1461
      %v1494 = vpack.c.b16 %v1462, %v1462
      %v1495 = vpack.c.b16 %v1463, %v1463
      %v1496 = vpack.c.b16 %v1464, %v1464
      %v1497 = vpack.c.b16 %v1465, %v1465
      %v1498 = vpack.c.b16 %v1466, %v1466
      %v1499 = vpack.c.b16 %v1467, %v1467
      %v1500 = vpack.c.b16 %v1468, %v1468
      %v1501 = vpack.c.b16 %v1469, %v1469
      %v1502 = vpack.c.b16 %v1470, %v1470
      %v1503 = vpack.c.b16 %v1471, %v1471
      %v1504 = vpack.c.b16 %v1472, %v1472
      %1537 = vst [vmem:[%s209] sm:$0xf] %v1473
      %1538 = vst [vmem:[%s209 + $0x4] sm:$0xf] %v1474
      %1539 = vst [vmem:[%s209 + $0x8] sm:$0xf] %v1475
      %1540 = vst [vmem:[%s209 + $0xc] sm:$0xf] %v1476
      %1541 = vst [vmem:[%s209 + $0x10] sm:$0xf] %v1477
      %1542 = vst [vmem:[%s209 + $0x14] sm:$0xf] %v1478
      %1543 = vst [vmem:[%s209 + $0x18] sm:$0xf] %v1479
      %1544 = vst [vmem:[%s209 + $0x1c] sm:$0xf] %v1480
      %1545 = vst [vmem:[%s209 + $0x20] sm:$0xf] %v1481
      %1546 = vst [vmem:[%s209 + $0x24] sm:$0xf] %v1482
      %1547 = vst [vmem:[%s209 + $0x28] sm:$0xf] %v1483
      %1548 = vst [vmem:[%s209 + $0x2c] sm:$0xf] %v1484
      %1549 = vst [vmem:[%s209 + $0x30] sm:$0xf] %v1485
      %1550 = vst [vmem:[%s209 + $0x34] sm:$0xf] %v1486
      %1551 = vst [vmem:[%s209 + $0x38] sm:$0xf] %v1487
      %1552 = vst [vmem:[%s209 + $0x3c] sm:$0xf] %v1488
      %1553 = vst [vmem:[%s209 + $0x40] sm:$0xf] %v1489
      %1554 = vst [vmem:[%s209 + $0x44] sm:$0xf] %v1490
      %1555 = vst [vmem:[%s209 + $0x48] sm:$0xf] %v1491
      %1556 = vst [vmem:[%s209 + $0x4c] sm:$0xf] %v1492
      %1557 = vst [vmem:[%s209 + $0x50] sm:$0xf] %v1493
      %1558 = vst [vmem:[%s209 + $0x54] sm:$0xf] %v1494
      %1559 = vst [vmem:[%s209 + $0x58] sm:$0xf] %v1495
      %1560 = vst [vmem:[%s209 + $0x5c] sm:$0xf] %v1496
      %1561 = vst [vmem:[%s209 + $0x60] sm:$0xf] %v1497
      %1562 = vst [vmem:[%s209 + $0x64] sm:$0xf] %v1498
      %1563 = vst [vmem:[%s209 + $0x68] sm:$0xf] %v1499
      %1564 = vst [vmem:[%s209 + $0x6c] sm:$0xf] %v1500
      %1565 = vst [vmem:[%s209 + $0x70] sm:$0xf] %v1501
      %1566 = vst [vmem:[%s209 + $0x74] sm:$0xf] %v1502
      %1567 = vst [vmem:[%s209 + $0x78] sm:$0xf] %v1503
      %1568 = vst [vmem:[%s209 + $0x7c] sm:$0xf] %v1504
      %v1569 = vadd.f32 %v1377, %v1378
      %v1570 = vadd.f32 %v1569, %v1379
      %v1571 = vadd.f32 %v1570, %v1380
      %v1572 = vadd.f32 %v1571, %v1381
      %v1573 = vadd.f32 %v1572, %v1382
      %v1574 = vadd.f32 %v1573, %v1383
      %v1575 = vadd.f32 %v1574, %v1384
      %v1576 = vadd.f32 %v1575, %v1385
      %v1577 = vadd.f32 %v1576, %v1386
      %v1578 = vadd.f32 %v1577, %v1387
      %v1579 = vadd.f32 %v1578, %v1388
      %v1580 = vadd.f32 %v1579, %v1389
      %v1581 = vadd.f32 %v1580, %v1390
      %v1582 = vadd.f32 %v1581, %v1391
      %v1583 = vadd.f32 %v1582, %v1392
      %v1584 = vadd.f32 %v1583, %v1393
      %v1585 = vadd.f32 %v1584, %v1394
      %v1586 = vadd.f32 %v1585, %v1395
      %v1587 = vadd.f32 %v1586, %v1396
      %v1588 = vadd.f32 %v1587, %v1397
      %v1589 = vadd.f32 %v1588, %v1398
      %v1590 = vadd.f32 %v1589, %v1399
      %v1591 = vadd.f32 %v1590, %v1400
      %v1592 = vadd.f32 %v1591, %v1401
      %v1593 = vadd.f32 %v1592, %v1402
      %v1594 = vadd.f32 %v1593, %v1403
      %v1595 = vadd.f32 %v1594, %v1404
      %v1596 = vadd.f32 %v1595, %v1405
      %v1597 = vadd.f32 %v1596, %v1406
      %v1598 = vadd.f32 %v1597, %v1407
      %v1599 = vadd.f32 %v1598, %v1408
      %v1600 = vrot.slane %v1599, 4
      %v1601 = vadd.f32 %v1599, %v1600
      %v1602 = vrot.slane %v1601, 2
      %v1603 = vadd.f32 %v1601, %v1602
      %v1604 = vrot.slane %v1603, 1
      %v1605 = vadd.f32 %v1603, %v1604
      %1606 = vst [vmem:[%s214] sm:$0x1] %v1605
      %v1607 = vmul.f32 %v1377, %v1377
      %v1608 = vmul.f32 %v1378, %v1378
      %v1609 = vmul.f32 %v1379, %v1379
      %v1610 = vmul.f32 %v1380, %v1380
      %v1611 = vmul.f32 %v1381, %v1381
      %v1612 = vmul.f32 %v1382, %v1382
      %v1613 = vmul.f32 %v1383, %v1383
      %v1614 = vmul.f32 %v1384, %v1384
      %v1615 = vmul.f32 %v1385, %v1385
      %v1616 = vmul.f32 %v1386, %v1386
      %v1617 = vmul.f32 %v1387, %v1387
      %v1618 = vmul.f32 %v1388, %v1388
      %v1619 = vmul.f32 %v1389, %v1389
      %v1620 = vmul.f32 %v1390, %v1390
      %v1621 = vmul.f32 %v1391, %v1391
      %v1622 = vmul.f32 %v1392, %v1392
      %v1623 = vmul.f32 %v1393, %v1393
      %v1624 = vmul.f32 %v1394, %v1394
      %v1625 = vmul.f32 %v1395, %v1395
      %v1626 = vmul.f32 %v1396, %v1396
      %v1627 = vmul.f32 %v1397, %v1397
      %v1628 = vmul.f32 %v1398, %v1398
      %v1629 = vmul.f32 %v1399, %v1399
      %v1630 = vmul.f32 %v1400, %v1400
      %v1631 = vmul.f32 %v1401, %v1401
      %v1632 = vmul.f32 %v1402, %v1402
      %v1633 = vmul.f32 %v1403, %v1403
      %v1634 = vmul.f32 %v1404, %v1404
      %v1635 = vmul.f32 %v1405, %v1405
      %v1636 = vmul.f32 %v1406, %v1406
      %v1637 = vmul.f32 %v1407, %v1407
      %v1638 = vmul.f32 %v1408, %v1408
      %v1639 = vadd.f32 %v1607, %v1608
      %v1640 = vadd.f32 %v1639, %v1609
      %v1641 = vadd.f32 %v1640, %v1610
      %v1642 = vadd.f32 %v1641, %v1611
      %v1643 = vadd.f32 %v1642, %v1612
      %v1644 = vadd.f32 %v1643, %v1613
      %v1645 = vadd.f32 %v1644, %v1614
      %v1646 = vadd.f32 %v1645, %v1615
      %v1647 = vadd.f32 %v1646, %v1616
      %v1648 = vadd.f32 %v1647, %v1617
      %v1649 = vadd.f32 %v1648, %v1618
      %v1650 = vadd.f32 %v1649, %v1619
      %v1651 = vadd.f32 %v1650, %v1620
      %v1652 = vadd.f32 %v1651, %v1621
      %v1653 = vadd.f32 %v1652, %v1622
      %v1654 = vadd.f32 %v1653, %v1623
      %v1655 = vadd.f32 %v1654, %v1624
      %v1656 = vadd.f32 %v1655, %v1625
      %v1657 = vadd.f32 %v1656, %v1626
      %v1658 = vadd.f32 %v1657, %v1627
      %v1659 = vadd.f32 %v1658, %v1628
      %v1660 = vadd.f32 %v1659, %v1629
      %v1661 = vadd.f32 %v1660, %v1630
      %v1662 = vadd.f32 %v1661, %v1631
      %v1663 = vadd.f32 %v1662, %v1632
      %v1664 = vadd.f32 %v1663, %v1633
      %v1665 = vadd.f32 %v1664, %v1634
      %v1666 = vadd.f32 %v1665, %v1635
      %v1667 = vadd.f32 %v1666, %v1636
      %v1668 = vadd.f32 %v1667, %v1637
      %v1669 = vadd.f32 %v1668, %v1638
      %v1670 = vrot.slane %v1669, 4
      %v1671 = vadd.f32 %v1669, %v1670
      %v1672 = vrot.slane %v1671, 2
      %v1673 = vadd.f32 %v1671, %v1672
      %v1674 = vrot.slane %v1673, 1
      %v1675 = vadd.f32 %v1673, %v1674
      %1676 = vst [vmem:[%s214 + $0x1] sm:$0x1] %v1675
      %s1677 = smul.u32 32, %s16
      %p1678 = scmp.lt.s32.totalorder %s1677, 63
      %s1679 = scalar_select %p1678, %s1677, 63
      %s1680 = smul.addr %s1679, 4
      %s1681 = scalar_lea.vmem %s3, %s1680
      %p1682 = scmp.lt.s32.totalorder %s16, 1
      %s1683 = scalar_select %p1682, %s16, 1
      %s1684 = smul.addr %s1683, 8
      %s1685 = scalar_lea.vmem %s4, %s1684
      // Predicated region
      $region33: #{conv_encoder_forward.8} parent=31 // pred_check
        %p1686 = pneg %p102
      $region34: #{conv_encoder_forward.8} parent=31 // pred_check_branch
        %1688 = sbr.rel (%p1686) target = $region36
      $region35: #{conv_encoder_forward.8} parent=31 // pred_region
        %s1689 = smul.u32 32, %s16
      $region36: #{conv_encoder_forward.8} parent=31 // pred_fallthru
        _
      // Predicated region
      $region37: #{conv_encoder_forward.8} parent=31 // pred_check
        %p1690 = pneg %p128
      $region38: #{conv_encoder_forward.8} parent=31 // pred_check_branch
        %1692 = sbr.rel (%p1690) target = $region40
      $region39: #{conv_encoder_forward.8} parent=31 // pred_region
        _
      $region40: #{conv_encoder_forward.8} parent=31 // pred_fallthru
        _
    $region32: #{conv_encoder_forward.8} parent=5 // pred_fallthru
      _
    %p1693 = scmp.le.s32.totalorder 2, %s11
    // Predicated region
    $region41: #{conv_encoder_forward.8} parent=5 // pred_check
      %p1694 = pneg %p1693
    $region42: #{conv_encoder_forward.8} parent=5 // pred_check_branch
      %1696 = sbr.rel (%p1694) target = $region44
    $region43: #{conv_encoder_forward.8} parent=5 // pred_region
      %s1697 = ssub.s32 %s11, 2
      // Predicated region
      $region45: #{conv_encoder_forward.8} parent=43 // pred_check
        %p1698 = pneg %p108
      $region46: #{conv_encoder_forward.8} parent=43 // pred_check_branch
        %1700 = sbr.rel (%p1698) target = $region48
      $region47: #{conv_encoder_forward.8} parent=43 // pred_region
        %s1701 = smul.u32 32, %s17
        %p1702 = scmp.lt.s32.totalorder %s1701, 63
        %s1703 = scalar_select %p1702, %s1701, 63
        %s1704 = smul.addr %s1703, 4
        %s1705 = scalar_lea.vmem %s3, %s1704
      $region48: #{conv_encoder_forward.8} parent=43 // pred_fallthru
        _
      // Predicated region
      $region49: #{conv_encoder_forward.8} parent=43 // pred_check
        %p1706 = pneg %p134
      $region50: #{conv_encoder_forward.8} parent=43 // pred_check_branch
        %1708 = sbr.rel (%p1706) target = $region52
      $region51: #{conv_encoder_forward.8} parent=43 // pred_region
        %p1709 = scmp.lt.s32.totalorder %s17, 1
        %s1710 = scalar_select %p1709, %s17, 1
        %s1711 = smul.addr %s1710, 8
        %s1712 = scalar_lea.vmem %s4, %s1711
      $region52: #{conv_encoder_forward.8} parent=43 // pred_fallthru
        _
    $region44: #{conv_encoder_forward.8} parent=5 // pred_fallthru
      _
  $region6: #{conv_encoder_forward.8} parent=0 // loop_footer
    %s15 = sadd.s32 1, %s11
  $region7: #{conv_encoder_forward.8} parent=0 // loop_footer_branch
    %10 = sbr.rel target = $region3
  $region8: #{conv_encoder_forward.8} parent=0 // loop_exit
    _

// kernel: conv_encoder_forward.9
$region0: #{conv_encoder_forward.9}
  #allocation0 [shape = 'u32[]', space=smem, size = 0x4, offset = 0x4, fixed_abs, tag = 'smem constant byte address 0x4 - core index']
  #allocation1 [shape = 'u32[144,128]{1,0:T(1,128)}', space=vmem, size = 0x12000, scoped, tag = 'internal scratch']
  %s0 = inlined_call_operand.vmem [shape: bf16[128,1024], index: 0, kind: input, shape index: {}]
  %s1 = inlined_call_operand.vmem [shape: bf16[1024,128], index: 1, kind: input, shape index: {}]
  %s2 = inlined_call_operand.vmem [shape: f32[1,128], index: 2, kind: input, shape index: {}]
  %s3 = inlined_call_operand.vmem [shape: bf16[128,128], index: 3, kind: output, shape index: {0}]
  %s4 = inlined_call_operand.vmem [shape: f32[16,128], index: 4, kind: output, shape index: {1}]
  %5 = xla_tuple %s3, %s4
  %s6 = sld [smem:[#allocation0]]
  $region53: #{conv_encoder_forward.9} parent=0
    _
  %s8 = ssub.s32 1, %s6
  %s9 = scalar_select 0, %s8, %s6
  loop: start=0, step=1, limit=4
  $region2: #{conv_encoder_forward.9} parent=0 // loop_pre_header
    _
  $region3: #{conv_encoder_forward.9} parent=0 // loop_header
    %s11 = sphi 0, %s15
    %p12 = scmp.ge.s32.totalorder %s11, 4
    %s21 = sphi 0, %s23
    %s24 = sphi 0, %s21
    %s25 = sphi 0, %s24
    %s41 = sphi 0, %s25
    %s45 = sphi 0, %s45
    %s47 = sphi 0, %s45
    %s48 = sphi 0, %s47
    %s62 = sphi 0, %s48
    %s66 = sphi 0, %s66
    %s68 = sphi 0, %s66
    %s69 = sphi 0, %s68
    %s83 = sphi 0, %s69
    %s89 = sphi 0, %s91
    %s92 = sphi 0, %s89
    %s93 = sphi 0, %s92
    %s109 = sphi 0, %s93
    %s115 = sphi 0, %s117
    %s118 = sphi 0, %s115
    %s119 = sphi 0, %s118
    %s135 = sphi 0, %s119
  $region4: #{conv_encoder_forward.9} parent=0 // loop_header_branch
    %14 = sbr.rel (%p12) target = $region8
  $region5: #{conv_encoder_forward.9} parent=0 // loop_body
    %s16 = ssub.s32 %s11, 1
    %s17 = ssub.s32 %s11, 2
    %s18 = sadd.s32 %s11, 1
    %s19 = ssub.s32 %s11, %s18
    %p20 = scmp.eq.s32.totalorder %s19, 0
    %s22 = sadd.s32 %s21, 1
    %s23 = scalar_select %p20, %s21, %s22
    %p26 = pneg %p20
    %p27 = scmp.eq.s32.totalorder %s11, 1
    %p28 = por %p26, %p27
    %p29 = scmp.ne.s32.totalorder %s21, %s24
    %p30 = scmp.eq.s32.totalorder %s11, 0
    %p31 = por %p29, %p30
    %p32 = scmp.ne.s32.totalorder %s21, %s24
    %p33 = scmp.eq.s32.totalorder %s16, 1
    %p34 = por %p32, %p33
    %p35 = scmp.ne.s32.totalorder %s24, %s25
    %p36 = scmp.eq.s32.totalorder %s16, 0
    %p37 = por %p35, %p36
    %p38 = scmp.ne.s32.totalorder %s24, %s25
    %p39 = scmp.eq.s32.totalorder %s17, 1
    %p40 = por %p38, %p39
    %p42 = scmp.ne.s32.totalorder %s25, %s41
    %p43 = scmp.eq.s32.totalorder %s17, 0
    %p44 = por %p42, %p43
    %s46 = sadd.s32 %s45, 1
    %p49 = scmp.eq.s32.totalorder %s11, 1
    %p50 = scmp.ne.s32.totalorder %s45, %s47
    %p51 = scmp.eq.s32.totalorder %s11, 0
    %p52 = por %p50, %p51
    %p53 = scmp.ne.s32.totalorder %s45, %s47
    %p54 = scmp.eq.s32.totalorder %s16, 1
    %p55 = por %p53, %p54
    %p56 = scmp.ne.s32.totalorder %s47, %s48
    %p57 = scmp.eq.s32.totalorder %s16, 0
    %p58 = por %p56, %p57
    %p59 = scmp.ne.s32.totalorder %s47, %s48
    %p60 = scmp.eq.s32.totalorder %s17, 1
    %p61 = por %p59, %p60
    %p63 = scmp.ne.s32.totalorder %s48, %s62
    %p64 = scmp.eq.s32.totalorder %s17, 0
    %p65 = por %p63, %p64
    %s67 = sadd.s32 %s66, 1
    %p70 = scmp.eq.s32.totalorder %s11, 1
    %p71 = scmp.ne.s32.totalorder %s66, %s68
    %p72 = scmp.eq.s32.totalorder %s11, 0
    %p73 = por %p71, %p72
    %p74 = scmp.ne.s32.totalorder %s66, %s68
    %p75 = scmp.eq.s32.totalorder %s16, 1
    %p76 = por %p74, %p75
    %p77 = scmp.ne.s32.totalorder %s68, %s69
    %p78 = scmp.eq.s32.totalorder %s16, 0
    %p79 = por %p77, %p78
    %p80 = scmp.ne.s32.totalorder %s68, %s69
    %p81 = scmp.eq.s32.totalorder %s17, 1
    %p82 = por %p80, %p81
    %p84 = scmp.ne.s32.totalorder %s69, %s83
    %p85 = scmp.eq.s32.totalorder %s17, 0
    %p86 = por %p84, %p85
    %s87 = ssub.s32 %s11, %s18
    %p88 = scmp.eq.s32.totalorder %s87, 0
    %s90 = sadd.s32 %s89, 1
    %s91 = scalar_select %p88, %s89, %s90
    %p94 = pneg %p88
    %p95 = scmp.eq.s32.totalorder %s11, 1
    %p96 = por %p94, %p95
    %p97 = scmp.ne.s32.totalorder %s89, %s92
    %p98 = scmp.eq.s32.totalorder %s11, 0
    %p99 = por %p97, %p98
    %p100 = scmp.ne.s32.totalorder %s89, %s92
    %p101 = scmp.eq.s32.totalorder %s16, 1
    %p102 = por %p100, %p101
    %p103 = scmp.ne.s32.totalorder %s92, %s93
    %p104 = scmp.eq.s32.totalorder %s16, 0
    %p105 = por %p103, %p104
    %p106 = scmp.ne.s32.totalorder %s92, %s93
    %p107 = scmp.eq.s32.totalorder %s17, 1
    %p108 = por %p106, %p107
    %p110 = scmp.ne.s32.totalorder %s93, %s109
    %p111 = scmp.eq.s32.totalorder %s17, 0
    %p112 = por %p110, %p111
    %s113 = ssub.s32 %s11, %s18
    %p114 = scmp.eq.s32.totalorder %s113, 0
    %s116 = sadd.s32 %s115, 1
    %s117 = scalar_select %p114, %s115, %s116
    %p120 = pneg %p114
    %p121 = scmp.eq.s32.totalorder %s11, 1
    %p122 = por %p120, %p121
    %p123 = scmp.ne.s32.totalorder %s115, %s118
    %p124 = scmp.eq.s32.totalorder %s11, 0
    %p125 = por %p123, %p124
    %p126 = scmp.ne.s32.totalorder %s115, %s118
    %p127 = scmp.eq.s32.totalorder %s16, 1
    %p128 = por %p126, %p127
    %p129 = scmp.ne.s32.totalorder %s118, %s119
    %p130 = scmp.eq.s32.totalorder %s16, 0
    %p131 = por %p129, %p130
    %p132 = scmp.ne.s32.totalorder %s118, %s119
    %p133 = scmp.eq.s32.totalorder %s17, 1
    %p134 = por %p132, %p133
    %p136 = scmp.ne.s32.totalorder %s119, %s135
    %p137 = scmp.eq.s32.totalorder %s17, 0
    %p138 = por %p136, %p137
    %p139 = scmp.le.s32.totalorder 1, %s11
    %p140 = scmp.lt.s32.totalorder %s11, 3
    %p141 = pnand %p139, %p140
    %p142 = pneg %p141
    // Predicated region
    $region9: #{conv_encoder_forward.9} parent=5 // pred_check
      _
    $region10: #{conv_encoder_forward.9} parent=5 // pred_check_branch
      %144 = sbr.rel (%p141) target = $region12
    $region11: #{conv_encoder_forward.9} parent=5 // pred_region
      %s145 = ssub.s32 %s11, 1
      // Predicated region
      $region13: #{conv_encoder_forward.9} parent=11 // pred_check
        %p146 = pneg %p58
      $region14: #{conv_encoder_forward.9} parent=11 // pred_check_branch
        %148 = sbr.rel (%p146) target = $region16
      $region15: #{conv_encoder_forward.9} parent=11 // pred_region
        _
      $region16: #{conv_encoder_forward.9} parent=11 // pred_fallthru
        _
      // Predicated region
      $region17: #{conv_encoder_forward.9} parent=11 // pred_check
        %p149 = pneg %p79
      $region18: #{conv_encoder_forward.9} parent=11 // pred_check_branch
        %151 = sbr.rel (%p149) target = $region20
      $region19: #{conv_encoder_forward.9} parent=11 // pred_region
        _
      $region20: #{conv_encoder_forward.9} parent=11 // pred_fallthru
        _
    $region12: #{conv_encoder_forward.9} parent=5 // pred_fallthru
      _
    %p152 = scmp.lt.s32.totalorder %s11, 2
    // Predicated region
    $region21: #{conv_encoder_forward.9} parent=5 // pred_check
      %p153 = pneg %p152
    $region22: #{conv_encoder_forward.9} parent=5 // pred_check_branch
      %155 = sbr.rel (%p153) target = $region24
    $region23: #{conv_encoder_forward.9} parent=5 // pred_region
      // Predicated region
      $region25: #{conv_encoder_forward.9} parent=23 // pred_check
        %p156 = pneg %p31
      $region26: #{conv_encoder_forward.9} parent=23 // pred_check_branch
        %158 = sbr.rel (%p156) target = $region28
      $region27: #{conv_encoder_forward.9} parent=23 // pred_region
        %s159 = smul.u32 8, %s11
        %p160 = scmp.lt.s32.totalorder %s159, 15
        %s161 = scalar_select %p160, %s159, 15
        %s162 = smul.addr %s161, 8
        %s163 = smul.addr %s162, 4
        %s164 = scalar_lea.vmem %s0, %s163
        %s165 = smul.u32 8, %s11
      $region28: #{conv_encoder_forward.9} parent=23 // pred_fallthru
        _
    $region24: #{conv_encoder_forward.9} parent=5 // pred_fallthru
      _
    %p166 = scmp.le.s32.totalorder 1, %s11
    %p167 = scmp.lt.s32.totalorder %s11, 3
    %p168 = pnand %p166, %p167
    %p169 = pneg %p168
    // Predicated region
    $region29: #{conv_encoder_forward.9} parent=5 // pred_check
      _
    $region30: #{conv_encoder_forward.9} parent=5 // pred_check_branch
      %171 = sbr.rel (%p168) target = $region32
    $region31: #{conv_encoder_forward.9} parent=5 // pred_region
      %s172 = ssub.s32 %s11, 1
      %s173 = smul.u32 8, %s16
      %p174 = scmp.lt.s32.totalorder %s173, 15
      %s175 = scalar_select %p174, %s173, 15
      %s176 = smul.addr %s175, 8
      %s177 = smul.addr %s176, 4
      %s178 = scalar_lea.vmem %s0, %s177
      %p179 = pneg %p37
      %p180 = pneg %p34
      %p181 = pneg %p58
      %p182 = pneg %p55
      %p183 = pneg %p79
      %p184 = pneg %p76
      %p185 = pneg %p105
      %p186 = pneg %p102
      %s187 = smul.u32 8, %s16
      %p188 = scmp.lt.s32.totalorder %s187, 15
      %s189 = scalar_select %p188, %s187, 15
      %s190 = smul.addr %s189, 4
      %s191 = scalar_lea.vmem %s3, %s190
      %p192 = pneg %p131
      %p193 = pneg %p128
      %p194 = scmp.lt.s32.totalorder %s16, 1
      %s195 = scalar_select %p194, %s16, 1
      %s196 = smul.addr %s195, 8
      %s197 = scalar_lea.vmem %s4, %s196
      %s198 = smul.u32 8, %s16
      %p199 = scmp.lt.s32.totalorder %s198, 15
      %s200 = scalar_select %p199, %s198, 15
      %s201 = smul.addr %s200, 8
      %s202 = smul.addr %s201, 4
      %s203 = scalar_lea.vmem %s0, %s202
      %s204 = smul.u32 8, %s16
      %s205 = smul.u32 8, %s16
      %p206 = scmp.lt.s32.totalorder %s205, 15
      %s207 = scalar_select %p206, %s205, 15
      %s208 = smul.addr %s207, 4
      %s209 = scalar_lea.vmem %s3, %s208
      %s210 = smul.u32 8, %s16
      %p211 = scmp.lt.s32.totalorder %s16, 1
      %s212 = scalar_select %p211, %s16, 1
      %s213 = smul.addr %s212, 8
      %s214 = scalar_lea.vmem %s4, %s213
      %v216 = vld [vmem:[%s203] sm:$0xff]
      %v217 = vld [vmem:[%s203 + $0x8] sm:$0xff]
      %v218 = vld [vmem:[%s203 + $0x10] sm:$0xff]
      %v219 = vld [vmem:[%s203 + $0x18] sm:$0xff]
      %v220 = vld [vmem:[%s203 + $0x20] sm:$0xff]
      %v221 = vld [vmem:[%s203 + $0x28] sm:$0xff]
      %v222 = vld [vmem:[%s203 + $0x30] sm:$0xff]
      %v223 = vld [vmem:[%s203 + $0x38] sm:$0xff]
      %v224 = vld [vmem:[%s203 + $0x40] sm:$0xff]
      %v225 = vld [vmem:[%s203 + $0x48] sm:$0xff]
      %v226 = vld [vmem:[%s203 + $0x50] sm:$0xff]
      %v227 = vld [vmem:[%s203 + $0x58] sm:$0xff]
      %v228 = vld [vmem:[%s203 + $0x60] sm:$0xff]
      %v229 = vld [vmem:[%s203 + $0x68] sm:$0xff]
      %v230 = vld [vmem:[%s203 + $0x70] sm:$0xff]
      %v231 = vld [vmem:[%s203 + $0x78] sm:$0xff]
      %v232 = vld [vmem:[%s203 + $0x80] sm:$0xff]
      %v233 = vld [vmem:[%s203 + $0x88] sm:$0xff]
      %v234 = vld [vmem:[%s203 + $0x90] sm:$0xff]
      %v235 = vld [vmem:[%s203 + $0x98] sm:$0xff]
      %v236 = vld [vmem:[%s203 + $0xa0] sm:$0xff]
      %v237 = vld [vmem:[%s203 + $0xa8] sm:$0xff]
      %v238 = vld [vmem:[%s203 + $0xb0] sm:$0xff]
      %v239 = vld [vmem:[%s203 + $0xb8] sm:$0xff]
      %v240 = vld [vmem:[%s203 + $0xc0] sm:$0xff]
      %v241 = vld [vmem:[%s203 + $0xc8] sm:$0xff]
      %v242 = vld [vmem:[%s203 + $0xd0] sm:$0xff]
      %v243 = vld [vmem:[%s203 + $0xd8] sm:$0xff]
      %v244 = vld [vmem:[%s203 + $0xe0] sm:$0xff]
      %v245 = vld [vmem:[%s203 + $0xe8] sm:$0xff]
      %v246 = vld [vmem:[%s203 + $0xf0] sm:$0xff]
      %v247 = vld [vmem:[%s203 + $0xf8] sm:$0xff]
      %v248 = vld [vmem:[%s1] sm:$0xf]
      %v249 = vld [vmem:[%s1 + $0x4] sm:$0xf]
      %v250 = vld [vmem:[%s1 + $0x8] sm:$0xf]
      %v251 = vld [vmem:[%s1 + $0xc] sm:$0xf]
      %v252 = vld [vmem:[%s1 + $0x10] sm:$0xf]
      %v253 = vld [vmem:[%s1 + $0x14] sm:$0xf]
      %v254 = vld [vmem:[%s1 + $0x18] sm:$0xf]
      %v255 = vld [vmem:[%s1 + $0x1c] sm:$0xf]
      %v256 = vld [vmem:[%s1 + $0x20] sm:$0xf]
      %v257 = vld [vmem:[%s1 + $0x24] sm:$0xf]
      %v258 = vld [vmem:[%s1 + $0x28] sm:$0xf]
      %v259 = vld [vmem:[%s1 + $0x2c] sm:$0xf]
      %v260 = vld [vmem:[%s1 + $0x30] sm:$0xf]
      %v261 = vld [vmem:[%s1 + $0x34] sm:$0xf]
      %v262 = vld [vmem:[%s1 + $0x38] sm:$0xf]
      %v263 = vld [vmem:[%s1 + $0x3c] sm:$0xf]
      %v264 = vld [vmem:[%s1 + $0x40] sm:$0xf]
      %v265 = vld [vmem:[%s1 + $0x44] sm:$0xf]
      %v266 = vld [vmem:[%s1 + $0x48] sm:$0xf]
      %v267 = vld [vmem:[%s1 + $0x4c] sm:$0xf]
      %v268 = vld [vmem:[%s1 + $0x50] sm:$0xf]
      %v269 = vld [vmem:[%s1 + $0x54] sm:$0xf]
      %v270 = vld [vmem:[%s1 + $0x58] sm:$0xf]
      %v271 = vld [vmem:[%s1 + $0x5c] sm:$0xf]
      %v272 = vld [vmem:[%s1 + $0x60] sm:$0xf]
      %v273 = vld [vmem:[%s1 + $0x64] sm:$0xf]
      %v274 = vld [vmem:[%s1 + $0x68] sm:$0xf]
      %v275 = vld [vmem:[%s1 + $0x6c] sm:$0xf]
      %v276 = vld [vmem:[%s1 + $0x70] sm:$0xf]
      %v277 = vld [vmem:[%s1 + $0x74] sm:$0xf]
      %v278 = vld [vmem:[%s1 + $0x78] sm:$0xf]
      %v279 = vld [vmem:[%s1 + $0x7c] sm:$0xf]
      %v280 = vld [vmem:[%s1 + $0x80] sm:$0xf]
      %v281 = vld [vmem:[%s1 + $0x84] sm:$0xf]
      %v282 = vld [vmem:[%s1 + $0x88] sm:$0xf]
      %v283 = vld [vmem:[%s1 + $0x8c] sm:$0xf]
      %v284 = vld [vmem:[%s1 + $0x90] sm:$0xf]
      %v285 = vld [vmem:[%s1 + $0x94] sm:$0xf]
      %v286 = vld [vmem:[%s1 + $0x98] sm:$0xf]
      %v287 = vld [vmem:[%s1 + $0x9c] sm:$0xf]
      %v288 = vld [vmem:[%s1 + $0xa0] sm:$0xf]
      %v289 = vld [vmem:[%s1 + $0xa4] sm:$0xf]
      %v290 = vld [vmem:[%s1 + $0xa8] sm:$0xf]
      %v291 = vld [vmem:[%s1 + $0xac] sm:$0xf]
      %v292 = vld [vmem:[%s1 + $0xb0] sm:$0xf]
      %v293 = vld [vmem:[%s1 + $0xb4] sm:$0xf]
      %v294 = vld [vmem:[%s1 + $0xb8] sm:$0xf]
      %v295 = vld [vmem:[%s1 + $0xbc] sm:$0xf]
      %v296 = vld [vmem:[%s1 + $0xc0] sm:$0xf]
      %v297 = vld [vmem:[%s1 + $0xc4] sm:$0xf]
      %v298 = vld [vmem:[%s1 + $0xc8] sm:$0xf]
      %v299 = vld [vmem:[%s1 + $0xcc] sm:$0xf]
      %v300 = vld [vmem:[%s1 + $0xd0] sm:$0xf]
      %v301 = vld [vmem:[%s1 + $0xd4] sm:$0xf]
      %v302 = vld [vmem:[%s1 + $0xd8] sm:$0xf]
      %v303 = vld [vmem:[%s1 + $0xdc] sm:$0xf]
      %v304 = vld [vmem:[%s1 + $0xe0] sm:$0xf]
      %v305 = vld [vmem:[%s1 + $0xe4] sm:$0xf]
      %v306 = vld [vmem:[%s1 + $0xe8] sm:$0xf]
      %v307 = vld [vmem:[%s1 + $0xec] sm:$0xf]
      %v308 = vld [vmem:[%s1 + $0xf0] sm:$0xf]
      %v309 = vld [vmem:[%s1 + $0xf4] sm:$0xf]
      %v310 = vld [vmem:[%s1 + $0xf8] sm:$0xf]
      %v311 = vld [vmem:[%s1 + $0xfc] sm:$0xf]
      %v312 = vld [vmem:[%s1 + $0x100] sm:$0xf]
      %v313 = vld [vmem:[%s1 + $0x104] sm:$0xf]
      %v314 = vld [vmem:[%s1 + $0x108] sm:$0xf]
      %v315 = vld [vmem:[%s1 + $0x10c] sm:$0xf]
      %v316 = vld [vmem:[%s1 + $0x110] sm:$0xf]
      %v317 = vld [vmem:[%s1 + $0x114] sm:$0xf]
      %v318 = vld [vmem:[%s1 + $0x118] sm:$0xf]
      %v319 = vld [vmem:[%s1 + $0x11c] sm:$0xf]
      %v320 = vld [vmem:[%s1 + $0x120] sm:$0xf]
      %v321 = vld [vmem:[%s1 + $0x124] sm:$0xf]
      %v322 = vld [vmem:[%s1 + $0x128] sm:$0xf]
      %v323 = vld [vmem:[%s1 + $0x12c] sm:$0xf]
      %v324 = vld [vmem:[%s1 + $0x130] sm:$0xf]
      %v325 = vld [vmem:[%s1 + $0x134] sm:$0xf]
      %v326 = vld [vmem:[%s1 + $0x138] sm:$0xf]
      %v327 = vld [vmem:[%s1 + $0x13c] sm:$0xf]
      %v328 = vld [vmem:[%s1 + $0x140] sm:$0xf]
      %v329 = vld [vmem:[%s1 + $0x144] sm:$0xf]
      %v330 = vld [vmem:[%s1 + $0x148] sm:$0xf]
      %v331 = vld [vmem:[%s1 + $0x14c] sm:$0xf]
      %v332 = vld [vmem:[%s1 + $0x150] sm:$0xf]
      %v333 = vld [vmem:[%s1 + $0x154] sm:$0xf]
      %v334 = vld [vmem:[%s1 + $0x158] sm:$0xf]
      %v335 = vld [vmem:[%s1 + $0x15c] sm:$0xf]
      %v336 = vld [vmem:[%s1 + $0x160] sm:$0xf]
      %v337 = vld [vmem:[%s1 + $0x164] sm:$0xf]
      %v338 = vld [vmem:[%s1 + $0x168] sm:$0xf]
      %v339 = vld [vmem:[%s1 + $0x16c] sm:$0xf]
      %v340 = vld [vmem:[%s1 + $0x170] sm:$0xf]
      %v341 = vld [vmem:[%s1 + $0x174] sm:$0xf]
      %v342 = vld [vmem:[%s1 + $0x178] sm:$0xf]
      %v343 = vld [vmem:[%s1 + $0x17c] sm:$0xf]
      %v344 = vld [vmem:[%s1 + $0x180] sm:$0xf]
      %v345 = vld [vmem:[%s1 + $0x184] sm:$0xf]
      %v346 = vld [vmem:[%s1 + $0x188] sm:$0xf]
      %v347 = vld [vmem:[%s1 + $0x18c] sm:$0xf]
      %v348 = vld [vmem:[%s1 + $0x190] sm:$0xf]
      %v349 = vld [vmem:[%s1 + $0x194] sm:$0xf]
      %v350 = vld [vmem:[%s1 + $0x198] sm:$0xf]
      %v351 = vld [vmem:[%s1 + $0x19c] sm:$0xf]
      %v352 = vld [vmem:[%s1 + $0x1a0] sm:$0xf]
      %v353 = vld [vmem:[%s1 + $0x1a4] sm:$0xf]
      %v354 = vld [vmem:[%s1 + $0x1a8] sm:$0xf]
      %v355 = vld [vmem:[%s1 + $0x1ac] sm:$0xf]
      %v356 = vld [vmem:[%s1 + $0x1b0] sm:$0xf]
      %v357 = vld [vmem:[%s1 + $0x1b4] sm:$0xf]
      %v358 = vld [vmem:[%s1 + $0x1b8] sm:$0xf]
      %v359 = vld [vmem:[%s1 + $0x1bc] sm:$0xf]
      %v360 = vld [vmem:[%s1 + $0x1c0] sm:$0xf]
      %v361 = vld [vmem:[%s1 + $0x1c4] sm:$0xf]
      %v362 = vld [vmem:[%s1 + $0x1c8] sm:$0xf]
      %v363 = vld [vmem:[%s1 + $0x1cc] sm:$0xf]
      %v364 = vld [vmem:[%s1 + $0x1d0] sm:$0xf]
      %v365 = vld [vmem:[%s1 + $0x1d4] sm:$0xf]
      %v366 = vld [vmem:[%s1 + $0x1d8] sm:$0xf]
      %v367 = vld [vmem:[%s1 + $0x1dc] sm:$0xf]
      %v368 = vld [vmem:[%s1 + $0x1e0] sm:$0xf]
      %v369 = vld [vmem:[%s1 + $0x1e4] sm:$0xf]
      %v370 = vld [vmem:[%s1 + $0x1e8] sm:$0xf]
      %v371 = vld [vmem:[%s1 + $0x1ec] sm:$0xf]
      %v372 = vld [vmem:[%s1 + $0x1f0] sm:$0xf]
      %v373 = vld [vmem:[%s1 + $0x1f4] sm:$0xf]
      %v374 = vld [vmem:[%s1 + $0x1f8] sm:$0xf]
      %v375 = vld [vmem:[%s1 + $0x1fc] sm:$0xf]
      %v376 = vld [vmem:[%s2] sm:$0x1]
      %v378 = vlaneseq
      %v379 = vshrl.u32 %v378, 7
      %v380 = vsub.s32 0, %v379
      %v381 = vrot.slane %v376, %v380
      %v415 = vunpack.c.l.b16 %v216
      %v416 = vunpack.c.h.b16 %v216
      %v417 = vunpack.c.l.b16 %v217
      %v418 = vunpack.c.h.b16 %v217
      %v419 = vunpack.c.l.b16 %v218
      %v420 = vunpack.c.h.b16 %v218
      %v421 = vunpack.c.l.b16 %v219
      %v422 = vunpack.c.h.b16 %v219
      %v423 = vunpack.c.l.b16 %v220
      %v424 = vunpack.c.h.b16 %v220
      %v425 = vunpack.c.l.b16 %v221
      %v426 = vunpack.c.h.b16 %v221
      %v427 = vunpack.c.l.b16 %v222
      %v428 = vunpack.c.h.b16 %v222
      %v429 = vunpack.c.l.b16 %v223
      %v430 = vunpack.c.h.b16 %v223
      %v431 = vunpack.c.l.b16 %v224
      %v432 = vunpack.c.h.b16 %v224
      %v433 = vunpack.c.l.b16 %v225
      %v434 = vunpack.c.h.b16 %v225
      %v435 = vunpack.c.l.b16 %v226
      %v436 = vunpack.c.h.b16 %v226
      %v437 = vunpack.c.l.b16 %v227
      %v438 = vunpack.c.h.b16 %v227
      %v439 = vunpack.c.l.b16 %v228
      %v440 = vunpack.c.h.b16 %v228
      %v441 = vunpack.c.l.b16 %v229
      %v442 = vunpack.c.h.b16 %v229
      %v443 = vunpack.c.l.b16 %v230
      %v444 = vunpack.c.h.b16 %v230
      %v445 = vunpack.c.l.b16 %v231
      %v446 = vunpack.c.h.b16 %v231
      %v447 = vunpack.c.l.b16 %v232
      %v448 = vunpack.c.h.b16 %v232
      %v449 = vunpack.c.l.b16 %v233
      %v450 = vunpack.c.h.b16 %v233
      %v451 = vunpack.c.l.b16 %v234
      %v452 = vunpack.c.h.b16 %v234
      %v453 = vunpack.c.l.b16 %v235
      %v454 = vunpack.c.h.b16 %v235
      %v455 = vunpack.c.l.b16 %v236
      %v456 = vunpack.c.h.b16 %v236
      %v457 = vunpack.c.l.b16 %v237
      %v458 = vunpack.c.h.b16 %v237
      %v459 = vunpack.c.l.b16 %v238
      %v460 = vunpack.c.h.b16 %v238
      %v461 = vunpack.c.l.b16 %v239
      %v462 = vunpack.c.h.b16 %v239
      %v463 = vunpack.c.l.b16 %v240
      %v464 = vunpack.c.h.b16 %v240
      %v465 = vunpack.c.l.b16 %v241
      %v466 = vunpack.c.h.b16 %v241
      %v467 = vunpack.c.l.b16 %v242
      %v468 = vunpack.c.h.b16 %v242
      %v469 = vunpack.c.l.b16 %v243
      %v470 = vunpack.c.h.b16 %v243
      %v471 = vunpack.c.l.b16 %v244
      %v472 = vunpack.c.h.b16 %v244
      %v473 = vunpack.c.l.b16 %v245
      %v474 = vunpack.c.h.b16 %v245
      %v475 = vunpack.c.l.b16 %v246
      %v476 = vunpack.c.h.b16 %v246
      %v477 = vunpack.c.l.b16 %v247
      %v478 = vunpack.c.h.b16 %v247
      %v479 = vpack.c.b16 %v423, %v415
      %v480 = vpack.c.b16 %v424, %v416
      %v481 = vpack.c.b16 %v425, %v417
      %v482 = vpack.c.b16 %v426, %v418
      %v483 = vpack.c.b16 %v427, %v419
      %v484 = vpack.c.b16 %v428, %v420
      %v485 = vpack.c.b16 %v429, %v421
      %v486 = vpack.c.b16 %v430, %v422
      %v487 = vpack.c.b16 %v439, %v431
      %v488 = vpack.c.b16 %v440, %v432
      %v489 = vpack.c.b16 %v441, %v433
      %v490 = vpack.c.b16 %v442, %v434
      %v491 = vpack.c.b16 %v443, %v435
      %v492 = vpack.c.b16 %v444, %v436
      %v493 = vpack.c.b16 %v445, %v437
      %v494 = vpack.c.b16 %v446, %v438
      %v495 = vpack.c.b16 %v455, %v447
      %v496 = vpack.c.b16 %v456, %v448
      %v497 = vpack.c.b16 %v457, %v449
      %v498 = vpack.c.b16 %v458, %v450
      %v499 = vpack.c.b16 %v459, %v451
      %v500 = vpack.c.b16 %v460, %v452
      %v501 = vpack.c.b16 %v461, %v453
      %v502 = vpack.c.b16 %v462, %v454
      %v503 = vpack.c.b16 %v471, %v463
      %v504 = vpack.c.b16 %v472, %v464
      %v505 = vpack.c.b16 %v473, %v465
      %v506 = vpack.c.b16 %v474, %v466
      %v507 = vpack.c.b16 %v475, %v467
      %v508 = vpack.c.b16 %v476, %v468
      %v509 = vpack.c.b16 %v477, %v469
      %v510 = vpack.c.b16 %v478, %v470
      %v671 = vunpack.c.l.b16 %v248
      %v672 = vunpack.c.l.b16 %v249
      %v673 = vunpack.c.l.b16 %v250
      %v674 = vunpack.c.l.b16 %v251
      %v675 = vunpack.c.l.b16 %v252
      %v676 = vunpack.c.l.b16 %v253
      %v677 = vunpack.c.l.b16 %v254
      %v678 = vunpack.c.l.b16 %v255
      %v679 = vunpack.c.l.b16 %v256
      %v680 = vunpack.c.l.b16 %v257
      %v681 = vunpack.c.l.b16 %v258
      %v682 = vunpack.c.l.b16 %v259
      %v683 = vunpack.c.l.b16 %v260
      %v684 = vunpack.c.l.b16 %v261
      %v685 = vunpack.c.l.b16 %v262
      %v686 = vunpack.c.l.b16 %v263
      %v687 = vunpack.c.l.b16 %v264
      %v688 = vunpack.c.l.b16 %v265
      %v689 = vunpack.c.l.b16 %v266
      %v690 = vunpack.c.l.b16 %v267
      %v691 = vunpack.c.l.b16 %v268
      %v692 = vunpack.c.l.b16 %v269
      %v693 = vunpack.c.l.b16 %v270
      %v694 = vunpack.c.l.b16 %v271
      %v695 = vunpack.c.l.b16 %v272
      %v696 = vunpack.c.l.b16 %v273
      %v697 = vunpack.c.l.b16 %v274
      %v698 = vunpack.c.l.b16 %v275
      %v699 = vunpack.c.l.b16 %v276
      %v700 = vunpack.c.l.b16 %v277
      %v701 = vunpack.c.l.b16 %v278
      %v702 = vunpack.c.l.b16 %v279
      %v703 = vunpack.c.l.b16 %v280
      %v704 = vunpack.c.l.b16 %v281
      %v705 = vunpack.c.l.b16 %v282
      %v706 = vunpack.c.l.b16 %v283
      %v707 = vunpack.c.l.b16 %v284
      %v708 = vunpack.c.l.b16 %v285
      %v709 = vunpack.c.l.b16 %v286
      %v710 = vunpack.c.l.b16 %v287
      %v711 = vunpack.c.l.b16 %v288
      %v712 = vunpack.c.l.b16 %v289
      %v713 = vunpack.c.l.b16 %v290
      %v714 = vunpack.c.l.b16 %v291
      %v715 = vunpack.c.l.b16 %v292
      %v716 = vunpack.c.l.b16 %v293
      %v717 = vunpack.c.l.b16 %v294
      %v718 = vunpack.c.l.b16 %v295
      %v719 = vunpack.c.l.b16 %v296
      %v720 = vunpack.c.l.b16 %v297
      %v721 = vunpack.c.l.b16 %v298
      %v722 = vunpack.c.l.b16 %v299
      %v723 = vunpack.c.l.b16 %v300
      %v724 = vunpack.c.l.b16 %v301
      %v725 = vunpack.c.l.b16 %v302
      %v726 = vunpack.c.l.b16 %v303
      %v727 = vunpack.c.l.b16 %v304
      %v728 = vunpack.c.l.b16 %v305
      %v729 = vunpack.c.l.b16 %v306
      %v730 = vunpack.c.l.b16 %v307
      %v731 = vunpack.c.l.b16 %v308
      %v732 = vunpack.c.l.b16 %v309
      %v733 = vunpack.c.l.b16 %v310
      %v734 = vunpack.c.l.b16 %v311
      %v735 = vunpack.c.l.b16 %v312
      %v736 = vunpack.c.l.b16 %v313
      %v737 = vunpack.c.l.b16 %v314
      %v738 = vunpack.c.l.b16 %v315
      %v739 = vunpack.c.l.b16 %v316
      %v740 = vunpack.c.l.b16 %v317
      %v741 = vunpack.c.l.b16 %v318
      %v742 = vunpack.c.l.b16 %v319
      %v743 = vunpack.c.l.b16 %v320
      %v744 = vunpack.c.l.b16 %v321
      %v745 = vunpack.c.l.b16 %v322
      %v746 = vunpack.c.l.b16 %v323
      %v747 = vunpack.c.l.b16 %v324
      %v748 = vunpack.c.l.b16 %v325
      %v749 = vunpack.c.l.b16 %v326
      %v750 = vunpack.c.l.b16 %v327
      %v751 = vunpack.c.l.b16 %v328
      %v752 = vunpack.c.l.b16 %v329
      %v753 = vunpack.c.l.b16 %v330
      %v754 = vunpack.c.l.b16 %v331
      %v755 = vunpack.c.l.b16 %v332
      %v756 = vunpack.c.l.b16 %v333
      %v757 = vunpack.c.l.b16 %v334
      %v758 = vunpack.c.l.b16 %v335
      %v759 = vunpack.c.l.b16 %v336
      %v760 = vunpack.c.l.b16 %v337
      %v761 = vunpack.c.l.b16 %v338
      %v762 = vunpack.c.l.b16 %v339
      %v763 = vunpack.c.l.b16 %v340
      %v764 = vunpack.c.l.b16 %v341
      %v765 = vunpack.c.l.b16 %v342
      %v766 = vunpack.c.l.b16 %v343
      %v767 = vunpack.c.l.b16 %v344
      %v768 = vunpack.c.l.b16 %v345
      %v769 = vunpack.c.l.b16 %v346
      %v770 = vunpack.c.l.b16 %v347
      %v771 = vunpack.c.l.b16 %v348
      %v772 = vunpack.c.l.b16 %v349
      %v773 = vunpack.c.l.b16 %v350
      %v774 = vunpack.c.l.b16 %v351
      %v775 = vunpack.c.l.b16 %v352
      %v776 = vunpack.c.l.b16 %v353
      %v777 = vunpack.c.l.b16 %v354
      %v778 = vunpack.c.l.b16 %v355
      %v779 = vunpack.c.l.b16 %v356
      %v780 = vunpack.c.l.b16 %v357
      %v781 = vunpack.c.l.b16 %v358
      %v782 = vunpack.c.l.b16 %v359
      %v783 = vunpack.c.l.b16 %v360
      %v784 = vunpack.c.l.b16 %v361
      %v785 = vunpack.c.l.b16 %v362
      %v786 = vunpack.c.l.b16 %v363
      %v787 = vunpack.c.l.b16 %v364
      %v788 = vunpack.c.l.b16 %v365
      %v789 = vunpack.c.l.b16 %v366
      %v790 = vunpack.c.l.b16 %v367
      %v791 = vunpack.c.l.b16 %v368
      %v792 = vunpack.c.l.b16 %v369
      %v793 = vunpack.c.l.b16 %v370
      %v794 = vunpack.c.l.b16 %v371
      %v795 = vunpack.c.l.b16 %v372
      %v796 = vunpack.c.l.b16 %v373
      %v797 = vunpack.c.l.b16 %v374
      %v798 = vunpack.c.l.b16 %v375
      %v799 = vpack.c.b16 %v672, %v671
      %v800 = vpack.c.b16 %v674, %v673
      %v801 = vpack.c.b16 %v676, %v675
      %v802 = vpack.c.b16 %v678, %v677
      %v803 = vpack.c.b16 %v680, %v679
      %v804 = vpack.c.b16 %v682, %v681
      %v805 = vpack.c.b16 %v684, %v683
      %v806 = vpack.c.b16 %v686, %v685
      %v807 = vpack.c.b16 %v688, %v687
      %v808 = vpack.c.b16 %v690, %v689
      %v809 = vpack.c.b16 %v692, %v691
      %v810 = vpack.c.b16 %v694, %v693
      %v811 = vpack.c.b16 %v696, %v695
      %v812 = vpack.c.b16 %v698, %v697
      %v813 = vpack.c.b16 %v700, %v699
      %v814 = vpack.c.b16 %v702, %v701
      %v815 = vpack.c.b16 %v704, %v703
      %v816 = vpack.c.b16 %v706, %v705
      %v817 = vpack.c.b16 %v708, %v707
      %v818 = vpack.c.b16 %v710, %v709
      %v819 = vpack.c.b16 %v712, %v711
      %v820 = vpack.c.b16 %v714, %v713
      %v821 = vpack.c.b16 %v716, %v715
      %v822 = vpack.c.b16 %v718, %v717
      %v823 = vpack.c.b16 %v720, %v719
      %v824 = vpack.c.b16 %v722, %v721
      %v825 = vpack.c.b16 %v724, %v723
      %v826 = vpack.c.b16 %v726, %v725
      %v827 = vpack.c.b16 %v728, %v727
      %v828 = vpack.c.b16 %v730, %v729
      %v829 = vpack.c.b16 %v732, %v731
      %v830 = vpack.c.b16 %v734, %v733
      %v831 = vpack.c.b16 %v736, %v735
      %v832 = vpack.c.b16 %v738, %v737
      %v833 = vpack.c.b16 %v740, %v739
      %v834 = vpack.c.b16 %v742, %v741
      %v835 = vpack.c.b16 %v744, %v743
      %v836 = vpack.c.b16 %v746, %v745
      %v837 = vpack.c.b16 %v748, %v747
      %v838 = vpack.c.b16 %v750, %v749
      %v839 = vpack.c.b16 %v752, %v751
      %v840 = vpack.c.b16 %v754, %v753
      %v841 = vpack.c.b16 %v756, %v755
      %v842 = vpack.c.b16 %v758, %v757
      %v843 = vpack.c.b16 %v760, %v759
      %v844 = vpack.c.b16 %v762, %v761
      %v845 = vpack.c.b16 %v764, %v763
      %v846 = vpack.c.b16 %v766, %v765
      %v847 = vpack.c.b16 %v768, %v767
      %v848 = vpack.c.b16 %v770, %v769
      %v849 = vpack.c.b16 %v772, %v771
      %v850 = vpack.c.b16 %v774, %v773
      %v851 = vpack.c.b16 %v776, %v775
      %v852 = vpack.c.b16 %v778, %v777
      %v853 = vpack.c.b16 %v780, %v779
      %v854 = vpack.c.b16 %v782, %v781
      %v855 = vpack.c.b16 %v784, %v783
      %v856 = vpack.c.b16 %v786, %v785
      %v857 = vpack.c.b16 %v788, %v787
      %v858 = vpack.c.b16 %v790, %v789
      %v859 = vpack.c.b16 %v792, %v791
      %v860 = vpack.c.b16 %v794, %v793
      %v861 = vpack.c.b16 %v796, %v795
      %v862 = vpack.c.b16 %v798, %v797
      %927 = vmatprep.subr.bf16.mxu0 0
      %928 = vmatpush1.bf16.msra.mxu0 %v799
      %929 = vmatprep.subr.bf16.mxu0 0
      %930 = vmatpush1.bf16.msra.mxu0 %v800
      %931 = vmatprep.subr.bf16.mxu0 0
      %932 = vmatpush1.bf16.msra.mxu0 %v801
      %933 = vmatprep.subr.bf16.mxu0 0
      %934 = vmatpush1.bf16.msra.mxu0 %v802
      %935 = vmatprep.subr.bf16.mxu0 0
      %936 = vmatpush1.bf16.msra.mxu0 %v803
      %937 = vmatprep.subr.bf16.mxu0 0
      %938 = vmatpush1.bf16.msra.mxu0 %v804
      %939 = vmatprep.subr.bf16.mxu0 0
      %940 = vmatpush1.bf16.msra.mxu0 %v805
      %941 = vmatprep.subr.bf16.mxu0 0
      %942 = vmatpush1.bf16.msra.mxu0 %v806
      %943 = vmatprep.subr.bf16.mxu0 0
      %944 = vmatpush1.bf16.msra.mxu0 %v807
      %945 = vmatprep.subr.bf16.mxu0 0
      %946 = vmatpush1.bf16.msra.mxu0 %v808
      %947 = vmatprep.subr.bf16.mxu0 0
      %948 = vmatpush1.bf16.msra.mxu0 %v809
      %949 = vmatprep.subr.bf16.mxu0 0
      %950 = vmatpush1.bf16.msra.mxu0 %v810
      %951 = vmatprep.subr.bf16.mxu0 0
      %952 = vmatpush1.bf16.msra.mxu0 %v811
      %953 = vmatprep.subr.bf16.mxu0 0
      %954 = vmatpush1.bf16.msra.mxu0 %v812
      %955 = vmatprep.subr.bf16.mxu0 0
      %956 = vmatpush1.bf16.msra.mxu0 %v813
      %957 = vmatprep.subr.bf16.mxu0 0
      %958 = vmatpush1.bf16.msra.mxu0 %v814
      %959 = vmatprep.mubr.bf16.mxu0 %v480
      %960 = vmatmul.mubr.bf16.gmra.mrb[0].mxu0 %v479
      %v961 = vpop.f32.mrb[0].mxu0
      %v962 = vadd.f32 %v381, %v961
      %v963 = vpop.f32.mrb[0].mxu0
      %v964 = vpop.f32.mrb[0].mxu0
      %v965 = vadd.f32 %v381, %v964
      %v966 = vpop.f32.mrb[0].mxu0
      %967 = vmatprep.mubr.bf16.mxu0 %v488
      %968 = vmatmul.mubr.bf16.gmra.mrb[0].mxu0 %v487
      %v969 = vpop.f32.mrb[0].mxu0
      %v970 = vadd.f32 %v381, %v969
      %v971 = vpop.f32.mrb[0].mxu0
      %v972 = vpop.f32.mrb[0].mxu0
      %v973 = vadd.f32 %v381, %v972
      %v974 = vpop.f32.mrb[0].mxu0
      %975 = vmatprep.mubr.bf16.mxu0 %v496
      %976 = vmatmul.mubr.bf16.gmra.mrb[0].mxu0 %v495
      %v977 = vpop.f32.mrb[0].mxu0
      %v978 = vadd.f32 %v381, %v977
      %v979 = vpop.f32.mrb[0].mxu0
      %v980 = vpop.f32.mrb[0].mxu0
      %v981 = vadd.f32 %v381, %v980
      %v982 = vpop.f32.mrb[0].mxu0
      %983 = vmatprep.mubr.bf16.mxu0 %v504
      %984 = vmatmul.mubr.bf16.gmra.mrb[0].mxu0 %v503
      %v985 = vpop.f32.mrb[0].mxu0
      %v986 = vadd.f32 %v381, %v985
      %v987 = vpop.f32.mrb[0].mxu0
      %v988 = vpop.f32.mrb[0].mxu0
      %v989 = vadd.f32 %v381, %v988
      %v990 = vpop.f32.mrb[0].mxu0
      %991 = vdwg.mxu0
      %992 = vmatprep.subr.bf16.mxu0 0
      %993 = vmatpush1.bf16.msra.mxu0 %v815
      %994 = vmatprep.subr.bf16.mxu0 0
      %995 = vmatpush1.bf16.msra.mxu0 %v816
      %996 = vmatprep.subr.bf16.mxu0 0
      %997 = vmatpush1.bf16.msra.mxu0 %v817
      %998 = vmatprep.subr.bf16.mxu0 0
      %999 = vmatpush1.bf16.msra.mxu0 %v818
      %1000 = vmatprep.subr.bf16.mxu0 0
      %1001 = vmatpush1.bf16.msra.mxu0 %v819
      %1002 = vmatprep.subr.bf16.mxu0 0
      %1003 = vmatpush1.bf16.msra.mxu0 %v820
      %1004 = vmatprep.subr.bf16.mxu0 0
      %1005 = vmatpush1.bf16.msra.mxu0 %v821
      %1006 = vmatprep.subr.bf16.mxu0 0
      %1007 = vmatpush1.bf16.msra.mxu0 %v822
      %1008 = vmatprep.subr.bf16.mxu0 0
      %1009 = vmatpush1.bf16.msra.mxu0 %v823
      %1010 = vmatprep.subr.bf16.mxu0 0
      %1011 = vmatpush1.bf16.msra.mxu0 %v824
      %1012 = vmatprep.subr.bf16.mxu0 0
      %1013 = vmatpush1.bf16.msra.mxu0 %v825
      %1014 = vmatprep.subr.bf16.mxu0 0
      %1015 = vmatpush1.bf16.msra.mxu0 %v826
      %1016 = vmatprep.subr.bf16.mxu0 0
      %1017 = vmatpush1.bf16.msra.mxu0 %v827
      %1018 = vmatprep.subr.bf16.mxu0 0
      %1019 = vmatpush1.bf16.msra.mxu0 %v828
      %1020 = vmatprep.subr.bf16.mxu0 0
      %1021 = vmatpush1.bf16.msra.mxu0 %v829
      %1022 = vmatprep.subr.bf16.mxu0 0
      %1023 = vmatpush1.bf16.msra.mxu0 %v830
      %1024 = vmatprep.mubr.bf16.mxu0 %v482
      %1025 = vmatmul.mubr.bf16.gmra.mrb[0].mxu0 %v481
      %v1026 = vpop.f32.mrb[0].mxu0
      %v1027 = vadd.f32 %v962, %v1026
      %v1028 = vpop.f32.mrb[0].mxu0
      %v1029 = vpop.f32.mrb[0].mxu0
      %v1030 = vadd.f32 %v965, %v1029
      %v1031 = vpop.f32.mrb[0].mxu0
      %1032 = vmatprep.mubr.bf16.mxu0 %v490
      %1033 = vmatmul.mubr.bf16.gmra.mrb[0].mxu0 %v489
      %v1034 = vpop.f32.mrb[0].mxu0
      %v1035 = vadd.f32 %v970, %v1034
      %v1036 = vpop.f32.mrb[0].mxu0
      %v1037 = vpop.f32.mrb[0].mxu0
      %v1038 = vadd.f32 %v973, %v1037
      %v1039 = vpop.f32.mrb[0].mxu0
      %1040 = vmatprep.mubr.bf16.mxu0 %v498
      %1041 = vmatmul.mubr.bf16.gmra.mrb[0].mxu0 %v497
      %v1042 = vpop.f32.mrb[0].mxu0
      %v1043 = vadd.f32 %v978, %v1042
      %v1044 = vpop.f32.mrb[0].mxu0
      %v1045 = vpop.f32.mrb[0].mxu0
      %v1046 = vadd.f32 %v981, %v1045
      %v1047 = vpop.f32.mrb[0].mxu0
      %1048 = vmatprep.mubr.bf16.mxu0 %v506
      %1049 = vmatmul.mubr.bf16.gmra.mrb[0].mxu0 %v505
      %v1050 = vpop.f32.mrb[0].mxu0
      %v1051 = vadd.f32 %v986, %v1050
      %v1052 = vpop.f32.mrb[0].mxu0
      %v1053 = vpop.f32.mrb[0].mxu0
      %v1054 = vadd.f32 %v989, %v1053
      %v1055 = vpop.f32.mrb[0].mxu0
      %1056 = vdwg.mxu0
      %1057 = vmatprep.subr.bf16.mxu0 0
      %1058 = vmatpush1.bf16.msra.mxu0 %v831
      %1059 = vmatprep.subr.bf16.mxu0 0
      %1060 = vmatpush1.bf16.msra.mxu0 %v832
      %1061 = vmatprep.subr.bf16.mxu0 0
      %1062 = vmatpush1.bf16.msra.mxu0 %v833
      %1063 = vmatprep.subr.bf16.mxu0 0
      %1064 = vmatpush1.bf16.msra.mxu0 %v834
      %1065 = vmatprep.subr.bf16.mxu0 0
      %1066 = vmatpush1.bf16.msra.mxu0 %v835
      %1067 = vmatprep.subr.bf16.mxu0 0
      %1068 = vmatpush1.bf16.msra.mxu0 %v836
      %1069 = vmatprep.subr.bf16.mxu0 0
      %1070 = vmatpush1.bf16.msra.mxu0 %v837
      %1071 = vmatprep.subr.bf16.mxu0 0
      %1072 = vmatpush1.bf16.msra.mxu0 %v838
      %1073 = vmatprep.subr.bf16.mxu0 0
      %1074 = vmatpush1.bf16.msra.mxu0 %v839
      %1075 = vmatprep.subr.bf16.mxu0 0
      %1076 = vmatpush1.bf16.msra.mxu0 %v840
      %1077 = vmatprep.subr.bf16.mxu0 0
      %1078 = vmatpush1.bf16.msra.mxu0 %v841
      %1079 = vmatprep.subr.bf16.mxu0 0
      %1080 = vmatpush1.bf16.msra.mxu0 %v842
      %1081 = vmatprep.subr.bf16.mxu0 0
      %1082 = vmatpush1.bf16.msra.mxu0 %v843
      %1083 = vmatprep.subr.bf16.mxu0 0
      %1084 = vmatpush1.bf16.msra.mxu0 %v844
      %1085 = vmatprep.subr.bf16.mxu0 0
      %1086 = vmatpush1.bf16.msra.mxu0 %v845
      %1087 = vmatprep.subr.bf16.mxu0 0
      %1088 = vmatpush1.bf16.msra.mxu0 %v846
      %1089 = vmatprep.mubr.bf16.mxu0 %v484
      %1090 = vmatmul.mubr.bf16.gmra.mrb[0].mxu0 %v483
      %v1091 = vpop.f32.mrb[0].mxu0
      %v1092 = vadd.f32 %v1027, %v1091
      %v1093 = vpop.f32.mrb[0].mxu0
      %v1094 = vpop.f32.mrb[0].mxu0
      %v1095 = vadd.f32 %v1030, %v1094
      %v1096 = vpop.f32.mrb[0].mxu0
      %1097 = vmatprep.mubr.bf16.mxu0 %v492
      %1098 = vmatmul.mubr.bf16.gmra.mrb[0].mxu0 %v491
      %v1099 = vpop.f32.mrb[0].mxu0
      %v1100 = vadd.f32 %v1035, %v1099
      %v1101 = vpop.f32.mrb[0].mxu0
      %v1102 = vpop.f32.mrb[0].mxu0
      %v1103 = vadd.f32 %v1038, %v1102
      %v1104 = vpop.f32.mrb[0].mxu0
      %1105 = vmatprep.mubr.bf16.mxu0 %v500
      %1106 = vmatmul.mubr.bf16.gmra.mrb[0].mxu0 %v499
      %v1107 = vpop.f32.mrb[0].mxu0
      %v1108 = vadd.f32 %v1043, %v1107
      %v1109 = vpop.f32.mrb[0].mxu0
      %v1110 = vpop.f32.mrb[0].mxu0
      %v1111 = vadd.f32 %v1046, %v1110
      %v1112 = vpop.f32.mrb[0].mxu0
      %1113 = vmatprep.mubr.bf16.mxu0 %v508
      %1114 = vmatmul.mubr.bf16.gmra.mrb[0].mxu0 %v507
      %v1115 = vpop.f32.mrb[0].mxu0
      %v1116 = vadd.f32 %v1051, %v1115
      %v1117 = vpop.f32.mrb[0].mxu0
      %v1118 = vpop.f32.mrb[0].mxu0
      %v1119 = vadd.f32 %v1054, %v1118
      %v1120 = vpop.f32.mrb[0].mxu0
      %1121 = vdwg.mxu0
      %1122 = vmatprep.subr.bf16.mxu0 0
      %1123 = vmatpush1.bf16.msra.mxu0 %v847
      %1124 = vmatprep.subr.bf16.mxu0 0
      %1125 = vmatpush1.bf16.msra.mxu0 %v848
      %1126 = vmatprep.subr.bf16.mxu0 0
      %1127 = vmatpush1.bf16.msra.mxu0 %v849
      %1128 = vmatprep.subr.bf16.mxu0 0
      %1129 = vmatpush1.bf16.msra.mxu0 %v850
      %1130 = vmatprep.subr.bf16.mxu0 0
      %1131 = vmatpush1.bf16.msra.mxu0 %v851
      %1132 = vmatprep.subr.bf16.mxu0 0
      %1133 = vmatpush1.bf16.msra.mxu0 %v852
      %1134 = vmatprep.subr.bf16.mxu0 0
      %1135 = vmatpush1.bf16.msra.mxu0 %v853
      %1136 = vmatprep.subr.bf16.mxu0 0
      %1137 = vmatpush1.bf16.msra.mxu0 %v854
      %1138 = vmatprep.subr.bf16.mxu0 0
      %1139 = vmatpush1.bf16.msra.mxu0 %v855
      %1140 = vmatprep.subr.bf16.mxu0 0
      %1141 = vmatpush1.bf16.msra.mxu0 %v856
      %1142 = vmatprep.subr.bf16.mxu0 0
      %1143 = vmatpush1.bf16.msra.mxu0 %v857
      %1144 = vmatprep.subr.bf16.mxu0 0
      %1145 = vmatpush1.bf16.msra.mxu0 %v858
      %1146 = vmatprep.subr.bf16.mxu0 0
      %1147 = vmatpush1.bf16.msra.mxu0 %v859
      %1148 = vmatprep.subr.bf16.mxu0 0
      %1149 = vmatpush1.bf16.msra.mxu0 %v860
      %1150 = vmatprep.subr.bf16.mxu0 0
      %1151 = vmatpush1.bf16.msra.mxu0 %v861
      %1152 = vmatprep.subr.bf16.mxu0 0
      %1153 = vmatpush1.bf16.msra.mxu0 %v862
      %1154 = vmatprep.mubr.bf16.mxu0 %v486
      %1155 = vmatmul.mubr.bf16.gmra.mrb[0].mxu0 %v485
      %v1156 = vpop.f32.mrb[0].mxu0
      %v1157 = vadd.f32 %v1092, %v1156
      %v1158 = vpop.f32.mrb[0].mxu0
      %v1159 = vpop.f32.mrb[0].mxu0
      %v1160 = vadd.f32 %v1095, %v1159
      %v1161 = vpop.f32.mrb[0].mxu0
      %1162 = vmatprep.mubr.bf16.mxu0 %v494
      %1163 = vmatmul.mubr.bf16.gmra.mrb[0].mxu0 %v493
      %v1164 = vpop.f32.mrb[0].mxu0
      %v1165 = vadd.f32 %v1100, %v1164
      %v1166 = vpop.f32.mrb[0].mxu0
      %v1167 = vpop.f32.mrb[0].mxu0
      %v1168 = vadd.f32 %v1103, %v1167
      %v1169 = vpop.f32.mrb[0].mxu0
      %1170 = vmatprep.mubr.bf16.mxu0 %v502
      %1171 = vmatmul.mubr.bf16.gmra.mrb[0].mxu0 %v501
      %v1172 = vpop.f32.mrb[0].mxu0
      %v1173 = vadd.f32 %v1108, %v1172
      %v1174 = vpop.f32.mrb[0].mxu0
      %v1175 = vpop.f32.mrb[0].mxu0
      %v1176 = vadd.f32 %v1111, %v1175
      %v1177 = vpop.f32.mrb[0].mxu0
      %1178 = vmatprep.mubr.bf16.mxu0 %v510
      %1179 = vmatmul.mubr.bf16.gmra.mrb[0].mxu0 %v509
      %v1180 = vpop.f32.mrb[0].mxu0
      %v1181 = vadd.f32 %v1116, %v1180
      %v1182 = vpop.f32.mrb[0].mxu0
      %v1183 = vpop.f32.mrb[0].mxu0
      %v1184 = vadd.f32 %v1119, %v1183
      %v1185 = vpop.f32.mrb[0].mxu0
      %1186 = vdwg.mxu0
      %v1187 = vxor.u32 %v1157, 2147483648
      %v1188 = vxor.u32 %v1160, 2147483648
      %v1189 = vxor.u32 %v1165, 2147483648
      %v1190 = vxor.u32 %v1168, 2147483648
      %v1191 = vxor.u32 %v1173, 2147483648
      %v1192 = vxor.u32 %v1176, 2147483648
      %v1193 = vxor.u32 %v1181, 2147483648
      %v1194 = vxor.u32 %v1184, 2147483648
      %v1195 = vmul.f32 %v1187, 1.442695
      %v1196 = vpow.pop %v1195
      %v1197 = vmul.f32 %v1188, 1.442695
      %v1198 = vpow.pop %v1197
      %v1199 = vmul.f32 %v1189, 1.442695
      %v1200 = vpow.pop %v1199
      %v1201 = vmul.f32 %v1190, 1.442695
      %v1202 = vpow.pop %v1201
      %v1203 = vmul.f32 %v1191, 1.442695
      %v1204 = vpow.pop %v1203
      %v1205 = vmul.f32 %v1192, 1.442695
      %v1206 = vpow.pop %v1205
      %v1207 = vmul.f32 %v1193, 1.442695
      %v1208 = vpow.pop %v1207
      %v1209 = vmul.f32 %v1194, 1.442695
      %v1210 = vpow.pop %v1209
      %v1211 = vadd.f32 %v1196, 1.0
      %v1212 = vadd.f32 %v1198, 1.0
      %v1213 = vadd.f32 %v1200, 1.0
      %v1214 = vadd.f32 %v1202, 1.0
      %v1215 = vadd.f32 %v1204, 1.0
      %v1216 = vadd.f32 %v1206, 1.0
      %v1217 = vadd.f32 %v1208, 1.0
      %v1218 = vadd.f32 %v1210, 1.0
      %v1219 = vrcp.pop %v1211
      %v1220 = vmul.f32 1.0, %v1219
      %v1221 = vrcp.pop %v1212
      %v1222 = vmul.f32 1.0, %v1221
      %v1223 = vrcp.pop %v1213
      %v1224 = vmul.f32 1.0, %v1223
      %v1225 = vrcp.pop %v1214
      %v1226 = vmul.f32 1.0, %v1225
      %v1227 = vrcp.pop %v1215
      %v1228 = vmul.f32 1.0, %v1227
      %v1229 = vrcp.pop %v1216
      %v1230 = vmul.f32 1.0, %v1229
      %v1231 = vrcp.pop %v1217
      %v1232 = vmul.f32 1.0, %v1231
      %v1233 = vrcp.pop %v1218
      %v1234 = vmul.f32 1.0, %v1233
      %v1235 = vmul.f32 %v1157, %v1220
      %v1236 = vmul.f32 %v1160, %v1222
      %v1237 = vmul.f32 %v1165, %v1224
      %v1238 = vmul.f32 %v1168, %v1226
      %v1239 = vmul.f32 %v1173, %v1228
      %v1240 = vmul.f32 %v1176, %v1230
      %v1241 = vmul.f32 %v1181, %v1232
      %v1242 = vmul.f32 %v1184, %v1234
      %v1243 = vpack.c.bf16 %v1236, %v1235
      %v1244 = vpack.c.bf16 %v1238, %v1237
      %v1245 = vpack.c.bf16 %v1240, %v1239
      %v1246 = vpack.c.bf16 %v1242, %v1241
      %v1251 = vunpack.c.l.b16 %v1243
      %v1252 = vunpack.c.h.b16 %v1243
      %v1253 = vunpack.c.l.b16 %v1244
      %v1254 = vunpack.c.h.b16 %v1244
      %v1255 = vunpack.c.l.b16 %v1245
      %v1256 = vunpack.c.h.b16 %v1245
      %v1257 = vunpack.c.l.b16 %v1246
      %v1258 = vunpack.c.h.b16 %v1246
      %v1259 = vpack.c.b16 %v1251, %v1251
      %v1260 = vpack.c.b16 %v1252, %v1252
      %v1261 = vpack.c.b16 %v1253, %v1253
      %v1262 = vpack.c.b16 %v1254, %v1254
      %v1263 = vpack.c.b16 %v1255, %v1255
      %v1264 = vpack.c.b16 %v1256, %v1256
      %v1265 = vpack.c.b16 %v1257, %v1257
      %v1266 = vpack.c.b16 %v1258, %v1258
      %1275 = vst [vmem:[%s209] sm:$0xf] %v1259
      %1276 = vst [vmem:[%s209 + $0x4] sm:$0xf] %v1260
      %1277 = vst [vmem:[%s209 + $0x8] sm:$0xf] %v1261
      %1278 = vst [vmem:[%s209 + $0xc] sm:$0xf] %v1262
      %1279 = vst [vmem:[%s209 + $0x10] sm:$0xf] %v1263
      %1280 = vst [vmem:[%s209 + $0x14] sm:$0xf] %v1264
      %1281 = vst [vmem:[%s209 + $0x18] sm:$0xf] %v1265
      %1282 = vst [vmem:[%s209 + $0x1c] sm:$0xf] %v1266
      %v1283 = vadd.f32 %v1235, %v1236
      %v1284 = vadd.f32 %v1283, %v1237
      %v1285 = vadd.f32 %v1284, %v1238
      %v1286 = vadd.f32 %v1285, %v1239
      %v1287 = vadd.f32 %v1286, %v1240
      %v1288 = vadd.f32 %v1287, %v1241
      %v1289 = vadd.f32 %v1288, %v1242
      %v1290 = vrot.slane %v1289, 4
      %v1291 = vadd.f32 %v1289, %v1290
      %v1292 = vrot.slane %v1291, 2
      %v1293 = vadd.f32 %v1291, %v1292
      %v1294 = vrot.slane %v1293, 1
      %v1295 = vadd.f32 %v1293, %v1294
      %1296 = vst [vmem:[%s214] sm:$0x1] %v1295
      %v1297 = vmul.f32 %v1235, %v1235
      %v1298 = vmul.f32 %v1236, %v1236
      %v1299 = vmul.f32 %v1237, %v1237
      %v1300 = vmul.f32 %v1238, %v1238
      %v1301 = vmul.f32 %v1239, %v1239
      %v1302 = vmul.f32 %v1240, %v1240
      %v1303 = vmul.f32 %v1241, %v1241
      %v1304 = vmul.f32 %v1242, %v1242
      %v1305 = vadd.f32 %v1297, %v1298
      %v1306 = vadd.f32 %v1305, %v1299
      %v1307 = vadd.f32 %v1306, %v1300
      %v1308 = vadd.f32 %v1307, %v1301
      %v1309 = vadd.f32 %v1308, %v1302
      %v1310 = vadd.f32 %v1309, %v1303
      %v1311 = vadd.f32 %v1310, %v1304
      %v1312 = vrot.slane %v1311, 4
      %v1313 = vadd.f32 %v1311, %v1312
      %v1314 = vrot.slane %v1313, 2
      %v1315 = vadd.f32 %v1313, %v1314
      %v1316 = vrot.slane %v1315, 1
      %v1317 = vadd.f32 %v1315, %v1316
      %1318 = vst [vmem:[%s214 + $0x1] sm:$0x1] %v1317
      %s1319 = smul.u32 8, %s16
      %p1320 = scmp.lt.s32.totalorder %s1319, 15
      %s1321 = scalar_select %p1320, %s1319, 15
      %s1322 = smul.addr %s1321, 4
      %s1323 = scalar_lea.vmem %s3, %s1322
      %p1324 = scmp.lt.s32.totalorder %s16, 1
      %s1325 = scalar_select %p1324, %s16, 1
      %s1326 = smul.addr %s1325, 8
      %s1327 = scalar_lea.vmem %s4, %s1326
      // Predicated region
      $region33: #{conv_encoder_forward.9} parent=31 // pred_check
        %p1328 = pneg %p102
      $region34: #{conv_encoder_forward.9} parent=31 // pred_check_branch
        %1330 = sbr.rel (%p1328) target = $region36
      $region35: #{conv_encoder_forward.9} parent=31 // pred_region
        %s1331 = smul.u32 8, %s16
      $region36: #{conv_encoder_forward.9} parent=31 // pred_fallthru
        _
      // Predicated region
      $region37: #{conv_encoder_forward.9} parent=31 // pred_check
        %p1332 = pneg %p128
      $region38: #{conv_encoder_forward.9} parent=31 // pred_check_branch
        %1334 = sbr.rel (%p1332) target = $region40
      $region39: #{conv_encoder_forward.9} parent=31 // pred_region
        _
      $region40: #{conv_encoder_forward.9} parent=31 // pred_fallthru
        _
    $region32: #{conv_encoder_forward.9} parent=5 // pred_fallthru
      _
    %p1335 = scmp.le.s32.totalorder 2, %s11
    // Predicated region
    $region41: #{conv_encoder_forward.9} parent=5 // pred_check
      %p1336 = pneg %p1335
    $region42: #{conv_encoder_forward.9} parent=5 // pred_check_branch
      %1338 = sbr.rel (%p1336) target = $region44
    $region43: #{conv_encoder_forward.9} parent=5 // pred_region
      %s1339 = ssub.s32 %s11, 2
      // Predicated region
      $region45: #{conv_encoder_forward.9} parent=43 // pred_check
        %p1340 = pneg %p108
      $region46: #{conv_encoder_forward.9} parent=43 // pred_check_branch
        %1342 = sbr.rel (%p1340) target = $region48
      $region47: #{conv_encoder_forward.9} parent=43 // pred_region
        %s1343 = smul.u32 8, %s17
        %p1344 = scmp.lt.s32.totalorder %s1343, 15
        %s1345 = scalar_select %p1344, %s1343, 15
        %s1346 = smul.addr %s1345, 4
        %s1347 = scalar_lea.vmem %s3, %s1346
      $region48: #{conv_encoder_forward.9} parent=43 // pred_fallthru
        _
      // Predicated region
      $region49: #{conv_encoder_forward.9} parent=43 // pred_check
        %p1348 = pneg %p134
      $region50: #{conv_encoder_forward.9} parent=43 // pred_check_branch
        %1350 = sbr.rel (%p1348) target = $region52
      $region51: #{conv_encoder_forward.9} parent=43 // pred_region
        %p1351 = scmp.lt.s32.totalorder %s17, 1
        %s1352 = scalar_select %p1351, %s17, 1
        %s1353 = smul.addr %s1352, 8
        %s1354 = scalar_lea.vmem %s4, %s1353
      $region52: #{conv_encoder_forward.9} parent=43 // pred_fallthru
        _
    $region44: #{conv_encoder_forward.9} parent=5 // pred_fallthru
      _
  $region6: #{conv_encoder_forward.9} parent=0 // loop_footer
    %s15 = sadd.s32 1, %s11
  $region7: #{conv_encoder_forward.9} parent=0 // loop_footer_branch
    %10 = sbr.rel target = $region3
  $region8: #{conv_encoder_forward.9} parent=0 // loop_exit
    _

// kernel: conv_encoder_forward.10
$region0: #{conv_encoder_forward.10}
  #allocation0 [shape = 'u32[]', space=smem, size = 0x4, offset = 0x4, fixed_abs, tag = 'smem constant byte address 0x4 - core index']
  #allocation1 [shape = 'u32[144,128]{1,0:T(1,128)}', space=vmem, size = 0x12000, scoped, tag = 'internal scratch']
  %s0 = inlined_call_operand.vmem [shape: bf16[32,2048], index: 0, kind: input, shape index: {}]
  %s1 = inlined_call_operand.vmem [shape: bf16[2048,256], index: 1, kind: input, shape index: {}]
  %s2 = inlined_call_operand.vmem [shape: f32[1,256], index: 2, kind: input, shape index: {}]
  %s3 = inlined_call_operand.vmem [shape: bf16[32,256], index: 3, kind: output, shape index: {0}]
  %s4 = inlined_call_operand.vmem [shape: f32[16,256], index: 4, kind: output, shape index: {1}]
  %5 = xla_tuple %s3, %s4
  %s6 = sld [smem:[#allocation0]]
  $region53: #{conv_encoder_forward.10} parent=0
    _
  %s8 = ssub.s32 1, %s6
  %s9 = scalar_select 0, %s8, %s6
  loop: start=0, step=1, limit=4
  $region2: #{conv_encoder_forward.10} parent=0 // loop_pre_header
    _
  $region3: #{conv_encoder_forward.10} parent=0 // loop_header
    %s11 = sphi 0, %s15
    %p12 = scmp.ge.s32.totalorder %s11, 4
    %s21 = sphi 0, %s23
    %s24 = sphi 0, %s21
    %s25 = sphi 0, %s24
    %s41 = sphi 0, %s25
    %s45 = sphi 0, %s45
    %s47 = sphi 0, %s45
    %s48 = sphi 0, %s47
    %s62 = sphi 0, %s48
    %s66 = sphi 0, %s66
    %s68 = sphi 0, %s66
    %s69 = sphi 0, %s68
    %s83 = sphi 0, %s69
    %s89 = sphi 0, %s91
    %s92 = sphi 0, %s89
    %s93 = sphi 0, %s92
    %s109 = sphi 0, %s93
    %s115 = sphi 0, %s117
    %s118 = sphi 0, %s115
    %s119 = sphi 0, %s118
    %s135 = sphi 0, %s119
  $region4: #{conv_encoder_forward.10} parent=0 // loop_header_branch
    %14 = sbr.rel (%p12) target = $region8
  $region5: #{conv_encoder_forward.10} parent=0 // loop_body
    %s16 = ssub.s32 %s11, 1
    %s17 = ssub.s32 %s11, 2
    %s18 = sadd.s32 %s11, 1
    %s19 = ssub.s32 %s11, %s18
    %p20 = scmp.eq.s32.totalorder %s19, 0
    %s22 = sadd.s32 %s21, 1
    %s23 = scalar_select %p20, %s21, %s22
    %p26 = pneg %p20
    %p27 = scmp.eq.s32.totalorder %s11, 1
    %p28 = por %p26, %p27
    %p29 = scmp.ne.s32.totalorder %s21, %s24
    %p30 = scmp.eq.s32.totalorder %s11, 0
    %p31 = por %p29, %p30
    %p32 = scmp.ne.s32.totalorder %s21, %s24
    %p33 = scmp.eq.s32.totalorder %s16, 1
    %p34 = por %p32, %p33
    %p35 = scmp.ne.s32.totalorder %s24, %s25
    %p36 = scmp.eq.s32.totalorder %s16, 0
    %p37 = por %p35, %p36
    %p38 = scmp.ne.s32.totalorder %s24, %s25
    %p39 = scmp.eq.s32.totalorder %s17, 1
    %p40 = por %p38, %p39
    %p42 = scmp.ne.s32.totalorder %s25, %s41
    %p43 = scmp.eq.s32.totalorder %s17, 0
    %p44 = por %p42, %p43
    %s46 = sadd.s32 %s45, 1
    %p49 = scmp.eq.s32.totalorder %s11, 1
    %p50 = scmp.ne.s32.totalorder %s45, %s47
    %p51 = scmp.eq.s32.totalorder %s11, 0
    %p52 = por %p50, %p51
    %p53 = scmp.ne.s32.totalorder %s45, %s47
    %p54 = scmp.eq.s32.totalorder %s16, 1
    %p55 = por %p53, %p54
    %p56 = scmp.ne.s32.totalorder %s47, %s48
    %p57 = scmp.eq.s32.totalorder %s16, 0
    %p58 = por %p56, %p57
    %p59 = scmp.ne.s32.totalorder %s47, %s48
    %p60 = scmp.eq.s32.totalorder %s17, 1
    %p61 = por %p59, %p60
    %p63 = scmp.ne.s32.totalorder %s48, %s62
    %p64 = scmp.eq.s32.totalorder %s17, 0
    %p65 = por %p63, %p64
    %s67 = sadd.s32 %s66, 1
    %p70 = scmp.eq.s32.totalorder %s11, 1
    %p71 = scmp.ne.s32.totalorder %s66, %s68
    %p72 = scmp.eq.s32.totalorder %s11, 0
    %p73 = por %p71, %p72
    %p74 = scmp.ne.s32.totalorder %s66, %s68
    %p75 = scmp.eq.s32.totalorder %s16, 1
    %p76 = por %p74, %p75
    %p77 = scmp.ne.s32.totalorder %s68, %s69
    %p78 = scmp.eq.s32.totalorder %s16, 0
    %p79 = por %p77, %p78
    %p80 = scmp.ne.s32.totalorder %s68, %s69
    %p81 = scmp.eq.s32.totalorder %s17, 1
    %p82 = por %p80, %p81
    %p84 = scmp.ne.s32.totalorder %s69, %s83
    %p85 = scmp.eq.s32.totalorder %s17, 0
    %p86 = por %p84, %p85
    %s87 = ssub.s32 %s11, %s18
    %p88 = scmp.eq.s32.totalorder %s87, 0
    %s90 = sadd.s32 %s89, 1
    %s91 = scalar_select %p88, %s89, %s90
    %p94 = pneg %p88
    %p95 = scmp.eq.s32.totalorder %s11, 1
    %p96 = por %p94, %p95
    %p97 = scmp.ne.s32.totalorder %s89, %s92
    %p98 = scmp.eq.s32.totalorder %s11, 0
    %p99 = por %p97, %p98
    %p100 = scmp.ne.s32.totalorder %s89, %s92
    %p101 = scmp.eq.s32.totalorder %s16, 1
    %p102 = por %p100, %p101
    %p103 = scmp.ne.s32.totalorder %s92, %s93
    %p104 = scmp.eq.s32.totalorder %s16, 0
    %p105 = por %p103, %p104
    %p106 = scmp.ne.s32.totalorder %s92, %s93
    %p107 = scmp.eq.s32.totalorder %s17, 1
    %p108 = por %p106, %p107
    %p110 = scmp.ne.s32.totalorder %s93, %s109
    %p111 = scmp.eq.s32.totalorder %s17, 0
    %p112 = por %p110, %p111
    %s113 = ssub.s32 %s11, %s18
    %p114 = scmp.eq.s32.totalorder %s113, 0
    %s116 = sadd.s32 %s115, 1
    %s117 = scalar_select %p114, %s115, %s116
    %p120 = pneg %p114
    %p121 = scmp.eq.s32.totalorder %s11, 1
    %p122 = por %p120, %p121
    %p123 = scmp.ne.s32.totalorder %s115, %s118
    %p124 = scmp.eq.s32.totalorder %s11, 0
    %p125 = por %p123, %p124
    %p126 = scmp.ne.s32.totalorder %s115, %s118
    %p127 = scmp.eq.s32.totalorder %s16, 1
    %p128 = por %p126, %p127
    %p129 = scmp.ne.s32.totalorder %s118, %s119
    %p130 = scmp.eq.s32.totalorder %s16, 0
    %p131 = por %p129, %p130
    %p132 = scmp.ne.s32.totalorder %s118, %s119
    %p133 = scmp.eq.s32.totalorder %s17, 1
    %p134 = por %p132, %p133
    %p136 = scmp.ne.s32.totalorder %s119, %s135
    %p137 = scmp.eq.s32.totalorder %s17, 0
    %p138 = por %p136, %p137
    %p139 = scmp.le.s32.totalorder 1, %s11
    %p140 = scmp.lt.s32.totalorder %s11, 3
    %p141 = pnand %p139, %p140
    %p142 = pneg %p141
    // Predicated region
    $region9: #{conv_encoder_forward.10} parent=5 // pred_check
      _
    $region10: #{conv_encoder_forward.10} parent=5 // pred_check_branch
      %144 = sbr.rel (%p141) target = $region12
    $region11: #{conv_encoder_forward.10} parent=5 // pred_region
      %s145 = ssub.s32 %s11, 1
      // Predicated region
      $region13: #{conv_encoder_forward.10} parent=11 // pred_check
        %p146 = pneg %p58
      $region14: #{conv_encoder_forward.10} parent=11 // pred_check_branch
        %148 = sbr.rel (%p146) target = $region16
      $region15: #{conv_encoder_forward.10} parent=11 // pred_region
        _
      $region16: #{conv_encoder_forward.10} parent=11 // pred_fallthru
        _
      // Predicated region
      $region17: #{conv_encoder_forward.10} parent=11 // pred_check
        %p149 = pneg %p79
      $region18: #{conv_encoder_forward.10} parent=11 // pred_check_branch
        %151 = sbr.rel (%p149) target = $region20
      $region19: #{conv_encoder_forward.10} parent=11 // pred_region
        _
      $region20: #{conv_encoder_forward.10} parent=11 // pred_fallthru
        _
    $region12: #{conv_encoder_forward.10} parent=5 // pred_fallthru
      _
    %p152 = scmp.lt.s32.totalorder %s11, 2
    // Predicated region
    $region21: #{conv_encoder_forward.10} parent=5 // pred_check
      %p153 = pneg %p152
    $region22: #{conv_encoder_forward.10} parent=5 // pred_check_branch
      %155 = sbr.rel (%p153) target = $region24
    $region23: #{conv_encoder_forward.10} parent=5 // pred_region
      // Predicated region
      $region25: #{conv_encoder_forward.10} parent=23 // pred_check
        %p156 = pneg %p31
      $region26: #{conv_encoder_forward.10} parent=23 // pred_check_branch
        %158 = sbr.rel (%p156) target = $region28
      $region27: #{conv_encoder_forward.10} parent=23 // pred_region
        %s159 = smul.u32 2, %s11
        %p160 = scmp.lt.s32.totalorder %s159, 3
        %s161 = scalar_select %p160, %s159, 3
        %s162 = smul.addr %s161, 16
        %s163 = smul.addr %s162, 4
        %s164 = scalar_lea.vmem %s0, %s163
        %s165 = smul.u32 2, %s11
      $region28: #{conv_encoder_forward.10} parent=23 // pred_fallthru
        _
    $region24: #{conv_encoder_forward.10} parent=5 // pred_fallthru
      _
    %p166 = scmp.le.s32.totalorder 1, %s11
    %p167 = scmp.lt.s32.totalorder %s11, 3
    %p168 = pnand %p166, %p167
    %p169 = pneg %p168
    // Predicated region
    $region29: #{conv_encoder_forward.10} parent=5 // pred_check
      _
    $region30: #{conv_encoder_forward.10} parent=5 // pred_check_branch
      %171 = sbr.rel (%p168) target = $region32
    $region31: #{conv_encoder_forward.10} parent=5 // pred_region
      %s172 = ssub.s32 %s11, 1
      %s173 = smul.u32 2, %s16
      %p174 = scmp.lt.s32.totalorder %s173, 3
      %s175 = scalar_select %p174, %s173, 3
      %s176 = smul.addr %s175, 16
      %s177 = smul.addr %s176, 4
      %s178 = scalar_lea.vmem %s0, %s177
      %p179 = pneg %p37
      %p180 = pneg %p34
      %p181 = pneg %p58
      %p182 = pneg %p55
      %p183 = pneg %p79
      %p184 = pneg %p76
      %p185 = pneg %p105
      %p186 = pneg %p102
      %s187 = smul.u32 2, %s16
      %p188 = scmp.lt.s32.totalorder %s187, 3
      %s189 = scalar_select %p188, %s187, 3
      %s190 = smul.addr %s189, 2
      %s191 = smul.addr %s190, 4
      %s192 = scalar_lea.vmem %s3, %s191
      %p193 = pneg %p131
      %p194 = pneg %p128
      %p195 = scmp.lt.s32.totalorder %s16, 1
      %s196 = scalar_select %p195, %s16, 1
      %s197 = smul.addr %s196, 2
      %s198 = smul.addr %s197, 8
      %s199 = scalar_lea.vmem %s4, %s198
      %s200 = smul.u32 2, %s16
      %p201 = scmp.lt.s32.totalorder %s200, 3
      %s202 = scalar_select %p201, %s200, 3
      %s203 = smul.addr %s202, 16
      %s204 = smul.addr %s203, 4
      %s205 = scalar_lea.vmem %s0, %s204
      %s206 = smul.u32 2, %s16
      %s207 = smul.u32 2, %s16
      %p208 = scmp.lt.s32.totalorder %s207, 3
      %s209 = scalar_select %p208, %s207, 3
      %s210 = smul.addr %s209, 2
      %s211 = smul.addr %s210, 4
      %s212 = scalar_lea.vmem %s3, %s211
      %s213 = smul.u32 2, %s16
      %p214 = scmp.lt.s32.totalorder %s16, 1
      %s215 = scalar_select %p214, %s16, 1
      %s216 = smul.addr %s215, 2
      %s217 = smul.addr %s216, 8
      %s218 = scalar_lea.vmem %s4, %s217
      %v219 = vld [vmem:[%s205] sm:$0xff]
      %v220 = vld [vmem:[%s205 + $0x8] sm:$0xff]
      %v221 = vld [vmem:[%s205 + $0x10] sm:$0xff]
      %v222 = vld [vmem:[%s205 + $0x18] sm:$0xff]
      %v223 = vld [vmem:[%s205 + $0x20] sm:$0xff]
      %v224 = vld [vmem:[%s205 + $0x28] sm:$0xff]
      %v225 = vld [vmem:[%s205 + $0x30] sm:$0xff]
      %v226 = vld [vmem:[%s205 + $0x38] sm:$0xff]
      %v227 = vld [vmem:[%s205 + $0x40] sm:$0xff]
      %v228 = vld [vmem:[%s205 + $0x48] sm:$0xff]
      %v229 = vld [vmem:[%s205 + $0x50] sm:$0xff]
      %v230 = vld [vmem:[%s205 + $0x58] sm:$0xff]
      %v231 = vld [vmem:[%s205 + $0x60] sm:$0xff]
      %v232 = vld [vmem:[%s205 + $0x68] sm:$0xff]
      %v233 = vld [vmem:[%s205 + $0x70] sm:$0xff]
      %v234 = vld [vmem:[%s205 + $0x78] sm:$0xff]
      %v235 = vld [vmem:[%s1] sm:$0xff]
      %v236 = vld [vmem:[%s1 + $0x8] sm:$0xff]
      %v237 = vld [vmem:[%s1 + $0x10] sm:$0xff]
      %v238 = vld [vmem:[%s1 + $0x18] sm:$0xff]
      %v239 = vld [vmem:[%s1 + $0x20] sm:$0xff]
      %v240 = vld [vmem:[%s1 + $0x28] sm:$0xff]
      %v241 = vld [vmem:[%s1 + $0x30] sm:$0xff]
      %v242 = vld [vmem:[%s1 + $0x38] sm:$0xff]
      %v243 = vld [vmem:[%s1 + $0x40] sm:$0xff]
      %v244 = vld [vmem:[%s1 + $0x48] sm:$0xff]
      %v245 = vld [vmem:[%s1 + $0x50] sm:$0xff]
      %v246 = vld [vmem:[%s1 + $0x58] sm:$0xff]
      %v247 = vld [vmem:[%s1 + $0x60] sm:$0xff]
      %v248 = vld [vmem:[%s1 + $0x68] sm:$0xff]
      %v249 = vld [vmem:[%s1 + $0x70] sm:$0xff]
      %v250 = vld [vmem:[%s1 + $0x78] sm:$0xff]
      %v251 = vld [vmem:[%s1 + $0x80] sm:$0xff]
      %v252 = vld [vmem:[%s1 + $0x88] sm:$0xff]
      %v253 = vld [vmem:[%s1 + $0x90] sm:$0xff]
      %v254 = vld [vmem:[%s1 + $0x98] sm:$0xff]
      %v255 = vld [vmem:[%s1 + $0xa0] sm:$0xff]
      %v256 = vld [vmem:[%s1 + $0xa8] sm:$0xff]
      %v257 = vld [vmem:[%s1 + $0xb0] sm:$0xff]
      %v258 = vld [vmem:[%s1 + $0xb8] sm:$0xff]
      %v259 = vld [vmem:[%s1 + $0xc0] sm:$0xff]
      %v260 = vld [vmem:[%s1 + $0xc8] sm:$0xff]
      %v261 = vld [vmem:[%s1 + $0xd0] sm:$0xff]
      %v262 = vld [vmem:[%s1 + $0xd8] sm:$0xff]
      %v263 = vld [vmem:[%s1 + $0xe0] sm:$0xff]
      %v264 = vld [vmem:[%s1 + $0xe8] sm:$0xff]
      %v265 = vld [vmem:[%s1 + $0xf0] sm:$0xff]
      %v266 = vld [vmem:[%s1 + $0xf8] sm:$0xff]
      %v267 = vld [vmem:[%s1 + $0x100] sm:$0xff]
      %v268 = vld [vmem:[%s1 + $0x108] sm:$0xff]
      %v269 = vld [vmem:[%s1 + $0x110] sm:$0xff]
      %v270 = vld [vmem:[%s1 + $0x118] sm:$0xff]
      %v271 = vld [vmem:[%s1 + $0x120] sm:$0xff]
      %v272 = vld [vmem:[%s1 + $0x128] sm:$0xff]
      %v273 = vld [vmem:[%s1 + $0x130] sm:$0xff]
      %v274 = vld [vmem:[%s1 + $0x138] sm:$0xff]
      %v275 = vld [vmem:[%s1 + $0x140] sm:$0xff]
      %v276 = vld [vmem:[%s1 + $0x148] sm:$0xff]
      %v277 = vld [vmem:[%s1 + $0x150] sm:$0xff]
      %v278 = vld [vmem:[%s1 + $0x158] sm:$0xff]
      %v279 = vld [vmem:[%s1 + $0x160] sm:$0xff]
      %v280 = vld [vmem:[%s1 + $0x168] sm:$0xff]
      %v281 = vld [vmem:[%s1 + $0x170] sm:$0xff]
      %v282 = vld [vmem:[%s1 + $0x178] sm:$0xff]
      %v283 = vld [vmem:[%s1 + $0x180] sm:$0xff]
      %v284 = vld [vmem:[%s1 + $0x188] sm:$0xff]
      %v285 = vld [vmem:[%s1 + $0x190] sm:$0xff]
      %v286 = vld [vmem:[%s1 + $0x198] sm:$0xff]
      %v287 = vld [vmem:[%s1 + $0x1a0] sm:$0xff]
      %v288 = vld [vmem:[%s1 + $0x1a8] sm:$0xff]
      %v289 = vld [vmem:[%s1 + $0x1b0] sm:$0xff]
      %v290 = vld [vmem:[%s1 + $0x1b8] sm:$0xff]
      %v291 = vld [vmem:[%s1 + $0x1c0] sm:$0xff]
      %v292 = vld [vmem:[%s1 + $0x1c8] sm:$0xff]
      %v293 = vld [vmem:[%s1 + $0x1d0] sm:$0xff]
      %v294 = vld [vmem:[%s1 + $0x1d8] sm:$0xff]
      %v295 = vld [vmem:[%s1 + $0x1e0] sm:$0xff]
      %v296 = vld [vmem:[%s1 + $0x1e8] sm:$0xff]
      %v297 = vld [vmem:[%s1 + $0x1f0] sm:$0xff]
      %v298 = vld [vmem:[%s1 + $0x1f8] sm:$0xff]
      %v299 = vld [vmem:[%s1 + $0x200] sm:$0xff]
      %v300 = vld [vmem:[%s1 + $0x208] sm:$0xff]
      %v301 = vld [vmem:[%s1 + $0x210] sm:$0xff]
      %v302 = vld [vmem:[%s1 + $0x218] sm:$0xff]
      %v303 = vld [vmem:[%s1 + $0x220] sm:$0xff]
      %v304 = vld [vmem:[%s1 + $0x228] sm:$0xff]
      %v305 = vld [vmem:[%s1 + $0x230] sm:$0xff]
      %v306 = vld [vmem:[%s1 + $0x238] sm:$0xff]
      %v307 = vld [vmem:[%s1 + $0x240] sm:$0xff]
      %v308 = vld [vmem:[%s1 + $0x248] sm:$0xff]
      %v309 = vld [vmem:[%s1 + $0x250] sm:$0xff]
      %v310 = vld [vmem:[%s1 + $0x258] sm:$0xff]
      %v311 = vld [vmem:[%s1 + $0x260] sm:$0xff]
      %v312 = vld [vmem:[%s1 + $0x268] sm:$0xff]
      %v313 = vld [vmem:[%s1 + $0x270] sm:$0xff]
      %v314 = vld [vmem:[%s1 + $0x278] sm:$0xff]
      %v315 = vld [vmem:[%s1 + $0x280] sm:$0xff]
      %v316 = vld [vmem:[%s1 + $0x288] sm:$0xff]
      %v317 = vld [vmem:[%s1 + $0x290] sm:$0xff]
      %v318 = vld [vmem:[%s1 + $0x298] sm:$0xff]
      %v319 = vld [vmem:[%s1 + $0x2a0] sm:$0xff]
      %v320 = vld [vmem:[%s1 + $0x2a8] sm:$0xff]
      %v321 = vld [vmem:[%s1 + $0x2b0] sm:$0xff]
      %v322 = vld [vmem:[%s1 + $0x2b8] sm:$0xff]
      %v323 = vld [vmem:[%s1 + $0x2c0] sm:$0xff]
      %v324 = vld [vmem:[%s1 + $0x2c8] sm:$0xff]
      %v325 = vld [vmem:[%s1 + $0x2d0] sm:$0xff]
      %v326 = vld [vmem:[%s1 + $0x2d8] sm:$0xff]
      %v327 = vld [vmem:[%s1 + $0x2e0] sm:$0xff]
      %v328 = vld [vmem:[%s1 + $0x2e8] sm:$0xff]
      %v329 = vld [vmem:[%s1 + $0x2f0] sm:$0xff]
      %v330 = vld [vmem:[%s1 + $0x2f8] sm:$0xff]
      %v331 = vld [vmem:[%s1 + $0x300] sm:$0xff]
      %v332 = vld [vmem:[%s1 + $0x308] sm:$0xff]
      %v333 = vld [vmem:[%s1 + $0x310] sm:$0xff]
      %v334 = vld [vmem:[%s1 + $0x318] sm:$0xff]
      %v335 = vld [vmem:[%s1 + $0x320] sm:$0xff]
      %v336 = vld [vmem:[%s1 + $0x328] sm:$0xff]
      %v337 = vld [vmem:[%s1 + $0x330] sm:$0xff]
      %v338 = vld [vmem:[%s1 + $0x338] sm:$0xff]
      %v339 = vld [vmem:[%s1 + $0x340] sm:$0xff]
      %v340 = vld [vmem:[%s1 + $0x348] sm:$0xff]
      %v341 = vld [vmem:[%s1 + $0x350] sm:$0xff]
      %v342 = vld [vmem:[%s1 + $0x358] sm:$0xff]
      %v343 = vld [vmem:[%s1 + $0x360] sm:$0xff]
      %v344 = vld [vmem:[%s1 + $0x368] sm:$0xff]
      %v345 = vld [vmem:[%s1 + $0x370] sm:$0xff]
      %v346 = vld [vmem:[%s1 + $0x378] sm:$0xff]
      %v347 = vld [vmem:[%s1 + $0x380] sm:$0xff]
      %v348 = vld [vmem:[%s1 + $0x388] sm:$0xff]
      %v349 = vld [vmem:[%s1 + $0x390] sm:$0xff]
      %v350 = vld [vmem:[%s1 + $0x398] sm:$0xff]
      %v351 = vld [vmem:[%s1 + $0x3a0] sm:$0xff]
      %v352 = vld [vmem:[%s1 + $0x3a8] sm:$0xff]
      %v353 = vld [vmem:[%s1 + $0x3b0] sm:$0xff]
      %v354 = vld [vmem:[%s1 + $0x3b8] sm:$0xff]
      %v355 = vld [vmem:[%s1 + $0x3c0] sm:$0xff]
      %v356 = vld [vmem:[%s1 + $0x3c8] sm:$0xff]
      %v357 = vld [vmem:[%s1 + $0x3d0] sm:$0xff]
      %v358 = vld [vmem:[%s1 + $0x3d8] sm:$0xff]
      %v359 = vld [vmem:[%s1 + $0x3e0] sm:$0xff]
      %v360 = vld [vmem:[%s1 + $0x3e8] sm:$0xff]
      %v361 = vld [vmem:[%s1 + $0x3f0] sm:$0xff]
      %v362 = vld [vmem:[%s1 + $0x3f8] sm:$0xff]
      %v363 = vld [vmem:[%s1 + $0x400] sm:$0xff]
      %v364 = vld [vmem:[%s1 + $0x408] sm:$0xff]
      %v365 = vld [vmem:[%s1 + $0x410] sm:$0xff]
      %v366 = vld [vmem:[%s1 + $0x418] sm:$0xff]
      %v367 = vld [vmem:[%s1 + $0x420] sm:$0xff]
      %v368 = vld [vmem:[%s1 + $0x428] sm:$0xff]
      %v369 = vld [vmem:[%s1 + $0x430] sm:$0xff]
      %v370 = vld [vmem:[%s1 + $0x438] sm:$0xff]
      %v371 = vld [vmem:[%s1 + $0x440] sm:$0xff]
      %v372 = vld [vmem:[%s1 + $0x448] sm:$0xff]
      %v373 = vld [vmem:[%s1 + $0x450] sm:$0xff]
      %v374 = vld [vmem:[%s1 + $0x458] sm:$0xff]
      %v375 = vld [vmem:[%s1 + $0x460] sm:$0xff]
      %v376 = vld [vmem:[%s1 + $0x468] sm:$0xff]
      %v377 = vld [vmem:[%s1 + $0x470] sm:$0xff]
      %v378 = vld [vmem:[%s1 + $0x478] sm:$0xff]
      %v379 = vld [vmem:[%s1 + $0x480] sm:$0xff]
      %v380 = vld [vmem:[%s1 + $0x488] sm:$0xff]
      %v381 = vld [vmem:[%s1 + $0x490] sm:$0xff]
      %v382 = vld [vmem:[%s1 + $0x498] sm:$0xff]
      %v383 = vld [vmem:[%s1 + $0x4a0] sm:$0xff]
      %v384 = vld [vmem:[%s1 + $0x4a8] sm:$0xff]
      %v385 = vld [vmem:[%s1 + $0x4b0] sm:$0xff]
      %v386 = vld [vmem:[%s1 + $0x4b8] sm:$0xff]
      %v387 = vld [vmem:[%s1 + $0x4c0] sm:$0xff]
      %v388 = vld [vmem:[%s1 + $0x4c8] sm:$0xff]
      %v389 = vld [vmem:[%s1 + $0x4d0] sm:$0xff]
      %v390 = vld [vmem:[%s1 + $0x4d8] sm:$0xff]
      %v391 = vld [vmem:[%s1 + $0x4e0] sm:$0xff]
      %v392 = vld [vmem:[%s1 + $0x4e8] sm:$0xff]
      %v393 = vld [vmem:[%s1 + $0x4f0] sm:$0xff]
      %v394 = vld [vmem:[%s1 + $0x4f8] sm:$0xff]
      %v395 = vld [vmem:[%s1 + $0x500] sm:$0xff]
      %v396 = vld [vmem:[%s1 + $0x508] sm:$0xff]
      %v397 = vld [vmem:[%s1 + $0x510] sm:$0xff]
      %v398 = vld [vmem:[%s1 + $0x518] sm:$0xff]
      %v399 = vld [vmem:[%s1 + $0x520] sm:$0xff]
      %v400 = vld [vmem:[%s1 + $0x528] sm:$0xff]
      %v401 = vld [vmem:[%s1 + $0x530] sm:$0xff]
      %v402 = vld [vmem:[%s1 + $0x538] sm:$0xff]
      %v403 = vld [vmem:[%s1 + $0x540] sm:$0xff]
      %v404 = vld [vmem:[%s1 + $0x548] sm:$0xff]
      %v405 = vld [vmem:[%s1 + $0x550] sm:$0xff]
      %v406 = vld [vmem:[%s1 + $0x558] sm:$0xff]
      %v407 = vld [vmem:[%s1 + $0x560] sm:$0xff]
      %v408 = vld [vmem:[%s1 + $0x568] sm:$0xff]
      %v409 = vld [vmem:[%s1 + $0x570] sm:$0xff]
      %v410 = vld [vmem:[%s1 + $0x578] sm:$0xff]
      %v411 = vld [vmem:[%s1 + $0x580] sm:$0xff]
      %v412 = vld [vmem:[%s1 + $0x588] sm:$0xff]
      %v413 = vld [vmem:[%s1 + $0x590] sm:$0xff]
      %v414 = vld [vmem:[%s1 + $0x598] sm:$0xff]
      %v415 = vld [vmem:[%s1 + $0x5a0] sm:$0xff]
      %v416 = vld [vmem:[%s1 + $0x5a8] sm:$0xff]
      %v417 = vld [vmem:[%s1 + $0x5b0] sm:$0xff]
      %v418 = vld [vmem:[%s1 + $0x5b8] sm:$0xff]
      %v419 = vld [vmem:[%s1 + $0x5c0] sm:$0xff]
      %v420 = vld [vmem:[%s1 + $0x5c8] sm:$0xff]
      %v421 = vld [vmem:[%s1 + $0x5d0] sm:$0xff]
      %v422 = vld [vmem:[%s1 + $0x5d8] sm:$0xff]
      %v423 = vld [vmem:[%s1 + $0x5e0] sm:$0xff]
      %v424 = vld [vmem:[%s1 + $0x5e8] sm:$0xff]
      %v425 = vld [vmem:[%s1 + $0x5f0] sm:$0xff]
      %v426 = vld [vmem:[%s1 + $0x5f8] sm:$0xff]
      %v427 = vld [vmem:[%s1 + $0x600] sm:$0xff]
      %v428 = vld [vmem:[%s1 + $0x608] sm:$0xff]
      %v429 = vld [vmem:[%s1 + $0x610] sm:$0xff]
      %v430 = vld [vmem:[%s1 + $0x618] sm:$0xff]
      %v431 = vld [vmem:[%s1 + $0x620] sm:$0xff]
      %v432 = vld [vmem:[%s1 + $0x628] sm:$0xff]
      %v433 = vld [vmem:[%s1 + $0x630] sm:$0xff]
      %v434 = vld [vmem:[%s1 + $0x638] sm:$0xff]
      %v435 = vld [vmem:[%s1 + $0x640] sm:$0xff]
      %v436 = vld [vmem:[%s1 + $0x648] sm:$0xff]
      %v437 = vld [vmem:[%s1 + $0x650] sm:$0xff]
      %v438 = vld [vmem:[%s1 + $0x658] sm:$0xff]
      %v439 = vld [vmem:[%s1 + $0x660] sm:$0xff]
      %v440 = vld [vmem:[%s1 + $0x668] sm:$0xff]
      %v441 = vld [vmem:[%s1 + $0x670] sm:$0xff]
      %v442 = vld [vmem:[%s1 + $0x678] sm:$0xff]
      %v443 = vld [vmem:[%s1 + $0x680] sm:$0xff]
      %v444 = vld [vmem:[%s1 + $0x688] sm:$0xff]
      %v445 = vld [vmem:[%s1 + $0x690] sm:$0xff]
      %v446 = vld [vmem:[%s1 + $0x698] sm:$0xff]
      %v447 = vld [vmem:[%s1 + $0x6a0] sm:$0xff]
      %v448 = vld [vmem:[%s1 + $0x6a8] sm:$0xff]
      %v449 = vld [vmem:[%s1 + $0x6b0] sm:$0xff]
      %v450 = vld [vmem:[%s1 + $0x6b8] sm:$0xff]
      %v451 = vld [vmem:[%s1 + $0x6c0] sm:$0xff]
      %v452 = vld [vmem:[%s1 + $0x6c8] sm:$0xff]
      %v453 = vld [vmem:[%s1 + $0x6d0] sm:$0xff]
      %v454 = vld [vmem:[%s1 + $0x6d8] sm:$0xff]
      %v455 = vld [vmem:[%s1 + $0x6e0] sm:$0xff]
      %v456 = vld [vmem:[%s1 + $0x6e8] sm:$0xff]
      %v457 = vld [vmem:[%s1 + $0x6f0] sm:$0xff]
      %v458 = vld [vmem:[%s1 + $0x6f8] sm:$0xff]
      %v459 = vld [vmem:[%s1 + $0x700] sm:$0xff]
      %v460 = vld [vmem:[%s1 + $0x708] sm:$0xff]
      %v461 = vld [vmem:[%s1 + $0x710] sm:$0xff]
      %v462 = vld [vmem:[%s1 + $0x718] sm:$0xff]
      %v463 = vld [vmem:[%s1 + $0x720] sm:$0xff]
      %v464 = vld [vmem:[%s1 + $0x728] sm:$0xff]
      %v465 = vld [vmem:[%s1 + $0x730] sm:$0xff]
      %v466 = vld [vmem:[%s1 + $0x738] sm:$0xff]
      %v467 = vld [vmem:[%s1 + $0x740] sm:$0xff]
      %v468 = vld [vmem:[%s1 + $0x748] sm:$0xff]
      %v469 = vld [vmem:[%s1 + $0x750] sm:$0xff]
      %v470 = vld [vmem:[%s1 + $0x758] sm:$0xff]
      %v471 = vld [vmem:[%s1 + $0x760] sm:$0xff]
      %v472 = vld [vmem:[%s1 + $0x768] sm:$0xff]
      %v473 = vld [vmem:[%s1 + $0x770] sm:$0xff]
      %v474 = vld [vmem:[%s1 + $0x778] sm:$0xff]
      %v475 = vld [vmem:[%s1 + $0x780] sm:$0xff]
      %v476 = vld [vmem:[%s1 + $0x788] sm:$0xff]
      %v477 = vld [vmem:[%s1 + $0x790] sm:$0xff]
      %v478 = vld [vmem:[%s1 + $0x798] sm:$0xff]
      %v479 = vld [vmem:[%s1 + $0x7a0] sm:$0xff]
      %v480 = vld [vmem:[%s1 + $0x7a8] sm:$0xff]
      %v481 = vld [vmem:[%s1 + $0x7b0] sm:$0xff]
      %v482 = vld [vmem:[%s1 + $0x7b8] sm:$0xff]
      %v483 = vld [vmem:[%s1 + $0x7c0] sm:$0xff]
      %v484 = vld [vmem:[%s1 + $0x7c8] sm:$0xff]
      %v485 = vld [vmem:[%s1 + $0x7d0] sm:$0xff]
      %v486 = vld [vmem:[%s1 + $0x7d8] sm:$0xff]
      %v487 = vld [vmem:[%s1 + $0x7e0] sm:$0xff]
      %v488 = vld [vmem:[%s1 + $0x7e8] sm:$0xff]
      %v489 = vld [vmem:[%s1 + $0x7f0] sm:$0xff]
      %v490 = vld [vmem:[%s1 + $0x7f8] sm:$0xff]
      %v491 = vld [vmem:[%s2] sm:$0x3]
      %v493 = vlaneseq
      %v494 = vshrl.u32 %v493, 7
      %v495 = vsub.s32 0, %v494
      %v496 = vrot.slane %v491, %v495
      %v497 = vlaneseq
      %v498 = vshrl.u32 %v497, 7
      %v499 = vsub.s32 1, %v498
      %v500 = vrot.slane %v491, %v499
      %v519 = vunpack.c.l.b16 %v219
      %v520 = vunpack.c.h.b16 %v219
      %v521 = vunpack.c.l.b16 %v220
      %v522 = vunpack.c.h.b16 %v220
      %v523 = vunpack.c.l.b16 %v221
      %v524 = vunpack.c.h.b16 %v221
      %v525 = vunpack.c.l.b16 %v222
      %v526 = vunpack.c.h.b16 %v222
      %v527 = vunpack.c.l.b16 %v223
      %v528 = vunpack.c.h.b16 %v223
      %v529 = vunpack.c.l.b16 %v224
      %v530 = vunpack.c.h.b16 %v224
      %v531 = vunpack.c.l.b16 %v225
      %v532 = vunpack.c.h.b16 %v225
      %v533 = vunpack.c.l.b16 %v226
      %v534 = vunpack.c.h.b16 %v226
      %v535 = vunpack.c.l.b16 %v227
      %v536 = vunpack.c.h.b16 %v227
      %v537 = vunpack.c.l.b16 %v228
      %v538 = vunpack.c.h.b16 %v228
      %v539 = vunpack.c.l.b16 %v229
      %v540 = vunpack.c.h.b16 %v229
      %v541 = vunpack.c.l.b16 %v230
      %v542 = vunpack.c.h.b16 %v230
      %v543 = vunpack.c.l.b16 %v231
      %v544 = vunpack.c.h.b16 %v231
      %v545 = vunpack.c.l.b16 %v232
      %v546 = vunpack.c.h.b16 %v232
      %v547 = vunpack.c.l.b16 %v233
      %v548 = vunpack.c.h.b16 %v233
      %v549 = vunpack.c.l.b16 %v234
      %v550 = vunpack.c.h.b16 %v234
      %v551 = vpack.c.b16 %v535, %v519
      %v552 = vpack.c.b16 %v536, %v520
      %v553 = vpack.c.b16 %v537, %v521
      %v554 = vpack.c.b16 %v538, %v522
      %v555 = vpack.c.b16 %v539, %v523
      %v556 = vpack.c.b16 %v540, %v524
      %v557 = vpack.c.b16 %v541, %v525
      %v558 = vpack.c.b16 %v542, %v526
      %v559 = vpack.c.b16 %v543, %v527
      %v560 = vpack.c.b16 %v544, %v528
      %v561 = vpack.c.b16 %v545, %v529
      %v562 = vpack.c.b16 %v546, %v530
      %v563 = vpack.c.b16 %v547, %v531
      %v564 = vpack.c.b16 %v548, %v532
      %v565 = vpack.c.b16 %v549, %v533
      %v566 = vpack.c.b16 %v550, %v534
      %v839 = vunpack.c.l.b16 %v235
      %v840 = vunpack.c.h.b16 %v235
      %v841 = vunpack.c.l.b16 %v236
      %v842 = vunpack.c.h.b16 %v236
      %v843 = vunpack.c.l.b16 %v237
      %v844 = vunpack.c.h.b16 %v237
      %v845 = vunpack.c.l.b16 %v238
      %v846 = vunpack.c.h.b16 %v238
      %v847 = vunpack.c.l.b16 %v239
      %v848 = vunpack.c.h.b16 %v239
      %v849 = vunpack.c.l.b16 %v240
      %v850 = vunpack.c.h.b16 %v240
      %v851 = vunpack.c.l.b16 %v241
      %v852 = vunpack.c.h.b16 %v241
      %v853 = vunpack.c.l.b16 %v242
      %v854 = vunpack.c.h.b16 %v242
      %v855 = vunpack.c.l.b16 %v243
      %v856 = vunpack.c.h.b16 %v243
      %v857 = vunpack.c.l.b16 %v244
      %v858 = vunpack.c.h.b16 %v244
      %v859 = vunpack.c.l.b16 %v245
      %v860 = vunpack.c.h.b16 %v245
      %v861 = vunpack.c.l.b16 %v246
      %v862 = vunpack.c.h.b16 %v246
      %v863 = vunpack.c.l.b16 %v247
      %v864 = vunpack.c.h.b16 %v247
      %v865 = vunpack.c.l.b16 %v248
      %v866 = vunpack.c.h.b16 %v248
      %v867 = vunpack.c.l.b16 %v249
      %v868 = vunpack.c.h.b16 %v249
      %v869 = vunpack.c.l.b16 %v250
      %v870 = vunpack.c.h.b16 %v250
      %v871 = vunpack.c.l.b16 %v251
      %v872 = vunpack.c.h.b16 %v251
      %v873 = vunpack.c.l.b16 %v252
      %v874 = vunpack.c.h.b16 %v252
      %v875 = vunpack.c.l.b16 %v253
      %v876 = vunpack.c.h.b16 %v253
      %v877 = vunpack.c.l.b16 %v254
      %v878 = vunpack.c.h.b16 %v254
      %v879 = vunpack.c.l.b16 %v255
      %v880 = vunpack.c.h.b16 %v255
      %v881 = vunpack.c.l.b16 %v256
      %v882 = vunpack.c.h.b16 %v256
      %v883 = vunpack.c.l.b16 %v257
      %v884 = vunpack.c.h.b16 %v257
      %v885 = vunpack.c.l.b16 %v258
      %v886 = vunpack.c.h.b16 %v258
      %v887 = vunpack.c.l.b16 %v259
      %v888 = vunpack.c.h.b16 %v259
      %v889 = vunpack.c.l.b16 %v260
      %v890 = vunpack.c.h.b16 %v260
      %v891 = vunpack.c.l.b16 %v261
      %v892 = vunpack.c.h.b16 %v261
      %v893 = vunpack.c.l.b16 %v262
      %v894 = vunpack.c.h.b16 %v262
      %v895 = vunpack.c.l.b16 %v263
      %v896 = vunpack.c.h.b16 %v263
      %v897 = vunpack.c.l.b16 %v264
      %v898 = vunpack.c.h.b16 %v264
      %v899 = vunpack.c.l.b16 %v265
      %v900 = vunpack.c.h.b16 %v265
      %v901 = vunpack.c.l.b16 %v266
      %v902 = vunpack.c.h.b16 %v266
      %v903 = vunpack.c.l.b16 %v267
      %v904 = vunpack.c.h.b16 %v267
      %v905 = vunpack.c.l.b16 %v268
      %v906 = vunpack.c.h.b16 %v268
      %v907 = vunpack.c.l.b16 %v269
      %v908 = vunpack.c.h.b16 %v269
      %v909 = vunpack.c.l.b16 %v270
      %v910 = vunpack.c.h.b16 %v270
      %v911 = vunpack.c.l.b16 %v271
      %v912 = vunpack.c.h.b16 %v271
      %v913 = vunpack.c.l.b16 %v272
      %v914 = vunpack.c.h.b16 %v272
      %v915 = vunpack.c.l.b16 %v273
      %v916 = vunpack.c.h.b16 %v273
      %v917 = vunpack.c.l.b16 %v274
      %v918 = vunpack.c.h.b16 %v274
      %v919 = vunpack.c.l.b16 %v275
      %v920 = vunpack.c.h.b16 %v275
      %v921 = vunpack.c.l.b16 %v276
      %v922 = vunpack.c.h.b16 %v276
      %v923 = vunpack.c.l.b16 %v277
      %v924 = vunpack.c.h.b16 %v277
      %v925 = vunpack.c.l.b16 %v278
      %v926 = vunpack.c.h.b16 %v278
      %v927 = vunpack.c.l.b16 %v279
      %v928 = vunpack.c.h.b16 %v279
      %v929 = vunpack.c.l.b16 %v280
      %v930 = vunpack.c.h.b16 %v280
      %v931 = vunpack.c.l.b16 %v281
      %v932 = vunpack.c.h.b16 %v281
      %v933 = vunpack.c.l.b16 %v282
      %v934 = vunpack.c.h.b16 %v282
      %v935 = vunpack.c.l.b16 %v283
      %v936 = vunpack.c.h.b16 %v283
      %v937 = vunpack.c.l.b16 %v284
      %v938 = vunpack.c.h.b16 %v284
      %v939 = vunpack.c.l.b16 %v285
      %v940 = vunpack.c.h.b16 %v285
      %v941 = vunpack.c.l.b16 %v286
      %v942 = vunpack.c.h.b16 %v286
      %v943 = vunpack.c.l.b16 %v287
      %v944 = vunpack.c.h.b16 %v287
      %v945 = vunpack.c.l.b16 %v288
      %v946 = vunpack.c.h.b16 %v288
      %v947 = vunpack.c.l.b16 %v289
      %v948 = vunpack.c.h.b16 %v289
      %v949 = vunpack.c.l.b16 %v290
      %v950 = vunpack.c.h.b16 %v290
      %v951 = vunpack.c.l.b16 %v291
      %v952 = vunpack.c.h.b16 %v291
      %v953 = vunpack.c.l.b16 %v292
      %v954 = vunpack.c.h.b16 %v292
      %v955 = vunpack.c.l.b16 %v293
      %v956 = vunpack.c.h.b16 %v293
      %v957 = vunpack.c.l.b16 %v294
      %v958 = vunpack.c.h.b16 %v294
      %v959 = vunpack.c.l.b16 %v295
      %v960 = vunpack.c.h.b16 %v295
      %v961 = vunpack.c.l.b16 %v296
      %v962 = vunpack.c.h.b16 %v296
      %v963 = vunpack.c.l.b16 %v297
      %v964 = vunpack.c.h.b16 %v297
      %v965 = vunpack.c.l.b16 %v298
      %v966 = vunpack.c.h.b16 %v298
      %v967 = vunpack.c.l.b16 %v299
      %v968 = vunpack.c.h.b16 %v299
      %v969 = vunpack.c.l.b16 %v300
      %v970 = vunpack.c.h.b16 %v300
      %v971 = vunpack.c.l.b16 %v301
      %v972 = vunpack.c.h.b16 %v301
      %v973 = vunpack.c.l.b16 %v302
      %v974 = vunpack.c.h.b16 %v302
      %v975 = vunpack.c.l.b16 %v303
      %v976 = vunpack.c.h.b16 %v303
      %v977 = vunpack.c.l.b16 %v304
      %v978 = vunpack.c.h.b16 %v304
      %v979 = vunpack.c.l.b16 %v305
      %v980 = vunpack.c.h.b16 %v305
      %v981 = vunpack.c.l.b16 %v306
      %v982 = vunpack.c.h.b16 %v306
      %v983 = vunpack.c.l.b16 %v307
      %v984 = vunpack.c.h.b16 %v307
      %v985 = vunpack.c.l.b16 %v308
      %v986 = vunpack.c.h.b16 %v308
      %v987 = vunpack.c.l.b16 %v309
      %v988 = vunpack.c.h.b16 %v309
      %v989 = vunpack.c.l.b16 %v310
      %v990 = vunpack.c.h.b16 %v310
      %v991 = vunpack.c.l.b16 %v311
      %v992 = vunpack.c.h.b16 %v311
      %v993 = vunpack.c.l.b16 %v312
      %v994 = vunpack.c.h.b16 %v312
      %v995 = vunpack.c.l.b16 %v313
      %v996 = vunpack.c.h.b16 %v313
      %v997 = vunpack.c.l.b16 %v314
      %v998 = vunpack.c.h.b16 %v314
      %v999 = vunpack.c.l.b16 %v315
      %v1000 = vunpack.c.h.b16 %v315
      %v1001 = vunpack.c.l.b16 %v316
      %v1002 = vunpack.c.h.b16 %v316
      %v1003 = vunpack.c.l.b16 %v317
      %v1004 = vunpack.c.h.b16 %v317
      %v1005 = vunpack.c.l.b16 %v318
      %v1006 = vunpack.c.h.b16 %v318
      %v1007 = vunpack.c.l.b16 %v319
      %v1008 = vunpack.c.h.b16 %v319
      %v1009 = vunpack.c.l.b16 %v320
      %v1010 = vunpack.c.h.b16 %v320
      %v1011 = vunpack.c.l.b16 %v321
      %v1012 = vunpack.c.h.b16 %v321
      %v1013 = vunpack.c.l.b16 %v322
      %v1014 = vunpack.c.h.b16 %v322
      %v1015 = vunpack.c.l.b16 %v323
      %v1016 = vunpack.c.h.b16 %v323
      %v1017 = vunpack.c.l.b16 %v324
      %v1018 = vunpack.c.h.b16 %v324
      %v1019 = vunpack.c.l.b16 %v325
      %v1020 = vunpack.c.h.b16 %v325
      %v1021 = vunpack.c.l.b16 %v326
      %v1022 = vunpack.c.h.b16 %v326
      %v1023 = vunpack.c.l.b16 %v327
      %v1024 = vunpack.c.h.b16 %v327
      %v1025 = vunpack.c.l.b16 %v328
      %v1026 = vunpack.c.h.b16 %v328
      %v1027 = vunpack.c.l.b16 %v329
      %v1028 = vunpack.c.h.b16 %v329
      %v1029 = vunpack.c.l.b16 %v330
      %v1030 = vunpack.c.h.b16 %v330
      %v1031 = vunpack.c.l.b16 %v331
      %v1032 = vunpack.c.h.b16 %v331
      %v1033 = vunpack.c.l.b16 %v332
      %v1034 = vunpack.c.h.b16 %v332
      %v1035 = vunpack.c.l.b16 %v333
      %v1036 = vunpack.c.h.b16 %v333
      %v1037 = vunpack.c.l.b16 %v334
      %v1038 = vunpack.c.h.b16 %v334
      %v1039 = vunpack.c.l.b16 %v335
      %v1040 = vunpack.c.h.b16 %v335
      %v1041 = vunpack.c.l.b16 %v336
      %v1042 = vunpack.c.h.b16 %v336
      %v1043 = vunpack.c.l.b16 %v337
      %v1044 = vunpack.c.h.b16 %v337
      %v1045 = vunpack.c.l.b16 %v338
      %v1046 = vunpack.c.h.b16 %v338
      %v1047 = vunpack.c.l.b16 %v339
      %v1048 = vunpack.c.h.b16 %v339
      %v1049 = vunpack.c.l.b16 %v340
      %v1050 = vunpack.c.h.b16 %v340
      %v1051 = vunpack.c.l.b16 %v341
      %v1052 = vunpack.c.h.b16 %v341
      %v1053 = vunpack.c.l.b16 %v342
      %v1054 = vunpack.c.h.b16 %v342
      %v1055 = vunpack.c.l.b16 %v343
      %v1056 = vunpack.c.h.b16 %v343
      %v1057 = vunpack.c.l.b16 %v344
      %v1058 = vunpack.c.h.b16 %v344
      %v1059 = vunpack.c.l.b16 %v345
      %v1060 = vunpack.c.h.b16 %v345
      %v1061 = vunpack.c.l.b16 %v346
      %v1062 = vunpack.c.h.b16 %v346
      %v1063 = vunpack.c.l.b16 %v347
      %v1064 = vunpack.c.h.b16 %v347
      %v1065 = vunpack.c.l.b16 %v348
      %v1066 = vunpack.c.h.b16 %v348
      %v1067 = vunpack.c.l.b16 %v349
      %v1068 = vunpack.c.h.b16 %v349
      %v1069 = vunpack.c.l.b16 %v350
      %v1070 = vunpack.c.h.b16 %v350
      %v1071 = vunpack.c.l.b16 %v351
      %v1072 = vunpack.c.h.b16 %v351
      %v1073 = vunpack.c.l.b16 %v352
      %v1074 = vunpack.c.h.b16 %v352
      %v1075 = vunpack.c.l.b16 %v353
      %v1076 = vunpack.c.h.b16 %v353
      %v1077 = vunpack.c.l.b16 %v354
      %v1078 = vunpack.c.h.b16 %v354
      %v1079 = vunpack.c.l.b16 %v355
      %v1080 = vunpack.c.h.b16 %v355
      %v1081 = vunpack.c.l.b16 %v356
      %v1082 = vunpack.c.h.b16 %v356
      %v1083 = vunpack.c.l.b16 %v357
      %v1084 = vunpack.c.h.b16 %v357
      %v1085 = vunpack.c.l.b16 %v358
      %v1086 = vunpack.c.h.b16 %v358
      %v1087 = vunpack.c.l.b16 %v359
      %v1088 = vunpack.c.h.b16 %v359
      %v1089 = vunpack.c.l.b16 %v360
      %v1090 = vunpack.c.h.b16 %v360
      %v1091 = vunpack.c.l.b16 %v361
      %v1092 = vunpack.c.h.b16 %v361
      %v1093 = vunpack.c.l.b16 %v362
      %v1094 = vunpack.c.h.b16 %v362
      %v1095 = vunpack.c.l.b16 %v363
      %v1096 = vunpack.c.h.b16 %v363
      %v1097 = vunpack.c.l.b16 %v364
      %v1098 = vunpack.c.h.b16 %v364
      %v1099 = vunpack.c.l.b16 %v365
      %v1100 = vunpack.c.h.b16 %v365
      %v1101 = vunpack.c.l.b16 %v366
      %v1102 = vunpack.c.h.b16 %v366
      %v1103 = vunpack.c.l.b16 %v367
      %v1104 = vunpack.c.h.b16 %v367
      %v1105 = vunpack.c.l.b16 %v368
      %v1106 = vunpack.c.h.b16 %v368
      %v1107 = vunpack.c.l.b16 %v369
      %v1108 = vunpack.c.h.b16 %v369
      %v1109 = vunpack.c.l.b16 %v370
      %v1110 = vunpack.c.h.b16 %v370
      %v1111 = vunpack.c.l.b16 %v371
      %v1112 = vunpack.c.h.b16 %v371
      %v1113 = vunpack.c.l.b16 %v372
      %v1114 = vunpack.c.h.b16 %v372
      %v1115 = vunpack.c.l.b16 %v373
      %v1116 = vunpack.c.h.b16 %v373
      %v1117 = vunpack.c.l.b16 %v374
      %v1118 = vunpack.c.h.b16 %v374
      %v1119 = vunpack.c.l.b16 %v375
      %v1120 = vunpack.c.h.b16 %v375
      %v1121 = vunpack.c.l.b16 %v376
      %v1122 = vunpack.c.h.b16 %v376
      %v1123 = vunpack.c.l.b16 %v377
      %v1124 = vunpack.c.h.b16 %v377
      %v1125 = vunpack.c.l.b16 %v378
      %v1126 = vunpack.c.h.b16 %v378
      %v1127 = vunpack.c.l.b16 %v379
      %v1128 = vunpack.c.h.b16 %v379
      %v1129 = vunpack.c.l.b16 %v380
      %v1130 = vunpack.c.h.b16 %v380
      %v1131 = vunpack.c.l.b16 %v381
      %v1132 = vunpack.c.h.b16 %v381
      %v1133 = vunpack.c.l.b16 %v382
      %v1134 = vunpack.c.h.b16 %v382
      %v1135 = vunpack.c.l.b16 %v383
      %v1136 = vunpack.c.h.b16 %v383
      %v1137 = vunpack.c.l.b16 %v384
      %v1138 = vunpack.c.h.b16 %v384
      %v1139 = vunpack.c.l.b16 %v385
      %v1140 = vunpack.c.h.b16 %v385
      %v1141 = vunpack.c.l.b16 %v386
      %v1142 = vunpack.c.h.b16 %v386
      %v1143 = vunpack.c.l.b16 %v387
      %v1144 = vunpack.c.h.b16 %v387
      %v1145 = vunpack.c.l.b16 %v388
      %v1146 = vunpack.c.h.b16 %v388
      %v1147 = vunpack.c.l.b16 %v389
      %v1148 = vunpack.c.h.b16 %v389
      %v1149 = vunpack.c.l.b16 %v390
      %v1150 = vunpack.c.h.b16 %v390
      %v1151 = vunpack.c.l.b16 %v391
      %v1152 = vunpack.c.h.b16 %v391
      %v1153 = vunpack.c.l.b16 %v392
      %v1154 = vunpack.c.h.b16 %v392
      %v1155 = vunpack.c.l.b16 %v393
      %v1156 = vunpack.c.h.b16 %v393
      %v1157 = vunpack.c.l.b16 %v394
      %v1158 = vunpack.c.h.b16 %v394
      %v1159 = vunpack.c.l.b16 %v395
      %v1160 = vunpack.c.h.b16 %v395
      %v1161 = vunpack.c.l.b16 %v396
      %v1162 = vunpack.c.h.b16 %v396
      %v1163 = vunpack.c.l.b16 %v397
      %v1164 = vunpack.c.h.b16 %v397
      %v1165 = vunpack.c.l.b16 %v398
      %v1166 = vunpack.c.h.b16 %v398
      %v1167 = vunpack.c.l.b16 %v399
      %v1168 = vunpack.c.h.b16 %v399
      %v1169 = vunpack.c.l.b16 %v400
      %v1170 = vunpack.c.h.b16 %v400
      %v1171 = vunpack.c.l.b16 %v401
      %v1172 = vunpack.c.h.b16 %v401
      %v1173 = vunpack.c.l.b16 %v402
      %v1174 = vunpack.c.h.b16 %v402
      %v1175 = vunpack.c.l.b16 %v403
      %v1176 = vunpack.c.h.b16 %v403
      %v1177 = vunpack.c.l.b16 %v404
      %v1178 = vunpack.c.h.b16 %v404
      %v1179 = vunpack.c.l.b16 %v405
      %v1180 = vunpack.c.h.b16 %v405
      %v1181 = vunpack.c.l.b16 %v406
      %v1182 = vunpack.c.h.b16 %v406
      %v1183 = vunpack.c.l.b16 %v407
      %v1184 = vunpack.c.h.b16 %v407
      %v1185 = vunpack.c.l.b16 %v408
      %v1186 = vunpack.c.h.b16 %v408
      %v1187 = vunpack.c.l.b16 %v409
      %v1188 = vunpack.c.h.b16 %v409
      %v1189 = vunpack.c.l.b16 %v410
      %v1190 = vunpack.c.h.b16 %v410
      %v1191 = vunpack.c.l.b16 %v411
      %v1192 = vunpack.c.h.b16 %v411
      %v1193 = vunpack.c.l.b16 %v412
      %v1194 = vunpack.c.h.b16 %v412
      %v1195 = vunpack.c.l.b16 %v413
      %v1196 = vunpack.c.h.b16 %v413
      %v1197 = vunpack.c.l.b16 %v414
      %v1198 = vunpack.c.h.b16 %v414
      %v1199 = vunpack.c.l.b16 %v415
      %v1200 = vunpack.c.h.b16 %v415
      %v1201 = vunpack.c.l.b16 %v416
      %v1202 = vunpack.c.h.b16 %v416
      %v1203 = vunpack.c.l.b16 %v417
      %v1204 = vunpack.c.h.b16 %v417
      %v1205 = vunpack.c.l.b16 %v418
      %v1206 = vunpack.c.h.b16 %v418
      %v1207 = vunpack.c.l.b16 %v419
      %v1208 = vunpack.c.h.b16 %v419
      %v1209 = vunpack.c.l.b16 %v420
      %v1210 = vunpack.c.h.b16 %v420
      %v1211 = vunpack.c.l.b16 %v421
      %v1212 = vunpack.c.h.b16 %v421
      %v1213 = vunpack.c.l.b16 %v422
      %v1214 = vunpack.c.h.b16 %v422
      %v1215 = vunpack.c.l.b16 %v423
      %v1216 = vunpack.c.h.b16 %v423
      %v1217 = vunpack.c.l.b16 %v424
      %v1218 = vunpack.c.h.b16 %v424
      %v1219 = vunpack.c.l.b16 %v425
      %v1220 = vunpack.c.h.b16 %v425
      %v1221 = vunpack.c.l.b16 %v426
      %v1222 = vunpack.c.h.b16 %v426
      %v1223 = vunpack.c.l.b16 %v427
      %v1224 = vunpack.c.h.b16 %v427
      %v1225 = vunpack.c.l.b16 %v428
      %v1226 = vunpack.c.h.b16 %v428
      %v1227 = vunpack.c.l.b16 %v429
      %v1228 = vunpack.c.h.b16 %v429
      %v1229 = vunpack.c.l.b16 %v430
      %v1230 = vunpack.c.h.b16 %v430
      %v1231 = vunpack.c.l.b16 %v431
      %v1232 = vunpack.c.h.b16 %v431
      %v1233 = vunpack.c.l.b16 %v432
      %v1234 = vunpack.c.h.b16 %v432
      %v1235 = vunpack.c.l.b16 %v433
      %v1236 = vunpack.c.h.b16 %v433
      %v1237 = vunpack.c.l.b16 %v434
      %v1238 = vunpack.c.h.b16 %v434
      %v1239 = vunpack.c.l.b16 %v435
      %v1240 = vunpack.c.h.b16 %v435
      %v1241 = vunpack.c.l.b16 %v436
      %v1242 = vunpack.c.h.b16 %v436
      %v1243 = vunpack.c.l.b16 %v437
      %v1244 = vunpack.c.h.b16 %v437
      %v1245 = vunpack.c.l.b16 %v438
      %v1246 = vunpack.c.h.b16 %v438
      %v1247 = vunpack.c.l.b16 %v439
      %v1248 = vunpack.c.h.b16 %v439
      %v1249 = vunpack.c.l.b16 %v440
      %v1250 = vunpack.c.h.b16 %v440
      %v1251 = vunpack.c.l.b16 %v441
      %v1252 = vunpack.c.h.b16 %v441
      %v1253 = vunpack.c.l.b16 %v442
      %v1254 = vunpack.c.h.b16 %v442
      %v1255 = vunpack.c.l.b16 %v443
      %v1256 = vunpack.c.h.b16 %v443
      %v1257 = vunpack.c.l.b16 %v444
      %v1258 = vunpack.c.h.b16 %v444
      %v1259 = vunpack.c.l.b16 %v445
      %v1260 = vunpack.c.h.b16 %v445
      %v1261 = vunpack.c.l.b16 %v446
      %v1262 = vunpack.c.h.b16 %v446
      %v1263 = vunpack.c.l.b16 %v447
      %v1264 = vunpack.c.h.b16 %v447
      %v1265 = vunpack.c.l.b16 %v448
      %v1266 = vunpack.c.h.b16 %v448
      %v1267 = vunpack.c.l.b16 %v449
      %v1268 = vunpack.c.h.b16 %v449
      %v1269 = vunpack.c.l.b16 %v450
      %v1270 = vunpack.c.h.b16 %v450
      %v1271 = vunpack.c.l.b16 %v451
      %v1272 = vunpack.c.h.b16 %v451
      %v1273 = vunpack.c.l.b16 %v452
      %v1274 = vunpack.c.h.b16 %v452
      %v1275 = vunpack.c.l.b16 %v453
      %v1276 = vunpack.c.h.b16 %v453
      %v1277 = vunpack.c.l.b16 %v454
      %v1278 = vunpack.c.h.b16 %v454
      %v1279 = vunpack.c.l.b16 %v455
      %v1280 = vunpack.c.h.b16 %v455
      %v1281 = vunpack.c.l.b16 %v456
      %v1282 = vunpack.c.h.b16 %v456
      %v1283 = vunpack.c.l.b16 %v457
      %v1284 = vunpack.c.h.b16 %v457
      %v1285 = vunpack.c.l.b16 %v458
      %v1286 = vunpack.c.h.b16 %v458
      %v1287 = vunpack.c.l.b16 %v459
      %v1288 = vunpack.c.h.b16 %v459
      %v1289 = vunpack.c.l.b16 %v460
      %v1290 = vunpack.c.h.b16 %v460
      %v1291 = vunpack.c.l.b16 %v461
      %v1292 = vunpack.c.h.b16 %v461
      %v1293 = vunpack.c.l.b16 %v462
      %v1294 = vunpack.c.h.b16 %v462
      %v1295 = vunpack.c.l.b16 %v463
      %v1296 = vunpack.c.h.b16 %v463
      %v1297 = vunpack.c.l.b16 %v464
      %v1298 = vunpack.c.h.b16 %v464
      %v1299 = vunpack.c.l.b16 %v465
      %v1300 = vunpack.c.h.b16 %v465
      %v1301 = vunpack.c.l.b16 %v466
      %v1302 = vunpack.c.h.b16 %v466
      %v1303 = vunpack.c.l.b16 %v467
      %v1304 = vunpack.c.h.b16 %v467
      %v1305 = vunpack.c.l.b16 %v468
      %v1306 = vunpack.c.h.b16 %v468
      %v1307 = vunpack.c.l.b16 %v469
      %v1308 = vunpack.c.h.b16 %v469
      %v1309 = vunpack.c.l.b16 %v470
      %v1310 = vunpack.c.h.b16 %v470
      %v1311 = vunpack.c.l.b16 %v471
      %v1312 = vunpack.c.h.b16 %v471
      %v1313 = vunpack.c.l.b16 %v472
      %v1314 = vunpack.c.h.b16 %v472
      %v1315 = vunpack.c.l.b16 %v473
      %v1316 = vunpack.c.h.b16 %v473
      %v1317 = vunpack.c.l.b16 %v474
      %v1318 = vunpack.c.h.b16 %v474
      %v1319 = vunpack.c.l.b16 %v475
      %v1320 = vunpack.c.h.b16 %v475
      %v1321 = vunpack.c.l.b16 %v476
      %v1322 = vunpack.c.h.b16 %v476
      %v1323 = vunpack.c.l.b16 %v477
      %v1324 = vunpack.c.h.b16 %v477
      %v1325 = vunpack.c.l.b16 %v478
      %v1326 = vunpack.c.h.b16 %v478
      %v1327 = vunpack.c.l.b16 %v479
      %v1328 = vunpack.c.h.b16 %v479
      %v1329 = vunpack.c.l.b16 %v480
      %v1330 = vunpack.c.h.b16 %v480
      %v1331 = vunpack.c.l.b16 %v481
      %v1332 = vunpack.c.h.b16 %v481
      %v1333 = vunpack.c.l.b16 %v482
      %v1334 = vunpack.c.h.b16 %v482
      %v1335 = vunpack.c.l.b16 %v483
      %v1336 = vunpack.c.h.b16 %v483
      %v1337 = vunpack.c.l.b16 %v484
      %v1338 = vunpack.c.h.b16 %v484
      %v1339 = vunpack.c.l.b16 %v485
      %v1340 = vunpack.c.h.b16 %v485
      %v1341 = vunpack.c.l.b16 %v486
      %v1342 = vunpack.c.h.b16 %v486
      %v1343 = vunpack.c.l.b16 %v487
      %v1344 = vunpack.c.h.b16 %v487
      %v1345 = vunpack.c.l.b16 %v488
      %v1346 = vunpack.c.h.b16 %v488
      %v1347 = vunpack.c.l.b16 %v489
      %v1348 = vunpack.c.h.b16 %v489
      %v1349 = vunpack.c.l.b16 %v490
      %v1350 = vunpack.c.h.b16 %v490
      %v1351 = vpack.c.b16 %v841, %v839
      %v1352 = vpack.c.b16 %v842, %v840
      %v1353 = vpack.c.b16 %v845, %v843
      %v1354 = vpack.c.b16 %v846, %v844
      %v1355 = vpack.c.b16 %v849, %v847
      %v1356 = vpack.c.b16 %v850, %v848
      %v1357 = vpack.c.b16 %v853, %v851
      %v1358 = vpack.c.b16 %v854, %v852
      %v1359 = vpack.c.b16 %v857, %v855
      %v1360 = vpack.c.b16 %v858, %v856
      %v1361 = vpack.c.b16 %v861, %v859
      %v1362 = vpack.c.b16 %v862, %v860
      %v1363 = vpack.c.b16 %v865, %v863
      %v1364 = vpack.c.b16 %v866, %v864
      %v1365 = vpack.c.b16 %v869, %v867
      %v1366 = vpack.c.b16 %v870, %v868
      %v1367 = vpack.c.b16 %v873, %v871
      %v1368 = vpack.c.b16 %v874, %v872
      %v1369 = vpack.c.b16 %v877, %v875
      %v1370 = vpack.c.b16 %v878, %v876
      %v1371 = vpack.c.b16 %v881, %v879
      %v1372 = vpack.c.b16 %v882, %v880
      %v1373 = vpack.c.b16 %v885, %v883
      %v1374 = vpack.c.b16 %v886, %v884
      %v1375 = vpack.c.b16 %v889, %v887
      %v1376 = vpack.c.b16 %v890, %v888
      %v1377 = vpack.c.b16 %v893, %v891
      %v1378 = vpack.c.b16 %v894, %v892
      %v1379 = vpack.c.b16 %v897, %v895
      %v1380 = vpack.c.b16 %v898, %v896
      %v1381 = vpack.c.b16 %v901, %v899
      %v1382 = vpack.c.b16 %v902, %v900
      %v1383 = vpack.c.b16 %v905, %v903
      %v1384 = vpack.c.b16 %v906, %v904
      %v1385 = vpack.c.b16 %v909, %v907
      %v1386 = vpack.c.b16 %v910, %v908
      %v1387 = vpack.c.b16 %v913, %v911
      %v1388 = vpack.c.b16 %v914, %v912
      %v1389 = vpack.c.b16 %v917, %v915
      %v1390 = vpack.c.b16 %v918, %v916
      %v1391 = vpack.c.b16 %v921, %v919
      %v1392 = vpack.c.b16 %v922, %v920
      %v1393 = vpack.c.b16 %v925, %v923
      %v1394 = vpack.c.b16 %v926, %v924
      %v1395 = vpack.c.b16 %v929, %v927
      %v1396 = vpack.c.b16 %v930, %v928
      %v1397 = vpack.c.b16 %v933, %v931
      %v1398 = vpack.c.b16 %v934, %v932
      %v1399 = vpack.c.b16 %v937, %v935
      %v1400 = vpack.c.b16 %v938, %v936
      %v1401 = vpack.c.b16 %v941, %v939
      %v1402 = vpack.c.b16 %v942, %v940
      %v1403 = vpack.c.b16 %v945, %v943
      %v1404 = vpack.c.b16 %v946, %v944
      %v1405 = vpack.c.b16 %v949, %v947
      %v1406 = vpack.c.b16 %v950, %v948
      %v1407 = vpack.c.b16 %v953, %v951
      %v1408 = vpack.c.b16 %v954, %v952
      %v1409 = vpack.c.b16 %v957, %v955
      %v1410 = vpack.c.b16 %v958, %v956
      %v1411 = vpack.c.b16 %v961, %v959
      %v1412 = vpack.c.b16 %v962, %v960
      %v1413 = vpack.c.b16 %v965, %v963
      %v1414 = vpack.c.b16 %v966, %v964
      %v1415 = vpack.c.b16 %v969, %v967
      %v1416 = vpack.c.b16 %v970, %v968
      %v1417 = vpack.c.b16 %v973, %v971
      %v1418 = vpack.c.b16 %v974, %v972
      %v1419 = vpack.c.b16 %v977, %v975
      %v1420 = vpack.c.b16 %v978, %v976
      %v1421 = vpack.c.b16 %v981, %v979
      %v1422 = vpack.c.b16 %v982, %v980
      %v1423 = vpack.c.b16 %v985, %v983
      %v1424 = vpack.c.b16 %v986, %v984
      %v1425 = vpack.c.b16 %v989, %v987
      %v1426 = vpack.c.b16 %v990, %v988
      %v1427 = vpack.c.b16 %v993, %v991
      %v1428 = vpack.c.b16 %v994, %v992
      %v1429 = vpack.c.b16 %v997, %v995
      %v1430 = vpack.c.b16 %v998, %v996
      %v1431 = vpack.c.b16 %v1001, %v999
      %v1432 = vpack.c.b16 %v1002, %v1000
      %v1433 = vpack.c.b16 %v1005, %v1003
      %v1434 = vpack.c.b16 %v1006, %v1004
      %v1435 = vpack.c.b16 %v1009, %v1007
      %v1436 = vpack.c.b16 %v1010, %v1008
      %v1437 = vpack.c.b16 %v1013, %v1011
      %v1438 = vpack.c.b16 %v1014, %v1012
      %v1439 = vpack.c.b16 %v1017, %v1015
      %v1440 = vpack.c.b16 %v1018, %v1016
      %v1441 = vpack.c.b16 %v1021, %v1019
      %v1442 = vpack.c.b16 %v1022, %v1020
      %v1443 = vpack.c.b16 %v1025, %v1023
      %v1444 = vpack.c.b16 %v1026, %v1024
      %v1445 = vpack.c.b16 %v1029, %v1027
      %v1446 = vpack.c.b16 %v1030, %v1028
      %v1447 = vpack.c.b16 %v1033, %v1031
      %v1448 = vpack.c.b16 %v1034, %v1032
      %v1449 = vpack.c.b16 %v1037, %v1035
      %v1450 = vpack.c.b16 %v1038, %v1036
      %v1451 = vpack.c.b16 %v1041, %v1039
      %v1452 = vpack.c.b16 %v1042, %v1040
      %v1453 = vpack.c.b16 %v1045, %v1043
      %v1454 = vpack.c.b16 %v1046, %v1044
      %v1455 = vpack.c.b16 %v1049, %v1047
      %v1456 = vpack.c.b16 %v1050, %v1048
      %v1457 = vpack.c.b16 %v1053, %v1051
      %v1458 = vpack.c.b16 %v1054, %v1052
      %v1459 = vpack.c.b16 %v1057, %v1055
      %v1460 = vpack.c.b16 %v1058, %v1056
      %v1461 = vpack.c.b16 %v1061, %v1059
      %v1462 = vpack.c.b16 %v1062, %v1060
      %v1463 = vpack.c.b16 %v1065, %v1063
      %v1464 = vpack.c.b16 %v1066, %v1064
      %v1465 = vpack.c.b16 %v1069, %v1067
      %v1466 = vpack.c.b16 %v1070, %v1068
      %v1467 = vpack.c.b16 %v1073, %v1071
      %v1468 = vpack.c.b16 %v1074, %v1072
      %v1469 = vpack.c.b16 %v1077, %v1075
      %v1470 = vpack.c.b16 %v1078, %v1076
      %v1471 = vpack.c.b16 %v1081, %v1079
      %v1472 = vpack.c.b16 %v1082, %v1080
      %v1473 = vpack.c.b16 %v1085, %v1083
      %v1474 = vpack.c.b16 %v1086, %v1084
      %v1475 = vpack.c.b16 %v1089, %v1087
      %v1476 = vpack.c.b16 %v1090, %v1088
      %v1477 = vpack.c.b16 %v1093, %v1091
      %v1478 = vpack.c.b16 %v1094, %v1092
      %v1479 = vpack.c.b16 %v1097, %v1095
      %v1480 = vpack.c.b16 %v1098, %v1096
      %v1481 = vpack.c.b16 %v1101, %v1099
      %v1482 = vpack.c.b16 %v1102, %v1100
      %v1483 = vpack.c.b16 %v1105, %v1103
      %v1484 = vpack.c.b16 %v1106, %v1104
      %v1485 = vpack.c.b16 %v1109, %v1107
      %v1486 = vpack.c.b16 %v1110, %v1108
      %v1487 = vpack.c.b16 %v1113, %v1111
      %v1488 = vpack.c.b16 %v1114, %v1112
      %v1489 = vpack.c.b16 %v1117, %v1115
      %v1490 = vpack.c.b16 %v1118, %v1116
      %v1491 = vpack.c.b16 %v1121, %v1119
      %v1492 = vpack.c.b16 %v1122, %v1120
      %v1493 = vpack.c.b16 %v1125, %v1123
      %v1494 = vpack.c.b16 %v1126, %v1124
      %v1495 = vpack.c.b16 %v1129, %v1127
      %v1496 = vpack.c.b16 %v1130, %v1128
      %v1497 = vpack.c.b16 %v1133, %v1131
      %v1498 = vpack.c.b16 %v1134, %v1132
      %v1499 = vpack.c.b16 %v1137, %v1135
      %v1500 = vpack.c.b16 %v1138, %v1136
      %v1501 = vpack.c.b16 %v1141, %v1139
      %v1502 = vpack.c.b16 %v1142, %v1140
      %v1503 = vpack.c.b16 %v1145, %v1143
      %v1504 = vpack.c.b16 %v1146, %v1144
      %v1505 = vpack.c.b16 %v1149, %v1147
      %v1506 = vpack.c.b16 %v1150, %v1148
      %v1507 = vpack.c.b16 %v1153, %v1151
      %v1508 = vpack.c.b16 %v1154, %v1152
      %v1509 = vpack.c.b16 %v1157, %v1155
      %v1510 = vpack.c.b16 %v1158, %v1156
      %v1511 = vpack.c.b16 %v1161, %v1159
      %v1512 = vpack.c.b16 %v1162, %v1160
      %v1513 = vpack.c.b16 %v1165, %v1163
      %v1514 = vpack.c.b16 %v1166, %v1164
      %v1515 = vpack.c.b16 %v1169, %v1167
      %v1516 = vpack.c.b16 %v1170, %v1168
      %v1517 = vpack.c.b16 %v1173, %v1171
      %v1518 = vpack.c.b16 %v1174, %v1172
      %v1519 = vpack.c.b16 %v1177, %v1175
      %v1520 = vpack.c.b16 %v1178, %v1176
      %v1521 = vpack.c.b16 %v1181, %v1179
      %v1522 = vpack.c.b16 %v1182, %v1180
      %v1523 = vpack.c.b16 %v1185, %v1183
      %v1524 = vpack.c.b16 %v1186, %v1184
      %v1525 = vpack.c.b16 %v1189, %v1187
      %v1526 = vpack.c.b16 %v1190, %v1188
      %v1527 = vpack.c.b16 %v1193, %v1191
      %v1528 = vpack.c.b16 %v1194, %v1192
      %v1529 = vpack.c.b16 %v1197, %v1195
      %v1530 = vpack.c.b16 %v1198, %v1196
      %v1531 = vpack.c.b16 %v1201, %v1199
      %v1532 = vpack.c.b16 %v1202, %v1200
      %v1533 = vpack.c.b16 %v1205, %v1203
      %v1534 = vpack.c.b16 %v1206, %v1204
      %v1535 = vpack.c.b16 %v1209, %v1207
      %v1536 = vpack.c.b16 %v1210, %v1208
      %v1537 = vpack.c.b16 %v1213, %v1211
      %v1538 = vpack.c.b16 %v1214, %v1212
      %v1539 = vpack.c.b16 %v1217, %v1215
      %v1540 = vpack.c.b16 %v1218, %v1216
      %v1541 = vpack.c.b16 %v1221, %v1219
      %v1542 = vpack.c.b16 %v1222, %v1220
      %v1543 = vpack.c.b16 %v1225, %v1223
      %v1544 = vpack.c.b16 %v1226, %v1224
      %v1545 = vpack.c.b16 %v1229, %v1227
      %v1546 = vpack.c.b16 %v1230, %v1228
      %v1547 = vpack.c.b16 %v1233, %v1231
      %v1548 = vpack.c.b16 %v1234, %v1232
      %v1549 = vpack.c.b16 %v1237, %v1235
      %v1550 = vpack.c.b16 %v1238, %v1236
      %v1551 = vpack.c.b16 %v1241, %v1239
      %v1552 = vpack.c.b16 %v1242, %v1240
      %v1553 = vpack.c.b16 %v1245, %v1243
      %v1554 = vpack.c.b16 %v1246, %v1244
      %v1555 = vpack.c.b16 %v1249, %v1247
      %v1556 = vpack.c.b16 %v1250, %v1248
      %v1557 = vpack.c.b16 %v1253, %v1251
      %v1558 = vpack.c.b16 %v1254, %v1252
      %v1559 = vpack.c.b16 %v1257, %v1255
      %v1560 = vpack.c.b16 %v1258, %v1256
      %v1561 = vpack.c.b16 %v1261, %v1259
      %v1562 = vpack.c.b16 %v1262, %v1260
      %v1563 = vpack.c.b16 %v1265, %v1263
      %v1564 = vpack.c.b16 %v1266, %v1264
      %v1565 = vpack.c.b16 %v1269, %v1267
      %v1566 = vpack.c.b16 %v1270, %v1268
      %v1567 = vpack.c.b16 %v1273, %v1271
      %v1568 = vpack.c.b16 %v1274, %v1272
      %v1569 = vpack.c.b16 %v1277, %v1275
      %v1570 = vpack.c.b16 %v1278, %v1276
      %v1571 = vpack.c.b16 %v1281, %v1279
      %v1572 = vpack.c.b16 %v1282, %v1280
      %v1573 = vpack.c.b16 %v1285, %v1283
      %v1574 = vpack.c.b16 %v1286, %v1284
      %v1575 = vpack.c.b16 %v1289, %v1287
      %v1576 = vpack.c.b16 %v1290, %v1288
      %v1577 = vpack.c.b16 %v1293, %v1291
      %v1578 = vpack.c.b16 %v1294, %v1292
      %v1579 = vpack.c.b16 %v1297, %v1295
      %v1580 = vpack.c.b16 %v1298, %v1296
      %v1581 = vpack.c.b16 %v1301, %v1299
      %v1582 = vpack.c.b16 %v1302, %v1300
      %v1583 = vpack.c.b16 %v1305, %v1303
      %v1584 = vpack.c.b16 %v1306, %v1304
      %v1585 = vpack.c.b16 %v1309, %v1307
      %v1586 = vpack.c.b16 %v1310, %v1308
      %v1587 = vpack.c.b16 %v1313, %v1311
      %v1588 = vpack.c.b16 %v1314, %v1312
      %v1589 = vpack.c.b16 %v1317, %v1315
      %v1590 = vpack.c.b16 %v1318, %v1316
      %v1591 = vpack.c.b16 %v1321, %v1319
      %v1592 = vpack.c.b16 %v1322, %v1320
      %v1593 = vpack.c.b16 %v1325, %v1323
      %v1594 = vpack.c.b16 %v1326, %v1324
      %v1595 = vpack.c.b16 %v1329, %v1327
      %v1596 = vpack.c.b16 %v1330, %v1328
      %v1597 = vpack.c.b16 %v1333, %v1331
      %v1598 = vpack.c.b16 %v1334, %v1332
      %v1599 = vpack.c.b16 %v1337, %v1335
      %v1600 = vpack.c.b16 %v1338, %v1336
      %v1601 = vpack.c.b16 %v1341, %v1339
      %v1602 = vpack.c.b16 %v1342, %v1340
      %v1603 = vpack.c.b16 %v1345, %v1343
      %v1604 = vpack.c.b16 %v1346, %v1344
      %v1605 = vpack.c.b16 %v1349, %v1347
      %v1606 = vpack.c.b16 %v1350, %v1348
      %1863 = vmatprep.subr.bf16.mxu0 %v1352
      %1864 = vmatpush1.bf16.msra.mxu0 %v1351
      %1865 = vmatprep.subr.bf16.mxu0 %v1354
      %1866 = vmatpush1.bf16.msra.mxu0 %v1353
      %1867 = vmatprep.subr.bf16.mxu0 %v1356
      %1868 = vmatpush1.bf16.msra.mxu0 %v1355
      %1869 = vmatprep.subr.bf16.mxu0 %v1358
      %1870 = vmatpush1.bf16.msra.mxu0 %v1357
      %1871 = vmatprep.subr.bf16.mxu0 %v1360
      %1872 = vmatpush1.bf16.msra.mxu0 %v1359
      %1873 = vmatprep.subr.bf16.mxu0 %v1362
      %1874 = vmatpush1.bf16.msra.mxu0 %v1361
      %1875 = vmatprep.subr.bf16.mxu0 %v1364
      %1876 = vmatpush1.bf16.msra.mxu0 %v1363
      %1877 = vmatprep.subr.bf16.mxu0 %v1366
      %1878 = vmatpush1.bf16.msra.mxu0 %v1365
      %1879 = vmatprep.subr.bf16.mxu0 %v1368
      %1880 = vmatpush1.bf16.msra.mxu0 %v1367
      %1881 = vmatprep.subr.bf16.mxu0 %v1370
      %1882 = vmatpush1.bf16.msra.mxu0 %v1369
      %1883 = vmatprep.subr.bf16.mxu0 %v1372
      %1884 = vmatpush1.bf16.msra.mxu0 %v1371
      %1885 = vmatprep.subr.bf16.mxu0 %v1374
      %1886 = vmatpush1.bf16.msra.mxu0 %v1373
      %1887 = vmatprep.subr.bf16.mxu0 %v1376
      %1888 = vmatpush1.bf16.msra.mxu0 %v1375
      %1889 = vmatprep.subr.bf16.mxu0 %v1378
      %1890 = vmatpush1.bf16.msra.mxu0 %v1377
      %1891 = vmatprep.subr.bf16.mxu0 %v1380
      %1892 = vmatpush1.bf16.msra.mxu0 %v1379
      %1893 = vmatprep.subr.bf16.mxu0 %v1382
      %1894 = vmatpush1.bf16.msra.mxu0 %v1381
      %1895 = vmatprep.mubr.bf16.mxu0 %v552
      %1896 = vmatmul.mubr.bf16.gmra.mrb[0].mxu0 %v551
      %v1897 = vpop.f32.mrb[0].mxu0
      %v1898 = vadd.f32 %v496, %v1897
      %v1899 = vpop.f32.mrb[0].mxu0
      %v1900 = vadd.f32 %v500, %v1899
      %v1901 = vpop.f32.mrb[0].mxu0
      %v1902 = vadd.f32 %v496, %v1901
      %v1903 = vpop.f32.mrb[0].mxu0
      %v1904 = vadd.f32 %v500, %v1903
      %1905 = vdwg.mxu0
      %1906 = vmatprep.subr.bf16.mxu0 %v1384
      %1907 = vmatpush1.bf16.msra.mxu0 %v1383
      %1908 = vmatprep.subr.bf16.mxu0 %v1386
      %1909 = vmatpush1.bf16.msra.mxu0 %v1385
      %1910 = vmatprep.subr.bf16.mxu0 %v1388
      %1911 = vmatpush1.bf16.msra.mxu0 %v1387
      %1912 = vmatprep.subr.bf16.mxu0 %v1390
      %1913 = vmatpush1.bf16.msra.mxu0 %v1389
      %1914 = vmatprep.subr.bf16.mxu0 %v1392
      %1915 = vmatpush1.bf16.msra.mxu0 %v1391
      %1916 = vmatprep.subr.bf16.mxu0 %v1394
      %1917 = vmatpush1.bf16.msra.mxu0 %v1393
      %1918 = vmatprep.subr.bf16.mxu0 %v1396
      %1919 = vmatpush1.bf16.msra.mxu0 %v1395
      %1920 = vmatprep.subr.bf16.mxu0 %v1398
      %1921 = vmatpush1.bf16.msra.mxu0 %v1397
      %1922 = vmatprep.subr.bf16.mxu0 %v1400
      %1923 = vmatpush1.bf16.msra.mxu0 %v1399
      %1924 = vmatprep.subr.bf16.mxu0 %v1402
      %1925 = vmatpush1.bf16.msra.mxu0 %v1401
      %1926 = vmatprep.subr.bf16.mxu0 %v1404
      %1927 = vmatpush1.bf16.msra.mxu0 %v1403
      %1928 = vmatprep.subr.bf16.mxu0 %v1406
      %1929 = vmatpush1.bf16.msra.mxu0 %v1405
      %1930 = vmatprep.subr.bf16.mxu0 %v1408
      %1931 = vmatpush1.bf16.msra.mxu0 %v1407
      %1932 = vmatprep.subr.bf16.mxu0 %v1410
      %1933 = vmatpush1.bf16.msra.mxu0 %v1409
      %1934 = vmatprep.subr.bf16.mxu0 %v1412
      %1935 = vmatpush1.bf16.msra.mxu0 %v1411
      %1936 = vmatprep.subr.bf16.mxu0 %v1414
      %1937 = vmatpush1.bf16.msra.mxu0 %v1413
      %1938 = vmatprep.mubr.bf16.mxu0 %v554
      %1939 = vmatmul.mubr.bf16.gmra.mrb[0].mxu0 %v553
      %v1940 = vpop.f32.mrb[0].mxu0
      %v1941 = vadd.f32 %v1898, %v1940
      %v1942 = vpop.f32.mrb[0].mxu0
      %v1943 = vadd.f32 %v1900, %v1942
      %v1944 = vpop.f32.mrb[0].mxu0
      %v1945 = vadd.f32 %v1902, %v1944
      %v1946 = vpop.f32.mrb[0].mxu0
      %v1947 = vadd.f32 %v1904, %v1946
      %1948 = vdwg.mxu0
      %1949 = vmatprep.subr.bf16.mxu0 %v1416
      %1950 = vmatpush1.bf16.msra.mxu0 %v1415
      %1951 = vmatprep.subr.bf16.mxu0 %v1418
      %1952 = vmatpush1.bf16.msra.mxu0 %v1417
      %1953 = vmatprep.subr.bf16.mxu0 %v1420
      %1954 = vmatpush1.bf16.msra.mxu0 %v1419
      %1955 = vmatprep.subr.bf16.mxu0 %v1422
      %1956 = vmatpush1.bf16.msra.mxu0 %v1421
      %1957 = vmatprep.subr.bf16.mxu0 %v1424
      %1958 = vmatpush1.bf16.msra.mxu0 %v1423
      %1959 = vmatprep.subr.bf16.mxu0 %v1426
      %1960 = vmatpush1.bf16.msra.mxu0 %v1425
      %1961 = vmatprep.subr.bf16.mxu0 %v1428
      %1962 = vmatpush1.bf16.msra.mxu0 %v1427
      %1963 = vmatprep.subr.bf16.mxu0 %v1430
      %1964 = vmatpush1.bf16.msra.mxu0 %v1429
      %1965 = vmatprep.subr.bf16.mxu0 %v1432
      %1966 = vmatpush1.bf16.msra.mxu0 %v1431
      %1967 = vmatprep.subr.bf16.mxu0 %v1434
      %1968 = vmatpush1.bf16.msra.mxu0 %v1433
      %1969 = vmatprep.subr.bf16.mxu0 %v1436
      %1970 = vmatpush1.bf16.msra.mxu0 %v1435
      %1971 = vmatprep.subr.bf16.mxu0 %v1438
      %1972 = vmatpush1.bf16.msra.mxu0 %v1437
      %1973 = vmatprep.subr.bf16.mxu0 %v1440
      %1974 = vmatpush1.bf16.msra.mxu0 %v1439
      %1975 = vmatprep.subr.bf16.mxu0 %v1442
      %1976 = vmatpush1.bf16.msra.mxu0 %v1441
      %1977 = vmatprep.subr.bf16.mxu0 %v1444
      %1978 = vmatpush1.bf16.msra.mxu0 %v1443
      %1979 = vmatprep.subr.bf16.mxu0 %v1446
      %1980 = vmatpush1.bf16.msra.mxu0 %v1445
      %1981 = vmatprep.mubr.bf16.mxu0 %v556
      %1982 = vmatmul.mubr.bf16.gmra.mrb[0].mxu0 %v555
      %v1983 = vpop.f32.mrb[0].mxu0
      %v1984 = vadd.f32 %v1941, %v1983
      %v1985 = vpop.f32.mrb[0].mxu0
      %v1986 = vadd.f32 %v1943, %v1985
      %v1987 = vpop.f32.mrb[0].mxu0
      %v1988 = vadd.f32 %v1945, %v1987
      %v1989 = vpop.f32.mrb[0].mxu0
      %v1990 = vadd.f32 %v1947, %v1989
      %1991 = vdwg.mxu0
      %1992 = vmatprep.subr.bf16.mxu0 %v1448
      %1993 = vmatpush1.bf16.msra.mxu0 %v1447
      %1994 = vmatprep.subr.bf16.mxu0 %v1450
      %1995 = vmatpush1.bf16.msra.mxu0 %v1449
      %1996 = vmatprep.subr.bf16.mxu0 %v1452
      %1997 = vmatpush1.bf16.msra.mxu0 %v1451
      %1998 = vmatprep.subr.bf16.mxu0 %v1454
      %1999 = vmatpush1.bf16.msra.mxu0 %v1453
      %2000 = vmatprep.subr.bf16.mxu0 %v1456
      %2001 = vmatpush1.bf16.msra.mxu0 %v1455
      %2002 = vmatprep.subr.bf16.mxu0 %v1458
      %2003 = vmatpush1.bf16.msra.mxu0 %v1457
      %2004 = vmatprep.subr.bf16.mxu0 %v1460
      %2005 = vmatpush1.bf16.msra.mxu0 %v1459
      %2006 = vmatprep.subr.bf16.mxu0 %v1462
      %2007 = vmatpush1.bf16.msra.mxu0 %v1461
      %2008 = vmatprep.subr.bf16.mxu0 %v1464
      %2009 = vmatpush1.bf16.msra.mxu0 %v1463
      %2010 = vmatprep.subr.bf16.mxu0 %v1466
      %2011 = vmatpush1.bf16.msra.mxu0 %v1465
      %2012 = vmatprep.subr.bf16.mxu0 %v1468
      %2013 = vmatpush1.bf16.msra.mxu0 %v1467
      %2014 = vmatprep.subr.bf16.mxu0 %v1470
      %2015 = vmatpush1.bf16.msra.mxu0 %v1469
      %2016 = vmatprep.subr.bf16.mxu0 %v1472
      %2017 = vmatpush1.bf16.msra.mxu0 %v1471
      %2018 = vmatprep.subr.bf16.mxu0 %v1474
      %2019 = vmatpush1.bf16.msra.mxu0 %v1473
      %2020 = vmatprep.subr.bf16.mxu0 %v1476
      %2021 = vmatpush1.bf16.msra.mxu0 %v1475
      %2022 = vmatprep.subr.bf16.mxu0 %v1478
      %2023 = vmatpush1.bf16.msra.mxu0 %v1477
      %2024 = vmatprep.mubr.bf16.mxu0 %v558
      %2025 = vmatmul.mubr.bf16.gmra.mrb[0].mxu0 %v557
      %v2026 = vpop.f32.mrb[0].mxu0
      %v2027 = vadd.f32 %v1984, %v2026
      %v2028 = vpop.f32.mrb[0].mxu0
      %v2029 = vadd.f32 %v1986, %v2028
      %v2030 = vpop.f32.mrb[0].mxu0
      %v2031 = vadd.f32 %v1988, %v2030
      %v2032 = vpop.f32.mrb[0].mxu0
      %v2033 = vadd.f32 %v1990, %v2032
      %2034 = vdwg.mxu0
      %2035 = vmatprep.subr.bf16.mxu0 %v1480
      %2036 = vmatpush1.bf16.msra.mxu0 %v1479
      %2037 = vmatprep.subr.bf16.mxu0 %v1482
      %2038 = vmatpush1.bf16.msra.mxu0 %v1481
      %2039 = vmatprep.subr.bf16.mxu0 %v1484
      %2040 = vmatpush1.bf16.msra.mxu0 %v1483
      %2041 = vmatprep.subr.bf16.mxu0 %v1486
      %2042 = vmatpush1.bf16.msra.mxu0 %v1485
      %2043 = vmatprep.subr.bf16.mxu0 %v1488
      %2044 = vmatpush1.bf16.msra.mxu0 %v1487
      %2045 = vmatprep.subr.bf16.mxu0 %v1490
      %2046 = vmatpush1.bf16.msra.mxu0 %v1489
      %2047 = vmatprep.subr.bf16.mxu0 %v1492
      %2048 = vmatpush1.bf16.msra.mxu0 %v1491
      %2049 = vmatprep.subr.bf16.mxu0 %v1494
      %2050 = vmatpush1.bf16.msra.mxu0 %v1493
      %2051 = vmatprep.subr.bf16.mxu0 %v1496
      %2052 = vmatpush1.bf16.msra.mxu0 %v1495
      %2053 = vmatprep.subr.bf16.mxu0 %v1498
      %2054 = vmatpush1.bf16.msra.mxu0 %v1497
      %2055 = vmatprep.subr.bf16.mxu0 %v1500
      %2056 = vmatpush1.bf16.msra.mxu0 %v1499
      %2057 = vmatprep.subr.bf16.mxu0 %v1502
      %2058 = vmatpush1.bf16.msra.mxu0 %v1501
      %2059 = vmatprep.subr.bf16.mxu0 %v1504
      %2060 = vmatpush1.bf16.msra.mxu0 %v1503
      %2061 = vmatprep.subr.bf16.mxu0 %v1506
      %2062 = vmatpush1.bf16.msra.mxu0 %v1505
      %2063 = vmatprep.subr.bf16.mxu0 %v1508
      %2064 = vmatpush1.bf16.msra.mxu0 %v1507
      %2065 = vmatprep.subr.bf16.mxu0 %v1510
      %2066 = vmatpush1.bf16.msra.mxu0 %v1509
      %2067 = vmatprep.mubr.bf16.mxu0 %v560
      %2068 = vmatmul.mubr.bf16.gmra.mrb[0].mxu0 %v559
      %v2069 = vpop.f32.mrb[0].mxu0
      %v2070 = vadd.f32 %v2027, %v2069
      %v2071 = vpop.f32.mrb[0].mxu0
      %v2072 = vadd.f32 %v2029, %v2071
      %v2073 = vpop.f32.mrb[0].mxu0
      %v2074 = vadd.f32 %v2031, %v2073
      %v2075 = vpop.f32.mrb[0].mxu0
      %v2076 = vadd.f32 %v2033, %v2075
      %2077 = vdwg.mxu0
      %2078 = vmatprep.subr.bf16.mxu0 %v1512
      %2079 = vmatpush1.bf16.msra.mxu0 %v1511
      %2080 = vmatprep.subr.bf16.mxu0 %v1514
      %2081 = vmatpush1.bf16.msra.mxu0 %v1513
      %2082 = vmatprep.subr.bf16.mxu0 %v1516
      %2083 = vmatpush1.bf16.msra.mxu0 %v1515
      %2084 = vmatprep.subr.bf16.mxu0 %v1518
      %2085 = vmatpush1.bf16.msra.mxu0 %v1517
      %2086 = vmatprep.subr.bf16.mxu0 %v1520
      %2087 = vmatpush1.bf16.msra.mxu0 %v1519
      %2088 = vmatprep.subr.bf16.mxu0 %v1522
      %2089 = vmatpush1.bf16.msra.mxu0 %v1521
      %2090 = vmatprep.subr.bf16.mxu0 %v1524
      %2091 = vmatpush1.bf16.msra.mxu0 %v1523
      %2092 = vmatprep.subr.bf16.mxu0 %v1526
      %2093 = vmatpush1.bf16.msra.mxu0 %v1525
      %2094 = vmatprep.subr.bf16.mxu0 %v1528
      %2095 = vmatpush1.bf16.msra.mxu0 %v1527
      %2096 = vmatprep.subr.bf16.mxu0 %v1530
      %2097 = vmatpush1.bf16.msra.mxu0 %v1529
      %2098 = vmatprep.subr.bf16.mxu0 %v1532
      %2099 = vmatpush1.bf16.msra.mxu0 %v1531
      %2100 = vmatprep.subr.bf16.mxu0 %v1534
      %2101 = vmatpush1.bf16.msra.mxu0 %v1533
      %2102 = vmatprep.subr.bf16.mxu0 %v1536
      %2103 = vmatpush1.bf16.msra.mxu0 %v1535
      %2104 = vmatprep.subr.bf16.mxu0 %v1538
      %2105 = vmatpush1.bf16.msra.mxu0 %v1537
      %2106 = vmatprep.subr.bf16.mxu0 %v1540
      %2107 = vmatpush1.bf16.msra.mxu0 %v1539
      %2108 = vmatprep.subr.bf16.mxu0 %v1542
      %2109 = vmatpush1.bf16.msra.mxu0 %v1541
      %2110 = vmatprep.mubr.bf16.mxu0 %v562
      %2111 = vmatmul.mubr.bf16.gmra.mrb[0].mxu0 %v561
      %v2112 = vpop.f32.mrb[0].mxu0
      %v2113 = vadd.f32 %v2070, %v2112
      %v2114 = vpop.f32.mrb[0].mxu0
      %v2115 = vadd.f32 %v2072, %v2114
      %v2116 = vpop.f32.mrb[0].mxu0
      %v2117 = vadd.f32 %v2074, %v2116
      %v2118 = vpop.f32.mrb[0].mxu0
      %v2119 = vadd.f32 %v2076, %v2118
      %2120 = vdwg.mxu0
      %2121 = vmatprep.subr.bf16.mxu0 %v1544
      %2122 = vmatpush1.bf16.msra.mxu0 %v1543
      %2123 = vmatprep.subr.bf16.mxu0 %v1546
      %2124 = vmatpush1.bf16.msra.mxu0 %v1545
      %2125 = vmatprep.subr.bf16.mxu0 %v1548
      %2126 = vmatpush1.bf16.msra.mxu0 %v1547
      %2127 = vmatprep.subr.bf16.mxu0 %v1550
      %2128 = vmatpush1.bf16.msra.mxu0 %v1549
      %2129 = vmatprep.subr.bf16.mxu0 %v1552
      %2130 = vmatpush1.bf16.msra.mxu0 %v1551
      %2131 = vmatprep.subr.bf16.mxu0 %v1554
      %2132 = vmatpush1.bf16.msra.mxu0 %v1553
      %2133 = vmatprep.subr.bf16.mxu0 %v1556
      %2134 = vmatpush1.bf16.msra.mxu0 %v1555
      %2135 = vmatprep.subr.bf16.mxu0 %v1558
      %2136 = vmatpush1.bf16.msra.mxu0 %v1557
      %2137 = vmatprep.subr.bf16.mxu0 %v1560
      %2138 = vmatpush1.bf16.msra.mxu0 %v1559
      %2139 = vmatprep.subr.bf16.mxu0 %v1562
      %2140 = vmatpush1.bf16.msra.mxu0 %v1561
      %2141 = vmatprep.subr.bf16.mxu0 %v1564
      %2142 = vmatpush1.bf16.msra.mxu0 %v1563
      %2143 = vmatprep.subr.bf16.mxu0 %v1566
      %2144 = vmatpush1.bf16.msra.mxu0 %v1565
      %2145 = vmatprep.subr.bf16.mxu0 %v1568
      %2146 = vmatpush1.bf16.msra.mxu0 %v1567
      %2147 = vmatprep.subr.bf16.mxu0 %v1570
      %2148 = vmatpush1.bf16.msra.mxu0 %v1569
      %2149 = vmatprep.subr.bf16.mxu0 %v1572
      %2150 = vmatpush1.bf16.msra.mxu0 %v1571
      %2151 = vmatprep.subr.bf16.mxu0 %v1574
      %2152 = vmatpush1.bf16.msra.mxu0 %v1573
      %2153 = vmatprep.mubr.bf16.mxu0 %v564
      %2154 = vmatmul.mubr.bf16.gmra.mrb[0].mxu0 %v563
      %v2155 = vpop.f32.mrb[0].mxu0
      %v2156 = vadd.f32 %v2113, %v2155
      %v2157 = vpop.f32.mrb[0].mxu0
      %v2158 = vadd.f32 %v2115, %v2157
      %v2159 = vpop.f32.mrb[0].mxu0
      %v2160 = vadd.f32 %v2117, %v2159
      %v2161 = vpop.f32.mrb[0].mxu0
      %v2162 = vadd.f32 %v2119, %v2161
      %2163 = vdwg.mxu0
      %2164 = vmatprep.subr.bf16.mxu0 %v1576
      %2165 = vmatpush1.bf16.msra.mxu0 %v1575
      %2166 = vmatprep.subr.bf16.mxu0 %v1578
      %2167 = vmatpush1.bf16.msra.mxu0 %v1577
      %2168 = vmatprep.subr.bf16.mxu0 %v1580
      %2169 = vmatpush1.bf16.msra.mxu0 %v1579
      %2170 = vmatprep.subr.bf16.mxu0 %v1582
      %2171 = vmatpush1.bf16.msra.mxu0 %v1581
      %2172 = vmatprep.subr.bf16.mxu0 %v1584
      %2173 = vmatpush1.bf16.msra.mxu0 %v1583
      %2174 = vmatprep.subr.bf16.mxu0 %v1586
      %2175 = vmatpush1.bf16.msra.mxu0 %v1585
      %2176 = vmatprep.subr.bf16.mxu0 %v1588
      %2177 = vmatpush1.bf16.msra.mxu0 %v1587
      %2178 = vmatprep.subr.bf16.mxu0 %v1590
      %2179 = vmatpush1.bf16.msra.mxu0 %v1589
      %2180 = vmatprep.subr.bf16.mxu0 %v1592
      %2181 = vmatpush1.bf16.msra.mxu0 %v1591
      %2182 = vmatprep.subr.bf16.mxu0 %v1594
      %2183 = vmatpush1.bf16.msra.mxu0 %v1593
      %2184 = vmatprep.subr.bf16.mxu0 %v1596
      %2185 = vmatpush1.bf16.msra.mxu0 %v1595
      %2186 = vmatprep.subr.bf16.mxu0 %v1598
      %2187 = vmatpush1.bf16.msra.mxu0 %v1597
      %2188 = vmatprep.subr.bf16.mxu0 %v1600
      %2189 = vmatpush1.bf16.msra.mxu0 %v1599
      %2190 = vmatprep.subr.bf16.mxu0 %v1602
      %2191 = vmatpush1.bf16.msra.mxu0 %v1601
      %2192 = vmatprep.subr.bf16.mxu0 %v1604
      %2193 = vmatpush1.bf16.msra.mxu0 %v1603
      %2194 = vmatprep.subr.bf16.mxu0 %v1606
      %2195 = vmatpush1.bf16.msra.mxu0 %v1605
      %2196 = vmatprep.mubr.bf16.mxu0 %v566
      %2197 = vmatmul.mubr.bf16.gmra.mrb[0].mxu0 %v565
      %v2198 = vpop.f32.mrb[0].mxu0
      %v2199 = vadd.f32 %v2156, %v2198
      %v2200 = vpop.f32.mrb[0].mxu0
      %v2201 = vadd.f32 %v2158, %v2200
      %v2202 = vpop.f32.mrb[0].mxu0
      %v2203 = vadd.f32 %v2160, %v2202
      %v2204 = vpop.f32.mrb[0].mxu0
      %v2205 = vadd.f32 %v2162, %v2204
      %2206 = vdwg.mxu0
      %v2207 = vxor.u32 %v2199, 2147483648
      %v2208 = vxor.u32 %v2201, 2147483648
      %v2209 = vxor.u32 %v2203, 2147483648
      %v2210 = vxor.u32 %v2205, 2147483648
      %v2211 = vmul.f32 %v2207, 1.442695
      %v2212 = vpow.pop %v2211
      %v2213 = vmul.f32 %v2208, 1.442695
      %v2214 = vpow.pop %v2213
      %v2215 = vmul.f32 %v2209, 1.442695
      %v2216 = vpow.pop %v2215
      %v2217 = vmul.f32 %v2210, 1.442695
      %v2218 = vpow.pop %v2217
      %v2219 = vadd.f32 %v2212, 1.0
      %v2220 = vadd.f32 %v2214, 1.0
      %v2221 = vadd.f32 %v2216, 1.0
      %v2222 = vadd.f32 %v2218, 1.0
      %v2223 = vrcp.pop %v2219
      %v2224 = vmul.f32 1.0, %v2223
      %v2225 = vrcp.pop %v2220
      %v2226 = vmul.f32 1.0, %v2225
      %v2227 = vrcp.pop %v2221
      %v2228 = vmul.f32 1.0, %v2227
      %v2229 = vrcp.pop %v2222
      %v2230 = vmul.f32 1.0, %v2229
      %v2231 = vmul.f32 %v2199, %v2224
      %v2232 = vmul.f32 %v2201, %v2226
      %v2233 = vmul.f32 %v2203, %v2228
      %v2234 = vmul.f32 %v2205, %v2230
      %v2235 = vpack.c.bf16 %v2233, %v2231
      %v2236 = vpack.c.bf16 %v2234, %v2232
      %v2239 = vunpack.c.l.b16 %v2235
      %v2240 = vunpack.c.l.b16 %v2236
      %v2241 = vunpack.c.h.b16 %v2235
      %v2242 = vunpack.c.h.b16 %v2236
      %v2243 = vpack.c.b16 %v2240, %v2239
      %v2244 = vpack.c.b16 %v2242, %v2241
      %2247 = vst [vmem:[%s212] sm:$0xff] %v2243
      %2248 = vst [vmem:[%s212 + $0x8] sm:$0xff] %v2244
      %v2249 = vadd.f32 %v2231, %v2233
      %v2250 = vrot.slane %v2249, 4
      %v2251 = vadd.f32 %v2249, %v2250
      %v2252 = vrot.slane %v2251, 2
      %v2253 = vadd.f32 %v2251, %v2252
      %v2254 = vrot.slane %v2253, 1
      %v2255 = vadd.f32 %v2253, %v2254
      %v2256 = vadd.f32 %v2232, %v2234
      %v2257 = vrot.slane %v2256, 4
      %v2258 = vadd.f32 %v2256, %v2257
      %v2259 = vrot.slane %v2258, 2
      %v2260 = vadd.f32 %v2258, %v2259
      %v2261 = vrot.slane %v2260, 1
      %v2262 = vadd.f32 %v2260, %v2261
      %v2265 = vcombine.low %v2255, %v2262
      %v2267 = vunpack.c.l.s4 1966171168
      %v2268 = vunpack.c.0.s8 %v2267
      %v2269 = vlaneseq
      %v2270 = vshrl.u32 %v2269, 7
      %v2271 = vsub.s32 %v2268, %v2270
      %v2272 = vrot.slane %v2265, %v2271
      %v2274 = vunpack.c.l.s4 1966171168
      %v2275 = vunpack.c.0.s8 %v2274
      %v2276 = vlaneseq
      %v2277 = vshrl.u32 %v2276, 7
      %v2278 = vsub.s32 %v2275, %v2277
      %v2279 = vrot.slane %v2272, %v2278
      %v2281 = vlaneseq
      %vm2282 = vcmp.ge.s32.totalorder %v2281, 0
      %vm2283 = vcmp.lt.s32.totalorder %v2281, 256
      %vm2284 = vmand %vm2282, %vm2283
      %2285 = vst.msk [vmem:[%s218] ss:$8 sm:$0x3] %vm2284, %v2279
      %2286 = vst.msk [vmem:[%s218] ss:$8 sm:$0x0] %vm2284, %v2279
      %v2287 = vmul.f32 %v2231, %v2231
      %v2288 = vmul.f32 %v2232, %v2232
      %v2289 = vmul.f32 %v2233, %v2233
      %v2290 = vmul.f32 %v2234, %v2234
      %v2291 = vadd.f32 %v2287, %v2289
      %v2292 = vrot.slane %v2291, 4
      %v2293 = vadd.f32 %v2291, %v2292
      %v2294 = vrot.slane %v2293, 2
      %v2295 = vadd.f32 %v2293, %v2294
      %v2296 = vrot.slane %v2295, 1
      %v2297 = vadd.f32 %v2295, %v2296
      %v2298 = vadd.f32 %v2288, %v2290
      %v2299 = vrot.slane %v2298, 4
      %v2300 = vadd.f32 %v2298, %v2299
      %v2301 = vrot.slane %v2300, 2
      %v2302 = vadd.f32 %v2300, %v2301
      %v2303 = vrot.slane %v2302, 1
      %v2304 = vadd.f32 %v2302, %v2303
      %v2307 = vcombine.low %v2297, %v2304
      %v2309 = vunpack.c.l.s4 1966171168
      %v2310 = vunpack.c.0.s8 %v2309
      %v2311 = vlaneseq
      %v2312 = vshrl.u32 %v2311, 7
      %v2313 = vsub.s32 %v2310, %v2312
      %v2314 = vrot.slane %v2307, %v2313
      %v2316 = vunpack.c.l.s4 1966171168
      %v2317 = vunpack.c.0.s8 %v2316
      %v2318 = vlaneseq
      %v2319 = vshrl.u32 %v2318, 7
      %v2320 = vsub.s32 %v2317, %v2319
      %v2321 = vrot.slane %v2314, %v2320
      %s2323 = scalar_lea.vmem %s218, 1
      %2324 = vst.msk [vmem:[%s2323] ss:$8 sm:$0x3] %vm2284, %v2321
      %2325 = vst.msk [vmem:[%s2323] ss:$8 sm:$0x0] %vm2284, %v2321
      %s2326 = smul.u32 2, %s16
      %p2327 = scmp.lt.s32.totalorder %s2326, 3
      %s2328 = scalar_select %p2327, %s2326, 3
      %s2329 = smul.addr %s2328, 2
      %s2330 = smul.addr %s2329, 4
      %s2331 = scalar_lea.vmem %s3, %s2330
      %p2332 = scmp.lt.s32.totalorder %s16, 1
      %s2333 = scalar_select %p2332, %s16, 1
      %s2334 = smul.addr %s2333, 2
      %s2335 = smul.addr %s2334, 8
      %s2336 = scalar_lea.vmem %s4, %s2335
      // Predicated region
      $region33: #{conv_encoder_forward.10} parent=31 // pred_check
        %p2337 = pneg %p102
      $region34: #{conv_encoder_forward.10} parent=31 // pred_check_branch
        %2339 = sbr.rel (%p2337) target = $region36
      $region35: #{conv_encoder_forward.10} parent=31 // pred_region
        %s2340 = smul.u32 2, %s16
      $region36: #{conv_encoder_forward.10} parent=31 // pred_fallthru
        _
      // Predicated region
      $region37: #{conv_encoder_forward.10} parent=31 // pred_check
        %p2341 = pneg %p128
      $region38: #{conv_encoder_forward.10} parent=31 // pred_check_branch
        %2343 = sbr.rel (%p2341) target = $region40
      $region39: #{conv_encoder_forward.10} parent=31 // pred_region
        _
      $region40: #{conv_encoder_forward.10} parent=31 // pred_fallthru
        _
    $region32: #{conv_encoder_forward.10} parent=5 // pred_fallthru
      _
    %p2344 = scmp.le.s32.totalorder 2, %s11
    // Predicated region
    $region41: #{conv_encoder_forward.10} parent=5 // pred_check
      %p2345 = pneg %p2344
    $region42: #{conv_encoder_forward.10} parent=5 // pred_check_branch
      %2347 = sbr.rel (%p2345) target = $region44
    $region43: #{conv_encoder_forward.10} parent=5 // pred_region
      %s2348 = ssub.s32 %s11, 2
      // Predicated region
      $region45: #{conv_encoder_forward.10} parent=43 // pred_check
        %p2349 = pneg %p108
      $region46: #{conv_encoder_forward.10} parent=43 // pred_check_branch
        %2351 = sbr.rel (%p2349) target = $region48
      $region47: #{conv_encoder_forward.10} parent=43 // pred_region
        %s2352 = smul.u32 2, %s17
        %p2353 = scmp.lt.s32.totalorder %s2352, 3
        %s2354 = scalar_select %p2353, %s2352, 3
        %s2355 = smul.addr %s2354, 2
        %s2356 = smul.addr %s2355, 4
        %s2357 = scalar_lea.vmem %s3, %s2356
      $region48: #{conv_encoder_forward.10} parent=43 // pred_fallthru
        _
      // Predicated region
      $region49: #{conv_encoder_forward.10} parent=43 // pred_check
        %p2358 = pneg %p134
      $region50: #{conv_encoder_forward.10} parent=43 // pred_check_branch
        %2360 = sbr.rel (%p2358) target = $region52
      $region51: #{conv_encoder_forward.10} parent=43 // pred_region
        %p2361 = scmp.lt.s32.totalorder %s17, 1
        %s2362 = scalar_select %p2361, %s17, 1
        %s2363 = smul.addr %s2362, 2
        %s2364 = smul.addr %s2363, 8
        %s2365 = scalar_lea.vmem %s4, %s2364
      $region52: #{conv_encoder_forward.10} parent=43 // pred_fallthru
        _
    $region44: #{conv_encoder_forward.10} parent=5 // pred_fallthru
      _
  $region6: #{conv_encoder_forward.10} parent=0 // loop_footer
    %s15 = sadd.s32 1, %s11
  $region7: #{conv_encoder_forward.10} parent=0 // loop_footer_branch
    %10 = sbr.rel target = $region3
  $region8: #{conv_encoder_forward.10} parent=0 // loop_exit
    _

// kernel: conv_encoder_forward.11
$region0: #{conv_encoder_forward.11}
  #allocation0 [shape = 'u32[]', space=smem, size = 0x4, offset = 0x4, fixed_abs, tag = 'smem constant byte address 0x4 - core index']
  #allocation1 [shape = 'u32[144,128]{1,0:T(1,128)}', space=vmem, size = 0x12000, scoped, tag = 'internal scratch']
  %s0 = inlined_call_operand.vmem [shape: bf16[8,4096], index: 0, kind: input, shape index: {}]
  %s1 = inlined_call_operand.vmem [shape: bf16[4096,256], index: 1, kind: input, shape index: {}]
  %s2 = inlined_call_operand.vmem [shape: f32[1,256], index: 2, kind: input, shape index: {}]
  %s3 = inlined_call_operand.vmem [shape: bf16[256,128], index: 3, kind: input, shape index: {}]
  %s4 = inlined_call_operand.vmem [shape: f32[1,128], index: 4, kind: input, shape index: {}]
  %s5 = inlined_call_operand.vmem [shape: f32[8,128], index: 5, kind: output, shape index: {}]
  %s6 = sld [smem:[#allocation0]]
  $region30: #{conv_encoder_forward.11} parent=0
    _
  %s8 = ssub.s32 1, %s6
  %s9 = scalar_select 0, %s8, %s6
  // Predicated region
  $region2: #{conv_encoder_forward.11} parent=0 // pred_check
    _
  $region3: #{conv_encoder_forward.11} parent=0 // pred_check_branch
    %11 = sbr.rel (0) target = $region5
  $region4: #{conv_encoder_forward.11} parent=0 // pred_region
    _
  $region5: #{conv_encoder_forward.11} parent=0 // pred_fallthru
    _
  // Predicated region
  $region6: #{conv_encoder_forward.11} parent=0 // pred_check
    _
  $region7: #{conv_encoder_forward.11} parent=0 // pred_check_branch
    %13 = sbr.rel (0) target = $region9
  $region8: #{conv_encoder_forward.11} parent=0 // pred_region
    _
  $region9: #{conv_encoder_forward.11} parent=0 // pred_fallthru
    _
  // Predicated region
  $region10: #{conv_encoder_forward.11} parent=0 // pred_check
    _
  $region11: #{conv_encoder_forward.11} parent=0 // pred_check_branch
    %15 = sbr.rel (0) target = $region13
  $region12: #{conv_encoder_forward.11} parent=0 // pred_region
    _
  $region13: #{conv_encoder_forward.11} parent=0 // pred_fallthru
    _
  // Predicated region
  $region14: #{conv_encoder_forward.11} parent=0 // pred_check
    _
  $region15: #{conv_encoder_forward.11} parent=0 // pred_check_branch
    %17 = sbr.rel (0) target = $region17
  $region16: #{conv_encoder_forward.11} parent=0 // pred_region
    _
  $region17: #{conv_encoder_forward.11} parent=0 // pred_fallthru
    _
  // Predicated region
  $region18: #{conv_encoder_forward.11} parent=0 // pred_check
    _
  $region19: #{conv_encoder_forward.11} parent=0 // pred_check_branch
    %19 = sbr.rel (0) target = $region21
  $region20: #{conv_encoder_forward.11} parent=0 // pred_region
    _
  $region21: #{conv_encoder_forward.11} parent=0 // pred_fallthru
    _
  %v21 = vld [vmem:[%s0] sm:$0xff]
  %v22 = vld [vmem:[%s0 + $0x8] sm:$0xff]
  %v23 = vld [vmem:[%s0 + $0x10] sm:$0xff]
  %v24 = vld [vmem:[%s0 + $0x18] sm:$0xff]
  %v25 = vld [vmem:[%s0 + $0x20] sm:$0xff]
  %v26 = vld [vmem:[%s0 + $0x28] sm:$0xff]
  %v27 = vld [vmem:[%s0 + $0x30] sm:$0xff]
  %v28 = vld [vmem:[%s0 + $0x38] sm:$0xff]
  %v29 = vld [vmem:[%s0 + $0x40] sm:$0xff]
  %v30 = vld [vmem:[%s0 + $0x48] sm:$0xff]
  %v31 = vld [vmem:[%s0 + $0x50] sm:$0xff]
  %v32 = vld [vmem:[%s0 + $0x58] sm:$0xff]
  %v33 = vld [vmem:[%s0 + $0x60] sm:$0xff]
  %v34 = vld [vmem:[%s0 + $0x68] sm:$0xff]
  %v35 = vld [vmem:[%s0 + $0x70] sm:$0xff]
  %v36 = vld [vmem:[%s0 + $0x78] sm:$0xff]
  %v37 = vld [vmem:[%s1] sm:$0xff]
  %v38 = vld [vmem:[%s1 + $0x8] sm:$0xff]
  %v39 = vld [vmem:[%s1 + $0x10] sm:$0xff]
  %v40 = vld [vmem:[%s1 + $0x18] sm:$0xff]
  %v41 = vld [vmem:[%s1 + $0x20] sm:$0xff]
  %v42 = vld [vmem:[%s1 + $0x28] sm:$0xff]
  %v43 = vld [vmem:[%s1 + $0x30] sm:$0xff]
  %v44 = vld [vmem:[%s1 + $0x38] sm:$0xff]
  %v45 = vld [vmem:[%s1 + $0x40] sm:$0xff]
  %v46 = vld [vmem:[%s1 + $0x48] sm:$0xff]
  %v47 = vld [vmem:[%s1 + $0x50] sm:$0xff]
  %v48 = vld [vmem:[%s1 + $0x58] sm:$0xff]
  %v49 = vld [vmem:[%s1 + $0x60] sm:$0xff]
  %v50 = vld [vmem:[%s1 + $0x68] sm:$0xff]
  %v51 = vld [vmem:[%s1 + $0x70] sm:$0xff]
  %v52 = vld [vmem:[%s1 + $0x78] sm:$0xff]
  %v53 = vld [vmem:[%s1 + $0x80] sm:$0xff]
  %v54 = vld [vmem:[%s1 + $0x88] sm:$0xff]
  %v55 = vld [vmem:[%s1 + $0x90] sm:$0xff]
  %v56 = vld [vmem:[%s1 + $0x98] sm:$0xff]
  %v57 = vld [vmem:[%s1 + $0xa0] sm:$0xff]
  %v58 = vld [vmem:[%s1 + $0xa8] sm:$0xff]
  %v59 = vld [vmem:[%s1 + $0xb0] sm:$0xff]
  %v60 = vld [vmem:[%s1 + $0xb8] sm:$0xff]
  %v61 = vld [vmem:[%s1 + $0xc0] sm:$0xff]
  %v62 = vld [vmem:[%s1 + $0xc8] sm:$0xff]
  %v63 = vld [vmem:[%s1 + $0xd0] sm:$0xff]
  %v64 = vld [vmem:[%s1 + $0xd8] sm:$0xff]
  %v65 = vld [vmem:[%s1 + $0xe0] sm:$0xff]
  %v66 = vld [vmem:[%s1 + $0xe8] sm:$0xff]
  %v67 = vld [vmem:[%s1 + $0xf0] sm:$0xff]
  %v68 = vld [vmem:[%s1 + $0xf8] sm:$0xff]
  %v69 = vld [vmem:[%s1 + $0x100] sm:$0xff]
  %v70 = vld [vmem:[%s1 + $0x108] sm:$0xff]
  %v71 = vld [vmem:[%s1 + $0x110] sm:$0xff]
  %v72 = vld [vmem:[%s1 + $0x118] sm:$0xff]
  %v73 = vld [vmem:[%s1 + $0x120] sm:$0xff]
  %v74 = vld [vmem:[%s1 + $0x128] sm:$0xff]
  %v75 = vld [vmem:[%s1 + $0x130] sm:$0xff]
  %v76 = vld [vmem:[%s1 + $0x138] sm:$0xff]
  %v77 = vld [vmem:[%s1 + $0x140] sm:$0xff]
  %v78 = vld [vmem:[%s1 + $0x148] sm:$0xff]
  %v79 = vld [vmem:[%s1 + $0x150] sm:$0xff]
  %v80 = vld [vmem:[%s1 + $0x158] sm:$0xff]
  %v81 = vld [vmem:[%s1 + $0x160] sm:$0xff]
  %v82 = vld [vmem:[%s1 + $0x168] sm:$0xff]
  %v83 = vld [vmem:[%s1 + $0x170] sm:$0xff]
  %v84 = vld [vmem:[%s1 + $0x178] sm:$0xff]
  %v85 = vld [vmem:[%s1 + $0x180] sm:$0xff]
  %v86 = vld [vmem:[%s1 + $0x188] sm:$0xff]
  %v87 = vld [vmem:[%s1 + $0x190] sm:$0xff]
  %v88 = vld [vmem:[%s1 + $0x198] sm:$0xff]
  %v89 = vld [vmem:[%s1 + $0x1a0] sm:$0xff]
  %v90 = vld [vmem:[%s1 + $0x1a8] sm:$0xff]
  %v91 = vld [vmem:[%s1 + $0x1b0] sm:$0xff]
  %v92 = vld [vmem:[%s1 + $0x1b8] sm:$0xff]
  %v93 = vld [vmem:[%s1 + $0x1c0] sm:$0xff]
  %v94 = vld [vmem:[%s1 + $0x1c8] sm:$0xff]
  %v95 = vld [vmem:[%s1 + $0x1d0] sm:$0xff]
  %v96 = vld [vmem:[%s1 + $0x1d8] sm:$0xff]
  %v97 = vld [vmem:[%s1 + $0x1e0] sm:$0xff]
  %v98 = vld [vmem:[%s1 + $0x1e8] sm:$0xff]
  %v99 = vld [vmem:[%s1 + $0x1f0] sm:$0xff]
  %v100 = vld [vmem:[%s1 + $0x1f8] sm:$0xff]
  %v101 = vld [vmem:[%s1 + $0x200] sm:$0xff]
  %v102 = vld [vmem:[%s1 + $0x208] sm:$0xff]
  %v103 = vld [vmem:[%s1 + $0x210] sm:$0xff]
  %v104 = vld [vmem:[%s1 + $0x218] sm:$0xff]
  %v105 = vld [vmem:[%s1 + $0x220] sm:$0xff]
  %v106 = vld [vmem:[%s1 + $0x228] sm:$0xff]
  %v107 = vld [vmem:[%s1 + $0x230] sm:$0xff]
  %v108 = vld [vmem:[%s1 + $0x238] sm:$0xff]
  %v109 = vld [vmem:[%s1 + $0x240] sm:$0xff]
  %v110 = vld [vmem:[%s1 + $0x248] sm:$0xff]
  %v111 = vld [vmem:[%s1 + $0x250] sm:$0xff]
  %v112 = vld [vmem:[%s1 + $0x258] sm:$0xff]
  %v113 = vld [vmem:[%s1 + $0x260] sm:$0xff]
  %v114 = vld [vmem:[%s1 + $0x268] sm:$0xff]
  %v115 = vld [vmem:[%s1 + $0x270] sm:$0xff]
  %v116 = vld [vmem:[%s1 + $0x278] sm:$0xff]
  %v117 = vld [vmem:[%s1 + $0x280] sm:$0xff]
  %v118 = vld [vmem:[%s1 + $0x288] sm:$0xff]
  %v119 = vld [vmem:[%s1 + $0x290] sm:$0xff]
  %v120 = vld [vmem:[%s1 + $0x298] sm:$0xff]
  %v121 = vld [vmem:[%s1 + $0x2a0] sm:$0xff]
  %v122 = vld [vmem:[%s1 + $0x2a8] sm:$0xff]
  %v123 = vld [vmem:[%s1 + $0x2b0] sm:$0xff]
  %v124 = vld [vmem:[%s1 + $0x2b8] sm:$0xff]
  %v125 = vld [vmem:[%s1 + $0x2c0] sm:$0xff]
  %v126 = vld [vmem:[%s1 + $0x2c8] sm:$0xff]
  %v127 = vld [vmem:[%s1 + $0x2d0] sm:$0xff]
  %v128 = vld [vmem:[%s1 + $0x2d8] sm:$0xff]
  %v129 = vld [vmem:[%s1 + $0x2e0] sm:$0xff]
  %v130 = vld [vmem:[%s1 + $0x2e8] sm:$0xff]
  %v131 = vld [vmem:[%s1 + $0x2f0] sm:$0xff]
  %v132 = vld [vmem:[%s1 + $0x2f8] sm:$0xff]
  %v133 = vld [vmem:[%s1 + $0x300] sm:$0xff]
  %v134 = vld [vmem:[%s1 + $0x308] sm:$0xff]
  %v135 = vld [vmem:[%s1 + $0x310] sm:$0xff]
  %v136 = vld [vmem:[%s1 + $0x318] sm:$0xff]
  %v137 = vld [vmem:[%s1 + $0x320] sm:$0xff]
  %v138 = vld [vmem:[%s1 + $0x328] sm:$0xff]
  %v139 = vld [vmem:[%s1 + $0x330] sm:$0xff]
  %v140 = vld [vmem:[%s1 + $0x338] sm:$0xff]
  %v141 = vld [vmem:[%s1 + $0x340] sm:$0xff]
  %v142 = vld [vmem:[%s1 + $0x348] sm:$0xff]
  %v143 = vld [vmem:[%s1 + $0x350] sm:$0xff]
  %v144 = vld [vmem:[%s1 + $0x358] sm:$0xff]
  %v145 = vld [vmem:[%s1 + $0x360] sm:$0xff]
  %v146 = vld [vmem:[%s1 + $0x368] sm:$0xff]
  %v147 = vld [vmem:[%s1 + $0x370] sm:$0xff]
  %v148 = vld [vmem:[%s1 + $0x378] sm:$0xff]
  %v149 = vld [vmem:[%s1 + $0x380] sm:$0xff]
  %v150 = vld [vmem:[%s1 + $0x388] sm:$0xff]
  %v151 = vld [vmem:[%s1 + $0x390] sm:$0xff]
  %v152 = vld [vmem:[%s1 + $0x398] sm:$0xff]
  %v153 = vld [vmem:[%s1 + $0x3a0] sm:$0xff]
  %v154 = vld [vmem:[%s1 + $0x3a8] sm:$0xff]
  %v155 = vld [vmem:[%s1 + $0x3b0] sm:$0xff]
  %v156 = vld [vmem:[%s1 + $0x3b8] sm:$0xff]
  %v157 = vld [vmem:[%s1 + $0x3c0] sm:$0xff]
  %v158 = vld [vmem:[%s1 + $0x3c8] sm:$0xff]
  %v159 = vld [vmem:[%s1 + $0x3d0] sm:$0xff]
  %v160 = vld [vmem:[%s1 + $0x3d8] sm:$0xff]
  %v161 = vld [vmem:[%s1 + $0x3e0] sm:$0xff]
  %v162 = vld [vmem:[%s1 + $0x3e8] sm:$0xff]
  %v163 = vld [vmem:[%s1 + $0x3f0] sm:$0xff]
  %v164 = vld [vmem:[%s1 + $0x3f8] sm:$0xff]
  %v165 = vld [vmem:[%s1 + $0x400] sm:$0xff]
  %v166 = vld [vmem:[%s1 + $0x408] sm:$0xff]
  %v167 = vld [vmem:[%s1 + $0x410] sm:$0xff]
  %v168 = vld [vmem:[%s1 + $0x418] sm:$0xff]
  %v169 = vld [vmem:[%s1 + $0x420] sm:$0xff]
  %v170 = vld [vmem:[%s1 + $0x428] sm:$0xff]
  %v171 = vld [vmem:[%s1 + $0x430] sm:$0xff]
  %v172 = vld [vmem:[%s1 + $0x438] sm:$0xff]
  %v173 = vld [vmem:[%s1 + $0x440] sm:$0xff]
  %v174 = vld [vmem:[%s1 + $0x448] sm:$0xff]
  %v175 = vld [vmem:[%s1 + $0x450] sm:$0xff]
  %v176 = vld [vmem:[%s1 + $0x458] sm:$0xff]
  %v177 = vld [vmem:[%s1 + $0x460] sm:$0xff]
  %v178 = vld [vmem:[%s1 + $0x468] sm:$0xff]
  %v179 = vld [vmem:[%s1 + $0x470] sm:$0xff]
  %v180 = vld [vmem:[%s1 + $0x478] sm:$0xff]
  %v181 = vld [vmem:[%s1 + $0x480] sm:$0xff]
  %v182 = vld [vmem:[%s1 + $0x488] sm:$0xff]
  %v183 = vld [vmem:[%s1 + $0x490] sm:$0xff]
  %v184 = vld [vmem:[%s1 + $0x498] sm:$0xff]
  %v185 = vld [vmem:[%s1 + $0x4a0] sm:$0xff]
  %v186 = vld [vmem:[%s1 + $0x4a8] sm:$0xff]
  %v187 = vld [vmem:[%s1 + $0x4b0] sm:$0xff]
  %v188 = vld [vmem:[%s1 + $0x4b8] sm:$0xff]
  %v189 = vld [vmem:[%s1 + $0x4c0] sm:$0xff]
  %v190 = vld [vmem:[%s1 + $0x4c8] sm:$0xff]
  %v191 = vld [vmem:[%s1 + $0x4d0] sm:$0xff]
  %v192 = vld [vmem:[%s1 + $0x4d8] sm:$0xff]
  %v193 = vld [vmem:[%s1 + $0x4e0] sm:$0xff]
  %v194 = vld [vmem:[%s1 + $0x4e8] sm:$0xff]
  %v195 = vld [vmem:[%s1 + $0x4f0] sm:$0xff]
  %v196 = vld [vmem:[%s1 + $0x4f8] sm:$0xff]
  %v197 = vld [vmem:[%s1 + $0x500] sm:$0xff]
  %v198 = vld [vmem:[%s1 + $0x508] sm:$0xff]
  %v199 = vld [vmem:[%s1 + $0x510] sm:$0xff]
  %v200 = vld [vmem:[%s1 + $0x518] sm:$0xff]
  %v201 = vld [vmem:[%s1 + $0x520] sm:$0xff]
  %v202 = vld [vmem:[%s1 + $0x528] sm:$0xff]
  %v203 = vld [vmem:[%s1 + $0x530] sm:$0xff]
  %v204 = vld [vmem:[%s1 + $0x538] sm:$0xff]
  %v205 = vld [vmem:[%s1 + $0x540] sm:$0xff]
  %v206 = vld [vmem:[%s1 + $0x548] sm:$0xff]
  %v207 = vld [vmem:[%s1 + $0x550] sm:$0xff]
  %v208 = vld [vmem:[%s1 + $0x558] sm:$0xff]
  %v209 = vld [vmem:[%s1 + $0x560] sm:$0xff]
  %v210 = vld [vmem:[%s1 + $0x568] sm:$0xff]
  %v211 = vld [vmem:[%s1 + $0x570] sm:$0xff]
  %v212 = vld [vmem:[%s1 + $0x578] sm:$0xff]
  %v213 = vld [vmem:[%s1 + $0x580] sm:$0xff]
  %v214 = vld [vmem:[%s1 + $0x588] sm:$0xff]
  %v215 = vld [vmem:[%s1 + $0x590] sm:$0xff]
  %v216 = vld [vmem:[%s1 + $0x598] sm:$0xff]
  %v217 = vld [vmem:[%s1 + $0x5a0] sm:$0xff]
  %v218 = vld [vmem:[%s1 + $0x5a8] sm:$0xff]
  %v219 = vld [vmem:[%s1 + $0x5b0] sm:$0xff]
  %v220 = vld [vmem:[%s1 + $0x5b8] sm:$0xff]
  %v221 = vld [vmem:[%s1 + $0x5c0] sm:$0xff]
  %v222 = vld [vmem:[%s1 + $0x5c8] sm:$0xff]
  %v223 = vld [vmem:[%s1 + $0x5d0] sm:$0xff]
  %v224 = vld [vmem:[%s1 + $0x5d8] sm:$0xff]
  %v225 = vld [vmem:[%s1 + $0x5e0] sm:$0xff]
  %v226 = vld [vmem:[%s1 + $0x5e8] sm:$0xff]
  %v227 = vld [vmem:[%s1 + $0x5f0] sm:$0xff]
  %v228 = vld [vmem:[%s1 + $0x5f8] sm:$0xff]
  %v229 = vld [vmem:[%s1 + $0x600] sm:$0xff]
  %v230 = vld [vmem:[%s1 + $0x608] sm:$0xff]
  %v231 = vld [vmem:[%s1 + $0x610] sm:$0xff]
  %v232 = vld [vmem:[%s1 + $0x618] sm:$0xff]
  %v233 = vld [vmem:[%s1 + $0x620] sm:$0xff]
  %v234 = vld [vmem:[%s1 + $0x628] sm:$0xff]
  %v235 = vld [vmem:[%s1 + $0x630] sm:$0xff]
  %v236 = vld [vmem:[%s1 + $0x638] sm:$0xff]
  %v237 = vld [vmem:[%s1 + $0x640] sm:$0xff]
  %v238 = vld [vmem:[%s1 + $0x648] sm:$0xff]
  %v239 = vld [vmem:[%s1 + $0x650] sm:$0xff]
  %v240 = vld [vmem:[%s1 + $0x658] sm:$0xff]
  %v241 = vld [vmem:[%s1 + $0x660] sm:$0xff]
  %v242 = vld [vmem:[%s1 + $0x668] sm:$0xff]
  %v243 = vld [vmem:[%s1 + $0x670] sm:$0xff]
  %v244 = vld [vmem:[%s1 + $0x678] sm:$0xff]
  %v245 = vld [vmem:[%s1 + $0x680] sm:$0xff]
  %v246 = vld [vmem:[%s1 + $0x688] sm:$0xff]
  %v247 = vld [vmem:[%s1 + $0x690] sm:$0xff]
  %v248 = vld [vmem:[%s1 + $0x698] sm:$0xff]
  %v249 = vld [vmem:[%s1 + $0x6a0] sm:$0xff]
  %v250 = vld [vmem:[%s1 + $0x6a8] sm:$0xff]
  %v251 = vld [vmem:[%s1 + $0x6b0] sm:$0xff]
  %v252 = vld [vmem:[%s1 + $0x6b8] sm:$0xff]
  %v253 = vld [vmem:[%s1 + $0x6c0] sm:$0xff]
  %v254 = vld [vmem:[%s1 + $0x6c8] sm:$0xff]
  %v255 = vld [vmem:[%s1 + $0x6d0] sm:$0xff]
  %v256 = vld [vmem:[%s1 + $0x6d8] sm:$0xff]
  %v257 = vld [vmem:[%s1 + $0x6e0] sm:$0xff]
  %v258 = vld [vmem:[%s1 + $0x6e8] sm:$0xff]
  %v259 = vld [vmem:[%s1 + $0x6f0] sm:$0xff]
  %v260 = vld [vmem:[%s1 + $0x6f8] sm:$0xff]
  %v261 = vld [vmem:[%s1 + $0x700] sm:$0xff]
  %v262 = vld [vmem:[%s1 + $0x708] sm:$0xff]
  %v263 = vld [vmem:[%s1 + $0x710] sm:$0xff]
  %v264 = vld [vmem:[%s1 + $0x718] sm:$0xff]
  %v265 = vld [vmem:[%s1 + $0x720] sm:$0xff]
  %v266 = vld [vmem:[%s1 + $0x728] sm:$0xff]
  %v267 = vld [vmem:[%s1 + $0x730] sm:$0xff]
  %v268 = vld [vmem:[%s1 + $0x738] sm:$0xff]
  %v269 = vld [vmem:[%s1 + $0x740] sm:$0xff]
  %v270 = vld [vmem:[%s1 + $0x748] sm:$0xff]
  %v271 = vld [vmem:[%s1 + $0x750] sm:$0xff]
  %v272 = vld [vmem:[%s1 + $0x758] sm:$0xff]
  %v273 = vld [vmem:[%s1 + $0x760] sm:$0xff]
  %v274 = vld [vmem:[%s1 + $0x768] sm:$0xff]
  %v275 = vld [vmem:[%s1 + $0x770] sm:$0xff]
  %v276 = vld [vmem:[%s1 + $0x778] sm:$0xff]
  %v277 = vld [vmem:[%s1 + $0x780] sm:$0xff]
  %v278 = vld [vmem:[%s1 + $0x788] sm:$0xff]
  %v279 = vld [vmem:[%s1 + $0x790] sm:$0xff]
  %v280 = vld [vmem:[%s1 + $0x798] sm:$0xff]
  %v281 = vld [vmem:[%s1 + $0x7a0] sm:$0xff]
  %v282 = vld [vmem:[%s1 + $0x7a8] sm:$0xff]
  %v283 = vld [vmem:[%s1 + $0x7b0] sm:$0xff]
  %v284 = vld [vmem:[%s1 + $0x7b8] sm:$0xff]
  %v285 = vld [vmem:[%s1 + $0x7c0] sm:$0xff]
  %v286 = vld [vmem:[%s1 + $0x7c8] sm:$0xff]
  %v287 = vld [vmem:[%s1 + $0x7d0] sm:$0xff]
  %v288 = vld [vmem:[%s1 + $0x7d8] sm:$0xff]
  %v289 = vld [vmem:[%s1 + $0x7e0] sm:$0xff]
  %v290 = vld [vmem:[%s1 + $0x7e8] sm:$0xff]
  %v291 = vld [vmem:[%s1 + $0x7f0] sm:$0xff]
  %v292 = vld [vmem:[%s1 + $0x7f8] sm:$0xff]
  %v293 = vld [vmem:[%s1 + $0x800] sm:$0xff]
  %v294 = vld [vmem:[%s1 + $0x808] sm:$0xff]
  %v295 = vld [vmem:[%s1 + $0x810] sm:$0xff]
  %v296 = vld [vmem:[%s1 + $0x818] sm:$0xff]
  %v297 = vld [vmem:[%s1 + $0x820] sm:$0xff]
  %v298 = vld [vmem:[%s1 + $0x828] sm:$0xff]
  %v299 = vld [vmem:[%s1 + $0x830] sm:$0xff]
  %v300 = vld [vmem:[%s1 + $0x838] sm:$0xff]
  %v301 = vld [vmem:[%s1 + $0x840] sm:$0xff]
  %v302 = vld [vmem:[%s1 + $0x848] sm:$0xff]
  %v303 = vld [vmem:[%s1 + $0x850] sm:$0xff]
  %v304 = vld [vmem:[%s1 + $0x858] sm:$0xff]
  %v305 = vld [vmem:[%s1 + $0x860] sm:$0xff]
  %v306 = vld [vmem:[%s1 + $0x868] sm:$0xff]
  %v307 = vld [vmem:[%s1 + $0x870] sm:$0xff]
  %v308 = vld [vmem:[%s1 + $0x878] sm:$0xff]
  %v309 = vld [vmem:[%s1 + $0x880] sm:$0xff]
  %v310 = vld [vmem:[%s1 + $0x888] sm:$0xff]
  %v311 = vld [vmem:[%s1 + $0x890] sm:$0xff]
  %v312 = vld [vmem:[%s1 + $0x898] sm:$0xff]
  %v313 = vld [vmem:[%s1 + $0x8a0] sm:$0xff]
  %v314 = vld [vmem:[%s1 + $0x8a8] sm:$0xff]
  %v315 = vld [vmem:[%s1 + $0x8b0] sm:$0xff]
  %v316 = vld [vmem:[%s1 + $0x8b8] sm:$0xff]
  %v317 = vld [vmem:[%s1 + $0x8c0] sm:$0xff]
  %v318 = vld [vmem:[%s1 + $0x8c8] sm:$0xff]
  %v319 = vld [vmem:[%s1 + $0x8d0] sm:$0xff]
  %v320 = vld [vmem:[%s1 + $0x8d8] sm:$0xff]
  %v321 = vld [vmem:[%s1 + $0x8e0] sm:$0xff]
  %v322 = vld [vmem:[%s1 + $0x8e8] sm:$0xff]
  %v323 = vld [vmem:[%s1 + $0x8f0] sm:$0xff]
  %v324 = vld [vmem:[%s1 + $0x8f8] sm:$0xff]
  %v325 = vld [vmem:[%s1 + $0x900] sm:$0xff]
  %v326 = vld [vmem:[%s1 + $0x908] sm:$0xff]
  %v327 = vld [vmem:[%s1 + $0x910] sm:$0xff]
  %v328 = vld [vmem:[%s1 + $0x918] sm:$0xff]
  %v329 = vld [vmem:[%s1 + $0x920] sm:$0xff]
  %v330 = vld [vmem:[%s1 + $0x928] sm:$0xff]
  %v331 = vld [vmem:[%s1 + $0x930] sm:$0xff]
  %v332 = vld [vmem:[%s1 + $0x938] sm:$0xff]
  %v333 = vld [vmem:[%s1 + $0x940] sm:$0xff]
  %v334 = vld [vmem:[%s1 + $0x948] sm:$0xff]
  %v335 = vld [vmem:[%s1 + $0x950] sm:$0xff]
  %v336 = vld [vmem:[%s1 + $0x958] sm:$0xff]
  %v337 = vld [vmem:[%s1 + $0x960] sm:$0xff]
  %v338 = vld [vmem:[%s1 + $0x968] sm:$0xff]
  %v339 = vld [vmem:[%s1 + $0x970] sm:$0xff]
  %v340 = vld [vmem:[%s1 + $0x978] sm:$0xff]
  %v341 = vld [vmem:[%s1 + $0x980] sm:$0xff]
  %v342 = vld [vmem:[%s1 + $0x988] sm:$0xff]
  %v343 = vld [vmem:[%s1 + $0x990] sm:$0xff]
  %v344 = vld [vmem:[%s1 + $0x998] sm:$0xff]
  %v345 = vld [vmem:[%s1 + $0x9a0] sm:$0xff]
  %v346 = vld [vmem:[%s1 + $0x9a8] sm:$0xff]
  %v347 = vld [vmem:[%s1 + $0x9b0] sm:$0xff]
  %v348 = vld [vmem:[%s1 + $0x9b8] sm:$0xff]
  %v349 = vld [vmem:[%s1 + $0x9c0] sm:$0xff]
  %v350 = vld [vmem:[%s1 + $0x9c8] sm:$0xff]
  %v351 = vld [vmem:[%s1 + $0x9d0] sm:$0xff]
  %v352 = vld [vmem:[%s1 + $0x9d8] sm:$0xff]
  %v353 = vld [vmem:[%s1 + $0x9e0] sm:$0xff]
  %v354 = vld [vmem:[%s1 + $0x9e8] sm:$0xff]
  %v355 = vld [vmem:[%s1 + $0x9f0] sm:$0xff]
  %v356 = vld [vmem:[%s1 + $0x9f8] sm:$0xff]
  %v357 = vld [vmem:[%s1 + $0xa00] sm:$0xff]
  %v358 = vld [vmem:[%s1 + $0xa08] sm:$0xff]
  %v359 = vld [vmem:[%s1 + $0xa10] sm:$0xff]
  %v360 = vld [vmem:[%s1 + $0xa18] sm:$0xff]
  %v361 = vld [vmem:[%s1 + $0xa20] sm:$0xff]
  %v362 = vld [vmem:[%s1 + $0xa28] sm:$0xff]
  %v363 = vld [vmem:[%s1 + $0xa30] sm:$0xff]
  %v364 = vld [vmem:[%s1 + $0xa38] sm:$0xff]
  %v365 = vld [vmem:[%s1 + $0xa40] sm:$0xff]
  %v366 = vld [vmem:[%s1 + $0xa48] sm:$0xff]
  %v367 = vld [vmem:[%s1 + $0xa50] sm:$0xff]
  %v368 = vld [vmem:[%s1 + $0xa58] sm:$0xff]
  %v369 = vld [vmem:[%s1 + $0xa60] sm:$0xff]
  %v370 = vld [vmem:[%s1 + $0xa68] sm:$0xff]
  %v371 = vld [vmem:[%s1 + $0xa70] sm:$0xff]
  %v372 = vld [vmem:[%s1 + $0xa78] sm:$0xff]
  %v373 = vld [vmem:[%s1 + $0xa80] sm:$0xff]
  %v374 = vld [vmem:[%s1 + $0xa88] sm:$0xff]
  %v375 = vld [vmem:[%s1 + $0xa90] sm:$0xff]
  %v376 = vld [vmem:[%s1 + $0xa98] sm:$0xff]
  %v377 = vld [vmem:[%s1 + $0xaa0] sm:$0xff]
  %v378 = vld [vmem:[%s1 + $0xaa8] sm:$0xff]
  %v379 = vld [vmem:[%s1 + $0xab0] sm:$0xff]
  %v380 = vld [vmem:[%s1 + $0xab8] sm:$0xff]
  %v381 = vld [vmem:[%s1 + $0xac0] sm:$0xff]
  %v382 = vld [vmem:[%s1 + $0xac8] sm:$0xff]
  %v383 = vld [vmem:[%s1 + $0xad0] sm:$0xff]
  %v384 = vld [vmem:[%s1 + $0xad8] sm:$0xff]
  %v385 = vld [vmem:[%s1 + $0xae0] sm:$0xff]
  %v386 = vld [vmem:[%s1 + $0xae8] sm:$0xff]
  %v387 = vld [vmem:[%s1 + $0xaf0] sm:$0xff]
  %v388 = vld [vmem:[%s1 + $0xaf8] sm:$0xff]
  %v389 = vld [vmem:[%s1 + $0xb00] sm:$0xff]
  %v390 = vld [vmem:[%s1 + $0xb08] sm:$0xff]
  %v391 = vld [vmem:[%s1 + $0xb10] sm:$0xff]
  %v392 = vld [vmem:[%s1 + $0xb18] sm:$0xff]
  %v393 = vld [vmem:[%s1 + $0xb20] sm:$0xff]
  %v394 = vld [vmem:[%s1 + $0xb28] sm:$0xff]
  %v395 = vld [vmem:[%s1 + $0xb30] sm:$0xff]
  %v396 = vld [vmem:[%s1 + $0xb38] sm:$0xff]
  %v397 = vld [vmem:[%s1 + $0xb40] sm:$0xff]
  %v398 = vld [vmem:[%s1 + $0xb48] sm:$0xff]
  %v399 = vld [vmem:[%s1 + $0xb50] sm:$0xff]
  %v400 = vld [vmem:[%s1 + $0xb58] sm:$0xff]
  %v401 = vld [vmem:[%s1 + $0xb60] sm:$0xff]
  %v402 = vld [vmem:[%s1 + $0xb68] sm:$0xff]
  %v403 = vld [vmem:[%s1 + $0xb70] sm:$0xff]
  %v404 = vld [vmem:[%s1 + $0xb78] sm:$0xff]
  %v405 = vld [vmem:[%s1 + $0xb80] sm:$0xff]
  %v406 = vld [vmem:[%s1 + $0xb88] sm:$0xff]
  %v407 = vld [vmem:[%s1 + $0xb90] sm:$0xff]
  %v408 = vld [vmem:[%s1 + $0xb98] sm:$0xff]
  %v409 = vld [vmem:[%s1 + $0xba0] sm:$0xff]
  %v410 = vld [vmem:[%s1 + $0xba8] sm:$0xff]
  %v411 = vld [vmem:[%s1 + $0xbb0] sm:$0xff]
  %v412 = vld [vmem:[%s1 + $0xbb8] sm:$0xff]
  %v413 = vld [vmem:[%s1 + $0xbc0] sm:$0xff]
  %v414 = vld [vmem:[%s1 + $0xbc8] sm:$0xff]
  %v415 = vld [vmem:[%s1 + $0xbd0] sm:$0xff]
  %v416 = vld [vmem:[%s1 + $0xbd8] sm:$0xff]
  %v417 = vld [vmem:[%s1 + $0xbe0] sm:$0xff]
  %v418 = vld [vmem:[%s1 + $0xbe8] sm:$0xff]
  %v419 = vld [vmem:[%s1 + $0xbf0] sm:$0xff]
  %v420 = vld [vmem:[%s1 + $0xbf8] sm:$0xff]
  %v421 = vld [vmem:[%s1 + $0xc00] sm:$0xff]
  %v422 = vld [vmem:[%s1 + $0xc08] sm:$0xff]
  %v423 = vld [vmem:[%s1 + $0xc10] sm:$0xff]
  %v424 = vld [vmem:[%s1 + $0xc18] sm:$0xff]
  %v425 = vld [vmem:[%s1 + $0xc20] sm:$0xff]
  %v426 = vld [vmem:[%s1 + $0xc28] sm:$0xff]
  %v427 = vld [vmem:[%s1 + $0xc30] sm:$0xff]
  %v428 = vld [vmem:[%s1 + $0xc38] sm:$0xff]
  %v429 = vld [vmem:[%s1 + $0xc40] sm:$0xff]
  %v430 = vld [vmem:[%s1 + $0xc48] sm:$0xff]
  %v431 = vld [vmem:[%s1 + $0xc50] sm:$0xff]
  %v432 = vld [vmem:[%s1 + $0xc58] sm:$0xff]
  %v433 = vld [vmem:[%s1 + $0xc60] sm:$0xff]
  %v434 = vld [vmem:[%s1 + $0xc68] sm:$0xff]
  %v435 = vld [vmem:[%s1 + $0xc70] sm:$0xff]
  %v436 = vld [vmem:[%s1 + $0xc78] sm:$0xff]
  %v437 = vld [vmem:[%s1 + $0xc80] sm:$0xff]
  %v438 = vld [vmem:[%s1 + $0xc88] sm:$0xff]
  %v439 = vld [vmem:[%s1 + $0xc90] sm:$0xff]
  %v440 = vld [vmem:[%s1 + $0xc98] sm:$0xff]
  %v441 = vld [vmem:[%s1 + $0xca0] sm:$0xff]
  %v442 = vld [vmem:[%s1 + $0xca8] sm:$0xff]
  %v443 = vld [vmem:[%s1 + $0xcb0] sm:$0xff]
  %v444 = vld [vmem:[%s1 + $0xcb8] sm:$0xff]
  %v445 = vld [vmem:[%s1 + $0xcc0] sm:$0xff]
  %v446 = vld [vmem:[%s1 + $0xcc8] sm:$0xff]
  %v447 = vld [vmem:[%s1 + $0xcd0] sm:$0xff]
  %v448 = vld [vmem:[%s1 + $0xcd8] sm:$0xff]
  %v449 = vld [vmem:[%s1 + $0xce0] sm:$0xff]
  %v450 = vld [vmem:[%s1 + $0xce8] sm:$0xff]
  %v451 = vld [vmem:[%s1 + $0xcf0] sm:$0xff]
  %v452 = vld [vmem:[%s1 + $0xcf8] sm:$0xff]
  %v453 = vld [vmem:[%s1 + $0xd00] sm:$0xff]
  %v454 = vld [vmem:[%s1 + $0xd08] sm:$0xff]
  %v455 = vld [vmem:[%s1 + $0xd10] sm:$0xff]
  %v456 = vld [vmem:[%s1 + $0xd18] sm:$0xff]
  %v457 = vld [vmem:[%s1 + $0xd20] sm:$0xff]
  %v458 = vld [vmem:[%s1 + $0xd28] sm:$0xff]
  %v459 = vld [vmem:[%s1 + $0xd30] sm:$0xff]
  %v460 = vld [vmem:[%s1 + $0xd38] sm:$0xff]
  %v461 = vld [vmem:[%s1 + $0xd40] sm:$0xff]
  %v462 = vld [vmem:[%s1 + $0xd48] sm:$0xff]
  %v463 = vld [vmem:[%s1 + $0xd50] sm:$0xff]
  %v464 = vld [vmem:[%s1 + $0xd58] sm:$0xff]
  %v465 = vld [vmem:[%s1 + $0xd60] sm:$0xff]
  %v466 = vld [vmem:[%s1 + $0xd68] sm:$0xff]
  %v467 = vld [vmem:[%s1 + $0xd70] sm:$0xff]
  %v468 = vld [vmem:[%s1 + $0xd78] sm:$0xff]
  %v469 = vld [vmem:[%s1 + $0xd80] sm:$0xff]
  %v470 = vld [vmem:[%s1 + $0xd88] sm:$0xff]
  %v471 = vld [vmem:[%s1 + $0xd90] sm:$0xff]
  %v472 = vld [vmem:[%s1 + $0xd98] sm:$0xff]
  %v473 = vld [vmem:[%s1 + $0xda0] sm:$0xff]
  %v474 = vld [vmem:[%s1 + $0xda8] sm:$0xff]
  %v475 = vld [vmem:[%s1 + $0xdb0] sm:$0xff]
  %v476 = vld [vmem:[%s1 + $0xdb8] sm:$0xff]
  %v477 = vld [vmem:[%s1 + $0xdc0] sm:$0xff]
  %v478 = vld [vmem:[%s1 + $0xdc8] sm:$0xff]
  %v479 = vld [vmem:[%s1 + $0xdd0] sm:$0xff]
  %v480 = vld [vmem:[%s1 + $0xdd8] sm:$0xff]
  %v481 = vld [vmem:[%s1 + $0xde0] sm:$0xff]
  %v482 = vld [vmem:[%s1 + $0xde8] sm:$0xff]
  %v483 = vld [vmem:[%s1 + $0xdf0] sm:$0xff]
  %v484 = vld [vmem:[%s1 + $0xdf8] sm:$0xff]
  %v485 = vld [vmem:[%s1 + $0xe00] sm:$0xff]
  %v486 = vld [vmem:[%s1 + $0xe08] sm:$0xff]
  %v487 = vld [vmem:[%s1 + $0xe10] sm:$0xff]
  %v488 = vld [vmem:[%s1 + $0xe18] sm:$0xff]
  %v489 = vld [vmem:[%s1 + $0xe20] sm:$0xff]
  %v490 = vld [vmem:[%s1 + $0xe28] sm:$0xff]
  %v491 = vld [vmem:[%s1 + $0xe30] sm:$0xff]
  %v492 = vld [vmem:[%s1 + $0xe38] sm:$0xff]
  %v493 = vld [vmem:[%s1 + $0xe40] sm:$0xff]
  %v494 = vld [vmem:[%s1 + $0xe48] sm:$0xff]
  %v495 = vld [vmem:[%s1 + $0xe50] sm:$0xff]
  %v496 = vld [vmem:[%s1 + $0xe58] sm:$0xff]
  %v497 = vld [vmem:[%s1 + $0xe60] sm:$0xff]
  %v498 = vld [vmem:[%s1 + $0xe68] sm:$0xff]
  %v499 = vld [vmem:[%s1 + $0xe70] sm:$0xff]
  %v500 = vld [vmem:[%s1 + $0xe78] sm:$0xff]
  %v501 = vld [vmem:[%s1 + $0xe80] sm:$0xff]
  %v502 = vld [vmem:[%s1 + $0xe88] sm:$0xff]
  %v503 = vld [vmem:[%s1 + $0xe90] sm:$0xff]
  %v504 = vld [vmem:[%s1 + $0xe98] sm:$0xff]
  %v505 = vld [vmem:[%s1 + $0xea0] sm:$0xff]
  %v506 = vld [vmem:[%s1 + $0xea8] sm:$0xff]
  %v507 = vld [vmem:[%s1 + $0xeb0] sm:$0xff]
  %v508 = vld [vmem:[%s1 + $0xeb8] sm:$0xff]
  %v509 = vld [vmem:[%s1 + $0xec0] sm:$0xff]
  %v510 = vld [vmem:[%s1 + $0xec8] sm:$0xff]
  %v511 = vld [vmem:[%s1 + $0xed0] sm:$0xff]
  %v512 = vld [vmem:[%s1 + $0xed8] sm:$0xff]
  %v513 = vld [vmem:[%s1 + $0xee0] sm:$0xff]
  %v514 = vld [vmem:[%s1 + $0xee8] sm:$0xff]
  %v515 = vld [vmem:[%s1 + $0xef0] sm:$0xff]
  %v516 = vld [vmem:[%s1 + $0xef8] sm:$0xff]
  %v517 = vld [vmem:[%s1 + $0xf00] sm:$0xff]
  %v518 = vld [vmem:[%s1 + $0xf08] sm:$0xff]
  %v519 = vld [vmem:[%s1 + $0xf10] sm:$0xff]
  %v520 = vld [vmem:[%s1 + $0xf18] sm:$0xff]
  %v521 = vld [vmem:[%s1 + $0xf20] sm:$0xff]
  %v522 = vld [vmem:[%s1 + $0xf28] sm:$0xff]
  %v523 = vld [vmem:[%s1 + $0xf30] sm:$0xff]
  %v524 = vld [vmem:[%s1 + $0xf38] sm:$0xff]
  %v525 = vld [vmem:[%s1 + $0xf40] sm:$0xff]
  %v526 = vld [vmem:[%s1 + $0xf48] sm:$0xff]
  %v527 = vld [vmem:[%s1 + $0xf50] sm:$0xff]
  %v528 = vld [vmem:[%s1 + $0xf58] sm:$0xff]
  %v529 = vld [vmem:[%s1 + $0xf60] sm:$0xff]
  %v530 = vld [vmem:[%s1 + $0xf68] sm:$0xff]
  %v531 = vld [vmem:[%s1 + $0xf70] sm:$0xff]
  %v532 = vld [vmem:[%s1 + $0xf78] sm:$0xff]
  %v533 = vld [vmem:[%s1 + $0xf80] sm:$0xff]
  %v534 = vld [vmem:[%s1 + $0xf88] sm:$0xff]
  %v535 = vld [vmem:[%s1 + $0xf90] sm:$0xff]
  %v536 = vld [vmem:[%s1 + $0xf98] sm:$0xff]
  %v537 = vld [vmem:[%s1 + $0xfa0] sm:$0xff]
  %v538 = vld [vmem:[%s1 + $0xfa8] sm:$0xff]
  %v539 = vld [vmem:[%s1 + $0xfb0] sm:$0xff]
  %v540 = vld [vmem:[%s1 + $0xfb8] sm:$0xff]
  %v541 = vld [vmem:[%s1 + $0xfc0] sm:$0xff]
  %v542 = vld [vmem:[%s1 + $0xfc8] sm:$0xff]
  %v543 = vld [vmem:[%s1 + $0xfd0] sm:$0xff]
  %v544 = vld [vmem:[%s1 + $0xfd8] sm:$0xff]
  %v545 = vld [vmem:[%s1 + $0xfe0] sm:$0xff]
  %v546 = vld [vmem:[%s1 + $0xfe8] sm:$0xff]
  %v547 = vld [vmem:[%s1 + $0xff0] sm:$0xff]
  %v548 = vld [vmem:[%s1 + $0xff8] sm:$0xff]
  %v549 = vld [vmem:[%s2] sm:$0x3]
  %v551 = vlaneseq
  %v552 = vshrl.u32 %v551, 7
  %v553 = vsub.s32 0, %v552
  %v554 = vrot.slane %v549, %v553
  %v555 = vlaneseq
  %v556 = vshrl.u32 %v555, 7
  %v557 = vsub.s32 1, %v556
  %v558 = vrot.slane %v549, %v557
  %v577 = vunpack.c.l.b16 %v21
  %v578 = vunpack.c.h.b16 %v21
  %v579 = vunpack.c.l.b16 %v22
  %v580 = vunpack.c.h.b16 %v22
  %v581 = vunpack.c.l.b16 %v23
  %v582 = vunpack.c.h.b16 %v23
  %v583 = vunpack.c.l.b16 %v24
  %v584 = vunpack.c.h.b16 %v24
  %v585 = vunpack.c.l.b16 %v25
  %v586 = vunpack.c.h.b16 %v25
  %v587 = vunpack.c.l.b16 %v26
  %v588 = vunpack.c.h.b16 %v26
  %v589 = vunpack.c.l.b16 %v27
  %v590 = vunpack.c.h.b16 %v27
  %v591 = vunpack.c.l.b16 %v28
  %v592 = vunpack.c.h.b16 %v28
  %v593 = vunpack.c.l.b16 %v29
  %v594 = vunpack.c.h.b16 %v29
  %v595 = vunpack.c.l.b16 %v30
  %v596 = vunpack.c.h.b16 %v30
  %v597 = vunpack.c.l.b16 %v31
  %v598 = vunpack.c.h.b16 %v31
  %v599 = vunpack.c.l.b16 %v32
  %v600 = vunpack.c.h.b16 %v32
  %v601 = vunpack.c.l.b16 %v33
  %v602 = vunpack.c.h.b16 %v33
  %v603 = vunpack.c.l.b16 %v34
  %v604 = vunpack.c.h.b16 %v34
  %v605 = vunpack.c.l.b16 %v35
  %v606 = vunpack.c.h.b16 %v35
  %v607 = vunpack.c.l.b16 %v36
  %v608 = vunpack.c.h.b16 %v36
  %v609 = vpack.c.b16 %v577, %v577
  %v610 = vpack.c.b16 %v578, %v578
  %v611 = vpack.c.b16 %v579, %v579
  %v612 = vpack.c.b16 %v580, %v580
  %v613 = vpack.c.b16 %v581, %v581
  %v614 = vpack.c.b16 %v582, %v582
  %v615 = vpack.c.b16 %v583, %v583
  %v616 = vpack.c.b16 %v584, %v584
  %v617 = vpack.c.b16 %v585, %v585
  %v618 = vpack.c.b16 %v586, %v586
  %v619 = vpack.c.b16 %v587, %v587
  %v620 = vpack.c.b16 %v588, %v588
  %v621 = vpack.c.b16 %v589, %v589
  %v622 = vpack.c.b16 %v590, %v590
  %v623 = vpack.c.b16 %v591, %v591
  %v624 = vpack.c.b16 %v592, %v592
  %v625 = vpack.c.b16 %v593, %v593
  %v626 = vpack.c.b16 %v594, %v594
  %v627 = vpack.c.b16 %v595, %v595
  %v628 = vpack.c.b16 %v596, %v596
  %v629 = vpack.c.b16 %v597, %v597
  %v630 = vpack.c.b16 %v598, %v598
  %v631 = vpack.c.b16 %v599, %v599
  %v632 = vpack.c.b16 %v600, %v600
  %v633 = vpack.c.b16 %v601, %v601
  %v634 = vpack.c.b16 %v602, %v602
  %v635 = vpack.c.b16 %v603, %v603
  %v636 = vpack.c.b16 %v604, %v604
  %v637 = vpack.c.b16 %v605, %v605
  %v638 = vpack.c.b16 %v606, %v606
  %v639 = vpack.c.b16 %v607, %v607
  %v640 = vpack.c.b16 %v608, %v608
  %v1185 = vunpack.c.l.b16 %v37
  %v1186 = vunpack.c.h.b16 %v37
  %v1187 = vunpack.c.l.b16 %v38
  %v1188 = vunpack.c.h.b16 %v38
  %v1189 = vunpack.c.l.b16 %v39
  %v1190 = vunpack.c.h.b16 %v39
  %v1191 = vunpack.c.l.b16 %v40
  %v1192 = vunpack.c.h.b16 %v40
  %v1193 = vunpack.c.l.b16 %v41
  %v1194 = vunpack.c.h.b16 %v41
  %v1195 = vunpack.c.l.b16 %v42
  %v1196 = vunpack.c.h.b16 %v42
  %v1197 = vunpack.c.l.b16 %v43
  %v1198 = vunpack.c.h.b16 %v43
  %v1199 = vunpack.c.l.b16 %v44
  %v1200 = vunpack.c.h.b16 %v44
  %v1201 = vunpack.c.l.b16 %v45
  %v1202 = vunpack.c.h.b16 %v45
  %v1203 = vunpack.c.l.b16 %v46
  %v1204 = vunpack.c.h.b16 %v46
  %v1205 = vunpack.c.l.b16 %v47
  %v1206 = vunpack.c.h.b16 %v47
  %v1207 = vunpack.c.l.b16 %v48
  %v1208 = vunpack.c.h.b16 %v48
  %v1209 = vunpack.c.l.b16 %v49
  %v1210 = vunpack.c.h.b16 %v49
  %v1211 = vunpack.c.l.b16 %v50
  %v1212 = vunpack.c.h.b16 %v50
  %v1213 = vunpack.c.l.b16 %v51
  %v1214 = vunpack.c.h.b16 %v51
  %v1215 = vunpack.c.l.b16 %v52
  %v1216 = vunpack.c.h.b16 %v52
  %v1217 = vunpack.c.l.b16 %v53
  %v1218 = vunpack.c.h.b16 %v53
  %v1219 = vunpack.c.l.b16 %v54
  %v1220 = vunpack.c.h.b16 %v54
  %v1221 = vunpack.c.l.b16 %v55
  %v1222 = vunpack.c.h.b16 %v55
  %v1223 = vunpack.c.l.b16 %v56
  %v1224 = vunpack.c.h.b16 %v56
  %v1225 = vunpack.c.l.b16 %v57
  %v1226 = vunpack.c.h.b16 %v57
  %v1227 = vunpack.c.l.b16 %v58
  %v1228 = vunpack.c.h.b16 %v58
  %v1229 = vunpack.c.l.b16 %v59
  %v1230 = vunpack.c.h.b16 %v59
  %v1231 = vunpack.c.l.b16 %v60
  %v1232 = vunpack.c.h.b16 %v60
  %v1233 = vunpack.c.l.b16 %v61
  %v1234 = vunpack.c.h.b16 %v61
  %v1235 = vunpack.c.l.b16 %v62
  %v1236 = vunpack.c.h.b16 %v62
  %v1237 = vunpack.c.l.b16 %v63
  %v1238 = vunpack.c.h.b16 %v63
  %v1239 = vunpack.c.l.b16 %v64
  %v1240 = vunpack.c.h.b16 %v64
  %v1241 = vunpack.c.l.b16 %v65
  %v1242 = vunpack.c.h.b16 %v65
  %v1243 = vunpack.c.l.b16 %v66
  %v1244 = vunpack.c.h.b16 %v66
  %v1245 = vunpack.c.l.b16 %v67
  %v1246 = vunpack.c.h.b16 %v67
  %v1247 = vunpack.c.l.b16 %v68
  %v1248 = vunpack.c.h.b16 %v68
  %v1249 = vunpack.c.l.b16 %v69
  %v1250 = vunpack.c.h.b16 %v69
  %v1251 = vunpack.c.l.b16 %v70
  %v1252 = vunpack.c.h.b16 %v70
  %v1253 = vunpack.c.l.b16 %v71
  %v1254 = vunpack.c.h.b16 %v71
  %v1255 = vunpack.c.l.b16 %v72
  %v1256 = vunpack.c.h.b16 %v72
  %v1257 = vunpack.c.l.b16 %v73
  %v1258 = vunpack.c.h.b16 %v73
  %v1259 = vunpack.c.l.b16 %v74
  %v1260 = vunpack.c.h.b16 %v74
  %v1261 = vunpack.c.l.b16 %v75
  %v1262 = vunpack.c.h.b16 %v75
  %v1263 = vunpack.c.l.b16 %v76
  %v1264 = vunpack.c.h.b16 %v76
  %v1265 = vunpack.c.l.b16 %v77
  %v1266 = vunpack.c.h.b16 %v77
  %v1267 = vunpack.c.l.b16 %v78
  %v1268 = vunpack.c.h.b16 %v78
  %v1269 = vunpack.c.l.b16 %v79
  %v1270 = vunpack.c.h.b16 %v79
  %v1271 = vunpack.c.l.b16 %v80
  %v1272 = vunpack.c.h.b16 %v80
  %v1273 = vunpack.c.l.b16 %v81
  %v1274 = vunpack.c.h.b16 %v81
  %v1275 = vunpack.c.l.b16 %v82
  %v1276 = vunpack.c.h.b16 %v82
  %v1277 = vunpack.c.l.b16 %v83
  %v1278 = vunpack.c.h.b16 %v83
  %v1279 = vunpack.c.l.b16 %v84
  %v1280 = vunpack.c.h.b16 %v84
  %v1281 = vunpack.c.l.b16 %v85
  %v1282 = vunpack.c.h.b16 %v85
  %v1283 = vunpack.c.l.b16 %v86
  %v1284 = vunpack.c.h.b16 %v86
  %v1285 = vunpack.c.l.b16 %v87
  %v1286 = vunpack.c.h.b16 %v87
  %v1287 = vunpack.c.l.b16 %v88
  %v1288 = vunpack.c.h.b16 %v88
  %v1289 = vunpack.c.l.b16 %v89
  %v1290 = vunpack.c.h.b16 %v89
  %v1291 = vunpack.c.l.b16 %v90
  %v1292 = vunpack.c.h.b16 %v90
  %v1293 = vunpack.c.l.b16 %v91
  %v1294 = vunpack.c.h.b16 %v91
  %v1295 = vunpack.c.l.b16 %v92
  %v1296 = vunpack.c.h.b16 %v92
  %v1297 = vunpack.c.l.b16 %v93
  %v1298 = vunpack.c.h.b16 %v93
  %v1299 = vunpack.c.l.b16 %v94
  %v1300 = vunpack.c.h.b16 %v94
  %v1301 = vunpack.c.l.b16 %v95
  %v1302 = vunpack.c.h.b16 %v95
  %v1303 = vunpack.c.l.b16 %v96
  %v1304 = vunpack.c.h.b16 %v96
  %v1305 = vunpack.c.l.b16 %v97
  %v1306 = vunpack.c.h.b16 %v97
  %v1307 = vunpack.c.l.b16 %v98
  %v1308 = vunpack.c.h.b16 %v98
  %v1309 = vunpack.c.l.b16 %v99
  %v1310 = vunpack.c.h.b16 %v99
  %v1311 = vunpack.c.l.b16 %v100
  %v1312 = vunpack.c.h.b16 %v100
  %v1313 = vunpack.c.l.b16 %v101
  %v1314 = vunpack.c.h.b16 %v101
  %v1315 = vunpack.c.l.b16 %v102
  %v1316 = vunpack.c.h.b16 %v102
  %v1317 = vunpack.c.l.b16 %v103
  %v1318 = vunpack.c.h.b16 %v103
  %v1319 = vunpack.c.l.b16 %v104
  %v1320 = vunpack.c.h.b16 %v104
  %v1321 = vunpack.c.l.b16 %v105
  %v1322 = vunpack.c.h.b16 %v105
  %v1323 = vunpack.c.l.b16 %v106
  %v1324 = vunpack.c.h.b16 %v106
  %v1325 = vunpack.c.l.b16 %v107
  %v1326 = vunpack.c.h.b16 %v107
  %v1327 = vunpack.c.l.b16 %v108
  %v1328 = vunpack.c.h.b16 %v108
  %v1329 = vunpack.c.l.b16 %v109
  %v1330 = vunpack.c.h.b16 %v109
  %v1331 = vunpack.c.l.b16 %v110
  %v1332 = vunpack.c.h.b16 %v110
  %v1333 = vunpack.c.l.b16 %v111
  %v1334 = vunpack.c.h.b16 %v111
  %v1335 = vunpack.c.l.b16 %v112
  %v1336 = vunpack.c.h.b16 %v112
  %v1337 = vunpack.c.l.b16 %v113
  %v1338 = vunpack.c.h.b16 %v113
  %v1339 = vunpack.c.l.b16 %v114
  %v1340 = vunpack.c.h.b16 %v114
  %v1341 = vunpack.c.l.b16 %v115
  %v1342 = vunpack.c.h.b16 %v115
  %v1343 = vunpack.c.l.b16 %v116
  %v1344 = vunpack.c.h.b16 %v116
  %v1345 = vunpack.c.l.b16 %v117
  %v1346 = vunpack.c.h.b16 %v117
  %v1347 = vunpack.c.l.b16 %v118
  %v1348 = vunpack.c.h.b16 %v118
  %v1349 = vunpack.c.l.b16 %v119
  %v1350 = vunpack.c.h.b16 %v119
  %v1351 = vunpack.c.l.b16 %v120
  %v1352 = vunpack.c.h.b16 %v120
  %v1353 = vunpack.c.l.b16 %v121
  %v1354 = vunpack.c.h.b16 %v121
  %v1355 = vunpack.c.l.b16 %v122
  %v1356 = vunpack.c.h.b16 %v122
  %v1357 = vunpack.c.l.b16 %v123
  %v1358 = vunpack.c.h.b16 %v123
  %v1359 = vunpack.c.l.b16 %v124
  %v1360 = vunpack.c.h.b16 %v124
  %v1361 = vunpack.c.l.b16 %v125
  %v1362 = vunpack.c.h.b16 %v125
  %v1363 = vunpack.c.l.b16 %v126
  %v1364 = vunpack.c.h.b16 %v126
  %v1365 = vunpack.c.l.b16 %v127
  %v1366 = vunpack.c.h.b16 %v127
  %v1367 = vunpack.c.l.b16 %v128
  %v1368 = vunpack.c.h.b16 %v128
  %v1369 = vunpack.c.l.b16 %v129
  %v1370 = vunpack.c.h.b16 %v129
  %v1371 = vunpack.c.l.b16 %v130
  %v1372 = vunpack.c.h.b16 %v130
  %v1373 = vunpack.c.l.b16 %v131
  %v1374 = vunpack.c.h.b16 %v131
  %v1375 = vunpack.c.l.b16 %v132
  %v1376 = vunpack.c.h.b16 %v132
  %v1377 = vunpack.c.l.b16 %v133
  %v1378 = vunpack.c.h.b16 %v133
  %v1379 = vunpack.c.l.b16 %v134
  %v1380 = vunpack.c.h.b16 %v134
  %v1381 = vunpack.c.l.b16 %v135
  %v1382 = vunpack.c.h.b16 %v135
  %v1383 = vunpack.c.l.b16 %v136
  %v1384 = vunpack.c.h.b16 %v136
  %v1385 = vunpack.c.l.b16 %v137
  %v1386 = vunpack.c.h.b16 %v137
  %v1387 = vunpack.c.l.b16 %v138
  %v1388 = vunpack.c.h.b16 %v138
  %v1389 = vunpack.c.l.b16 %v139
  %v1390 = vunpack.c.h.b16 %v139
  %v1391 = vunpack.c.l.b16 %v140
  %v1392 = vunpack.c.h.b16 %v140
  %v1393 = vunpack.c.l.b16 %v141
  %v1394 = vunpack.c.h.b16 %v141
  %v1395 = vunpack.c.l.b16 %v142
  %v1396 = vunpack.c.h.b16 %v142
  %v1397 = vunpack.c.l.b16 %v143
  %v1398 = vunpack.c.h.b16 %v143
  %v1399 = vunpack.c.l.b16 %v144
  %v1400 = vunpack.c.h.b16 %v144
  %v1401 = vunpack.c.l.b16 %v145
  %v1402 = vunpack.c.h.b16 %v145
  %v1403 = vunpack.c.l.b16 %v146
  %v1404 = vunpack.c.h.b16 %v146
  %v1405 = vunpack.c.l.b16 %v147
  %v1406 = vunpack.c.h.b16 %v147
  %v1407 = vunpack.c.l.b16 %v148
  %v1408 = vunpack.c.h.b16 %v148
  %v1409 = vunpack.c.l.b16 %v149
  %v1410 = vunpack.c.h.b16 %v149
  %v1411 = vunpack.c.l.b16 %v150
  %v1412 = vunpack.c.h.b16 %v150
  %v1413 = vunpack.c.l.b16 %v151
  %v1414 = vunpack.c.h.b16 %v151
  %v1415 = vunpack.c.l.b16 %v152
  %v1416 = vunpack.c.h.b16 %v152
  %v1417 = vunpack.c.l.b16 %v153
  %v1418 = vunpack.c.h.b16 %v153
  %v1419 = vunpack.c.l.b16 %v154
  %v1420 = vunpack.c.h.b16 %v154
  %v1421 = vunpack.c.l.b16 %v155
  %v1422 = vunpack.c.h.b16 %v155
  %v1423 = vunpack.c.l.b16 %v156
  %v1424 = vunpack.c.h.b16 %v156
  %v1425 = vunpack.c.l.b16 %v157
  %v1426 = vunpack.c.h.b16 %v157
  %v1427 = vunpack.c.l.b16 %v158
  %v1428 = vunpack.c.h.b16 %v158
  %v1429 = vunpack.c.l.b16 %v159
  %v1430 = vunpack.c.h.b16 %v159
  %v1431 = vunpack.c.l.b16 %v160
  %v1432 = vunpack.c.h.b16 %v160
  %v1433 = vunpack.c.l.b16 %v161
  %v1434 = vunpack.c.h.b16 %v161
  %v1435 = vunpack.c.l.b16 %v162
  %v1436 = vunpack.c.h.b16 %v162
  %v1437 = vunpack.c.l.b16 %v163
  %v1438 = vunpack.c.h.b16 %v163
  %v1439 = vunpack.c.l.b16 %v164
  %v1440 = vunpack.c.h.b16 %v164
  %v1441 = vunpack.c.l.b16 %v165
  %v1442 = vunpack.c.h.b16 %v165
  %v1443 = vunpack.c.l.b16 %v166
  %v1444 = vunpack.c.h.b16 %v166
  %v1445 = vunpack.c.l.b16 %v167
  %v1446 = vunpack.c.h.b16 %v167
  %v1447 = vunpack.c.l.b16 %v168
  %v1448 = vunpack.c.h.b16 %v168
  %v1449 = vunpack.c.l.b16 %v169
  %v1450 = vunpack.c.h.b16 %v169
  %v1451 = vunpack.c.l.b16 %v170
  %v1452 = vunpack.c.h.b16 %v170
  %v1453 = vunpack.c.l.b16 %v171
  %v1454 = vunpack.c.h.b16 %v171
  %v1455 = vunpack.c.l.b16 %v172
  %v1456 = vunpack.c.h.b16 %v172
  %v1457 = vunpack.c.l.b16 %v173
  %v1458 = vunpack.c.h.b16 %v173
  %v1459 = vunpack.c.l.b16 %v174
  %v1460 = vunpack.c.h.b16 %v174
  %v1461 = vunpack.c.l.b16 %v175
  %v1462 = vunpack.c.h.b16 %v175
  %v1463 = vunpack.c.l.b16 %v176
  %v1464 = vunpack.c.h.b16 %v176
  %v1465 = vunpack.c.l.b16 %v177
  %v1466 = vunpack.c.h.b16 %v177
  %v1467 = vunpack.c.l.b16 %v178
  %v1468 = vunpack.c.h.b16 %v178
  %v1469 = vunpack.c.l.b16 %v179
  %v1470 = vunpack.c.h.b16 %v179
  %v1471 = vunpack.c.l.b16 %v180
  %v1472 = vunpack.c.h.b16 %v180
  %v1473 = vunpack.c.l.b16 %v181
  %v1474 = vunpack.c.h.b16 %v181
  %v1475 = vunpack.c.l.b16 %v182
  %v1476 = vunpack.c.h.b16 %v182
  %v1477 = vunpack.c.l.b16 %v183
  %v1478 = vunpack.c.h.b16 %v183
  %v1479 = vunpack.c.l.b16 %v184
  %v1480 = vunpack.c.h.b16 %v184
  %v1481 = vunpack.c.l.b16 %v185
  %v1482 = vunpack.c.h.b16 %v185
  %v1483 = vunpack.c.l.b16 %v186
  %v1484 = vunpack.c.h.b16 %v186
  %v1485 = vunpack.c.l.b16 %v187
  %v1486 = vunpack.c.h.b16 %v187
  %v1487 = vunpack.c.l.b16 %v188
  %v1488 = vunpack.c.h.b16 %v188
  %v1489 = vunpack.c.l.b16 %v189
  %v1490 = vunpack.c.h.b16 %v189
  %v1491 = vunpack.c.l.b16 %v190
  %v1492 = vunpack.c.h.b16 %v190
  %v1493 = vunpack.c.l.b16 %v191
  %v1494 = vunpack.c.h.b16 %v191
  %v1495 = vunpack.c.l.b16 %v192
  %v1496 = vunpack.c.h.b16 %v192
  %v1497 = vunpack.c.l.b16 %v193
  %v1498 = vunpack.c.h.b16 %v193
  %v1499 = vunpack.c.l.b16 %v194
  %v1500 = vunpack.c.h.b16 %v194
  %v1501 = vunpack.c.l.b16 %v195
  %v1502 = vunpack.c.h.b16 %v195
  %v1503 = vunpack.c.l.b16 %v196
  %v1504 = vunpack.c.h.b16 %v196
  %v1505 = vunpack.c.l.b16 %v197
  %v1506 = vunpack.c.h.b16 %v197
  %v1507 = vunpack.c.l.b16 %v198
  %v1508 = vunpack.c.h.b16 %v198
  %v1509 = vunpack.c.l.b16 %v199
  %v1510 = vunpack.c.h.b16 %v199
  %v1511 = vunpack.c.l.b16 %v200
  %v1512 = vunpack.c.h.b16 %v200
  %v1513 = vunpack.c.l.b16 %v201
  %v1514 = vunpack.c.h.b16 %v201
  %v1515 = vunpack.c.l.b16 %v202
  %v1516 = vunpack.c.h.b16 %v202
  %v1517 = vunpack.c.l.b16 %v203
  %v1518 = vunpack.c.h.b16 %v203
  %v1519 = vunpack.c.l.b16 %v204
  %v1520 = vunpack.c.h.b16 %v204
  %v1521 = vunpack.c.l.b16 %v205
  %v1522 = vunpack.c.h.b16 %v205
  %v1523 = vunpack.c.l.b16 %v206
  %v1524 = vunpack.c.h.b16 %v206
  %v1525 = vunpack.c.l.b16 %v207
  %v1526 = vunpack.c.h.b16 %v207
  %v1527 = vunpack.c.l.b16 %v208
  %v1528 = vunpack.c.h.b16 %v208
  %v1529 = vunpack.c.l.b16 %v209
  %v1530 = vunpack.c.h.b16 %v209
  %v1531 = vunpack.c.l.b16 %v210
  %v1532 = vunpack.c.h.b16 %v210
  %v1533 = vunpack.c.l.b16 %v211
  %v1534 = vunpack.c.h.b16 %v211
  %v1535 = vunpack.c.l.b16 %v212
  %v1536 = vunpack.c.h.b16 %v212
  %v1537 = vunpack.c.l.b16 %v213
  %v1538 = vunpack.c.h.b16 %v213
  %v1539 = vunpack.c.l.b16 %v214
  %v1540 = vunpack.c.h.b16 %v214
  %v1541 = vunpack.c.l.b16 %v215
  %v1542 = vunpack.c.h.b16 %v215
  %v1543 = vunpack.c.l.b16 %v216
  %v1544 = vunpack.c.h.b16 %v216
  %v1545 = vunpack.c.l.b16 %v217
  %v1546 = vunpack.c.h.b16 %v217
  %v1547 = vunpack.c.l.b16 %v218
  %v1548 = vunpack.c.h.b16 %v218
  %v1549 = vunpack.c.l.b16 %v219
  %v1550 = vunpack.c.h.b16 %v219
  %v1551 = vunpack.c.l.b16 %v220
  %v1552 = vunpack.c.h.b16 %v220
  %v1553 = vunpack.c.l.b16 %v221
  %v1554 = vunpack.c.h.b16 %v221
  %v1555 = vunpack.c.l.b16 %v222
  %v1556 = vunpack.c.h.b16 %v222
  %v1557 = vunpack.c.l.b16 %v223
  %v1558 = vunpack.c.h.b16 %v223
  %v1559 = vunpack.c.l.b16 %v224
  %v1560 = vunpack.c.h.b16 %v224
  %v1561 = vunpack.c.l.b16 %v225
  %v1562 = vunpack.c.h.b16 %v225
  %v1563 = vunpack.c.l.b16 %v226
  %v1564 = vunpack.c.h.b16 %v226
  %v1565 = vunpack.c.l.b16 %v227
  %v1566 = vunpack.c.h.b16 %v227
  %v1567 = vunpack.c.l.b16 %v228
  %v1568 = vunpack.c.h.b16 %v228
  %v1569 = vunpack.c.l.b16 %v229
  %v1570 = vunpack.c.h.b16 %v229
  %v1571 = vunpack.c.l.b16 %v230
  %v1572 = vunpack.c.h.b16 %v230
  %v1573 = vunpack.c.l.b16 %v231
  %v1574 = vunpack.c.h.b16 %v231
  %v1575 = vunpack.c.l.b16 %v232
  %v1576 = vunpack.c.h.b16 %v232
  %v1577 = vunpack.c.l.b16 %v233
  %v1578 = vunpack.c.h.b16 %v233
  %v1579 = vunpack.c.l.b16 %v234
  %v1580 = vunpack.c.h.b16 %v234
  %v1581 = vunpack.c.l.b16 %v235
  %v1582 = vunpack.c.h.b16 %v235
  %v1583 = vunpack.c.l.b16 %v236
  %v1584 = vunpack.c.h.b16 %v236
  %v1585 = vunpack.c.l.b16 %v237
  %v1586 = vunpack.c.h.b16 %v237
  %v1587 = vunpack.c.l.b16 %v238
  %v1588 = vunpack.c.h.b16 %v238
  %v1589 = vunpack.c.l.b16 %v239
  %v1590 = vunpack.c.h.b16 %v239
  %v1591 = vunpack.c.l.b16 %v240
  %v1592 = vunpack.c.h.b16 %v240
  %v1593 = vunpack.c.l.b16 %v241
  %v1594 = vunpack.c.h.b16 %v241
  %v1595 = vunpack.c.l.b16 %v242
  %v1596 = vunpack.c.h.b16 %v242
  %v1597 = vunpack.c.l.b16 %v243
  %v1598 = vunpack.c.h.b16 %v243
  %v1599 = vunpack.c.l.b16 %v244
  %v1600 = vunpack.c.h.b16 %v244
  %v1601 = vunpack.c.l.b16 %v245
  %v1602 = vunpack.c.h.b16 %v245
  %v1603 = vunpack.c.l.b16 %v246
  %v1604 = vunpack.c.h.b16 %v246
  %v1605 = vunpack.c.l.b16 %v247
  %v1606 = vunpack.c.h.b16 %v247
  %v1607 = vunpack.c.l.b16 %v248
  %v1608 = vunpack.c.h.b16 %v248
  %v1609 = vunpack.c.l.b16 %v249
  %v1610 = vunpack.c.h.b16 %v249
  %v1611 = vunpack.c.l.b16 %v250
  %v1612 = vunpack.c.h.b16 %v250
  %v1613 = vunpack.c.l.b16 %v251
  %v1614 = vunpack.c.h.b16 %v251
  %v1615 = vunpack.c.l.b16 %v252
  %v1616 = vunpack.c.h.b16 %v252
  %v1617 = vunpack.c.l.b16 %v253
  %v1618 = vunpack.c.h.b16 %v253
  %v1619 = vunpack.c.l.b16 %v254
  %v1620 = vunpack.c.h.b16 %v254
  %v1621 = vunpack.c.l.b16 %v255
  %v1622 = vunpack.c.h.b16 %v255
  %v1623 = vunpack.c.l.b16 %v256
  %v1624 = vunpack.c.h.b16 %v256
  %v1625 = vunpack.c.l.b16 %v257
  %v1626 = vunpack.c.h.b16 %v257
  %v1627 = vunpack.c.l.b16 %v258
  %v1628 = vunpack.c.h.b16 %v258
  %v1629 = vunpack.c.l.b16 %v259
  %v1630 = vunpack.c.h.b16 %v259
  %v1631 = vunpack.c.l.b16 %v260
  %v1632 = vunpack.c.h.b16 %v260
  %v1633 = vunpack.c.l.b16 %v261
  %v1634 = vunpack.c.h.b16 %v261
  %v1635 = vunpack.c.l.b16 %v262
  %v1636 = vunpack.c.h.b16 %v262
  %v1637 = vunpack.c.l.b16 %v263
  %v1638 = vunpack.c.h.b16 %v263
  %v1639 = vunpack.c.l.b16 %v264
  %v1640 = vunpack.c.h.b16 %v264
  %v1641 = vunpack.c.l.b16 %v265
  %v1642 = vunpack.c.h.b16 %v265
  %v1643 = vunpack.c.l.b16 %v266
  %v1644 = vunpack.c.h.b16 %v266
  %v1645 = vunpack.c.l.b16 %v267
  %v1646 = vunpack.c.h.b16 %v267
  %v1647 = vunpack.c.l.b16 %v268
  %v1648 = vunpack.c.h.b16 %v268
  %v1649 = vunpack.c.l.b16 %v269
  %v1650 = vunpack.c.h.b16 %v269
  %v1651 = vunpack.c.l.b16 %v270
  %v1652 = vunpack.c.h.b16 %v270
  %v1653 = vunpack.c.l.b16 %v271
  %v1654 = vunpack.c.h.b16 %v271
  %v1655 = vunpack.c.l.b16 %v272
  %v1656 = vunpack.c.h.b16 %v272
  %v1657 = vunpack.c.l.b16 %v273
  %v1658 = vunpack.c.h.b16 %v273
  %v1659 = vunpack.c.l.b16 %v274
  %v1660 = vunpack.c.h.b16 %v274
  %v1661 = vunpack.c.l.b16 %v275
  %v1662 = vunpack.c.h.b16 %v275
  %v1663 = vunpack.c.l.b16 %v276
  %v1664 = vunpack.c.h.b16 %v276
  %v1665 = vunpack.c.l.b16 %v277
  %v1666 = vunpack.c.h.b16 %v277
  %v1667 = vunpack.c.l.b16 %v278
  %v1668 = vunpack.c.h.b16 %v278
  %v1669 = vunpack.c.l.b16 %v279
  %v1670 = vunpack.c.h.b16 %v279
  %v1671 = vunpack.c.l.b16 %v280
  %v1672 = vunpack.c.h.b16 %v280
  %v1673 = vunpack.c.l.b16 %v281
  %v1674 = vunpack.c.h.b16 %v281
  %v1675 = vunpack.c.l.b16 %v282
  %v1676 = vunpack.c.h.b16 %v282
  %v1677 = vunpack.c.l.b16 %v283
  %v1678 = vunpack.c.h.b16 %v283
  %v1679 = vunpack.c.l.b16 %v284
  %v1680 = vunpack.c.h.b16 %v284
  %v1681 = vunpack.c.l.b16 %v285
  %v1682 = vunpack.c.h.b16 %v285
  %v1683 = vunpack.c.l.b16 %v286
  %v1684 = vunpack.c.h.b16 %v286
  %v1685 = vunpack.c.l.b16 %v287
  %v1686 = vunpack.c.h.b16 %v287
  %v1687 = vunpack.c.l.b16 %v288
  %v1688 = vunpack.c.h.b16 %v288
  %v1689 = vunpack.c.l.b16 %v289
  %v1690 = vunpack.c.h.b16 %v289
  %v1691 = vunpack.c.l.b16 %v290
  %v1692 = vunpack.c.h.b16 %v290
  %v1693 = vunpack.c.l.b16 %v291
  %v1694 = vunpack.c.h.b16 %v291
  %v1695 = vunpack.c.l.b16 %v292
  %v1696 = vunpack.c.h.b16 %v292
  %v1697 = vunpack.c.l.b16 %v293
  %v1698 = vunpack.c.h.b16 %v293
  %v1699 = vunpack.c.l.b16 %v294
  %v1700 = vunpack.c.h.b16 %v294
  %v1701 = vunpack.c.l.b16 %v295
  %v1702 = vunpack.c.h.b16 %v295
  %v1703 = vunpack.c.l.b16 %v296
  %v1704 = vunpack.c.h.b16 %v296
  %v1705 = vunpack.c.l.b16 %v297
  %v1706 = vunpack.c.h.b16 %v297
  %v1707 = vunpack.c.l.b16 %v298
  %v1708 = vunpack.c.h.b16 %v298
  %v1709 = vunpack.c.l.b16 %v299
  %v1710 = vunpack.c.h.b16 %v299
  %v1711 = vunpack.c.l.b16 %v300
  %v1712 = vunpack.c.h.b16 %v300
  %v1713 = vunpack.c.l.b16 %v301
  %v1714 = vunpack.c.h.b16 %v301
  %v1715 = vunpack.c.l.b16 %v302
  %v1716 = vunpack.c.h.b16 %v302
  %v1717 = vunpack.c.l.b16 %v303
  %v1718 = vunpack.c.h.b16 %v303
  %v1719 = vunpack.c.l.b16 %v304
  %v1720 = vunpack.c.h.b16 %v304
  %v1721 = vunpack.c.l.b16 %v305
  %v1722 = vunpack.c.h.b16 %v305
  %v1723 = vunpack.c.l.b16 %v306
  %v1724 = vunpack.c.h.b16 %v306
  %v1725 = vunpack.c.l.b16 %v307
  %v1726 = vunpack.c.h.b16 %v307
  %v1727 = vunpack.c.l.b16 %v308
  %v1728 = vunpack.c.h.b16 %v308
  %v1729 = vunpack.c.l.b16 %v309
  %v1730 = vunpack.c.h.b16 %v309
  %v1731 = vunpack.c.l.b16 %v310
  %v1732 = vunpack.c.h.b16 %v310
  %v1733 = vunpack.c.l.b16 %v311
  %v1734 = vunpack.c.h.b16 %v311
  %v1735 = vunpack.c.l.b16 %v312
  %v1736 = vunpack.c.h.b16 %v312
  %v1737 = vunpack.c.l.b16 %v313
  %v1738 = vunpack.c.h.b16 %v313
  %v1739 = vunpack.c.l.b16 %v314
  %v1740 = vunpack.c.h.b16 %v314
  %v1741 = vunpack.c.l.b16 %v315
  %v1742 = vunpack.c.h.b16 %v315
  %v1743 = vunpack.c.l.b16 %v316
  %v1744 = vunpack.c.h.b16 %v316
  %v1745 = vunpack.c.l.b16 %v317
  %v1746 = vunpack.c.h.b16 %v317
  %v1747 = vunpack.c.l.b16 %v318
  %v1748 = vunpack.c.h.b16 %v318
  %v1749 = vunpack.c.l.b16 %v319
  %v1750 = vunpack.c.h.b16 %v319
  %v1751 = vunpack.c.l.b16 %v320
  %v1752 = vunpack.c.h.b16 %v320
  %v1753 = vunpack.c.l.b16 %v321
  %v1754 = vunpack.c.h.b16 %v321
  %v1755 = vunpack.c.l.b16 %v322
  %v1756 = vunpack.c.h.b16 %v322
  %v1757 = vunpack.c.l.b16 %v323
  %v1758 = vunpack.c.h.b16 %v323
  %v1759 = vunpack.c.l.b16 %v324
  %v1760 = vunpack.c.h.b16 %v324
  %v1761 = vunpack.c.l.b16 %v325
  %v1762 = vunpack.c.h.b16 %v325
  %v1763 = vunpack.c.l.b16 %v326
  %v1764 = vunpack.c.h.b16 %v326
  %v1765 = vunpack.c.l.b16 %v327
  %v1766 = vunpack.c.h.b16 %v327
  %v1767 = vunpack.c.l.b16 %v328
  %v1768 = vunpack.c.h.b16 %v328
  %v1769 = vunpack.c.l.b16 %v329
  %v1770 = vunpack.c.h.b16 %v329
  %v1771 = vunpack.c.l.b16 %v330
  %v1772 = vunpack.c.h.b16 %v330
  %v1773 = vunpack.c.l.b16 %v331
  %v1774 = vunpack.c.h.b16 %v331
  %v1775 = vunpack.c.l.b16 %v332
  %v1776 = vunpack.c.h.b16 %v332
  %v1777 = vunpack.c.l.b16 %v333
  %v1778 = vunpack.c.h.b16 %v333
  %v1779 = vunpack.c.l.b16 %v334
  %v1780 = vunpack.c.h.b16 %v334
  %v1781 = vunpack.c.l.b16 %v335
  %v1782 = vunpack.c.h.b16 %v335
  %v1783 = vunpack.c.l.b16 %v336
  %v1784 = vunpack.c.h.b16 %v336
  %v1785 = vunpack.c.l.b16 %v337
  %v1786 = vunpack.c.h.b16 %v337
  %v1787 = vunpack.c.l.b16 %v338
  %v1788 = vunpack.c.h.b16 %v338
  %v1789 = vunpack.c.l.b16 %v339
  %v1790 = vunpack.c.h.b16 %v339
  %v1791 = vunpack.c.l.b16 %v340
  %v1792 = vunpack.c.h.b16 %v340
  %v1793 = vunpack.c.l.b16 %v341
  %v1794 = vunpack.c.h.b16 %v341
  %v1795 = vunpack.c.l.b16 %v342
  %v1796 = vunpack.c.h.b16 %v342
  %v1797 = vunpack.c.l.b16 %v343
  %v1798 = vunpack.c.h.b16 %v343
  %v1799 = vunpack.c.l.b16 %v344
  %v1800 = vunpack.c.h.b16 %v344
  %v1801 = vunpack.c.l.b16 %v345
  %v1802 = vunpack.c.h.b16 %v345
  %v1803 = vunpack.c.l.b16 %v346
  %v1804 = vunpack.c.h.b16 %v346
  %v1805 = vunpack.c.l.b16 %v347
  %v1806 = vunpack.c.h.b16 %v347
  %v1807 = vunpack.c.l.b16 %v348
  %v1808 = vunpack.c.h.b16 %v348
  %v1809 = vunpack.c.l.b16 %v349
  %v1810 = vunpack.c.h.b16 %v349
  %v1811 = vunpack.c.l.b16 %v350
  %v1812 = vunpack.c.h.b16 %v350
  %v1813 = vunpack.c.l.b16 %v351
  %v1814 = vunpack.c.h.b16 %v351
  %v1815 = vunpack.c.l.b16 %v352
  %v1816 = vunpack.c.h.b16 %v352
  %v1817 = vunpack.c.l.b16 %v353
  %v1818 = vunpack.c.h.b16 %v353
  %v1819 = vunpack.c.l.b16 %v354
  %v1820 = vunpack.c.h.b16 %v354
  %v1821 = vunpack.c.l.b16 %v355
  %v1822 = vunpack.c.h.b16 %v355
  %v1823 = vunpack.c.l.b16 %v356
  %v1824 = vunpack.c.h.b16 %v356
  %v1825 = vunpack.c.l.b16 %v357
  %v1826 = vunpack.c.h.b16 %v357
  %v1827 = vunpack.c.l.b16 %v358
  %v1828 = vunpack.c.h.b16 %v358
  %v1829 = vunpack.c.l.b16 %v359
  %v1830 = vunpack.c.h.b16 %v359
  %v1831 = vunpack.c.l.b16 %v360
  %v1832 = vunpack.c.h.b16 %v360
  %v1833 = vunpack.c.l.b16 %v361
  %v1834 = vunpack.c.h.b16 %v361
  %v1835 = vunpack.c.l.b16 %v362
  %v1836 = vunpack.c.h.b16 %v362
  %v1837 = vunpack.c.l.b16 %v363
  %v1838 = vunpack.c.h.b16 %v363
  %v1839 = vunpack.c.l.b16 %v364
  %v1840 = vunpack.c.h.b16 %v364
  %v1841 = vunpack.c.l.b16 %v365
  %v1842 = vunpack.c.h.b16 %v365
  %v1843 = vunpack.c.l.b16 %v366
  %v1844 = vunpack.c.h.b16 %v366
  %v1845 = vunpack.c.l.b16 %v367
  %v1846 = vunpack.c.h.b16 %v367
  %v1847 = vunpack.c.l.b16 %v368
  %v1848 = vunpack.c.h.b16 %v368
  %v1849 = vunpack.c.l.b16 %v369
  %v1850 = vunpack.c.h.b16 %v369
  %v1851 = vunpack.c.l.b16 %v370
  %v1852 = vunpack.c.h.b16 %v370
  %v1853 = vunpack.c.l.b16 %v371
  %v1854 = vunpack.c.h.b16 %v371
  %v1855 = vunpack.c.l.b16 %v372
  %v1856 = vunpack.c.h.b16 %v372
  %v1857 = vunpack.c.l.b16 %v373
  %v1858 = vunpack.c.h.b16 %v373
  %v1859 = vunpack.c.l.b16 %v374
  %v1860 = vunpack.c.h.b16 %v374
  %v1861 = vunpack.c.l.b16 %v375
  %v1862 = vunpack.c.h.b16 %v375
  %v1863 = vunpack.c.l.b16 %v376
  %v1864 = vunpack.c.h.b16 %v376
  %v1865 = vunpack.c.l.b16 %v377
  %v1866 = vunpack.c.h.b16 %v377
  %v1867 = vunpack.c.l.b16 %v378
  %v1868 = vunpack.c.h.b16 %v378
  %v1869 = vunpack.c.l.b16 %v379
  %v1870 = vunpack.c.h.b16 %v379
  %v1871 = vunpack.c.l.b16 %v380
  %v1872 = vunpack.c.h.b16 %v380
  %v1873 = vunpack.c.l.b16 %v381
  %v1874 = vunpack.c.h.b16 %v381
  %v1875 = vunpack.c.l.b16 %v382
  %v1876 = vunpack.c.h.b16 %v382
  %v1877 = vunpack.c.l.b16 %v383
  %v1878 = vunpack.c.h.b16 %v383
  %v1879 = vunpack.c.l.b16 %v384
  %v1880 = vunpack.c.h.b16 %v384
  %v1881 = vunpack.c.l.b16 %v385
  %v1882 = vunpack.c.h.b16 %v385
  %v1883 = vunpack.c.l.b16 %v386
  %v1884 = vunpack.c.h.b16 %v386
  %v1885 = vunpack.c.l.b16 %v387
  %v1886 = vunpack.c.h.b16 %v387
  %v1887 = vunpack.c.l.b16 %v388
  %v1888 = vunpack.c.h.b16 %v388
  %v1889 = vunpack.c.l.b16 %v389
  %v1890 = vunpack.c.h.b16 %v389
  %v1891 = vunpack.c.l.b16 %v390
  %v1892 = vunpack.c.h.b16 %v390
  %v1893 = vunpack.c.l.b16 %v391
  %v1894 = vunpack.c.h.b16 %v391
  %v1895 = vunpack.c.l.b16 %v392
  %v1896 = vunpack.c.h.b16 %v392
  %v1897 = vunpack.c.l.b16 %v393
  %v1898 = vunpack.c.h.b16 %v393
  %v1899 = vunpack.c.l.b16 %v394
  %v1900 = vunpack.c.h.b16 %v394
  %v1901 = vunpack.c.l.b16 %v395
  %v1902 = vunpack.c.h.b16 %v395
  %v1903 = vunpack.c.l.b16 %v396
  %v1904 = vunpack.c.h.b16 %v396
  %v1905 = vunpack.c.l.b16 %v397
  %v1906 = vunpack.c.h.b16 %v397
  %v1907 = vunpack.c.l.b16 %v398
  %v1908 = vunpack.c.h.b16 %v398
  %v1909 = vunpack.c.l.b16 %v399
  %v1910 = vunpack.c.h.b16 %v399
  %v1911 = vunpack.c.l.b16 %v400
  %v1912 = vunpack.c.h.b16 %v400
  %v1913 = vunpack.c.l.b16 %v401
  %v1914 = vunpack.c.h.b16 %v401
  %v1915 = vunpack.c.l.b16 %v402
  %v1916 = vunpack.c.h.b16 %v402
  %v1917 = vunpack.c.l.b16 %v403
  %v1918 = vunpack.c.h.b16 %v403
  %v1919 = vunpack.c.l.b16 %v404
  %v1920 = vunpack.c.h.b16 %v404
  %v1921 = vunpack.c.l.b16 %v405
  %v1922 = vunpack.c.h.b16 %v405
  %v1923 = vunpack.c.l.b16 %v406
  %v1924 = vunpack.c.h.b16 %v406
  %v1925 = vunpack.c.l.b16 %v407
  %v1926 = vunpack.c.h.b16 %v407
  %v1927 = vunpack.c.l.b16 %v408
  %v1928 = vunpack.c.h.b16 %v408
  %v1929 = vunpack.c.l.b16 %v409
  %v1930 = vunpack.c.h.b16 %v409
  %v1931 = vunpack.c.l.b16 %v410
  %v1932 = vunpack.c.h.b16 %v410
  %v1933 = vunpack.c.l.b16 %v411
  %v1934 = vunpack.c.h.b16 %v411
  %v1935 = vunpack.c.l.b16 %v412
  %v1936 = vunpack.c.h.b16 %v412
  %v1937 = vunpack.c.l.b16 %v413
  %v1938 = vunpack.c.h.b16 %v413
  %v1939 = vunpack.c.l.b16 %v414
  %v1940 = vunpack.c.h.b16 %v414
  %v1941 = vunpack.c.l.b16 %v415
  %v1942 = vunpack.c.h.b16 %v415
  %v1943 = vunpack.c.l.b16 %v416
  %v1944 = vunpack.c.h.b16 %v416
  %v1945 = vunpack.c.l.b16 %v417
  %v1946 = vunpack.c.h.b16 %v417
  %v1947 = vunpack.c.l.b16 %v418
  %v1948 = vunpack.c.h.b16 %v418
  %v1949 = vunpack.c.l.b16 %v419
  %v1950 = vunpack.c.h.b16 %v419
  %v1951 = vunpack.c.l.b16 %v420
  %v1952 = vunpack.c.h.b16 %v420
  %v1953 = vunpack.c.l.b16 %v421
  %v1954 = vunpack.c.h.b16 %v421
  %v1955 = vunpack.c.l.b16 %v422
  %v1956 = vunpack.c.h.b16 %v422
  %v1957 = vunpack.c.l.b16 %v423
  %v1958 = vunpack.c.h.b16 %v423
  %v1959 = vunpack.c.l.b16 %v424
  %v1960 = vunpack.c.h.b16 %v424
  %v1961 = vunpack.c.l.b16 %v425
  %v1962 = vunpack.c.h.b16 %v425
  %v1963 = vunpack.c.l.b16 %v426
  %v1964 = vunpack.c.h.b16 %v426
  %v1965 = vunpack.c.l.b16 %v427
  %v1966 = vunpack.c.h.b16 %v427
  %v1967 = vunpack.c.l.b16 %v428
  %v1968 = vunpack.c.h.b16 %v428
  %v1969 = vunpack.c.l.b16 %v429
  %v1970 = vunpack.c.h.b16 %v429
  %v1971 = vunpack.c.l.b16 %v430
  %v1972 = vunpack.c.h.b16 %v430
  %v1973 = vunpack.c.l.b16 %v431
  %v1974 = vunpack.c.h.b16 %v431
  %v1975 = vunpack.c.l.b16 %v432
  %v1976 = vunpack.c.h.b16 %v432
  %v1977 = vunpack.c.l.b16 %v433
  %v1978 = vunpack.c.h.b16 %v433
  %v1979 = vunpack.c.l.b16 %v434
  %v1980 = vunpack.c.h.b16 %v434
  %v1981 = vunpack.c.l.b16 %v435
  %v1982 = vunpack.c.h.b16 %v435
  %v1983 = vunpack.c.l.b16 %v436
  %v1984 = vunpack.c.h.b16 %v436
  %v1985 = vunpack.c.l.b16 %v437
  %v1986 = vunpack.c.h.b16 %v437
  %v1987 = vunpack.c.l.b16 %v438
  %v1988 = vunpack.c.h.b16 %v438
  %v1989 = vunpack.c.l.b16 %v439
  %v1990 = vunpack.c.h.b16 %v439
  %v1991 = vunpack.c.l.b16 %v440
  %v1992 = vunpack.c.h.b16 %v440
  %v1993 = vunpack.c.l.b16 %v441
  %v1994 = vunpack.c.h.b16 %v441
  %v1995 = vunpack.c.l.b16 %v442
  %v1996 = vunpack.c.h.b16 %v442
  %v1997 = vunpack.c.l.b16 %v443
  %v1998 = vunpack.c.h.b16 %v443
  %v1999 = vunpack.c.l.b16 %v444
  %v2000 = vunpack.c.h.b16 %v444
  %v2001 = vunpack.c.l.b16 %v445
  %v2002 = vunpack.c.h.b16 %v445
  %v2003 = vunpack.c.l.b16 %v446
  %v2004 = vunpack.c.h.b16 %v446
  %v2005 = vunpack.c.l.b16 %v447
  %v2006 = vunpack.c.h.b16 %v447
  %v2007 = vunpack.c.l.b16 %v448
  %v2008 = vunpack.c.h.b16 %v448
  %v2009 = vunpack.c.l.b16 %v449
  %v2010 = vunpack.c.h.b16 %v449
  %v2011 = vunpack.c.l.b16 %v450
  %v2012 = vunpack.c.h.b16 %v450
  %v2013 = vunpack.c.l.b16 %v451
  %v2014 = vunpack.c.h.b16 %v451
  %v2015 = vunpack.c.l.b16 %v452
  %v2016 = vunpack.c.h.b16 %v452
  %v2017 = vunpack.c.l.b16 %v453
  %v2018 = vunpack.c.h.b16 %v453
  %v2019 = vunpack.c.l.b16 %v454
  %v2020 = vunpack.c.h.b16 %v454
  %v2021 = vunpack.c.l.b16 %v455
  %v2022 = vunpack.c.h.b16 %v455
  %v2023 = vunpack.c.l.b16 %v456
  %v2024 = vunpack.c.h.b16 %v456
  %v2025 = vunpack.c.l.b16 %v457
  %v2026 = vunpack.c.h.b16 %v457
  %v2027 = vunpack.c.l.b16 %v458
  %v2028 = vunpack.c.h.b16 %v458
  %v2029 = vunpack.c.l.b16 %v459
  %v2030 = vunpack.c.h.b16 %v459
  %v2031 = vunpack.c.l.b16 %v460
  %v2032 = vunpack.c.h.b16 %v460
  %v2033 = vunpack.c.l.b16 %v461
  %v2034 = vunpack.c.h.b16 %v461
  %v2035 = vunpack.c.l.b16 %v462
  %v2036 = vunpack.c.h.b16 %v462
  %v2037 = vunpack.c.l.b16 %v463
  %v2038 = vunpack.c.h.b16 %v463
  %v2039 = vunpack.c.l.b16 %v464
  %v2040 = vunpack.c.h.b16 %v464
  %v2041 = vunpack.c.l.b16 %v465
  %v2042 = vunpack.c.h.b16 %v465
  %v2043 = vunpack.c.l.b16 %v466
  %v2044 = vunpack.c.h.b16 %v466
  %v2045 = vunpack.c.l.b16 %v467
  %v2046 = vunpack.c.h.b16 %v467
  %v2047 = vunpack.c.l.b16 %v468
  %v2048 = vunpack.c.h.b16 %v468
  %v2049 = vunpack.c.l.b16 %v469
  %v2050 = vunpack.c.h.b16 %v469
  %v2051 = vunpack.c.l.b16 %v470
  %v2052 = vunpack.c.h.b16 %v470
  %v2053 = vunpack.c.l.b16 %v471
  %v2054 = vunpack.c.h.b16 %v471
  %v2055 = vunpack.c.l.b16 %v472
  %v2056 = vunpack.c.h.b16 %v472
  %v2057 = vunpack.c.l.b16 %v473
  %v2058 = vunpack.c.h.b16 %v473
  %v2059 = vunpack.c.l.b16 %v474
  %v2060 = vunpack.c.h.b16 %v474
  %v2061 = vunpack.c.l.b16 %v475
  %v2062 = vunpack.c.h.b16 %v475
  %v2063 = vunpack.c.l.b16 %v476
  %v2064 = vunpack.c.h.b16 %v476
  %v2065 = vunpack.c.l.b16 %v477
  %v2066 = vunpack.c.h.b16 %v477
  %v2067 = vunpack.c.l.b16 %v478
  %v2068 = vunpack.c.h.b16 %v478
  %v2069 = vunpack.c.l.b16 %v479
  %v2070 = vunpack.c.h.b16 %v479
  %v2071 = vunpack.c.l.b16 %v480
  %v2072 = vunpack.c.h.b16 %v480
  %v2073 = vunpack.c.l.b16 %v481
  %v2074 = vunpack.c.h.b16 %v481
  %v2075 = vunpack.c.l.b16 %v482
  %v2076 = vunpack.c.h.b16 %v482
  %v2077 = vunpack.c.l.b16 %v483
  %v2078 = vunpack.c.h.b16 %v483
  %v2079 = vunpack.c.l.b16 %v484
  %v2080 = vunpack.c.h.b16 %v484
  %v2081 = vunpack.c.l.b16 %v485
  %v2082 = vunpack.c.h.b16 %v485
  %v2083 = vunpack.c.l.b16 %v486
  %v2084 = vunpack.c.h.b16 %v486
  %v2085 = vunpack.c.l.b16 %v487
  %v2086 = vunpack.c.h.b16 %v487
  %v2087 = vunpack.c.l.b16 %v488
  %v2088 = vunpack.c.h.b16 %v488
  %v2089 = vunpack.c.l.b16 %v489
  %v2090 = vunpack.c.h.b16 %v489
  %v2091 = vunpack.c.l.b16 %v490
  %v2092 = vunpack.c.h.b16 %v490
  %v2093 = vunpack.c.l.b16 %v491
  %v2094 = vunpack.c.h.b16 %v491
  %v2095 = vunpack.c.l.b16 %v492
  %v2096 = vunpack.c.h.b16 %v492
  %v2097 = vunpack.c.l.b16 %v493
  %v2098 = vunpack.c.h.b16 %v493
  %v2099 = vunpack.c.l.b16 %v494
  %v2100 = vunpack.c.h.b16 %v494
  %v2101 = vunpack.c.l.b16 %v495
  %v2102 = vunpack.c.h.b16 %v495
  %v2103 = vunpack.c.l.b16 %v496
  %v2104 = vunpack.c.h.b16 %v496
  %v2105 = vunpack.c.l.b16 %v497
  %v2106 = vunpack.c.h.b16 %v497
  %v2107 = vunpack.c.l.b16 %v498
  %v2108 = vunpack.c.h.b16 %v498
  %v2109 = vunpack.c.l.b16 %v499
  %v2110 = vunpack.c.h.b16 %v499
  %v2111 = vunpack.c.l.b16 %v500
  %v2112 = vunpack.c.h.b16 %v500
  %v2113 = vunpack.c.l.b16 %v501
  %v2114 = vunpack.c.h.b16 %v501
  %v2115 = vunpack.c.l.b16 %v502
  %v2116 = vunpack.c.h.b16 %v502
  %v2117 = vunpack.c.l.b16 %v503
  %v2118 = vunpack.c.h.b16 %v503
  %v2119 = vunpack.c.l.b16 %v504
  %v2120 = vunpack.c.h.b16 %v504
  %v2121 = vunpack.c.l.b16 %v505
  %v2122 = vunpack.c.h.b16 %v505
  %v2123 = vunpack.c.l.b16 %v506
  %v2124 = vunpack.c.h.b16 %v506
  %v2125 = vunpack.c.l.b16 %v507
  %v2126 = vunpack.c.h.b16 %v507
  %v2127 = vunpack.c.l.b16 %v508
  %v2128 = vunpack.c.h.b16 %v508
  %v2129 = vunpack.c.l.b16 %v509
  %v2130 = vunpack.c.h.b16 %v509
  %v2131 = vunpack.c.l.b16 %v510
  %v2132 = vunpack.c.h.b16 %v510
  %v2133 = vunpack.c.l.b16 %v511
  %v2134 = vunpack.c.h.b16 %v511
  %v2135 = vunpack.c.l.b16 %v512
  %v2136 = vunpack.c.h.b16 %v512
  %v2137 = vunpack.c.l.b16 %v513
  %v2138 = vunpack.c.h.b16 %v513
  %v2139 = vunpack.c.l.b16 %v514
  %v2140 = vunpack.c.h.b16 %v514
  %v2141 = vunpack.c.l.b16 %v515
  %v2142 = vunpack.c.h.b16 %v515
  %v2143 = vunpack.c.l.b16 %v516
  %v2144 = vunpack.c.h.b16 %v516
  %v2145 = vunpack.c.l.b16 %v517
  %v2146 = vunpack.c.h.b16 %v517
  %v2147 = vunpack.c.l.b16 %v518
  %v2148 = vunpack.c.h.b16 %v518
  %v2149 = vunpack.c.l.b16 %v519
  %v2150 = vunpack.c.h.b16 %v519
  %v2151 = vunpack.c.l.b16 %v520
  %v2152 = vunpack.c.h.b16 %v520
  %v2153 = vunpack.c.l.b16 %v521
  %v2154 = vunpack.c.h.b16 %v521
  %v2155 = vunpack.c.l.b16 %v522
  %v2156 = vunpack.c.h.b16 %v522
  %v2157 = vunpack.c.l.b16 %v523
  %v2158 = vunpack.c.h.b16 %v523
  %v2159 = vunpack.c.l.b16 %v524
  %v2160 = vunpack.c.h.b16 %v524
  %v2161 = vunpack.c.l.b16 %v525
  %v2162 = vunpack.c.h.b16 %v525
  %v2163 = vunpack.c.l.b16 %v526
  %v2164 = vunpack.c.h.b16 %v526
  %v2165 = vunpack.c.l.b16 %v527
  %v2166 = vunpack.c.h.b16 %v527
  %v2167 = vunpack.c.l.b16 %v528
  %v2168 = vunpack.c.h.b16 %v528
  %v2169 = vunpack.c.l.b16 %v529
  %v2170 = vunpack.c.h.b16 %v529
  %v2171 = vunpack.c.l.b16 %v530
  %v2172 = vunpack.c.h.b16 %v530
  %v2173 = vunpack.c.l.b16 %v531
  %v2174 = vunpack.c.h.b16 %v531
  %v2175 = vunpack.c.l.b16 %v532
  %v2176 = vunpack.c.h.b16 %v532
  %v2177 = vunpack.c.l.b16 %v533
  %v2178 = vunpack.c.h.b16 %v533
  %v2179 = vunpack.c.l.b16 %v534
  %v2180 = vunpack.c.h.b16 %v534
  %v2181 = vunpack.c.l.b16 %v535
  %v2182 = vunpack.c.h.b16 %v535
  %v2183 = vunpack.c.l.b16 %v536
  %v2184 = vunpack.c.h.b16 %v536
  %v2185 = vunpack.c.l.b16 %v537
  %v2186 = vunpack.c.h.b16 %v537
  %v2187 = vunpack.c.l.b16 %v538
  %v2188 = vunpack.c.h.b16 %v538
  %v2189 = vunpack.c.l.b16 %v539
  %v2190 = vunpack.c.h.b16 %v539
  %v2191 = vunpack.c.l.b16 %v540
  %v2192 = vunpack.c.h.b16 %v540
  %v2193 = vunpack.c.l.b16 %v541
  %v2194 = vunpack.c.h.b16 %v541
  %v2195 = vunpack.c.l.b16 %v542
  %v2196 = vunpack.c.h.b16 %v542
  %v2197 = vunpack.c.l.b16 %v543
  %v2198 = vunpack.c.h.b16 %v543
  %v2199 = vunpack.c.l.b16 %v544
  %v2200 = vunpack.c.h.b16 %v544
  %v2201 = vunpack.c.l.b16 %v545
  %v2202 = vunpack.c.h.b16 %v545
  %v2203 = vunpack.c.l.b16 %v546
  %v2204 = vunpack.c.h.b16 %v546
  %v2205 = vunpack.c.l.b16 %v547
  %v2206 = vunpack.c.h.b16 %v547
  %v2207 = vunpack.c.l.b16 %v548
  %v2208 = vunpack.c.h.b16 %v548
  %v2209 = vpack.c.b16 %v1187, %v1185
  %v2210 = vpack.c.b16 %v1188, %v1186
  %v2211 = vpack.c.b16 %v1191, %v1189
  %v2212 = vpack.c.b16 %v1192, %v1190
  %v2213 = vpack.c.b16 %v1195, %v1193
  %v2214 = vpack.c.b16 %v1196, %v1194
  %v2215 = vpack.c.b16 %v1199, %v1197
  %v2216 = vpack.c.b16 %v1200, %v1198
  %v2217 = vpack.c.b16 %v1203, %v1201
  %v2218 = vpack.c.b16 %v1204, %v1202
  %v2219 = vpack.c.b16 %v1207, %v1205
  %v2220 = vpack.c.b16 %v1208, %v1206
  %v2221 = vpack.c.b16 %v1211, %v1209
  %v2222 = vpack.c.b16 %v1212, %v1210
  %v2223 = vpack.c.b16 %v1215, %v1213
  %v2224 = vpack.c.b16 %v1216, %v1214
  %v2225 = vpack.c.b16 %v1219, %v1217
  %v2226 = vpack.c.b16 %v1220, %v1218
  %v2227 = vpack.c.b16 %v1223, %v1221
  %v2228 = vpack.c.b16 %v1224, %v1222
  %v2229 = vpack.c.b16 %v1227, %v1225
  %v2230 = vpack.c.b16 %v1228, %v1226
  %v2231 = vpack.c.b16 %v1231, %v1229
  %v2232 = vpack.c.b16 %v1232, %v1230
  %v2233 = vpack.c.b16 %v1235, %v1233
  %v2234 = vpack.c.b16 %v1236, %v1234
  %v2235 = vpack.c.b16 %v1239, %v1237
  %v2236 = vpack.c.b16 %v1240, %v1238
  %v2237 = vpack.c.b16 %v1243, %v1241
  %v2238 = vpack.c.b16 %v1244, %v1242
  %v2239 = vpack.c.b16 %v1247, %v1245
  %v2240 = vpack.c.b16 %v1248, %v1246
  %v2241 = vpack.c.b16 %v1251, %v1249
  %v2242 = vpack.c.b16 %v1252, %v1250
  %v2243 = vpack.c.b16 %v1255, %v1253
  %v2244 = vpack.c.b16 %v1256, %v1254
  %v2245 = vpack.c.b16 %v1259, %v1257
  %v2246 = vpack.c.b16 %v1260, %v1258
  %v2247 = vpack.c.b16 %v1263, %v1261
  %v2248 = vpack.c.b16 %v1264, %v1262
  %v2249 = vpack.c.b16 %v1267, %v1265
  %v2250 = vpack.c.b16 %v1268, %v1266
  %v2251 = vpack.c.b16 %v1271, %v1269
  %v2252 = vpack.c.b16 %v1272, %v1270
  %v2253 = vpack.c.b16 %v1275, %v1273
  %v2254 = vpack.c.b16 %v1276, %v1274
  %v2255 = vpack.c.b16 %v1279, %v1277
  %v2256 = vpack.c.b16 %v1280, %v1278
  %v2257 = vpack.c.b16 %v1283, %v1281
  %v2258 = vpack.c.b16 %v1284, %v1282
  %v2259 = vpack.c.b16 %v1287, %v1285
  %v2260 = vpack.c.b16 %v1288, %v1286
  %v2261 = vpack.c.b16 %v1291, %v1289
  %v2262 = vpack.c.b16 %v1292, %v1290
  %v2263 = vpack.c.b16 %v1295, %v1293
  %v2264 = vpack.c.b16 %v1296, %v1294
  %v2265 = vpack.c.b16 %v1299, %v1297
  %v2266 = vpack.c.b16 %v1300, %v1298
  %v2267 = vpack.c.b16 %v1303, %v1301
  %v2268 = vpack.c.b16 %v1304, %v1302
  %v2269 = vpack.c.b16 %v1307, %v1305
  %v2270 = vpack.c.b16 %v1308, %v1306
  %v2271 = vpack.c.b16 %v1311, %v1309
  %v2272 = vpack.c.b16 %v1312, %v1310
  %v2273 = vpack.c.b16 %v1315, %v1313
  %v2274 = vpack.c.b16 %v1316, %v1314
  %v2275 = vpack.c.b16 %v1319, %v1317
  %v2276 = vpack.c.b16 %v1320, %v1318
  %v2277 = vpack.c.b16 %v1323, %v1321
  %v2278 = vpack.c.b16 %v1324, %v1322
  %v2279 = vpack.c.b16 %v1327, %v1325
  %v2280 = vpack.c.b16 %v1328, %v1326
  %v2281 = vpack.c.b16 %v1331, %v1329
  %v2282 = vpack.c.b16 %v1332, %v1330
  %v2283 = vpack.c.b16 %v1335, %v1333
  %v2284 = vpack.c.b16 %v1336, %v1334
  %v2285 = vpack.c.b16 %v1339, %v1337
  %v2286 = vpack.c.b16 %v1340, %v1338
  %v2287 = vpack.c.b16 %v1343, %v1341
  %v2288 = vpack.c.b16 %v1344, %v1342
  %v2289 = vpack.c.b16 %v1347, %v1345
  %v2290 = vpack.c.b16 %v1348, %v1346
  %v2291 = vpack.c.b16 %v1351, %v1349
  %v2292 = vpack.c.b16 %v1352, %v1350
  %v2293 = vpack.c.b16 %v1355, %v1353
  %v2294 = vpack.c.b16 %v1356, %v1354
  %v2295 = vpack.c.b16 %v1359, %v1357
  %v2296 = vpack.c.b16 %v1360, %v1358
  %v2297 = vpack.c.b16 %v1363, %v1361
  %v2298 = vpack.c.b16 %v1364, %v1362
  %v2299 = vpack.c.b16 %v1367, %v1365
  %v2300 = vpack.c.b16 %v1368, %v1366
  %v2301 = vpack.c.b16 %v1371, %v1369
  %v2302 = vpack.c.b16 %v1372, %v1370
  %v2303 = vpack.c.b16 %v1375, %v1373
  %v2304 = vpack.c.b16 %v1376, %v1374
  %v2305 = vpack.c.b16 %v1379, %v1377
  %v2306 = vpack.c.b16 %v1380, %v1378
  %v2307 = vpack.c.b16 %v1383, %v1381
  %v2308 = vpack.c.b16 %v1384, %v1382
  %v2309 = vpack.c.b16 %v1387, %v1385
  %v2310 = vpack.c.b16 %v1388, %v1386
  %v2311 = vpack.c.b16 %v1391, %v1389
  %v2312 = vpack.c.b16 %v1392, %v1390
  %v2313 = vpack.c.b16 %v1395, %v1393
  %v2314 = vpack.c.b16 %v1396, %v1394
  %v2315 = vpack.c.b16 %v1399, %v1397
  %v2316 = vpack.c.b16 %v1400, %v1398
  %v2317 = vpack.c.b16 %v1403, %v1401
  %v2318 = vpack.c.b16 %v1404, %v1402
  %v2319 = vpack.c.b16 %v1407, %v1405
  %v2320 = vpack.c.b16 %v1408, %v1406
  %v2321 = vpack.c.b16 %v1411, %v1409
  %v2322 = vpack.c.b16 %v1412, %v1410
  %v2323 = vpack.c.b16 %v1415, %v1413
  %v2324 = vpack.c.b16 %v1416, %v1414
  %v2325 = vpack.c.b16 %v1419, %v1417
  %v2326 = vpack.c.b16 %v1420, %v1418
  %v2327 = vpack.c.b16 %v1423, %v1421
  %v2328 = vpack.c.b16 %v1424, %v1422
  %v2329 = vpack.c.b16 %v1427, %v1425
  %v2330 = vpack.c.b16 %v1428, %v1426
  %v2331 = vpack.c.b16 %v1431, %v1429
  %v2332 = vpack.c.b16 %v1432, %v1430
  %v2333 = vpack.c.b16 %v1435, %v1433
  %v2334 = vpack.c.b16 %v1436, %v1434
  %v2335 = vpack.c.b16 %v1439, %v1437
  %v2336 = vpack.c.b16 %v1440, %v1438
  %v2337 = vpack.c.b16 %v1443, %v1441
  %v2338 = vpack.c.b16 %v1444, %v1442
  %v2339 = vpack.c.b16 %v1447, %v1445
  %v2340 = vpack.c.b16 %v1448, %v1446
  %v2341 = vpack.c.b16 %v1451, %v1449
  %v2342 = vpack.c.b16 %v1452, %v1450
  %v2343 = vpack.c.b16 %v1455, %v1453
  %v2344 = vpack.c.b16 %v1456, %v1454
  %v2345 = vpack.c.b16 %v1459, %v1457
  %v2346 = vpack.c.b16 %v1460, %v1458
  %v2347 = vpack.c.b16 %v1463, %v1461
  %v2348 = vpack.c.b16 %v1464, %v1462
  %v2349 = vpack.c.b16 %v1467, %v1465
  %v2350 = vpack.c.b16 %v1468, %v1466
  %v2351 = vpack.c.b16 %v1471, %v1469
  %v2352 = vpack.c.b16 %v1472, %v1470
  %v2353 = vpack.c.b16 %v1475, %v1473
  %v2354 = vpack.c.b16 %v1476, %v1474
  %v2355 = vpack.c.b16 %v1479, %v1477
  %v2356 = vpack.c.b16 %v1480, %v1478
  %v2357 = vpack.c.b16 %v1483, %v1481
  %v2358 = vpack.c.b16 %v1484, %v1482
  %v2359 = vpack.c.b16 %v1487, %v1485
  %v2360 = vpack.c.b16 %v1488, %v1486
  %v2361 = vpack.c.b16 %v1491, %v1489
  %v2362 = vpack.c.b16 %v1492, %v1490
  %v2363 = vpack.c.b16 %v1495, %v1493
  %v2364 = vpack.c.b16 %v1496, %v1494
  %v2365 = vpack.c.b16 %v1499, %v1497
  %v2366 = vpack.c.b16 %v1500, %v1498
  %v2367 = vpack.c.b16 %v1503, %v1501
  %v2368 = vpack.c.b16 %v1504, %v1502
  %v2369 = vpack.c.b16 %v1507, %v1505
  %v2370 = vpack.c.b16 %v1508, %v1506
  %v2371 = vpack.c.b16 %v1511, %v1509
  %v2372 = vpack.c.b16 %v1512, %v1510
  %v2373 = vpack.c.b16 %v1515, %v1513
  %v2374 = vpack.c.b16 %v1516, %v1514
  %v2375 = vpack.c.b16 %v1519, %v1517
  %v2376 = vpack.c.b16 %v1520, %v1518
  %v2377 = vpack.c.b16 %v1523, %v1521
  %v2378 = vpack.c.b16 %v1524, %v1522
  %v2379 = vpack.c.b16 %v1527, %v1525
  %v2380 = vpack.c.b16 %v1528, %v1526
  %v2381 = vpack.c.b16 %v1531, %v1529
  %v2382 = vpack.c.b16 %v1532, %v1530
  %v2383 = vpack.c.b16 %v1535, %v1533
  %v2384 = vpack.c.b16 %v1536, %v1534
  %v2385 = vpack.c.b16 %v1539, %v1537
  %v2386 = vpack.c.b16 %v1540, %v1538
  %v2387 = vpack.c.b16 %v1543, %v1541
  %v2388 = vpack.c.b16 %v1544, %v1542
  %v2389 = vpack.c.b16 %v1547, %v1545
  %v2390 = vpack.c.b16 %v1548, %v1546
  %v2391 = vpack.c.b16 %v1551, %v1549
  %v2392 = vpack.c.b16 %v1552, %v1550
  %v2393 = vpack.c.b16 %v1555, %v1553
  %v2394 = vpack.c.b16 %v1556, %v1554
  %v2395 = vpack.c.b16 %v1559, %v1557
  %v2396 = vpack.c.b16 %v1560, %v1558
  %v2397 = vpack.c.b16 %v1563, %v1561
  %v2398 = vpack.c.b16 %v1564, %v1562
  %v2399 = vpack.c.b16 %v1567, %v1565
  %v2400 = vpack.c.b16 %v1568, %v1566
  %v2401 = vpack.c.b16 %v1571, %v1569
  %v2402 = vpack.c.b16 %v1572, %v1570
  %v2403 = vpack.c.b16 %v1575, %v1573
  %v2404 = vpack.c.b16 %v1576, %v1574
  %v2405 = vpack.c.b16 %v1579, %v1577
  %v2406 = vpack.c.b16 %v1580, %v1578
  %v2407 = vpack.c.b16 %v1583, %v1581
  %v2408 = vpack.c.b16 %v1584, %v1582
  %v2409 = vpack.c.b16 %v1587, %v1585
  %v2410 = vpack.c.b16 %v1588, %v1586
  %v2411 = vpack.c.b16 %v1591, %v1589
  %v2412 = vpack.c.b16 %v1592, %v1590
  %v2413 = vpack.c.b16 %v1595, %v1593
  %v2414 = vpack.c.b16 %v1596, %v1594
  %v2415 = vpack.c.b16 %v1599, %v1597
  %v2416 = vpack.c.b16 %v1600, %v1598
  %v2417 = vpack.c.b16 %v1603, %v1601
  %v2418 = vpack.c.b16 %v1604, %v1602
  %v2419 = vpack.c.b16 %v1607, %v1605
  %v2420 = vpack.c.b16 %v1608, %v1606
  %v2421 = vpack.c.b16 %v1611, %v1609
  %v2422 = vpack.c.b16 %v1612, %v1610
  %v2423 = vpack.c.b16 %v1615, %v1613
  %v2424 = vpack.c.b16 %v1616, %v1614
  %v2425 = vpack.c.b16 %v1619, %v1617
  %v2426 = vpack.c.b16 %v1620, %v1618
  %v2427 = vpack.c.b16 %v1623, %v1621
  %v2428 = vpack.c.b16 %v1624, %v1622
  %v2429 = vpack.c.b16 %v1627, %v1625
  %v2430 = vpack.c.b16 %v1628, %v1626
  %v2431 = vpack.c.b16 %v1631, %v1629
  %v2432 = vpack.c.b16 %v1632, %v1630
  %v2433 = vpack.c.b16 %v1635, %v1633
  %v2434 = vpack.c.b16 %v1636, %v1634
  %v2435 = vpack.c.b16 %v1639, %v1637
  %v2436 = vpack.c.b16 %v1640, %v1638
  %v2437 = vpack.c.b16 %v1643, %v1641
  %v2438 = vpack.c.b16 %v1644, %v1642
  %v2439 = vpack.c.b16 %v1647, %v1645
  %v2440 = vpack.c.b16 %v1648, %v1646
  %v2441 = vpack.c.b16 %v1651, %v1649
  %v2442 = vpack.c.b16 %v1652, %v1650
  %v2443 = vpack.c.b16 %v1655, %v1653
  %v2444 = vpack.c.b16 %v1656, %v1654
  %v2445 = vpack.c.b16 %v1659, %v1657
  %v2446 = vpack.c.b16 %v1660, %v1658
  %v2447 = vpack.c.b16 %v1663, %v1661
  %v2448 = vpack.c.b16 %v1664, %v1662
  %v2449 = vpack.c.b16 %v1667, %v1665
  %v2450 = vpack.c.b16 %v1668, %v1666
  %v2451 = vpack.c.b16 %v1671, %v1669
  %v2452 = vpack.c.b16 %v1672, %v1670
  %v2453 = vpack.c.b16 %v1675, %v1673
  %v2454 = vpack.c.b16 %v1676, %v1674
  %v2455 = vpack.c.b16 %v1679, %v1677
  %v2456 = vpack.c.b16 %v1680, %v1678
  %v2457 = vpack.c.b16 %v1683, %v1681
  %v2458 = vpack.c.b16 %v1684, %v1682
  %v2459 = vpack.c.b16 %v1687, %v1685
  %v2460 = vpack.c.b16 %v1688, %v1686
  %v2461 = vpack.c.b16 %v1691, %v1689
  %v2462 = vpack.c.b16 %v1692, %v1690
  %v2463 = vpack.c.b16 %v1695, %v1693
  %v2464 = vpack.c.b16 %v1696, %v1694
  %v2465 = vpack.c.b16 %v1699, %v1697
  %v2466 = vpack.c.b16 %v1700, %v1698
  %v2467 = vpack.c.b16 %v1703, %v1701
  %v2468 = vpack.c.b16 %v1704, %v1702
  %v2469 = vpack.c.b16 %v1707, %v1705
  %v2470 = vpack.c.b16 %v1708, %v1706
  %v2471 = vpack.c.b16 %v1711, %v1709
  %v2472 = vpack.c.b16 %v1712, %v1710
  %v2473 = vpack.c.b16 %v1715, %v1713
  %v2474 = vpack.c.b16 %v1716, %v1714
  %v2475 = vpack.c.b16 %v1719, %v1717
  %v2476 = vpack.c.b16 %v1720, %v1718
  %v2477 = vpack.c.b16 %v1723, %v1721
  %v2478 = vpack.c.b16 %v1724, %v1722
  %v2479 = vpack.c.b16 %v1727, %v1725
  %v2480 = vpack.c.b16 %v1728, %v1726
  %v2481 = vpack.c.b16 %v1731, %v1729
  %v2482 = vpack.c.b16 %v1732, %v1730
  %v2483 = vpack.c.b16 %v1735, %v1733
  %v2484 = vpack.c.b16 %v1736, %v1734
  %v2485 = vpack.c.b16 %v1739, %v1737
  %v2486 = vpack.c.b16 %v1740, %v1738
  %v2487 = vpack.c.b16 %v1743, %v1741
  %v2488 = vpack.c.b16 %v1744, %v1742
  %v2489 = vpack.c.b16 %v1747, %v1745
  %v2490 = vpack.c.b16 %v1748, %v1746
  %v2491 = vpack.c.b16 %v1751, %v1749
  %v2492 = vpack.c.b16 %v1752, %v1750
  %v2493 = vpack.c.b16 %v1755, %v1753
  %v2494 = vpack.c.b16 %v1756, %v1754
  %v2495 = vpack.c.b16 %v1759, %v1757
  %v2496 = vpack.c.b16 %v1760, %v1758
  %v2497 = vpack.c.b16 %v1763, %v1761
  %v2498 = vpack.c.b16 %v1764, %v1762
  %v2499 = vpack.c.b16 %v1767, %v1765
  %v2500 = vpack.c.b16 %v1768, %v1766
  %v2501 = vpack.c.b16 %v1771, %v1769
  %v2502 = vpack.c.b16 %v1772, %v1770
  %v2503 = vpack.c.b16 %v1775, %v1773
  %v2504 = vpack.c.b16 %v1776, %v1774
  %v2505 = vpack.c.b16 %v1779, %v1777
  %v2506 = vpack.c.b16 %v1780, %v1778
  %v2507 = vpack.c.b16 %v1783, %v1781
  %v2508 = vpack.c.b16 %v1784, %v1782
  %v2509 = vpack.c.b16 %v1787, %v1785
  %v2510 = vpack.c.b16 %v1788, %v1786
  %v2511 = vpack.c.b16 %v1791, %v1789
  %v2512 = vpack.c.b16 %v1792, %v1790
  %v2513 = vpack.c.b16 %v1795, %v1793
  %v2514 = vpack.c.b16 %v1796, %v1794
  %v2515 = vpack.c.b16 %v1799, %v1797
  %v2516 = vpack.c.b16 %v1800, %v1798
  %v2517 = vpack.c.b16 %v1803, %v1801
  %v2518 = vpack.c.b16 %v1804, %v1802
  %v2519 = vpack.c.b16 %v1807, %v1805
  %v2520 = vpack.c.b16 %v1808, %v1806
  %v2521 = vpack.c.b16 %v1811, %v1809
  %v2522 = vpack.c.b16 %v1812, %v1810
  %v2523 = vpack.c.b16 %v1815, %v1813
  %v2524 = vpack.c.b16 %v1816, %v1814
  %v2525 = vpack.c.b16 %v1819, %v1817
  %v2526 = vpack.c.b16 %v1820, %v1818
  %v2527 = vpack.c.b16 %v1823, %v1821
  %v2528 = vpack.c.b16 %v1824, %v1822
  %v2529 = vpack.c.b16 %v1827, %v1825
  %v2530 = vpack.c.b16 %v1828, %v1826
  %v2531 = vpack.c.b16 %v1831, %v1829
  %v2532 = vpack.c.b16 %v1832, %v1830
  %v2533 = vpack.c.b16 %v1835, %v1833
  %v2534 = vpack.c.b16 %v1836, %v1834
  %v2535 = vpack.c.b16 %v1839, %v1837
  %v2536 = vpack.c.b16 %v1840, %v1838
  %v2537 = vpack.c.b16 %v1843, %v1841
  %v2538 = vpack.c.b16 %v1844, %v1842
  %v2539 = vpack.c.b16 %v1847, %v1845
  %v2540 = vpack.c.b16 %v1848, %v1846
  %v2541 = vpack.c.b16 %v1851, %v1849
  %v2542 = vpack.c.b16 %v1852, %v1850
  %v2543 = vpack.c.b16 %v1855, %v1853
  %v2544 = vpack.c.b16 %v1856, %v1854
  %v2545 = vpack.c.b16 %v1859, %v1857
  %v2546 = vpack.c.b16 %v1860, %v1858
  %v2547 = vpack.c.b16 %v1863, %v1861
  %v2548 = vpack.c.b16 %v1864, %v1862
  %v2549 = vpack.c.b16 %v1867, %v1865
  %v2550 = vpack.c.b16 %v1868, %v1866
  %v2551 = vpack.c.b16 %v1871, %v1869
  %v2552 = vpack.c.b16 %v1872, %v1870
  %v2553 = vpack.c.b16 %v1875, %v1873
  %v2554 = vpack.c.b16 %v1876, %v1874
  %v2555 = vpack.c.b16 %v1879, %v1877
  %v2556 = vpack.c.b16 %v1880, %v1878
  %v2557 = vpack.c.b16 %v1883, %v1881
  %v2558 = vpack.c.b16 %v1884, %v1882
  %v2559 = vpack.c.b16 %v1887, %v1885
  %v2560 = vpack.c.b16 %v1888, %v1886
  %v2561 = vpack.c.b16 %v1891, %v1889
  %v2562 = vpack.c.b16 %v1892, %v1890
  %v2563 = vpack.c.b16 %v1895, %v1893
  %v2564 = vpack.c.b16 %v1896, %v1894
  %v2565 = vpack.c.b16 %v1899, %v1897
  %v2566 = vpack.c.b16 %v1900, %v1898
  %v2567 = vpack.c.b16 %v1903, %v1901
  %v2568 = vpack.c.b16 %v1904, %v1902
  %v2569 = vpack.c.b16 %v1907, %v1905
  %v2570 = vpack.c.b16 %v1908, %v1906
  %v2571 = vpack.c.b16 %v1911, %v1909
  %v2572 = vpack.c.b16 %v1912, %v1910
  %v2573 = vpack.c.b16 %v1915, %v1913
  %v2574 = vpack.c.b16 %v1916, %v1914
  %v2575 = vpack.c.b16 %v1919, %v1917
  %v2576 = vpack.c.b16 %v1920, %v1918
  %v2577 = vpack.c.b16 %v1923, %v1921
  %v2578 = vpack.c.b16 %v1924, %v1922
  %v2579 = vpack.c.b16 %v1927, %v1925
  %v2580 = vpack.c.b16 %v1928, %v1926
  %v2581 = vpack.c.b16 %v1931, %v1929
  %v2582 = vpack.c.b16 %v1932, %v1930
  %v2583 = vpack.c.b16 %v1935, %v1933
  %v2584 = vpack.c.b16 %v1936, %v1934
  %v2585 = vpack.c.b16 %v1939, %v1937
  %v2586 = vpack.c.b16 %v1940, %v1938
  %v2587 = vpack.c.b16 %v1943, %v1941
  %v2588 = vpack.c.b16 %v1944, %v1942
  %v2589 = vpack.c.b16 %v1947, %v1945
  %v2590 = vpack.c.b16 %v1948, %v1946
  %v2591 = vpack.c.b16 %v1951, %v1949
  %v2592 = vpack.c.b16 %v1952, %v1950
  %v2593 = vpack.c.b16 %v1955, %v1953
  %v2594 = vpack.c.b16 %v1956, %v1954
  %v2595 = vpack.c.b16 %v1959, %v1957
  %v2596 = vpack.c.b16 %v1960, %v1958
  %v2597 = vpack.c.b16 %v1963, %v1961
  %v2598 = vpack.c.b16 %v1964, %v1962
  %v2599 = vpack.c.b16 %v1967, %v1965
  %v2600 = vpack.c.b16 %v1968, %v1966
  %v2601 = vpack.c.b16 %v1971, %v1969
  %v2602 = vpack.c.b16 %v1972, %v1970
  %v2603 = vpack.c.b16 %v1975, %v1973
  %v2604 = vpack.c.b16 %v1976, %v1974
  %v2605 = vpack.c.b16 %v1979, %v1977
  %v2606 = vpack.c.b16 %v1980, %v1978
  %v2607 = vpack.c.b16 %v1983, %v1981
  %v2608 = vpack.c.b16 %v1984, %v1982
  %v2609 = vpack.c.b16 %v1987, %v1985
  %v2610 = vpack.c.b16 %v1988, %v1986
  %v2611 = vpack.c.b16 %v1991, %v1989
  %v2612 = vpack.c.b16 %v1992, %v1990
  %v2613 = vpack.c.b16 %v1995, %v1993
  %v2614 = vpack.c.b16 %v1996, %v1994
  %v2615 = vpack.c.b16 %v1999, %v1997
  %v2616 = vpack.c.b16 %v2000, %v1998
  %v2617 = vpack.c.b16 %v2003, %v2001
  %v2618 = vpack.c.b16 %v2004, %v2002
  %v2619 = vpack.c.b16 %v2007, %v2005
  %v2620 = vpack.c.b16 %v2008, %v2006
  %v2621 = vpack.c.b16 %v2011, %v2009
  %v2622 = vpack.c.b16 %v2012, %v2010
  %v2623 = vpack.c.b16 %v2015, %v2013
  %v2624 = vpack.c.b16 %v2016, %v2014
  %v2625 = vpack.c.b16 %v2019, %v2017
  %v2626 = vpack.c.b16 %v2020, %v2018
  %v2627 = vpack.c.b16 %v2023, %v2021
  %v2628 = vpack.c.b16 %v2024, %v2022
  %v2629 = vpack.c.b16 %v2027, %v2025
  %v2630 = vpack.c.b16 %v2028, %v2026
  %v2631 = vpack.c.b16 %v2031, %v2029
  %v2632 = vpack.c.b16 %v2032, %v2030
  %v2633 = vpack.c.b16 %v2035, %v2033
  %v2634 = vpack.c.b16 %v2036, %v2034
  %v2635 = vpack.c.b16 %v2039, %v2037
  %v2636 = vpack.c.b16 %v2040, %v2038
  %v2637 = vpack.c.b16 %v2043, %v2041
  %v2638 = vpack.c.b16 %v2044, %v2042
  %v2639 = vpack.c.b16 %v2047, %v2045
  %v2640 = vpack.c.b16 %v2048, %v2046
  %v2641 = vpack.c.b16 %v2051, %v2049
  %v2642 = vpack.c.b16 %v2052, %v2050
  %v2643 = vpack.c.b16 %v2055, %v2053
  %v2644 = vpack.c.b16 %v2056, %v2054
  %v2645 = vpack.c.b16 %v2059, %v2057
  %v2646 = vpack.c.b16 %v2060, %v2058
  %v2647 = vpack.c.b16 %v2063, %v2061
  %v2648 = vpack.c.b16 %v2064, %v2062
  %v2649 = vpack.c.b16 %v2067, %v2065
  %v2650 = vpack.c.b16 %v2068, %v2066
  %v2651 = vpack.c.b16 %v2071, %v2069
  %v2652 = vpack.c.b16 %v2072, %v2070
  %v2653 = vpack.c.b16 %v2075, %v2073
  %v2654 = vpack.c.b16 %v2076, %v2074
  %v2655 = vpack.c.b16 %v2079, %v2077
  %v2656 = vpack.c.b16 %v2080, %v2078
  %v2657 = vpack.c.b16 %v2083, %v2081
  %v2658 = vpack.c.b16 %v2084, %v2082
  %v2659 = vpack.c.b16 %v2087, %v2085
  %v2660 = vpack.c.b16 %v2088, %v2086
  %v2661 = vpack.c.b16 %v2091, %v2089
  %v2662 = vpack.c.b16 %v2092, %v2090
  %v2663 = vpack.c.b16 %v2095, %v2093
  %v2664 = vpack.c.b16 %v2096, %v2094
  %v2665 = vpack.c.b16 %v2099, %v2097
  %v2666 = vpack.c.b16 %v2100, %v2098
  %v2667 = vpack.c.b16 %v2103, %v2101
  %v2668 = vpack.c.b16 %v2104, %v2102
  %v2669 = vpack.c.b16 %v2107, %v2105
  %v2670 = vpack.c.b16 %v2108, %v2106
  %v2671 = vpack.c.b16 %v2111, %v2109
  %v2672 = vpack.c.b16 %v2112, %v2110
  %v2673 = vpack.c.b16 %v2115, %v2113
  %v2674 = vpack.c.b16 %v2116, %v2114
  %v2675 = vpack.c.b16 %v2119, %v2117
  %v2676 = vpack.c.b16 %v2120, %v2118
  %v2677 = vpack.c.b16 %v2123, %v2121
  %v2678 = vpack.c.b16 %v2124, %v2122
  %v2679 = vpack.c.b16 %v2127, %v2125
  %v2680 = vpack.c.b16 %v2128, %v2126
  %v2681 = vpack.c.b16 %v2131, %v2129
  %v2682 = vpack.c.b16 %v2132, %v2130
  %v2683 = vpack.c.b16 %v2135, %v2133
  %v2684 = vpack.c.b16 %v2136, %v2134
  %v2685 = vpack.c.b16 %v2139, %v2137
  %v2686 = vpack.c.b16 %v2140, %v2138
  %v2687 = vpack.c.b16 %v2143, %v2141
  %v2688 = vpack.c.b16 %v2144, %v2142
  %v2689 = vpack.c.b16 %v2147, %v2145
  %v2690 = vpack.c.b16 %v2148, %v2146
  %v2691 = vpack.c.b16 %v2151, %v2149
  %v2692 = vpack.c.b16 %v2152, %v2150
  %v2693 = vpack.c.b16 %v2155, %v2153
  %v2694 = vpack.c.b16 %v2156, %v2154
  %v2695 = vpack.c.b16 %v2159, %v2157
  %v2696 = vpack.c.b16 %v2160, %v2158
  %v2697 = vpack.c.b16 %v2163, %v2161
  %v2698 = vpack.c.b16 %v2164, %v2162
  %v2699 = vpack.c.b16 %v2167, %v2165
  %v2700 = vpack.c.b16 %v2168, %v2166
  %v2701 = vpack.c.b16 %v2171, %v2169
  %v2702 = vpack.c.b16 %v2172, %v2170
  %v2703 = vpack.c.b16 %v2175, %v2173
  %v2704 = vpack.c.b16 %v2176, %v2174
  %v2705 = vpack.c.b16 %v2179, %v2177
  %v2706 = vpack.c.b16 %v2180, %v2178
  %v2707 = vpack.c.b16 %v2183, %v2181
  %v2708 = vpack.c.b16 %v2184, %v2182
  %v2709 = vpack.c.b16 %v2187, %v2185
  %v2710 = vpack.c.b16 %v2188, %v2186
  %v2711 = vpack.c.b16 %v2191, %v2189
  %v2712 = vpack.c.b16 %v2192, %v2190
  %v2713 = vpack.c.b16 %v2195, %v2193
  %v2714 = vpack.c.b16 %v2196, %v2194
  %v2715 = vpack.c.b16 %v2199, %v2197
  %v2716 = vpack.c.b16 %v2200, %v2198
  %v2717 = vpack.c.b16 %v2203, %v2201
  %v2718 = vpack.c.b16 %v2204, %v2202
  %v2719 = vpack.c.b16 %v2207, %v2205
  %v2720 = vpack.c.b16 %v2208, %v2206
  %3233 = vmatprep.subr.bf16.mxu0 %v2210
  %3234 = vmatpush1.bf16.msra.mxu0 %v2209
  %3235 = vmatprep.subr.bf16.mxu0 %v2212
  %3236 = vmatpush1.bf16.msra.mxu0 %v2211
  %3237 = vmatprep.subr.bf16.mxu0 %v2214
  %3238 = vmatpush1.bf16.msra.mxu0 %v2213
  %3239 = vmatprep.subr.bf16.mxu0 %v2216
  %3240 = vmatpush1.bf16.msra.mxu0 %v2215
  %3241 = vmatprep.subr.bf16.mxu0 %v2218
  %3242 = vmatpush1.bf16.msra.mxu0 %v2217
  %3243 = vmatprep.subr.bf16.mxu0 %v2220
  %3244 = vmatpush1.bf16.msra.mxu0 %v2219
  %3245 = vmatprep.subr.bf16.mxu0 %v2222
  %3246 = vmatpush1.bf16.msra.mxu0 %v2221
  %3247 = vmatprep.subr.bf16.mxu0 %v2224
  %3248 = vmatpush1.bf16.msra.mxu0 %v2223
  %3249 = vmatprep.subr.bf16.mxu0 %v2226
  %3250 = vmatpush1.bf16.msra.mxu0 %v2225
  %3251 = vmatprep.subr.bf16.mxu0 %v2228
  %3252 = vmatpush1.bf16.msra.mxu0 %v2227
  %3253 = vmatprep.subr.bf16.mxu0 %v2230
  %3254 = vmatpush1.bf16.msra.mxu0 %v2229
  %3255 = vmatprep.subr.bf16.mxu0 %v2232
  %3256 = vmatpush1.bf16.msra.mxu0 %v2231
  %3257 = vmatprep.subr.bf16.mxu0 %v2234
  %3258 = vmatpush1.bf16.msra.mxu0 %v2233
  %3259 = vmatprep.subr.bf16.mxu0 %v2236
  %3260 = vmatpush1.bf16.msra.mxu0 %v2235
  %3261 = vmatprep.subr.bf16.mxu0 %v2238
  %3262 = vmatpush1.bf16.msra.mxu0 %v2237
  %3263 = vmatprep.subr.bf16.mxu0 %v2240
  %3264 = vmatpush1.bf16.msra.mxu0 %v2239
  %3265 = vmatprep.mubr.bf16.mxu0 %v610
  %3266 = vmatmul.mubr.bf16.gmra.mrb[0].mxu0 %v609
  %v3267 = vpop.f32.mrb[0].mxu0
  %v3268 = vadd.f32 %v554, %v3267
  %v3269 = vpop.f32.mrb[0].mxu0
  %v3270 = vadd.f32 %v558, %v3269
  %v3271 = vpop.f32.mrb[0].mxu0
  %v3272 = vpop.f32.mrb[0].mxu0
  %3273 = vdwg.mxu0
  %3274 = vmatprep.subr.bf16.mxu0 %v2242
  %3275 = vmatpush1.bf16.msra.mxu0 %v2241
  %3276 = vmatprep.subr.bf16.mxu0 %v2244
  %3277 = vmatpush1.bf16.msra.mxu0 %v2243
  %3278 = vmatprep.subr.bf16.mxu0 %v2246
  %3279 = vmatpush1.bf16.msra.mxu0 %v2245
  %3280 = vmatprep.subr.bf16.mxu0 %v2248
  %3281 = vmatpush1.bf16.msra.mxu0 %v2247
  %3282 = vmatprep.subr.bf16.mxu0 %v2250
  %3283 = vmatpush1.bf16.msra.mxu0 %v2249
  %3284 = vmatprep.subr.bf16.mxu0 %v2252
  %3285 = vmatpush1.bf16.msra.mxu0 %v2251
  %3286 = vmatprep.subr.bf16.mxu0 %v2254
  %3287 = vmatpush1.bf16.msra.mxu0 %v2253
  %3288 = vmatprep.subr.bf16.mxu0 %v2256
  %3289 = vmatpush1.bf16.msra.mxu0 %v2255
  %3290 = vmatprep.subr.bf16.mxu0 %v2258
  %3291 = vmatpush1.bf16.msra.mxu0 %v2257
  %3292 = vmatprep.subr.bf16.mxu0 %v2260
  %3293 = vmatpush1.bf16.msra.mxu0 %v2259
  %3294 = vmatprep.subr.bf16.mxu0 %v2262
  %3295 = vmatpush1.bf16.msra.mxu0 %v2261
  %3296 = vmatprep.subr.bf16.mxu0 %v2264
  %3297 = vmatpush1.bf16.msra.mxu0 %v2263
  %3298 = vmatprep.subr.bf16.mxu0 %v2266
  %3299 = vmatpush1.bf16.msra.mxu0 %v2265
  %3300 = vmatprep.subr.bf16.mxu0 %v2268
  %3301 = vmatpush1.bf16.msra.mxu0 %v2267
  %3302 = vmatprep.subr.bf16.mxu0 %v2270
  %3303 = vmatpush1.bf16.msra.mxu0 %v2269
  %3304 = vmatprep.subr.bf16.mxu0 %v2272
  %3305 = vmatpush1.bf16.msra.mxu0 %v2271
  %3306 = vmatprep.mubr.bf16.mxu0 %v612
  %3307 = vmatmul.mubr.bf16.gmra.mrb[0].mxu0 %v611
  %v3308 = vpop.f32.mrb[0].mxu0
  %v3309 = vadd.f32 %v3268, %v3308
  %v3310 = vpop.f32.mrb[0].mxu0
  %v3311 = vadd.f32 %v3270, %v3310
  %v3312 = vpop.f32.mrb[0].mxu0
  %v3313 = vpop.f32.mrb[0].mxu0
  %3314 = vdwg.mxu0
  %3315 = vmatprep.subr.bf16.mxu0 %v2274
  %3316 = vmatpush1.bf16.msra.mxu0 %v2273
  %3317 = vmatprep.subr.bf16.mxu0 %v2276
  %3318 = vmatpush1.bf16.msra.mxu0 %v2275
  %3319 = vmatprep.subr.bf16.mxu0 %v2278
  %3320 = vmatpush1.bf16.msra.mxu0 %v2277
  %3321 = vmatprep.subr.bf16.mxu0 %v2280
  %3322 = vmatpush1.bf16.msra.mxu0 %v2279
  %3323 = vmatprep.subr.bf16.mxu0 %v2282
  %3324 = vmatpush1.bf16.msra.mxu0 %v2281
  %3325 = vmatprep.subr.bf16.mxu0 %v2284
  %3326 = vmatpush1.bf16.msra.mxu0 %v2283
  %3327 = vmatprep.subr.bf16.mxu0 %v2286
  %3328 = vmatpush1.bf16.msra.mxu0 %v2285
  %3329 = vmatprep.subr.bf16.mxu0 %v2288
  %3330 = vmatpush1.bf16.msra.mxu0 %v2287
  %3331 = vmatprep.subr.bf16.mxu0 %v2290
  %3332 = vmatpush1.bf16.msra.mxu0 %v2289
  %3333 = vmatprep.subr.bf16.mxu0 %v2292
  %3334 = vmatpush1.bf16.msra.mxu0 %v2291
  %3335 = vmatprep.subr.bf16.mxu0 %v2294
  %3336 = vmatpush1.bf16.msra.mxu0 %v2293
  %3337 = vmatprep.subr.bf16.mxu0 %v2296
  %3338 = vmatpush1.bf16.msra.mxu0 %v2295
  %3339 = vmatprep.subr.bf16.mxu0 %v2298
  %3340 = vmatpush1.bf16.msra.mxu0 %v2297
  %3341 = vmatprep.subr.bf16.mxu0 %v2300
  %3342 = vmatpush1.bf16.msra.mxu0 %v2299
  %3343 = vmatprep.subr.bf16.mxu0 %v2302
  %3344 = vmatpush1.bf16.msra.mxu0 %v2301
  %3345 = vmatprep.subr.bf16.mxu0 %v2304
  %3346 = vmatpush1.bf16.msra.mxu0 %v2303
  %3347 = vmatprep.mubr.bf16.mxu0 %v614
  %3348 = vmatmul.mubr.bf16.gmra.mrb[0].mxu0 %v613
  %v3349 = vpop.f32.mrb[0].mxu0
  %v3350 = vadd.f32 %v3309, %v3349
  %v3351 = vpop.f32.mrb[0].mxu0
  %v3352 = vadd.f32 %v3311, %v3351
  %v3353 = vpop.f32.mrb[0].mxu0
  %v3354 = vpop.f32.mrb[0].mxu0
  %3355 = vdwg.mxu0
  %3356 = vmatprep.subr.bf16.mxu0 %v2306
  %3357 = vmatpush1.bf16.msra.mxu0 %v2305
  %3358 = vmatprep.subr.bf16.mxu0 %v2308
  %3359 = vmatpush1.bf16.msra.mxu0 %v2307
  %3360 = vmatprep.subr.bf16.mxu0 %v2310
  %3361 = vmatpush1.bf16.msra.mxu0 %v2309
  %3362 = vmatprep.subr.bf16.mxu0 %v2312
  %3363 = vmatpush1.bf16.msra.mxu0 %v2311
  %3364 = vmatprep.subr.bf16.mxu0 %v2314
  %3365 = vmatpush1.bf16.msra.mxu0 %v2313
  %3366 = vmatprep.subr.bf16.mxu0 %v2316
  %3367 = vmatpush1.bf16.msra.mxu0 %v2315
  %3368 = vmatprep.subr.bf16.mxu0 %v2318
  %3369 = vmatpush1.bf16.msra.mxu0 %v2317
  %3370 = vmatprep.subr.bf16.mxu0 %v2320
  %3371 = vmatpush1.bf16.msra.mxu0 %v2319
  %3372 = vmatprep.subr.bf16.mxu0 %v2322
  %3373 = vmatpush1.bf16.msra.mxu0 %v2321
  %3374 = vmatprep.subr.bf16.mxu0 %v2324
  %3375 = vmatpush1.bf16.msra.mxu0 %v2323
  %3376 = vmatprep.subr.bf16.mxu0 %v2326
  %3377 = vmatpush1.bf16.msra.mxu0 %v2325
  %3378 = vmatprep.subr.bf16.mxu0 %v2328
  %3379 = vmatpush1.bf16.msra.mxu0 %v2327
  %3380 = vmatprep.subr.bf16.mxu0 %v2330
  %3381 = vmatpush1.bf16.msra.mxu0 %v2329
  %3382 = vmatprep.subr.bf16.mxu0 %v2332
  %3383 = vmatpush1.bf16.msra.mxu0 %v2331
  %3384 = vmatprep.subr.bf16.mxu0 %v2334
  %3385 = vmatpush1.bf16.msra.mxu0 %v2333
  %3386 = vmatprep.subr.bf16.mxu0 %v2336
  %3387 = vmatpush1.bf16.msra.mxu0 %v2335
  %3388 = vmatprep.mubr.bf16.mxu0 %v616
  %3389 = vmatmul.mubr.bf16.gmra.mrb[0].mxu0 %v615
  %v3390 = vpop.f32.mrb[0].mxu0
  %v3391 = vadd.f32 %v3350, %v3390
  %v3392 = vpop.f32.mrb[0].mxu0
  %v3393 = vadd.f32 %v3352, %v3392
  %v3394 = vpop.f32.mrb[0].mxu0
  %v3395 = vpop.f32.mrb[0].mxu0
  %3396 = vdwg.mxu0
  %3397 = vmatprep.subr.bf16.mxu0 %v2338
  %3398 = vmatpush1.bf16.msra.mxu0 %v2337
  %3399 = vmatprep.subr.bf16.mxu0 %v2340
  %3400 = vmatpush1.bf16.msra.mxu0 %v2339
  %3401 = vmatprep.subr.bf16.mxu0 %v2342
  %3402 = vmatpush1.bf16.msra.mxu0 %v2341
  %3403 = vmatprep.subr.bf16.mxu0 %v2344
  %3404 = vmatpush1.bf16.msra.mxu0 %v2343
  %3405 = vmatprep.subr.bf16.mxu0 %v2346
  %3406 = vmatpush1.bf16.msra.mxu0 %v2345
  %3407 = vmatprep.subr.bf16.mxu0 %v2348
  %3408 = vmatpush1.bf16.msra.mxu0 %v2347
  %3409 = vmatprep.subr.bf16.mxu0 %v2350
  %3410 = vmatpush1.bf16.msra.mxu0 %v2349
  %3411 = vmatprep.subr.bf16.mxu0 %v2352
  %3412 = vmatpush1.bf16.msra.mxu0 %v2351
  %3413 = vmatprep.subr.bf16.mxu0 %v2354
  %3414 = vmatpush1.bf16.msra.mxu0 %v2353
  %3415 = vmatprep.subr.bf16.mxu0 %v2356
  %3416 = vmatpush1.bf16.msra.mxu0 %v2355
  %3417 = vmatprep.subr.bf16.mxu0 %v2358
  %3418 = vmatpush1.bf16.msra.mxu0 %v2357
  %3419 = vmatprep.subr.bf16.mxu0 %v2360
  %3420 = vmatpush1.bf16.msra.mxu0 %v2359
  %3421 = vmatprep.subr.bf16.mxu0 %v2362
  %3422 = vmatpush1.bf16.msra.mxu0 %v2361
  %3423 = vmatprep.subr.bf16.mxu0 %v2364
  %3424 = vmatpush1.bf16.msra.mxu0 %v2363
  %3425 = vmatprep.subr.bf16.mxu0 %v2366
  %3426 = vmatpush1.bf16.msra.mxu0 %v2365
  %3427 = vmatprep.subr.bf16.mxu0 %v2368
  %3428 = vmatpush1.bf16.msra.mxu0 %v2367
  %3429 = vmatprep.mubr.bf16.mxu0 %v618
  %3430 = vmatmul.mubr.bf16.gmra.mrb[0].mxu0 %v617
  %v3431 = vpop.f32.mrb[0].mxu0
  %v3432 = vadd.f32 %v3391, %v3431
  %v3433 = vpop.f32.mrb[0].mxu0
  %v3434 = vadd.f32 %v3393, %v3433
  %v3435 = vpop.f32.mrb[0].mxu0
  %v3436 = vpop.f32.mrb[0].mxu0
  %3437 = vdwg.mxu0
  %3438 = vmatprep.subr.bf16.mxu0 %v2370
  %3439 = vmatpush1.bf16.msra.mxu0 %v2369
  %3440 = vmatprep.subr.bf16.mxu0 %v2372
  %3441 = vmatpush1.bf16.msra.mxu0 %v2371
  %3442 = vmatprep.subr.bf16.mxu0 %v2374
  %3443 = vmatpush1.bf16.msra.mxu0 %v2373
  %3444 = vmatprep.subr.bf16.mxu0 %v2376
  %3445 = vmatpush1.bf16.msra.mxu0 %v2375
  %3446 = vmatprep.subr.bf16.mxu0 %v2378
  %3447 = vmatpush1.bf16.msra.mxu0 %v2377
  %3448 = vmatprep.subr.bf16.mxu0 %v2380
  %3449 = vmatpush1.bf16.msra.mxu0 %v2379
  %3450 = vmatprep.subr.bf16.mxu0 %v2382
  %3451 = vmatpush1.bf16.msra.mxu0 %v2381
  %3452 = vmatprep.subr.bf16.mxu0 %v2384
  %3453 = vmatpush1.bf16.msra.mxu0 %v2383
  %3454 = vmatprep.subr.bf16.mxu0 %v2386
  %3455 = vmatpush1.bf16.msra.mxu0 %v2385
  %3456 = vmatprep.subr.bf16.mxu0 %v2388
  %3457 = vmatpush1.bf16.msra.mxu0 %v2387
  %3458 = vmatprep.subr.bf16.mxu0 %v2390
  %3459 = vmatpush1.bf16.msra.mxu0 %v2389
  %3460 = vmatprep.subr.bf16.mxu0 %v2392
  %3461 = vmatpush1.bf16.msra.mxu0 %v2391
  %3462 = vmatprep.subr.bf16.mxu0 %v2394
  %3463 = vmatpush1.bf16.msra.mxu0 %v2393
  %3464 = vmatprep.subr.bf16.mxu0 %v2396
  %3465 = vmatpush1.bf16.msra.mxu0 %v2395
  %3466 = vmatprep.subr.bf16.mxu0 %v2398
  %3467 = vmatpush1.bf16.msra.mxu0 %v2397
  %3468 = vmatprep.subr.bf16.mxu0 %v2400
  %3469 = vmatpush1.bf16.msra.mxu0 %v2399
  %3470 = vmatprep.mubr.bf16.mxu0 %v620
  %3471 = vmatmul.mubr.bf16.gmra.mrb[0].mxu0 %v619
  %v3472 = vpop.f32.mrb[0].mxu0
  %v3473 = vadd.f32 %v3432, %v3472
  %v3474 = vpop.f32.mrb[0].mxu0
  %v3475 = vadd.f32 %v3434, %v3474
  %v3476 = vpop.f32.mrb[0].mxu0
  %v3477 = vpop.f32.mrb[0].mxu0
  %3478 = vdwg.mxu0
  %3479 = vmatprep.subr.bf16.mxu0 %v2402
  %3480 = vmatpush1.bf16.msra.mxu0 %v2401
  %3481 = vmatprep.subr.bf16.mxu0 %v2404
  %3482 = vmatpush1.bf16.msra.mxu0 %v2403
  %3483 = vmatprep.subr.bf16.mxu0 %v2406
  %3484 = vmatpush1.bf16.msra.mxu0 %v2405
  %3485 = vmatprep.subr.bf16.mxu0 %v2408
  %3486 = vmatpush1.bf16.msra.mxu0 %v2407
  %3487 = vmatprep.subr.bf16.mxu0 %v2410
  %3488 = vmatpush1.bf16.msra.mxu0 %v2409
  %3489 = vmatprep.subr.bf16.mxu0 %v2412
  %3490 = vmatpush1.bf16.msra.mxu0 %v2411
  %3491 = vmatprep.subr.bf16.mxu0 %v2414
  %3492 = vmatpush1.bf16.msra.mxu0 %v2413
  %3493 = vmatprep.subr.bf16.mxu0 %v2416
  %3494 = vmatpush1.bf16.msra.mxu0 %v2415
  %3495 = vmatprep.subr.bf16.mxu0 %v2418
  %3496 = vmatpush1.bf16.msra.mxu0 %v2417
  %3497 = vmatprep.subr.bf16.mxu0 %v2420
  %3498 = vmatpush1.bf16.msra.mxu0 %v2419
  %3499 = vmatprep.subr.bf16.mxu0 %v2422
  %3500 = vmatpush1.bf16.msra.mxu0 %v2421
  %3501 = vmatprep.subr.bf16.mxu0 %v2424
  %3502 = vmatpush1.bf16.msra.mxu0 %v2423
  %3503 = vmatprep.subr.bf16.mxu0 %v2426
  %3504 = vmatpush1.bf16.msra.mxu0 %v2425
  %3505 = vmatprep.subr.bf16.mxu0 %v2428
  %3506 = vmatpush1.bf16.msra.mxu0 %v2427
  %3507 = vmatprep.subr.bf16.mxu0 %v2430
  %3508 = vmatpush1.bf16.msra.mxu0 %v2429
  %3509 = vmatprep.subr.bf16.mxu0 %v2432
  %3510 = vmatpush1.bf16.msra.mxu0 %v2431
  %3511 = vmatprep.mubr.bf16.mxu0 %v622
  %3512 = vmatmul.mubr.bf16.gmra.mrb[0].mxu0 %v621
  %v3513 = vpop.f32.mrb[0].mxu0
  %v3514 = vadd.f32 %v3473, %v3513
  %v3515 = vpop.f32.mrb[0].mxu0
  %v3516 = vadd.f32 %v3475, %v3515
  %v3517 = vpop.f32.mrb[0].mxu0
  %v3518 = vpop.f32.mrb[0].mxu0
  %3519 = vdwg.mxu0
  %3520 = vmatprep.subr.bf16.mxu0 %v2434
  %3521 = vmatpush1.bf16.msra.mxu0 %v2433
  %3522 = vmatprep.subr.bf16.mxu0 %v2436
  %3523 = vmatpush1.bf16.msra.mxu0 %v2435
  %3524 = vmatprep.subr.bf16.mxu0 %v2438
  %3525 = vmatpush1.bf16.msra.mxu0 %v2437
  %3526 = vmatprep.subr.bf16.mxu0 %v2440
  %3527 = vmatpush1.bf16.msra.mxu0 %v2439
  %3528 = vmatprep.subr.bf16.mxu0 %v2442
  %3529 = vmatpush1.bf16.msra.mxu0 %v2441
  %3530 = vmatprep.subr.bf16.mxu0 %v2444
  %3531 = vmatpush1.bf16.msra.mxu0 %v2443
  %3532 = vmatprep.subr.bf16.mxu0 %v2446
  %3533 = vmatpush1.bf16.msra.mxu0 %v2445
  %3534 = vmatprep.subr.bf16.mxu0 %v2448
  %3535 = vmatpush1.bf16.msra.mxu0 %v2447
  %3536 = vmatprep.subr.bf16.mxu0 %v2450
  %3537 = vmatpush1.bf16.msra.mxu0 %v2449
  %3538 = vmatprep.subr.bf16.mxu0 %v2452
  %3539 = vmatpush1.bf16.msra.mxu0 %v2451
  %3540 = vmatprep.subr.bf16.mxu0 %v2454
  %3541 = vmatpush1.bf16.msra.mxu0 %v2453
  %3542 = vmatprep.subr.bf16.mxu0 %v2456
  %3543 = vmatpush1.bf16.msra.mxu0 %v2455
  %3544 = vmatprep.subr.bf16.mxu0 %v2458
  %3545 = vmatpush1.bf16.msra.mxu0 %v2457
  %3546 = vmatprep.subr.bf16.mxu0 %v2460
  %3547 = vmatpush1.bf16.msra.mxu0 %v2459
  %3548 = vmatprep.subr.bf16.mxu0 %v2462
  %3549 = vmatpush1.bf16.msra.mxu0 %v2461
  %3550 = vmatprep.subr.bf16.mxu0 %v2464
  %3551 = vmatpush1.bf16.msra.mxu0 %v2463
  %3552 = vmatprep.mubr.bf16.mxu0 %v624
  %3553 = vmatmul.mubr.bf16.gmra.mrb[0].mxu0 %v623
  %v3554 = vpop.f32.mrb[0].mxu0
  %v3555 = vadd.f32 %v3514, %v3554
  %v3556 = vpop.f32.mrb[0].mxu0
  %v3557 = vadd.f32 %v3516, %v3556
  %v3558 = vpop.f32.mrb[0].mxu0
  %v3559 = vpop.f32.mrb[0].mxu0
  %3560 = vdwg.mxu0
  %3561 = vmatprep.subr.bf16.mxu0 %v2466
  %3562 = vmatpush1.bf16.msra.mxu0 %v2465
  %3563 = vmatprep.subr.bf16.mxu0 %v2468
  %3564 = vmatpush1.bf16.msra.mxu0 %v2467
  %3565 = vmatprep.subr.bf16.mxu0 %v2470
  %3566 = vmatpush1.bf16.msra.mxu0 %v2469
  %3567 = vmatprep.subr.bf16.mxu0 %v2472
  %3568 = vmatpush1.bf16.msra.mxu0 %v2471
  %3569 = vmatprep.subr.bf16.mxu0 %v2474
  %3570 = vmatpush1.bf16.msra.mxu0 %v2473
  %3571 = vmatprep.subr.bf16.mxu0 %v2476
  %3572 = vmatpush1.bf16.msra.mxu0 %v2475
  %3573 = vmatprep.subr.bf16.mxu0 %v2478
  %3574 = vmatpush1.bf16.msra.mxu0 %v2477
  %3575 = vmatprep.subr.bf16.mxu0 %v2480
  %3576 = vmatpush1.bf16.msra.mxu0 %v2479
  %3577 = vmatprep.subr.bf16.mxu0 %v2482
  %3578 = vmatpush1.bf16.msra.mxu0 %v2481
  %3579 = vmatprep.subr.bf16.mxu0 %v2484
  %3580 = vmatpush1.bf16.msra.mxu0 %v2483
  %3581 = vmatprep.subr.bf16.mxu0 %v2486
  %3582 = vmatpush1.bf16.msra.mxu0 %v2485
  %3583 = vmatprep.subr.bf16.mxu0 %v2488
  %3584 = vmatpush1.bf16.msra.mxu0 %v2487
  %3585 = vmatprep.subr.bf16.mxu0 %v2490
  %3586 = vmatpush1.bf16.msra.mxu0 %v2489
  %3587 = vmatprep.subr.bf16.mxu0 %v2492
  %3588 = vmatpush1.bf16.msra.mxu0 %v2491
  %3589 = vmatprep.subr.bf16.mxu0 %v2494
  %3590 = vmatpush1.bf16.msra.mxu0 %v2493
  %3591 = vmatprep.subr.bf16.mxu0 %v2496
  %3592 = vmatpush1.bf16.msra.mxu0 %v2495
  %3593 = vmatprep.mubr.bf16.mxu0 %v626
  %3594 = vmatmul.mubr.bf16.gmra.mrb[0].mxu0 %v625
  %v3595 = vpop.f32.mrb[0].mxu0
  %v3596 = vadd.f32 %v3555, %v3595
  %v3597 = vpop.f32.mrb[0].mxu0
  %v3598 = vadd.f32 %v3557, %v3597
  %v3599 = vpop.f32.mrb[0].mxu0
  %v3600 = vpop.f32.mrb[0].mxu0
  %3601 = vdwg.mxu0
  %3602 = vmatprep.subr.bf16.mxu0 %v2498
  %3603 = vmatpush1.bf16.msra.mxu0 %v2497
  %3604 = vmatprep.subr.bf16.mxu0 %v2500
  %3605 = vmatpush1.bf16.msra.mxu0 %v2499
  %3606 = vmatprep.subr.bf16.mxu0 %v2502
  %3607 = vmatpush1.bf16.msra.mxu0 %v2501
  %3608 = vmatprep.subr.bf16.mxu0 %v2504
  %3609 = vmatpush1.bf16.msra.mxu0 %v2503
  %3610 = vmatprep.subr.bf16.mxu0 %v2506
  %3611 = vmatpush1.bf16.msra.mxu0 %v2505
  %3612 = vmatprep.subr.bf16.mxu0 %v2508
  %3613 = vmatpush1.bf16.msra.mxu0 %v2507
  %3614 = vmatprep.subr.bf16.mxu0 %v2510
  %3615 = vmatpush1.bf16.msra.mxu0 %v2509
  %3616 = vmatprep.subr.bf16.mxu0 %v2512
  %3617 = vmatpush1.bf16.msra.mxu0 %v2511
  %3618 = vmatprep.subr.bf16.mxu0 %v2514
  %3619 = vmatpush1.bf16.msra.mxu0 %v2513
  %3620 = vmatprep.subr.bf16.mxu0 %v2516
  %3621 = vmatpush1.bf16.msra.mxu0 %v2515
  %3622 = vmatprep.subr.bf16.mxu0 %v2518
  %3623 = vmatpush1.bf16.msra.mxu0 %v2517
  %3624 = vmatprep.subr.bf16.mxu0 %v2520
  %3625 = vmatpush1.bf16.msra.mxu0 %v2519
  %3626 = vmatprep.subr.bf16.mxu0 %v2522
  %3627 = vmatpush1.bf16.msra.mxu0 %v2521
  %3628 = vmatprep.subr.bf16.mxu0 %v2524
  %3629 = vmatpush1.bf16.msra.mxu0 %v2523
  %3630 = vmatprep.subr.bf16.mxu0 %v2526
  %3631 = vmatpush1.bf16.msra.mxu0 %v2525
  %3632 = vmatprep.subr.bf16.mxu0 %v2528
  %3633 = vmatpush1.bf16.msra.mxu0 %v2527
  %3634 = vmatprep.mubr.bf16.mxu0 %v628
  %3635 = vmatmul.mubr.bf16.gmra.mrb[0].mxu0 %v627
  %v3636 = vpop.f32.mrb[0].mxu0
  %v3637 = vadd.f32 %v3596, %v3636
  %v3638 = vpop.f32.mrb[0].mxu0
  %v3639 = vadd.f32 %v3598, %v3638
  %v3640 = vpop.f32.mrb[0].mxu0
  %v3641 = vpop.f32.mrb[0].mxu0
  %3642 = vdwg.mxu0
  %3643 = vmatprep.subr.bf16.mxu0 %v2530
  %3644 = vmatpush1.bf16.msra.mxu0 %v2529
  %3645 = vmatprep.subr.bf16.mxu0 %v2532
  %3646 = vmatpush1.bf16.msra.mxu0 %v2531
  %3647 = vmatprep.subr.bf16.mxu0 %v2534
  %3648 = vmatpush1.bf16.msra.mxu0 %v2533
  %3649 = vmatprep.subr.bf16.mxu0 %v2536
  %3650 = vmatpush1.bf16.msra.mxu0 %v2535
  %3651 = vmatprep.subr.bf16.mxu0 %v2538
  %3652 = vmatpush1.bf16.msra.mxu0 %v2537
  %3653 = vmatprep.subr.bf16.mxu0 %v2540
  %3654 = vmatpush1.bf16.msra.mxu0 %v2539
  %3655 = vmatprep.subr.bf16.mxu0 %v2542
  %3656 = vmatpush1.bf16.msra.mxu0 %v2541
  %3657 = vmatprep.subr.bf16.mxu0 %v2544
  %3658 = vmatpush1.bf16.msra.mxu0 %v2543
  %3659 = vmatprep.subr.bf16.mxu0 %v2546
  %3660 = vmatpush1.bf16.msra.mxu0 %v2545
  %3661 = vmatprep.subr.bf16.mxu0 %v2548
  %3662 = vmatpush1.bf16.msra.mxu0 %v2547
  %3663 = vmatprep.subr.bf16.mxu0 %v2550
  %3664 = vmatpush1.bf16.msra.mxu0 %v2549
  %3665 = vmatprep.subr.bf16.mxu0 %v2552
  %3666 = vmatpush1.bf16.msra.mxu0 %v2551
  %3667 = vmatprep.subr.bf16.mxu0 %v2554
  %3668 = vmatpush1.bf16.msra.mxu0 %v2553
  %3669 = vmatprep.subr.bf16.mxu0 %v2556
  %3670 = vmatpush1.bf16.msra.mxu0 %v2555
  %3671 = vmatprep.subr.bf16.mxu0 %v2558
  %3672 = vmatpush1.bf16.msra.mxu0 %v2557
  %3673 = vmatprep.subr.bf16.mxu0 %v2560
  %3674 = vmatpush1.bf16.msra.mxu0 %v2559
  %3675 = vmatprep.mubr.bf16.mxu0 %v630
  %3676 = vmatmul.mubr.bf16.gmra.mrb[0].mxu0 %v629
  %v3677 = vpop.f32.mrb[0].mxu0
  %v3678 = vadd.f32 %v3637, %v3677
  %v3679 = vpop.f32.mrb[0].mxu0
  %v3680 = vadd.f32 %v3639, %v3679
  %v3681 = vpop.f32.mrb[0].mxu0
  %v3682 = vpop.f32.mrb[0].mxu0
  %3683 = vdwg.mxu0
  %3684 = vmatprep.subr.bf16.mxu0 %v2562
  %3685 = vmatpush1.bf16.msra.mxu0 %v2561
  %3686 = vmatprep.subr.bf16.mxu0 %v2564
  %3687 = vmatpush1.bf16.msra.mxu0 %v2563
  %3688 = vmatprep.subr.bf16.mxu0 %v2566
  %3689 = vmatpush1.bf16.msra.mxu0 %v2565
  %3690 = vmatprep.subr.bf16.mxu0 %v2568
  %3691 = vmatpush1.bf16.msra.mxu0 %v2567
  %3692 = vmatprep.subr.bf16.mxu0 %v2570
  %3693 = vmatpush1.bf16.msra.mxu0 %v2569
  %3694 = vmatprep.subr.bf16.mxu0 %v2572
  %3695 = vmatpush1.bf16.msra.mxu0 %v2571
  %3696 = vmatprep.subr.bf16.mxu0 %v2574
  %3697 = vmatpush1.bf16.msra.mxu0 %v2573
  %3698 = vmatprep.subr.bf16.mxu0 %v2576
  %3699 = vmatpush1.bf16.msra.mxu0 %v2575
  %3700 = vmatprep.subr.bf16.mxu0 %v2578
  %3701 = vmatpush1.bf16.msra.mxu0 %v2577
  %3702 = vmatprep.subr.bf16.mxu0 %v2580
  %3703 = vmatpush1.bf16.msra.mxu0 %v2579
  %3704 = vmatprep.subr.bf16.mxu0 %v2582
  %3705 = vmatpush1.bf16.msra.mxu0 %v2581
  %3706 = vmatprep.subr.bf16.mxu0 %v2584
  %3707 = vmatpush1.bf16.msra.mxu0 %v2583
  %3708 = vmatprep.subr.bf16.mxu0 %v2586
  %3709 = vmatpush1.bf16.msra.mxu0 %v2585
  %3710 = vmatprep.subr.bf16.mxu0 %v2588
  %3711 = vmatpush1.bf16.msra.mxu0 %v2587
  %3712 = vmatprep.subr.bf16.mxu0 %v2590
  %3713 = vmatpush1.bf16.msra.mxu0 %v2589
  %3714 = vmatprep.subr.bf16.mxu0 %v2592
  %3715 = vmatpush1.bf16.msra.mxu0 %v2591
  %3716 = vmatprep.mubr.bf16.mxu0 %v632
  %3717 = vmatmul.mubr.bf16.gmra.mrb[0].mxu0 %v631
  %v3718 = vpop.f32.mrb[0].mxu0
  %v3719 = vadd.f32 %v3678, %v3718
  %v3720 = vpop.f32.mrb[0].mxu0
  %v3721 = vadd.f32 %v3680, %v3720
  %v3722 = vpop.f32.mrb[0].mxu0
  %v3723 = vpop.f32.mrb[0].mxu0
  %3724 = vdwg.mxu0
  %3725 = vmatprep.subr.bf16.mxu0 %v2594
  %3726 = vmatpush1.bf16.msra.mxu0 %v2593
  %3727 = vmatprep.subr.bf16.mxu0 %v2596
  %3728 = vmatpush1.bf16.msra.mxu0 %v2595
  %3729 = vmatprep.subr.bf16.mxu0 %v2598
  %3730 = vmatpush1.bf16.msra.mxu0 %v2597
  %3731 = vmatprep.subr.bf16.mxu0 %v2600
  %3732 = vmatpush1.bf16.msra.mxu0 %v2599
  %3733 = vmatprep.subr.bf16.mxu0 %v2602
  %3734 = vmatpush1.bf16.msra.mxu0 %v2601
  %3735 = vmatprep.subr.bf16.mxu0 %v2604
  %3736 = vmatpush1.bf16.msra.mxu0 %v2603
  %3737 = vmatprep.subr.bf16.mxu0 %v2606
  %3738 = vmatpush1.bf16.msra.mxu0 %v2605
  %3739 = vmatprep.subr.bf16.mxu0 %v2608
  %3740 = vmatpush1.bf16.msra.mxu0 %v2607
  %3741 = vmatprep.subr.bf16.mxu0 %v2610
  %3742 = vmatpush1.bf16.msra.mxu0 %v2609
  %3743 = vmatprep.subr.bf16.mxu0 %v2612
  %3744 = vmatpush1.bf16.msra.mxu0 %v2611
  %3745 = vmatprep.subr.bf16.mxu0 %v2614
  %3746 = vmatpush1.bf16.msra.mxu0 %v2613
  %3747 = vmatprep.subr.bf16.mxu0 %v2616
  %3748 = vmatpush1.bf16.msra.mxu0 %v2615
  %3749 = vmatprep.subr.bf16.mxu0 %v2618
  %3750 = vmatpush1.bf16.msra.mxu0 %v2617
  %3751 = vmatprep.subr.bf16.mxu0 %v2620
  %3752 = vmatpush1.bf16.msra.mxu0 %v2619
  %3753 = vmatprep.subr.bf16.mxu0 %v2622
  %3754 = vmatpush1.bf16.msra.mxu0 %v2621
  %3755 = vmatprep.subr.bf16.mxu0 %v2624
  %3756 = vmatpush1.bf16.msra.mxu0 %v2623
  %3757 = vmatprep.mubr.bf16.mxu0 %v634
  %3758 = vmatmul.mubr.bf16.gmra.mrb[0].mxu0 %v633
  %v3759 = vpop.f32.mrb[0].mxu0
  %v3760 = vadd.f32 %v3719, %v3759
  %v3761 = vpop.f32.mrb[0].mxu0
  %v3762 = vadd.f32 %v3721, %v3761
  %v3763 = vpop.f32.mrb[0].mxu0
  %v3764 = vpop.f32.mrb[0].mxu0
  %3765 = vdwg.mxu0
  %3766 = vmatprep.subr.bf16.mxu0 %v2626
  %3767 = vmatpush1.bf16.msra.mxu0 %v2625
  %3768 = vmatprep.subr.bf16.mxu0 %v2628
  %3769 = vmatpush1.bf16.msra.mxu0 %v2627
  %3770 = vmatprep.subr.bf16.mxu0 %v2630
  %3771 = vmatpush1.bf16.msra.mxu0 %v2629
  %3772 = vmatprep.subr.bf16.mxu0 %v2632
  %3773 = vmatpush1.bf16.msra.mxu0 %v2631
  %3774 = vmatprep.subr.bf16.mxu0 %v2634
  %3775 = vmatpush1.bf16.msra.mxu0 %v2633
  %3776 = vmatprep.subr.bf16.mxu0 %v2636
  %3777 = vmatpush1.bf16.msra.mxu0 %v2635
  %3778 = vmatprep.subr.bf16.mxu0 %v2638
  %3779 = vmatpush1.bf16.msra.mxu0 %v2637
  %3780 = vmatprep.subr.bf16.mxu0 %v2640
  %3781 = vmatpush1.bf16.msra.mxu0 %v2639
  %3782 = vmatprep.subr.bf16.mxu0 %v2642
  %3783 = vmatpush1.bf16.msra.mxu0 %v2641
  %3784 = vmatprep.subr.bf16.mxu0 %v2644
  %3785 = vmatpush1.bf16.msra.mxu0 %v2643
  %3786 = vmatprep.subr.bf16.mxu0 %v2646
  %3787 = vmatpush1.bf16.msra.mxu0 %v2645
  %3788 = vmatprep.subr.bf16.mxu0 %v2648
  %3789 = vmatpush1.bf16.msra.mxu0 %v2647
  %3790 = vmatprep.subr.bf16.mxu0 %v2650
  %3791 = vmatpush1.bf16.msra.mxu0 %v2649
  %3792 = vmatprep.subr.bf16.mxu0 %v2652
  %3793 = vmatpush1.bf16.msra.mxu0 %v2651
  %3794 = vmatprep.subr.bf16.mxu0 %v2654
  %3795 = vmatpush1.bf16.msra.mxu0 %v2653
  %3796 = vmatprep.subr.bf16.mxu0 %v2656
  %3797 = vmatpush1.bf16.msra.mxu0 %v2655
  %3798 = vmatprep.mubr.bf16.mxu0 %v636
  %3799 = vmatmul.mubr.bf16.gmra.mrb[0].mxu0 %v635
  %v3800 = vpop.f32.mrb[0].mxu0
  %v3801 = vadd.f32 %v3760, %v3800
  %v3802 = vpop.f32.mrb[0].mxu0
  %v3803 = vadd.f32 %v3762, %v3802
  %v3804 = vpop.f32.mrb[0].mxu0
  %v3805 = vpop.f32.mrb[0].mxu0
  %3806 = vdwg.mxu0
  %3807 = vmatprep.subr.bf16.mxu0 %v2658
  %3808 = vmatpush1.bf16.msra.mxu0 %v2657
  %3809 = vmatprep.subr.bf16.mxu0 %v2660
  %3810 = vmatpush1.bf16.msra.mxu0 %v2659
  %3811 = vmatprep.subr.bf16.mxu0 %v2662
  %3812 = vmatpush1.bf16.msra.mxu0 %v2661
  %3813 = vmatprep.subr.bf16.mxu0 %v2664
  %3814 = vmatpush1.bf16.msra.mxu0 %v2663
  %3815 = vmatprep.subr.bf16.mxu0 %v2666
  %3816 = vmatpush1.bf16.msra.mxu0 %v2665
  %3817 = vmatprep.subr.bf16.mxu0 %v2668
  %3818 = vmatpush1.bf16.msra.mxu0 %v2667
  %3819 = vmatprep.subr.bf16.mxu0 %v2670
  %3820 = vmatpush1.bf16.msra.mxu0 %v2669
  %3821 = vmatprep.subr.bf16.mxu0 %v2672
  %3822 = vmatpush1.bf16.msra.mxu0 %v2671
  %3823 = vmatprep.subr.bf16.mxu0 %v2674
  %3824 = vmatpush1.bf16.msra.mxu0 %v2673
  %3825 = vmatprep.subr.bf16.mxu0 %v2676
  %3826 = vmatpush1.bf16.msra.mxu0 %v2675
  %3827 = vmatprep.subr.bf16.mxu0 %v2678
  %3828 = vmatpush1.bf16.msra.mxu0 %v2677
  %3829 = vmatprep.subr.bf16.mxu0 %v2680
  %3830 = vmatpush1.bf16.msra.mxu0 %v2679
  %3831 = vmatprep.subr.bf16.mxu0 %v2682
  %3832 = vmatpush1.bf16.msra.mxu0 %v2681
  %3833 = vmatprep.subr.bf16.mxu0 %v2684
  %3834 = vmatpush1.bf16.msra.mxu0 %v2683
  %3835 = vmatprep.subr.bf16.mxu0 %v2686
  %3836 = vmatpush1.bf16.msra.mxu0 %v2685
  %3837 = vmatprep.subr.bf16.mxu0 %v2688
  %3838 = vmatpush1.bf16.msra.mxu0 %v2687
  %3839 = vmatprep.mubr.bf16.mxu0 %v638
  %3840 = vmatmul.mubr.bf16.gmra.mrb[0].mxu0 %v637
  %v3841 = vpop.f32.mrb[0].mxu0
  %v3842 = vadd.f32 %v3801, %v3841
  %v3843 = vpop.f32.mrb[0].mxu0
  %v3844 = vadd.f32 %v3803, %v3843
  %v3845 = vpop.f32.mrb[0].mxu0
  %v3846 = vpop.f32.mrb[0].mxu0
  %3847 = vdwg.mxu0
  %3848 = vmatprep.subr.bf16.mxu0 %v2690
  %3849 = vmatpush1.bf16.msra.mxu0 %v2689
  %3850 = vmatprep.subr.bf16.mxu0 %v2692
  %3851 = vmatpush1.bf16.msra.mxu0 %v2691
  %3852 = vmatprep.subr.bf16.mxu0 %v2694
  %3853 = vmatpush1.bf16.msra.mxu0 %v2693
  %3854 = vmatprep.subr.bf16.mxu0 %v2696
  %3855 = vmatpush1.bf16.msra.mxu0 %v2695
  %3856 = vmatprep.subr.bf16.mxu0 %v2698
  %3857 = vmatpush1.bf16.msra.mxu0 %v2697
  %3858 = vmatprep.subr.bf16.mxu0 %v2700
  %3859 = vmatpush1.bf16.msra.mxu0 %v2699
  %3860 = vmatprep.subr.bf16.mxu0 %v2702
  %3861 = vmatpush1.bf16.msra.mxu0 %v2701
  %3862 = vmatprep.subr.bf16.mxu0 %v2704
  %3863 = vmatpush1.bf16.msra.mxu0 %v2703
  %3864 = vmatprep.subr.bf16.mxu0 %v2706
  %3865 = vmatpush1.bf16.msra.mxu0 %v2705
  %3866 = vmatprep.subr.bf16.mxu0 %v2708
  %3867 = vmatpush1.bf16.msra.mxu0 %v2707
  %3868 = vmatprep.subr.bf16.mxu0 %v2710
  %3869 = vmatpush1.bf16.msra.mxu0 %v2709
  %3870 = vmatprep.subr.bf16.mxu0 %v2712
  %3871 = vmatpush1.bf16.msra.mxu0 %v2711
  %3872 = vmatprep.subr.bf16.mxu0 %v2714
  %3873 = vmatpush1.bf16.msra.mxu0 %v2713
  %3874 = vmatprep.subr.bf16.mxu0 %v2716
  %3875 = vmatpush1.bf16.msra.mxu0 %v2715
  %3876 = vmatprep.subr.bf16.mxu0 %v2718
  %3877 = vmatpush1.bf16.msra.mxu0 %v2717
  %3878 = vmatprep.subr.bf16.mxu0 %v2720
  %3879 = vmatpush1.bf16.msra.mxu0 %v2719
  %3880 = vmatprep.mubr.bf16.mxu0 %v640
  %3881 = vmatmul.mubr.bf16.gmra.mrb[0].mxu0 %v639
  %v3882 = vpop.f32.mrb[0].mxu0
  %v3883 = vadd.f32 %v3842, %v3882
  %v3884 = vpop.f32.mrb[0].mxu0
  %v3885 = vadd.f32 %v3844, %v3884
  %v3886 = vpop.f32.mrb[0].mxu0
  %v3887 = vpop.f32.mrb[0].mxu0
  %3888 = vdwg.mxu0
  %v3889 = vxor.u32 %v3883, 2147483648
  %v3890 = vxor.u32 %v3885, 2147483648
  %v3891 = vmul.f32 %v3889, 1.442695
  %v3892 = vpow.pop %v3891
  %v3893 = vmul.f32 %v3890, 1.442695
  %v3894 = vpow.pop %v3893
  %v3895 = vadd.f32 %v3892, 1.0
  %v3896 = vadd.f32 %v3894, 1.0
  %v3897 = vrcp.pop %v3895
  %v3898 = vmul.f32 1.0, %v3897
  %v3899 = vrcp.pop %v3896
  %v3900 = vmul.f32 1.0, %v3899
  %v3901 = vmul.f32 %v3883, %v3898
  %v3902 = vmul.f32 %v3885, %v3900
  %v3903 = vpack.c.bf16 %v3901, %v3901
  %v3904 = vpack.c.bf16 %v3902, %v3902
  %v3905 = vld [vmem:[%s3] sm:$0xf]
  %v3906 = vld [vmem:[%s3 + $0x4] sm:$0xf]
  %v3907 = vld [vmem:[%s3 + $0x8] sm:$0xf]
  %v3908 = vld [vmem:[%s3 + $0xc] sm:$0xf]
  %v3909 = vld [vmem:[%s3 + $0x10] sm:$0xf]
  %v3910 = vld [vmem:[%s3 + $0x14] sm:$0xf]
  %v3911 = vld [vmem:[%s3 + $0x18] sm:$0xf]
  %v3912 = vld [vmem:[%s3 + $0x1c] sm:$0xf]
  %v3913 = vld [vmem:[%s3 + $0x20] sm:$0xf]
  %v3914 = vld [vmem:[%s3 + $0x24] sm:$0xf]
  %v3915 = vld [vmem:[%s3 + $0x28] sm:$0xf]
  %v3916 = vld [vmem:[%s3 + $0x2c] sm:$0xf]
  %v3917 = vld [vmem:[%s3 + $0x30] sm:$0xf]
  %v3918 = vld [vmem:[%s3 + $0x34] sm:$0xf]
  %v3919 = vld [vmem:[%s3 + $0x38] sm:$0xf]
  %v3920 = vld [vmem:[%s3 + $0x3c] sm:$0xf]
  %v3921 = vld [vmem:[%s3 + $0x40] sm:$0xf]
  %v3922 = vld [vmem:[%s3 + $0x44] sm:$0xf]
  %v3923 = vld [vmem:[%s3 + $0x48] sm:$0xf]
  %v3924 = vld [vmem:[%s3 + $0x4c] sm:$0xf]
  %v3925 = vld [vmem:[%s3 + $0x50] sm:$0xf]
  %v3926 = vld [vmem:[%s3 + $0x54] sm:$0xf]
  %v3927 = vld [vmem:[%s3 + $0x58] sm:$0xf]
  %v3928 = vld [vmem:[%s3 + $0x5c] sm:$0xf]
  %v3929 = vld [vmem:[%s3 + $0x60] sm:$0xf]
  %v3930 = vld [vmem:[%s3 + $0x64] sm:$0xf]
  %v3931 = vld [vmem:[%s3 + $0x68] sm:$0xf]
  %v3932 = vld [vmem:[%s3 + $0x6c] sm:$0xf]
  %v3933 = vld [vmem:[%s3 + $0x70] sm:$0xf]
  %v3934 = vld [vmem:[%s3 + $0x74] sm:$0xf]
  %v3935 = vld [vmem:[%s3 + $0x78] sm:$0xf]
  %v3936 = vld [vmem:[%s3 + $0x7c] sm:$0xf]
  %v3937 = vld [vmem:[%s4] sm:$0x1]
  %v3939 = vlaneseq
  %v3940 = vshrl.u32 %v3939, 7
  %v3941 = vsub.s32 0, %v3940
  %v3942 = vrot.slane %v3937, %v3941
  %v3976 = vunpack.c.l.b16 %v3905
  %v3977 = vunpack.c.l.b16 %v3906
  %v3978 = vunpack.c.l.b16 %v3907
  %v3979 = vunpack.c.l.b16 %v3908
  %v3980 = vunpack.c.l.b16 %v3909
  %v3981 = vunpack.c.l.b16 %v3910
  %v3982 = vunpack.c.l.b16 %v3911
  %v3983 = vunpack.c.l.b16 %v3912
  %v3984 = vunpack.c.l.b16 %v3913
  %v3985 = vunpack.c.l.b16 %v3914
  %v3986 = vunpack.c.l.b16 %v3915
  %v3987 = vunpack.c.l.b16 %v3916
  %v3988 = vunpack.c.l.b16 %v3917
  %v3989 = vunpack.c.l.b16 %v3918
  %v3990 = vunpack.c.l.b16 %v3919
  %v3991 = vunpack.c.l.b16 %v3920
  %v3992 = vunpack.c.l.b16 %v3921
  %v3993 = vunpack.c.l.b16 %v3922
  %v3994 = vunpack.c.l.b16 %v3923
  %v3995 = vunpack.c.l.b16 %v3924
  %v3996 = vunpack.c.l.b16 %v3925
  %v3997 = vunpack.c.l.b16 %v3926
  %v3998 = vunpack.c.l.b16 %v3927
  %v3999 = vunpack.c.l.b16 %v3928
  %v4000 = vunpack.c.l.b16 %v3929
  %v4001 = vunpack.c.l.b16 %v3930
  %v4002 = vunpack.c.l.b16 %v3931
  %v4003 = vunpack.c.l.b16 %v3932
  %v4004 = vunpack.c.l.b16 %v3933
  %v4005 = vunpack.c.l.b16 %v3934
  %v4006 = vunpack.c.l.b16 %v3935
  %v4007 = vunpack.c.l.b16 %v3936
  %v4008 = vpack.c.b16 %v3977, %v3976
  %v4009 = vpack.c.b16 %v3979, %v3978
  %v4010 = vpack.c.b16 %v3981, %v3980
  %v4011 = vpack.c.b16 %v3983, %v3982
  %v4012 = vpack.c.b16 %v3985, %v3984
  %v4013 = vpack.c.b16 %v3987, %v3986
  %v4014 = vpack.c.b16 %v3989, %v3988
  %v4015 = vpack.c.b16 %v3991, %v3990
  %v4016 = vpack.c.b16 %v3993, %v3992
  %v4017 = vpack.c.b16 %v3995, %v3994
  %v4018 = vpack.c.b16 %v3997, %v3996
  %v4019 = vpack.c.b16 %v3999, %v3998
  %v4020 = vpack.c.b16 %v4001, %v4000
  %v4021 = vpack.c.b16 %v4003, %v4002
  %v4022 = vpack.c.b16 %v4005, %v4004
  %v4023 = vpack.c.b16 %v4007, %v4006
  %4040 = vmatprep.subr.bf16.mxu0 0
  %4041 = vmatpush1.bf16.msra.mxu0 %v4008
  %4042 = vmatprep.subr.bf16.mxu0 0
  %4043 = vmatpush1.bf16.msra.mxu0 %v4009
  %4044 = vmatprep.subr.bf16.mxu0 0
  %4045 = vmatpush1.bf16.msra.mxu0 %v4010
  %4046 = vmatprep.subr.bf16.mxu0 0
  %4047 = vmatpush1.bf16.msra.mxu0 %v4011
  %4048 = vmatprep.subr.bf16.mxu0 0
  %4049 = vmatpush1.bf16.msra.mxu0 %v4012
  %4050 = vmatprep.subr.bf16.mxu0 0
  %4051 = vmatpush1.bf16.msra.mxu0 %v4013
  %4052 = vmatprep.subr.bf16.mxu0 0
  %4053 = vmatpush1.bf16.msra.mxu0 %v4014
  %4054 = vmatprep.subr.bf16.mxu0 0
  %4055 = vmatpush1.bf16.msra.mxu0 %v4015
  %4056 = vmatprep.subr.bf16.mxu0 0
  %4057 = vmatpush1.bf16.msra.mxu0 %v4016
  %4058 = vmatprep.subr.bf16.mxu0 0
  %4059 = vmatpush1.bf16.msra.mxu0 %v4017
  %4060 = vmatprep.subr.bf16.mxu0 0
  %4061 = vmatpush1.bf16.msra.mxu0 %v4018
  %4062 = vmatprep.subr.bf16.mxu0 0
  %4063 = vmatpush1.bf16.msra.mxu0 %v4019
  %4064 = vmatprep.subr.bf16.mxu0 0
  %4065 = vmatpush1.bf16.msra.mxu0 %v4020
  %4066 = vmatprep.subr.bf16.mxu0 0
  %4067 = vmatpush1.bf16.msra.mxu0 %v4021
  %4068 = vmatprep.subr.bf16.mxu0 0
  %4069 = vmatpush1.bf16.msra.mxu0 %v4022
  %4070 = vmatprep.subr.bf16.mxu0 0
  %4071 = vmatpush1.bf16.msra.mxu0 %v4023
  %4072 = vmatprep.mubr.bf16.mxu0 %v3904
  %4073 = vmatmul.mubr.bf16.gmra.mrb[0].mxu0 %v3903
  %v4074 = vpop.f32.mrb[0].mxu0
  %v4075 = vadd.f32 %v3942, %v4074
  %v4076 = vpop.f32.mrb[0].mxu0
  %v4077 = vpop.f32.mrb[0].mxu0
  %v4078 = vpop.f32.mrb[0].mxu0
  %4079 = vdwg.mxu0
  %4080 = vst [vmem:[%s5] sm:$0xff] %v4075
  // Predicated region
  $region22: #{conv_encoder_forward.11} parent=0 // pred_check
    _
  $region23: #{conv_encoder_forward.11} parent=0 // pred_check_branch
    %4082 = sbr.rel (0) target = $region25
  $region24: #{conv_encoder_forward.11} parent=0 // pred_region
    _
  $region25: #{conv_encoder_forward.11} parent=0 // pred_fallthru
    _
  // Predicated region
  $region26: #{conv_encoder_forward.11} parent=0 // pred_check
    _
  $region27: #{conv_encoder_forward.11} parent=0 // pred_check_branch
    %4084 = sbr.rel (0) target = $region29
  $region28: #{conv_encoder_forward.11} parent=0 // pred_region
    _
  $region29: #{conv_encoder_forward.11} parent=0 // pred_fallthru
    _

</llo_original>
